<compile_context>
chip_gen: v7x
topology: tpu7x:2x2x1
jax: 0.10.0
libtpu: 0.0.40
codegen_flags: <defaults>
</compile_context>

<pallas_src>
import functools
import math

import jax
import jax.numpy as jnp
from jax.experimental import pallas as pl
from jax.experimental.pallas import tpu as pltpu


# ----------------------------- Pallas kernels ------------------------------

def _conv3x3_kernel(x_ref, w_ref, *args, H, W, use_bias):
    """Direct 3x3 conv on one image: 9 shifted (H*W, Cin) x (Cin, Cout_t)
    bf16 MXU matmuls accumulated in f32, fused bias and fused per-channel
    BatchNorm moments (accumulated across the batch grid axis)."""
    if use_bias:
        b_ref, o_ref, s_ref, sq_ref = args
    else:
        o_ref, s_ref, sq_ref = args
    cin = x_ref.shape[-1]
    cot = o_ref.shape[-1]
    acc = jnp.zeros((H * W, cot), jnp.float32)
    for dy in range(3):
        for dx in range(3):
            xs = x_ref[0, dy:dy + H, dx:dx + W, :].reshape(H * W, cin)
            acc = acc + jnp.dot(xs.astype(jnp.bfloat16), w_ref[dy, dx],
                                preferred_element_type=jnp.float32)
    if use_bias:
        acc = acc + b_ref[...]
    o_ref[0] = acc.reshape(H, W, cot)

    @pl.when(pl.program_id(1) == 0)
    def _():
        s_ref[...] = jnp.zeros_like(s_ref)
        sq_ref[...] = jnp.zeros_like(sq_ref)

    s_ref[...] += jnp.sum(acc, axis=0, keepdims=True)
    sq_ref[...] += jnp.sum(acc * acc, axis=0, keepdims=True)


def _matmul_kernel(x_ref, w_ref, *args, use_bias):
    """(tm, K) @ (K, tn) bf16 MXU matmul with f32 accumulation, fused bias
    and fused per-channel moments (accumulated across the row grid axis)."""
    if use_bias:
        b_ref, o_ref, s_ref, sq_ref = args
    else:
        o_ref, s_ref, sq_ref = args
    y = jnp.dot(x_ref[...].astype(jnp.bfloat16), w_ref[...],
                preferred_element_type=jnp.float32)
    if use_bias:
        y = y + b_ref[...]
    o_ref[...] = y

    @pl.when(pl.program_id(1) == 0)
    def _():
        s_ref[...] = jnp.zeros_like(s_ref)
        sq_ref[...] = jnp.zeros_like(sq_ref)

    s_ref[...] += jnp.sum(y, axis=0, keepdims=True)
    sq_ref[...] += jnp.sum(y * y, axis=0, keepdims=True)


def _bn_act_kernel(x_ref, scale_ref, shift_ref, *args, act, fuse_mul):
    """y = act(x*scale + shift) [* g]: BN apply + activation, optionally fused
    with the attention mask multiply."""
    if fuse_mul:
        g_ref, o_ref = args
    else:
        (o_ref,) = args
    y = x_ref[...] * scale_ref[...] + shift_ref[...]
    if act == "relu":
        y = jnp.maximum(y, 0.0)
    elif act == "sigmoid":
        y = jax.nn.sigmoid(y)
    if fuse_mul:
        y = y * g_ref[...]
    o_ref[...] = y


# --------------------------- tiling helpers ---------------------------------

def _cout_tile(c):
    # full channel block when <128 (or not 128-aligned), else 128/256 tiles.
    return min(c, 256) if c % 128 == 0 else c


def _row_tile(m, cap):
    if m <= cap:
        return m
    t = cap
    while m % t:
        t //= 2
    return max(t, 8)


# --------------------------- Pallas call wrappers ---------------------------

def _matmul_p(x2, w, b, use_bias):
    """x2:(M,K) f32, w:(K,Cout) bf16, b:(Cout,) f32 | None.
    Returns y:(M,Cout) f32, per-channel sum and sum-of-squares of y."""
    M, K = x2.shape
    Cout = w.shape[-1]
    tm = _row_tile(M, 512)
    tn = _cout_tile(Cout)
    grid = (Cout // tn, M // tm)

    in_specs = [pl.BlockSpec((tm, K), lambda co, i: (i, 0)),
                pl.BlockSpec((K, tn), lambda co, i: (0, co))]
    args = [x2, w]
    if use_bias:
        in_specs.append(pl.BlockSpec((1, tn), lambda co, i: (0, co)))
        args.append(b.reshape(1, Cout))
    mom_spec = pl.BlockSpec((1, tn), lambda co, i: (0, co))

    y, s, sq = pl.pallas_call(
        functools.partial(_matmul_kernel, use_bias=use_bias),
        out_shape=(jax.ShapeDtypeStruct((M, Cout), jnp.float32),
                   jax.ShapeDtypeStruct((1, Cout), jnp.float32),
                   jax.ShapeDtypeStruct((1, Cout), jnp.float32)),
        grid_spec=pltpu.PrefetchScalarGridSpec(
            num_scalar_prefetch=0, grid=grid,
            in_specs=in_specs,
            out_specs=(pl.BlockSpec((tm, tn), lambda co, i: (i, co)),
                       mom_spec, mom_spec)),
        compiler_params=pltpu.CompilerParams(
            dimension_semantics=("parallel", "arbitrary")),
    )(*args)
    return y, s[0], sq[0]


@functools.partial(jax.jit, static_argnames=("use_bias",))
def _conv3x3_jit(x, w, b, *, use_bias):
    """3x3, stride 1, pad 1 conv (NHWC). Returns (y, ch_sum, ch_sumsq)."""
    N, H, W, Cin = x.shape
    Cout = w.shape[-1]
    xp = jnp.pad(x, ((0, 0), (1, 1), (1, 1), (0, 0)))

    if W % 8 == 0:
        # Direct conv: whole padded image (per batch element) resident in VMEM,
        # 9 shifted matmuls inside the kernel.  No im2col materialization.
        Hp, Wp = H + 2, W + 2
        co_t = _cout_tile(Cout)
        grid = (Cout // co_t, N)
        in_specs = [pl.BlockSpec((1, Hp, Wp, Cin), lambda co, n: (n, 0, 0, 0)),
                    pl.BlockSpec((3, 3, Cin, co_t), lambda co, n: (0, 0, 0, co))]
        args = [xp, w]
        if use_bias:
            in_specs.append(pl.BlockSpec((1, co_t), lambda co, n: (0, co)))
            args.append(b.reshape(1, Cout))
        mom_spec = pl.BlockSpec((1, co_t), lambda co, n: (0, co))

        y, s, sq = pl.pallas_call(
            functools.partial(_conv3x3_kernel, H=H, W=W, use_bias=use_bias),
            out_shape=(jax.ShapeDtypeStruct((N, H, W, Cout), jnp.float32),
                       jax.ShapeDtypeStruct((1, Cout), jnp.float32),
                       jax.ShapeDtypeStruct((1, Cout), jnp.float32)),
            grid_spec=pltpu.PrefetchScalarGridSpec(
                num_scalar_prefetch=0, grid=grid,
                in_specs=in_specs,
                out_specs=(pl.BlockSpec((1, H, W, co_t),
                                        lambda co, n: (n, 0, 0, co)),
                           mom_spec, mom_spec)),
            compiler_params=pltpu.CompilerParams(
                dimension_semantics=("parallel", "arbitrary")),
        )(*args)
        return y, s[0], sq[0]

    # Tiny-spatial fallback (W not sublane aligned, W in {2,4}): im2col is
    # negligible here (few KB) and avoids non-aligned in-kernel reshapes.
    patches = jnp.concatenate(
        [xp[:, dy:dy + H, dx:dx + W, :] for dy in range(3) for dx in range(3)],
        axis=-1)
    y2, s, sq = _matmul_p(patches.reshape(N * H * W, 9 * Cin),
                          w.reshape(9 * Cin, Cout), b, use_bias)
    return y2.reshape(N, H, W, Cout), s, sq


def conv3x3(x, w, b=None):
    return _conv3x3_jit(x, w, b, use_bias=b is not None)


@functools.partial(jax.jit, static_argnames=("use_bias",))
def _conv1x1_jit(x, w, b, *, use_bias):
    N, H, W, Cin = x.shape
    Cout = w.shape[-1]
    y2, s, sq = _matmul_p(x.reshape(N * H * W, Cin), w, b, use_bias)
    return y2.reshape(N, H, W, Cout), s, sq


def conv1x1(x, w, b=None):
    return _conv1x1_jit(x, w, b, use_bias=b is not None)


@functools.partial(jax.jit, static_argnames=("act", "count"))
def _bn_act_jit(y, s, sq, gamma, beta, g, *, act, count):
    """Training-mode BatchNorm (batch statistics from fused moments) +
    activation, optionally fused with an elementwise multiply by g."""
    shape = y.shape
    C = shape[-1]
    mean = s / count
    # TODO(synk): E[x^2]-E[x]^2 in f32 can lose precision for large-mean
    # activations; switch to a two-pass/Welford reduction if numerics drift.
    var = jnp.maximum(sq / count - mean * mean, 0.0)
    scale = gamma * jax.lax.rsqrt(var + 1e-5)
    shift = beta - mean * scale

    y2 = y.reshape(-1, C)
    M = y2.shape[0]
    tm = _row_tile(M, 1024)
    fuse_mul = g is not None

    in_specs = [pl.BlockSpec((tm, C), lambda i: (i, 0)),
                pl.BlockSpec((1, C), lambda i: (0, 0)),
                pl.BlockSpec((1, C), lambda i: (0, 0))]
    args = [y2, scale.reshape(1, C), shift.reshape(1, C)]
    if fuse_mul:
        in_specs.append(pl.BlockSpec((tm, C), lambda i: (i, 0)))
        args.append(g.reshape(-1, C))

    out = pl.pallas_call(
        functools.partial(_bn_act_kernel, act=act, fuse_mul=fuse_mul),
        out_shape=jax.ShapeDtypeStruct((M, C), jnp.float32),
        grid_spec=pltpu.PrefetchScalarGridSpec(
            num_scalar_prefetch=0, grid=(M // tm,),
            in_specs=in_specs,
            out_specs=pl.BlockSpec((tm, C), lambda i: (i, 0))),
        compiler_params=pltpu.CompilerParams(
            dimension_semantics=("parallel",)),
    )(*args)
    return out.reshape(shape)


# ------------------------------- NN building --------------------------------

def conv_bn_relu(cp, x):
    y, s, sq = conv3x3(x, cp["w"])           # bias absorbed by BN -> omitted
    n, h, w, _ = y.shape
    return _bn_act_jit(y, s, sq, cp["gamma"], cp["beta"], None,
                       act="relu", count=n * h * w)


def apply_conv_block(block, x):
    for cp in block:                          # conv3x3 + BN + ReLU, possibly x2
        x = conv_bn_relu(cp, x)
    return x


def apply_att_layer(ap, x, g):
    """1x1+BN+ReLU, then 1x1+BN+Sigmoid fused with the attention multiply."""
    y, s, sq = conv1x1(x, ap["w1"])
    n, h, w, _ = y.shape
    m = n * h * w
    hid = _bn_act_jit(y, s, sq, ap["g1"], ap["be1"], None, act="relu", count=m)
    y2, s2, sq2 = conv1x1(hid, ap["w2"])
    return _bn_act_jit(y2, s2, sq2, ap["g2"], ap["be2"], g,
                       act="sigmoid", count=m)


def apply_pred(pp, x):                        # conv3x3 + conv1x1 (bias, no BN)
    y, _, _ = conv3x3(x, pp["w3"], pp["b3"])
    y2, _, _ = conv1x1(y, pp["w1"], pp["b1"])
    return y2


# TODO(synk): max-pool argmax bookkeeping / unpool scatter / bilinear upsample
# are pure index-shuffling glue and stay in plain JAX rather than Pallas.
@jax.jit
def max_pool_with_indices(x):
    N, H, W, C = x.shape
    xw = x.reshape(N, H // 2, 2, W // 2, 2, C).transpose(0, 1, 3, 2, 4, 5)
    xw = xw.reshape(N, H // 2, W // 2, 4, C)
    return jnp.max(xw, axis=3), jnp.argmax(xw, axis=3)


@jax.jit
def max_unpool(v, idx):
    N, h, w, C = v.shape
    k = jnp.arange(4, dtype=idx.dtype).reshape(1, 1, 1, 4, 1)
    sc = jnp.where(idx[:, :, :, None, :] == k, v[:, :, :, None, :], 0.0)
    sc = sc.reshape(N, h, w, 2, 2, C)
    return sc.transpose(0, 1, 3, 2, 4, 5).reshape(N, 2 * h, 2 * w, C)


@jax.jit
def max_pool2x2(x):
    N, H, W, C = x.shape
    return jnp.max(x.reshape(N, H // 2, 2, W // 2, 2, C), axis=(2, 4))


@jax.jit
def upsample_bilinear_x2(x):
    # F.interpolate(scale_factor=2, mode='bilinear', align_corners=True)
    N, H, W, C = x.shape
    Ho, Wo = 2 * H, 2 * W

    def coords(n_in, n_out):
        if n_in == 1:
            z = jnp.zeros((n_out,), jnp.int32)
            return z, z, jnp.zeros((n_out,), jnp.float32)
        src = jnp.arange(n_out, dtype=jnp.float32) * (n_in - 1) / (n_out - 1)
        i0 = jnp.clip(jnp.floor(src).astype(jnp.int32), 0, n_in - 1)
        i1 = jnp.minimum(i0 + 1, n_in - 1)
        return i0, i1, src - i0.astype(jnp.float32)

    y0, y1, wy = coords(H, Ho)
    x0, x1, wx = coords(W, Wo)
    r0, r1 = x[:, y0], x[:, y1]
    wx_ = wx[None, None, :, None]
    wy_ = wy[None, :, None, None]
    top = r0[:, :, x0] * (1 - wx_) + r0[:, :, x1] * wx_
    bot = r1[:, :, x0] * (1 - wx_) + r1[:, :, x1] * wx_
    return top * (1 - wy_) + bot * wy_


# ------------------------------ parameter init -------------------------------

def init_params(key):
    filt = [64, 128, 256, 512, 512]
    class_nb = 7
    keys = iter(jax.random.split(key, 256))

    def xavier(shape):
        if len(shape) == 4:
            rf = shape[0] * shape[1]
            fan_in, fan_out = shape[2] * rf, shape[3] * rf
        else:
            fan_in, fan_out = shape
        std = math.sqrt(2.0 / (fan_in + fan_out))
        w = std * jax.random.normal(next(keys), shape, dtype=jnp.float32)
        return w.astype(jnp.bfloat16)          # MXU operands kept in bf16

    def conv_layer(cin, cout):
        # conv bias omitted: exactly absorbed by the following BatchNorm.
        return {"w": xavier((3, 3, cin, cout)),
                "gamma": jnp.ones((cout,), jnp.float32),
                "beta": jnp.zeros((cout,), jnp.float32)}

    def att_layer(c0, c1, c2):
        return {"w1": xavier((c0, c1)),
                "g1": jnp.ones((c1,), jnp.float32),
                "be1": jnp.zeros((c1,), jnp.float32),
                "w2": xavier((c1, c2)),
                "g2": jnp.ones((c2,), jnp.float32),
                "be2": jnp.zeros((c2,), jnp.float32)}

    def pred_layer(cin, cout):
        return {"w3": xavier((3, 3, cin, cin)), "b3": jnp.zeros((cin,), jnp.float32),
                "w1": xavier((cin, cout)), "b1": jnp.zeros((cout,), jnp.float32)}

    p = {}
    p["encoder_block"] = [[conv_layer(3, filt[0])]] + \
                         [[conv_layer(filt[i], filt[i + 1])] for i in range(4)]
    p["decoder_block"] = [[conv_layer(filt[0], filt[0])]] + \
                         [[conv_layer(filt[i + 1], filt[i])] for i in range(4)]
    p["conv_block_enc"] = [[conv_layer(filt[0], filt[0])],
                           [conv_layer(filt[1], filt[1])],
                           [conv_layer(filt[2], filt[2]), conv_layer(filt[2], filt[2])],
                           [conv_layer(filt[3], filt[3]), conv_layer(filt[3], filt[3])],
                           [conv_layer(filt[4], filt[4]), conv_layer(filt[4], filt[4])]]
    p["conv_block_dec"] = [[conv_layer(filt[0], filt[0])],
                           [conv_layer(filt[0], filt[0])],
                           [conv_layer(filt[1], filt[1]), conv_layer(filt[1], filt[1])],
                           [conv_layer(filt[2], filt[2]), conv_layer(filt[2], filt[2])],
                           [conv_layer(filt[3], filt[3]), conv_layer(filt[3], filt[3])]]
    p["encoder_att"] = [[att_layer(filt[0], filt[0], filt[0])] +
                        [att_layer(2 * filt[k], filt[k], filt[k]) for k in range(1, 5)]
                        for _ in range(2)]
    p["decoder_att"] = [[att_layer(2 * filt[0], filt[0], filt[0])] +
                        [att_layer(filt[k] + filt[k - 1], filt[k - 1], filt[k - 1])
                         for k in range(1, 5)]
                        for _ in range(2)]
    p["encoder_block_att"] = [[conv_layer(filt[0], filt[1])],
                              [conv_layer(filt[1], filt[2])],
                              [conv_layer(filt[2], filt[3])],
                              [conv_layer(filt[3], filt[4])],
                              [conv_layer(filt[4], filt[4])]]
    p["decoder_block_att"] = [[conv_layer(filt[0], filt[0])],
                              [conv_layer(filt[1], filt[0])],
                              [conv_layer(filt[2], filt[1])],
                              [conv_layer(filt[3], filt[2])],
                              [conv_layer(filt[4], filt[4])]]
    p["pred_task1"] = pred_layer(filt[0], class_nb)
    p["pred_task2"] = pred_layer(filt[0], 1)
    return p


# --------------------------------- forward ----------------------------------

def segnet_mtan_forward(params, x_nchw, return_representation=False):
    x = jnp.transpose(x_nchw, (0, 2, 3, 1)).astype(jnp.float32)    # NCHW->NHWC
    P = params
    g_enc = [[None, None] for _ in range(5)]
    g_dec = [[None, None] for _ in range(5)]
    g_pool, g_up, idxs = [None] * 5, [None] * 5, [None] * 5

    # shared encoder
    for i in range(5):
        inp = x if i == 0 else g_pool[i - 1]
        g_enc[i][0] = apply_conv_block(P["encoder_block"][i], inp)
        g_enc[i][1] = apply_conv_block(P["conv_block_enc"][i], g_enc[i][0])
        g_pool[i], idxs[i] = max_pool_with_indices(g_enc[i][1])

    # shared decoder
    for i in range(5):
        src = g_pool[4] if i == 0 else g_dec[i - 1][1]
        g_up[i] = max_unpool(src, idxs[4 - i])
        g_dec[i][0] = apply_conv_block(P["decoder_block"][4 - i], g_up[i])
        g_dec[i][1] = apply_conv_block(P["conv_block_dec"][4 - i], g_dec[i][0])

    # per-task attention streams
    # TODO(synk): the two task streams could share one batched pallas_call per
    # level, but BatchNorm uses per-call batch statistics, so they are kept
    # separate to preserve the reference semantics.
    reps = []
    for t in range(2):
        ae_out = None
        for j in range(5):
            a_in = g_enc[0][0] if j == 0 else jnp.concatenate(
                [g_enc[j][0], ae_out], axis=-1)
            masked = apply_att_layer(P["encoder_att"][t][j], a_in, g_enc[j][1])
            ae_out = max_pool2x2(
                apply_conv_block(P["encoder_block_att"][j], masked))
        ad_prev = ae_out
        ad_masked = None
        for j in range(5):
            up = upsample_bilinear_x2(ad_prev)
            dec = apply_conv_block(P["decoder_block_att"][4 - j], up)
            d_in = jnp.concatenate([g_up[j], dec], axis=-1)
            ad_masked = apply_att_layer(P["decoder_att"][t][4 - j], d_in,
                                        g_dec[j][1])
            ad_prev = ad_masked
        reps.append(ad_masked)

    t1 = jax.nn.log_softmax(apply_pred(P["pred_task1"], reps[0]), axis=-1)
    t2 = apply_pred(P["pred_task2"], reps[1])
    t1 = jnp.transpose(t1, (0, 3, 1, 2))                           # back to NCHW
    t2 = jnp.transpose(t2, (0, 3, 1, 2))
    pred = [t1, t2]
    if return_representation:
        rep = (jnp.transpose(reps[0], (0, 3, 1, 2)),
               jnp.transpose(reps[1], (0, 3, 1, 2)))
        return pred, rep
    return pred


# ----------------------------------- main ------------------------------------

if __name__ == "__main__":
    key = jax.random.PRNGKey(0)
    pkey, xkey = jax.random.split(key)
    params = init_params(pkey)
    # 5 levels of stride-2 pooling -> spatial must be divisible by 32.
    x = jax.random.normal(xkey, (2, 3, 32, 32), dtype=jnp.float32)

    preds = segnet_mtan_forward(params, x)
    preds = jax.block_until_ready(preds)

    assert preds[0].shape == (2, 7, 32, 32), preds[0].shape
    assert preds[1].shape == (2, 1, 32, 32), preds[1].shape
    assert bool(jnp.all(jnp.isfinite(preds[0]))) and bool(jnp.all(jnp.isfinite(preds[1])))
    print("KERNEL_OK")
</pallas_src>

<mosaic_0001>
module attributes {stable_mosaic.version = 11 : i64} {
  func.func @_conv3x3_kernel(%arg0: i32, %arg1: i32, %arg2: memref<1x34x34x3xf32, #tpu.memory_space<vmem>>, %arg3: memref<3x3x3x64xbf16, #tpu.memory_space<vmem>>, %arg4: memref<1x32x32x64xf32, #tpu.memory_space<vmem>>, %arg5: memref<1x64xf32, #tpu.memory_space<vmem>>, %arg6: memref<1x64xf32, #tpu.memory_space<vmem>>) attributes {dimension_semantics = [#tpu.dimension_semantics<parallel>, #tpu.dimension_semantics<arbitrary>], iteration_bounds = array<i64: 1, 2>, scalar_prefetch = 0 : i64, scratch_operands = 0 : i64, tpu.core_type = #tpu.core_type<tc>, window_params = [{transform_indices = @transform_0, window_bounds = array<i64: 1, 34, 34, 3>}, {transform_indices = @transform_1, window_bounds = array<i64: 3, 3, 3, 64>}, {transform_indices = @transform_2, window_bounds = array<i64: 1, 32, 32, 64>}, {transform_indices = @transform_3, window_bounds = array<i64: 1, 64>}, {transform_indices = @transform_4, window_bounds = array<i64: 1, 64>}]} {
    %cst = arith.constant 0.000000e+00 : f32
    %0 = vector.broadcast %cst : f32 to vector<1024x64xf32>
    %c0 = arith.constant 0 : index
    %c0_0 = arith.constant 0 : index
    %c0_1 = arith.constant 0 : index
    %c0_2 = arith.constant 0 : index
    %1 = vector.load %arg2[%c0, %c0_0, %c0_1, %c0_2] : memref<1x34x34x3xf32, #tpu.memory_space<vmem>>, vector<1x32x32x3xf32>
    %2 = vector.shape_cast %1 : vector<1x32x32x3xf32> to vector<32x32x3xf32>
    %3 = vector.shape_cast %2 : vector<32x32x3xf32> to vector<1024x3xf32>
    %4 = arith.truncf %3 : vector<1024x3xf32> to vector<1024x3xbf16>
    %c0_3 = arith.constant 0 : index
    %c0_4 = arith.constant 0 : index
    %c0_5 = arith.constant 0 : index
    %c0_6 = arith.constant 0 : index
    %5 = vector.load %arg3[%c0_3, %c0_4, %c0_5, %c0_6] : memref<3x3x3x64xbf16, #tpu.memory_space<vmem>>, vector<1x1x3x64xbf16>
    %6 = vector.shape_cast %5 : vector<1x1x3x64xbf16> to vector<3x64xbf16>
    %cst_7 = arith.constant dense<0.000000e+00> : vector<1024x64xf32>
    %7 = tpu.matmul %4, %6, %cst_7 {dimension_numbers = #tpu.dot_dimension_numbers<[1], [0], [0], [1], [0, 0, 1, 1], [], []>} : vector<1024x3xbf16>, vector<3x64xbf16>, vector<1024x64xf32> -> vector<1024x64xf32>
    %8 = arith.addf %0, %7 : vector<1024x64xf32>
    %c0_8 = arith.constant 0 : index
    %c0_9 = arith.constant 0 : index
    %c1 = arith.constant 1 : index
    %c0_10 = arith.constant 0 : index
    %9 = vector.load %arg2[%c0_8, %c0_9, %c1, %c0_10] : memref<1x34x34x3xf32, #tpu.memory_space<vmem>>, vector<1x32x32x3xf32>
    %10 = vector.shape_cast %9 : vector<1x32x32x3xf32> to vector<32x32x3xf32>
    %11 = vector.shape_cast %10 : vector<32x32x3xf32> to vector<1024x3xf32>
    %12 = arith.truncf %11 : vector<1024x3xf32> to vector<1024x3xbf16>
    %c0_11 = arith.constant 0 : index
    %c1_12 = arith.constant 1 : index
    %c0_13 = arith.constant 0 : index
    %c0_14 = arith.constant 0 : index
    %13 = vector.load %arg3[%c0_11, %c1_12, %c0_13, %c0_14] : memref<3x3x3x64xbf16, #tpu.memory_space<vmem>>, vector<1x1x3x64xbf16>
    %14 = vector.shape_cast %13 : vector<1x1x3x64xbf16> to vector<3x64xbf16>
    %cst_15 = arith.constant dense<0.000000e+00> : vector<1024x64xf32>
    %15 = tpu.matmul %12, %14, %cst_15 {dimension_numbers = #tpu.dot_dimension_numbers<[1], [0], [0], [1], [0, 0, 1, 1], [], []>} : vector<1024x3xbf16>, vector<3x64xbf16>, vector<1024x64xf32> -> vector<1024x64xf32>
    %16 = arith.addf %8, %15 : vector<1024x64xf32>
    %c0_16 = arith.constant 0 : index
    %c0_17 = arith.constant 0 : index
    %c2 = arith.constant 2 : index
    %c0_18 = arith.constant 0 : index
    %17 = vector.load %arg2[%c0_16, %c0_17, %c2, %c0_18] : memref<1x34x34x3xf32, #tpu.memory_space<vmem>>, vector<1x32x32x3xf32>
    %18 = vector.shape_cast %17 : vector<1x32x32x3xf32> to vector<32x32x3xf32>
    %19 = vector.shape_cast %18 : vector<32x32x3xf32> to vector<1024x3xf32>
    %20 = arith.truncf %19 : vector<1024x3xf32> to vector<1024x3xbf16>
    %c0_19 = arith.constant 0 : index
    %c2_20 = arith.constant 2 : index
    %c0_21 = arith.constant 0 : index
    %c0_22 = arith.constant 0 : index
    %21 = vector.load %arg3[%c0_19, %c2_20, %c0_21, %c0_22] : memref<3x3x3x64xbf16, #tpu.memory_space<vmem>>, vector<1x1x3x64xbf16>
    %22 = vector.shape_cast %21 : vector<1x1x3x64xbf16> to vector<3x64xbf16>
    %cst_23 = arith.constant dense<0.000000e+00> : vector<1024x64xf32>
    %23 = tpu.matmul %20, %22, %cst_23 {dimension_numbers = #tpu.dot_dimension_numbers<[1], [0], [0], [1], [0, 0, 1, 1], [], []>} : vector<1024x3xbf16>, vector<3x64xbf16>, vector<1024x64xf32> -> vector<1024x64xf32>
    %24 = arith.addf %16, %23 : vector<1024x64xf32>
    %c0_24 = arith.constant 0 : index
    %c1_25 = arith.constant 1 : index
    %c0_26 = arith.constant 0 : index
    %c0_27 = arith.constant 0 : index
    %25 = vector.load %arg2[%c0_24, %c1_25, %c0_26, %c0_27] : memref<1x34x34x3xf32, #tpu.memory_space<vmem>>, vector<1x32x32x3xf32>
    %26 = vector.shape_cast %25 : vector<1x32x32x3xf32> to vector<32x32x3xf32>
    %27 = vector.shape_cast %26 : vector<32x32x3xf32> to vector<1024x3xf32>
    %28 = arith.truncf %27 : vector<1024x3xf32> to vector<1024x3xbf16>
    %c1_28 = arith.constant 1 : index
    %c0_29 = arith.constant 0 : index
    %c0_30 = arith.constant 0 : index
    %c0_31 = arith.constant 0 : index
    %29 = vector.load %arg3[%c1_28, %c0_29, %c0_30, %c0_31] : memref<3x3x3x64xbf16, #tpu.memory_space<vmem>>, vector<1x1x3x64xbf16>
    %30 = vector.shape_cast %29 : vector<1x1x3x64xbf16> to vector<3x64xbf16>
    %cst_32 = arith.constant dense<0.000000e+00> : vector<1024x64xf32>
    %31 = tpu.matmul %28, %30, %cst_32 {dimension_numbers = #tpu.dot_dimension_numbers<[1], [0], [0], [1], [0, 0, 1, 1], [], []>} : vector<1024x3xbf16>, vector<3x64xbf16>, vector<1024x64xf32> -> vector<1024x64xf32>
    %32 = arith.addf %24, %31 : vector<1024x64xf32>
    %c0_33 = arith.constant 0 : index
    %c1_34 = arith.constant 1 : index
    %c1_35 = arith.constant 1 : index
    %c0_36 = arith.constant 0 : index
    %33 = vector.load %arg2[%c0_33, %c1_34, %c1_35, %c0_36] : memref<1x34x34x3xf32, #tpu.memory_space<vmem>>, vector<1x32x32x3xf32>
    %34 = vector.shape_cast %33 : vector<1x32x32x3xf32> to vector<32x32x3xf32>
    %35 = vector.shape_cast %34 : vector<32x32x3xf32> to vector<1024x3xf32>
    %36 = arith.truncf %35 : vector<1024x3xf32> to vector<1024x3xbf16>
    %c1_37 = arith.constant 1 : index
    %c1_38 = arith.constant 1 : index
    %c0_39 = arith.constant 0 : index
    %c0_40 = arith.constant 0 : index
    %37 = vector.load %arg3[%c1_37, %c1_38, %c0_39, %c0_40] : memref<3x3x3x64xbf16, #tpu.memory_space<vmem>>, vector<1x1x3x64xbf16>
    %38 = vector.shape_cast %37 : vector<1x1x3x64xbf16> to vector<3x64xbf16>
    %cst_41 = arith.constant dense<0.000000e+00> : vector<1024x64xf32>
    %39 = tpu.matmul %36, %38, %cst_41 {dimension_numbers = #tpu.dot_dimension_numbers<[1], [0], [0], [1], [0, 0, 1, 1], [], []>} : vector<1024x3xbf16>, vector<3x64xbf16>, vector<1024x64xf32> -> vector<1024x64xf32>
    %40 = arith.addf %32, %39 : vector<1024x64xf32>
    %c0_42 = arith.constant 0 : index
    %c1_43 = arith.constant 1 : index
    %c2_44 = arith.constant 2 : index
    %c0_45 = arith.constant 0 : index
    %41 = vector.load %arg2[%c0_42, %c1_43, %c2_44, %c0_45] : memref<1x34x34x3xf32, #tpu.memory_space<vmem>>, vector<1x32x32x3xf32>
    %42 = vector.shape_cast %41 : vector<1x32x32x3xf32> to vector<32x32x3xf32>
    %43 = vector.shape_cast %42 : vector<32x32x3xf32> to vector<1024x3xf32>
    %44 = arith.truncf %43 : vector<1024x3xf32> to vector<1024x3xbf16>
    %c1_46 = arith.constant 1 : index
    %c2_47 = arith.constant 2 : index
    %c0_48 = arith.constant 0 : index
    %c0_49 = arith.constant 0 : index
    %45 = vector.load %arg3[%c1_46, %c2_47, %c0_48, %c0_49] : memref<3x3x3x64xbf16, #tpu.memory_space<vmem>>, vector<1x1x3x64xbf16>
    %46 = vector.shape_cast %45 : vector<1x1x3x64xbf16> to vector<3x64xbf16>
    %cst_50 = arith.constant dense<0.000000e+00> : vector<1024x64xf32>
    %47 = tpu.matmul %44, %46, %cst_50 {dimension_numbers = #tpu.dot_dimension_numbers<[1], [0], [0], [1], [0, 0, 1, 1], [], []>} : vector<1024x3xbf16>, vector<3x64xbf16>, vector<1024x64xf32> -> vector<1024x64xf32>
    %48 = arith.addf %40, %47 : vector<1024x64xf32>
    %c0_51 = arith.constant 0 : index
    %c2_52 = arith.constant 2 : index
    %c0_53 = arith.constant 0 : index
    %c0_54 = arith.constant 0 : index
    %49 = vector.load %arg2[%c0_51, %c2_52, %c0_53, %c0_54] : memref<1x34x34x3xf32, #tpu.memory_space<vmem>>, vector<1x32x32x3xf32>
    %50 = vector.shape_cast %49 : vector<1x32x32x3xf32> to vector<32x32x3xf32>
    %51 = vector.shape_cast %50 : vector<32x32x3xf32> to vector<1024x3xf32>
    %52 = arith.truncf %51 : vector<1024x3xf32> to vector<1024x3xbf16>
    %c2_55 = arith.constant 2 : index
    %c0_56 = arith.constant 0 : index
    %c0_57 = arith.constant 0 : index
    %c0_58 = arith.constant 0 : index
    %53 = vector.load %arg3[%c2_55, %c0_56, %c0_57, %c0_58] : memref<3x3x3x64xbf16, #tpu.memory_space<vmem>>, vector<1x1x3x64xbf16>
    %54 = vector.shape_cast %53 : vector<1x1x3x64xbf16> to vector<3x64xbf16>
    %cst_59 = arith.constant dense<0.000000e+00> : vector<1024x64xf32>
    %55 = tpu.matmul %52, %54, %cst_59 {dimension_numbers = #tpu.dot_dimension_numbers<[1], [0], [0], [1], [0, 0, 1, 1], [], []>} : vector<1024x3xbf16>, vector<3x64xbf16>, vector<1024x64xf32> -> vector<1024x64xf32>
    %56 = arith.addf %48, %55 : vector<1024x64xf32>
    %c0_60 = arith.constant 0 : index
    %c2_61 = arith.constant 2 : index
    %c1_62 = arith.constant 1 : index
    %c0_63 = arith.constant 0 : index
    %57 = vector.load %arg2[%c0_60, %c2_61, %c1_62, %c0_63] : memref<1x34x34x3xf32, #tpu.memory_space<vmem>>, vector<1x32x32x3xf32>
    %58 = vector.shape_cast %57 : vector<1x32x32x3xf32> to vector<32x32x3xf32>
    %59 = vector.shape_cast %58 : vector<32x32x3xf32> to vector<1024x3xf32>
    %60 = arith.truncf %59 : vector<1024x3xf32> to vector<1024x3xbf16>
    %c2_64 = arith.constant 2 : index
    %c1_65 = arith.constant 1 : index
    %c0_66 = arith.constant 0 : index
    %c0_67 = arith.constant 0 : index
    %61 = vector.load %arg3[%c2_64, %c1_65, %c0_66, %c0_67] : memref<3x3x3x64xbf16, #tpu.memory_space<vmem>>, vector<1x1x3x64xbf16>
    %62 = vector.shape_cast %61 : vector<1x1x3x64xbf16> to vector<3x64xbf16>
    %cst_68 = arith.constant dense<0.000000e+00> : vector<1024x64xf32>
    %63 = tpu.matmul %60, %62, %cst_68 {dimension_numbers = #tpu.dot_dimension_numbers<[1], [0], [0], [1], [0, 0, 1, 1], [], []>} : vector<1024x3xbf16>, vector<3x64xbf16>, vector<1024x64xf32> -> vector<1024x64xf32>
    %64 = arith.addf %56, %63 : vector<1024x64xf32>
    %c0_69 = arith.constant 0 : index
    %c2_70 = arith.constant 2 : index
    %c2_71 = arith.constant 2 : index
    %c0_72 = arith.constant 0 : index
    %65 = vector.load %arg2[%c0_69, %c2_70, %c2_71, %c0_72] : memref<1x34x34x3xf32, #tpu.memory_space<vmem>>, vector<1x32x32x3xf32>
    %66 = vector.shape_cast %65 : vector<1x32x32x3xf32> to vector<32x32x3xf32>
    %67 = vector.shape_cast %66 : vector<32x32x3xf32> to vector<1024x3xf32>
    %68 = arith.truncf %67 : vector<1024x3xf32> to vector<1024x3xbf16>
    %c2_73 = arith.constant 2 : index
    %c2_74 = arith.constant 2 : index
    %c0_75 = arith.constant 0 : index
    %c0_76 = arith.constant 0 : index
    %69 = vector.load %arg3[%c2_73, %c2_74, %c0_75, %c0_76] : memref<3x3x3x64xbf16, #tpu.memory_space<vmem>>, vector<1x1x3x64xbf16>
    %70 = vector.shape_cast %69 : vector<1x1x3x64xbf16> to vector<3x64xbf16>
    %cst_77 = arith.constant dense<0.000000e+00> : vector<1024x64xf32>
    %71 = tpu.matmul %68, %70, %cst_77 {dimension_numbers = #tpu.dot_dimension_numbers<[1], [0], [0], [1], [0, 0, 1, 1], [], []>} : vector<1024x3xbf16>, vector<3x64xbf16>, vector<1024x64xf32> -> vector<1024x64xf32>
    %72 = arith.addf %64, %71 : vector<1024x64xf32>
    %73 = vector.shape_cast %72 : vector<1024x64xf32> to vector<32x32x64xf32>
    %c0_78 = arith.constant 0 : index
    %c0_79 = arith.constant 0 : index
    %c0_80 = arith.constant 0 : index
    %c0_81 = arith.constant 0 : index
    %74 = vector.load %arg4[%c0_78, %c0_79, %c0_80, %c0_81] : memref<1x32x32x64xf32, #tpu.memory_space<vmem>>, vector<1x32x32x64xf32>
    %75 = vector.shape_cast %74 : vector<1x32x32x64xf32> to vector<32x32x64xf32>
    %76 = vector.shape_cast %73 : vector<32x32x64xf32> to vector<1x32x32x64xf32>
    tpu.vector_store %arg4[%c0_78, %c0_79, %c0_80, %c0_81], %76 {strides = array<i32>} : memref<1x32x32x64xf32, #tpu.memory_space<vmem>>, vector<1x32x32x64xf32>,
    %c0_i32 = arith.constant 0 : i32
    %77 = arith.cmpi eq, %arg1, %c0_i32 : i32
    %78 = arith.extui %77 : i1 to i32
    %c0_i32_82 = arith.constant 0 : i32
    %79 = arith.cmpi ne, %78, %c0_i32_82 : i32
    scf.if %79 {
      %cst_93 = arith.constant 0.000000e+00 : f32
      %91 = vector.broadcast %cst_93 : f32 to vector<1x64xf32>
      %c0_94 = arith.constant 0 : index
      %c0_95 = arith.constant 0 : index
      %92 = vector.load %arg5[%c0_94, %c0_95] : memref<1x64xf32, #tpu.memory_space<vmem>>, vector<1x64xf32>
      tpu.vector_store %arg5[%c0_94, %c0_95], %91 {strides = array<i32>} : memref<1x64xf32, #tpu.memory_space<vmem>>, vector<1x64xf32>,
      %cst_96 = arith.constant 0.000000e+00 : f32
      %93 = vector.broadcast %cst_96 : f32 to vector<1x64xf32>
      %c0_97 = arith.constant 0 : index
      %c0_98 = arith.constant 0 : index
      %94 = vector.load %arg6[%c0_97, %c0_98] : memref<1x64xf32, #tpu.memory_space<vmem>>, vector<1x64xf32>
      tpu.vector_store %arg6[%c0_97, %c0_98], %93 {strides = array<i32>} : memref<1x64xf32, #tpu.memory_space<vmem>>, vector<1x64xf32>,
    } else {
    }
    %c0_83 = arith.constant 0 : index
    %c0_84 = arith.constant 0 : index
    %80 = vector.load %arg5[%c0_83, %c0_84] : memref<1x64xf32, #tpu.memory_space<vmem>>, vector<1x64xf32>
    %cst_85 = arith.constant dense<0.000000e+00> : vector<64xf32>
    %81 = vector.multi_reduction <add>, %72, %cst_85 [0] : vector<1024x64xf32> to vector<64xf32>
    %82 = vector.shape_cast %81 : vector<64xf32> to vector<1x64xf32>
    %83 = arith.addf %80, %82 : vector<1x64xf32>
    %c0_86 = arith.constant 0 : index
    %c0_87 = arith.constant 0 : index
    %84 = vector.load %arg5[%c0_86, %c0_87] : memref<1x64xf32, #tpu.memory_space<vmem>>, vector<1x64xf32>
    tpu.vector_store %arg5[%c0_86, %c0_87], %83 {strides = array<i32>} : memref<1x64xf32, #tpu.memory_space<vmem>>, vector<1x64xf32>,
    %c0_88 = arith.constant 0 : index
    %c0_89 = arith.constant 0 : index
    %85 = vector.load %arg6[%c0_88, %c0_89] : memref<1x64xf32, #tpu.memory_space<vmem>>, vector<1x64xf32>
    %86 = arith.mulf %72, %72 : vector<1024x64xf32>
    %cst_90 = arith.constant dense<0.000000e+00> : vector<64xf32>
    %87 = vector.multi_reduction <add>, %86, %cst_90 [0] : vector<1024x64xf32> to vector<64xf32>
    %88 = vector.shape_cast %87 : vector<64xf32> to vector<1x64xf32>
    %89 = arith.addf %85, %88 : vector<1x64xf32>
    %c0_91 = arith.constant 0 : index
    %c0_92 = arith.constant 0 : index
    %90 = vector.load %arg6[%c0_91, %c0_92] : memref<1x64xf32, #tpu.memory_space<vmem>>, vector<1x64xf32>
    tpu.vector_store %arg6[%c0_91, %c0_92], %89 {strides = array<i32>} : memref<1x64xf32, #tpu.memory_space<vmem>>, vector<1x64xf32>,
    return
  }
  func.func @transform_0(%arg0: i32, %arg1: i32) -> (i32, i32, i32, i32) {
    %c0_i32 = arith.constant 0 : i32
    %c0_i32_0 = arith.constant 0 : i32
    %c0_i32_1 = arith.constant 0 : i32
    %c0_i32_2 = arith.constant 0 : i32
    return %arg1, %c0_i32, %c0_i32_0, %c0_i32_1 : i32, i32, i32, i32
  }
  func.func @transform_1(%arg0: i32, %arg1: i32) -> (i32, i32, i32, i32) {
    %c0_i32 = arith.constant 0 : i32
    %c0_i32_0 = arith.constant 0 : i32
    %c0_i32_1 = arith.constant 0 : i32
    %c0_i32_2 = arith.constant 0 : i32
    return %c0_i32, %c0_i32_0, %c0_i32_1, %arg0 : i32, i32, i32, i32
  }
  func.func @transform_2(%arg0: i32, %arg1: i32) -> (i32, i32, i32, i32) {
    %c0_i32 = arith.constant 0 : i32
    %c0_i32_0 = arith.constant 0 : i32
    %c0_i32_1 = arith.constant 0 : i32
    return %arg1, %c0_i32, %c0_i32_0, %arg0 : i32, i32, i32, i32
  }
  func.func @transform_3(%arg0: i32, %arg1: i32) -> (i32, i32) {
    %c0_i32 = arith.constant 0 : i32
    %c0_i32_0 = arith.constant 0 : i32
    return %c0_i32, %arg0 : i32, i32
  }
  func.func @transform_4(%arg0: i32, %arg1: i32) -> (i32, i32) {
    %c0_i32 = arith.constant 0 : i32
    %c0_i32_0 = arith.constant 0 : i32
    return %c0_i32, %arg0 : i32, i32
  }
}

</mosaic_0001>

<llo_original>
// kernel: _conv3x3_jit.1
$region0: #{_conv3x3_jit.1}
  #allocation0 [shape = 'u32[]', space=smem, size = 0x4, offset = 0x4, fixed_abs, tag = 'smem constant byte address 0x4 - core index']
  #allocation1 [shape = 'u32[144,128]{1,0:T(1,128)}', space=vmem, size = 0x12000, scoped, tag = 'internal scratch']
  %s0 = inlined_call_operand.vmem [shape: f32[2,34,34,3], index: 0, kind: input, shape index: {}]
  %s1 = inlined_call_operand.vmem [shape: bf16[3,3,3,64], index: 1, kind: input, shape index: {}]
  %s2 = inlined_call_operand.hbm [shape: f32[2,32,32,64], index: 2, kind: output, shape index: {0}]
  %s3 = inlined_call_operand.hbm [shape: f32[1,64], index: 3, kind: output, shape index: {1}]
  %s4 = inlined_call_operand.hbm [shape: f32[1,64], index: 4, kind: output, shape index: {2}]
  %5 = xla_tuple %s2, %s3, %s4
  %s6 = sld [smem:[#allocation0]]
  $region61: #{_conv3x3_jit.1} parent=0
    _
  %s8 = ssub.s32 1, %s6
  %s9 = scalar_select 0, %s8, %s6
  $region1: #{_conv3x3_jit.1} parent=0
    #allocation2 [shape = 'u8[1048576]{0}', space=vmem, size = 0x100000, scoped, tag = 'output window, operand 0']
    #allocation3 [shape = 's32[2]{0}', space=sflag, size = 0x8, scoped, tag = 'scoped memory for _conv3x3_jit.1']
    #allocation4 [shape = 'u8[512]{0}', space=vmem, size = 0x400, scoped, tag = 'output window, operand 1, single buffered']
    #allocation5 [shape = 's32[1]{0}', space=sflag, size = 0x4, scoped, tag = 'scoped memory for _conv3x3_jit.1']
    #allocation6 [shape = 'u8[512]{0}', space=vmem, size = 0x400, scoped, tag = 'output window, operand 2, single buffered']
    %10 = vsyncpa [#allocation3], 0
    %s11 = scalar_lea.sflag [#allocation3], 1
    %12 = vsyncpa %s11, 0
    %13 = vsyncpa [#allocation5], 0
    loop: start=0, step=1, limit=4
    $region2: #{_conv3x3_jit.1} parent=1 // loop_pre_header
      _
    $region3: #{_conv3x3_jit.1} parent=1 // loop_header
      %s15 = sphi 0, %s19
      %p16 = scmp.ge.s32.totalorder %s15, 4
      %s22 = sphi 0, %s34
      %s23 = sphi 0, %s30
      %s24 = sphi 0, %s22
      %s25 = sphi 0, %s23
      %s26 = sphi 0, %s24
      %s27 = sphi 0, %s25
      %s37 = sphi 0, %s39
      %s40 = sphi 0, %s37
      %s41 = sphi 0, %s40
      %s57 = sphi 0, %s41
      %s63 = sphi 0, %s65
      %s66 = sphi 0, %s63
      %s67 = sphi 0, %s66
      %s83 = sphi 0, %s67
      %s91 = sphi 0, %s93
      %s94 = sphi 0, %s91
      %s95 = sphi 0, %s94
      %s111 = sphi 0, %s95
      %s117 = sphi 0, %s119
      %s120 = sphi 0, %s117
      %s121 = sphi 0, %s120
      %s137 = sphi 0, %s121
      %s143 = sphi 0, %s145
      %s146 = sphi 0, %s143
      %s147 = sphi 0, %s146
      %s163 = sphi 0, %s147
    $region4: #{_conv3x3_jit.1} parent=1 // loop_header_branch
      %18 = sbr.rel (%p16) target = $region8
    $region5: #{_conv3x3_jit.1} parent=1 // loop_body
      %s20 = ssub.s32 %s15, 1
      %s21 = ssub.s32 %s15, 2
      %s28 = sadd.s32 1, %s23
      %p29 = scmp.ge.s32.totalorder %s28, 2
      %s30 = scalar_select %p29, 0, %s28
      %s31 = sadd.s32 1, %s22
      %s32 = scalar_select %p29, %s31, %s22
      %p33 = scmp.ge.s32.totalorder %s32, 1
      %s34 = scalar_select %p33, 0, %s32
      %s35 = ssub.s32 %s23, %s30
      %p36 = scmp.eq.s32.totalorder %s35, 0
      %s38 = sadd.s32 %s37, 1
      %s39 = scalar_select %p36, %s37, %s38
      %p42 = pneg %p36
      %p43 = scmp.eq.s32.totalorder %s15, 1
      %p44 = por %p42, %p43
      %p45 = scmp.ne.s32.totalorder %s37, %s40
      %p46 = scmp.eq.s32.totalorder %s15, 0
      %p47 = por %p45, %p46
      %p48 = scmp.ne.s32.totalorder %s37, %s40
      %p49 = scmp.eq.s32.totalorder %s20, 1
      %p50 = por %p48, %p49
      %p51 = scmp.ne.s32.totalorder %s40, %s41
      %p52 = scmp.eq.s32.totalorder %s20, 0
      %p53 = por %p51, %p52
      %p54 = scmp.ne.s32.totalorder %s40, %s41
      %p55 = scmp.eq.s32.totalorder %s21, 1
      %p56 = por %p54, %p55
      %p58 = scmp.ne.s32.totalorder %s41, %s57
      %p59 = scmp.eq.s32.totalorder %s21, 0
      %p60 = por %p58, %p59
      %s61 = ssub.s32 %s22, %s34
      %p62 = scmp.eq.s32.totalorder %s61, 0
      %s64 = sadd.s32 %s63, 1
      %s65 = scalar_select %p62, %s63, %s64
      %p68 = pneg %p62
      %p69 = scmp.eq.s32.totalorder %s15, 1
      %p70 = por %p68, %p69
      %p71 = scmp.ne.s32.totalorder %s63, %s66
      %p72 = scmp.eq.s32.totalorder %s15, 0
      %p73 = por %p71, %p72
      %p74 = scmp.ne.s32.totalorder %s63, %s66
      %p75 = scmp.eq.s32.totalorder %s20, 1
      %p76 = por %p74, %p75
      %p77 = scmp.ne.s32.totalorder %s66, %s67
      %p78 = scmp.eq.s32.totalorder %s20, 0
      %p79 = por %p77, %p78
      %p80 = scmp.ne.s32.totalorder %s66, %s67
      %p81 = scmp.eq.s32.totalorder %s21, 1
      %p82 = por %p80, %p81
      %p84 = scmp.ne.s32.totalorder %s67, %s83
      %p85 = scmp.eq.s32.totalorder %s21, 0
      %p86 = por %p84, %p85
      %s87 = ssub.s32 %s23, %s30
      %s88 = ssub.s32 %s22, %s34
      %s89 = sor.u32 %s87, %s88
      %p90 = scmp.eq.s32.totalorder %s89, 0
      %s92 = sadd.s32 %s91, 1
      %s93 = scalar_select %p90, %s91, %s92
      %p96 = pneg %p90
      %p97 = scmp.eq.s32.totalorder %s15, 1
      %p98 = por %p96, %p97
      %p99 = scmp.ne.s32.totalorder %s91, %s94
      %p100 = scmp.eq.s32.totalorder %s15, 0
      %p101 = por %p99, %p100
      %p102 = scmp.ne.s32.totalorder %s91, %s94
      %p103 = scmp.eq.s32.totalorder %s20, 1
      %p104 = por %p102, %p103
      %p105 = scmp.ne.s32.totalorder %s94, %s95
      %p106 = scmp.eq.s32.totalorder %s20, 0
      %p107 = por %p105, %p106
      %p108 = scmp.ne.s32.totalorder %s94, %s95
      %p109 = scmp.eq.s32.totalorder %s21, 1
      %p110 = por %p108, %p109
      %p112 = scmp.ne.s32.totalorder %s95, %s111
      %p113 = scmp.eq.s32.totalorder %s21, 0
      %p114 = por %p112, %p113
      %s115 = ssub.s32 %s22, %s34
      %p116 = scmp.eq.s32.totalorder %s115, 0
      %s118 = sadd.s32 %s117, 1
      %s119 = scalar_select %p116, %s117, %s118
      %p122 = pneg %p116
      %p123 = scmp.eq.s32.totalorder %s15, 1
      %p124 = por %p122, %p123
      %p125 = scmp.ne.s32.totalorder %s117, %s120
      %p126 = scmp.eq.s32.totalorder %s15, 0
      %p127 = por %p125, %p126
      %p128 = scmp.ne.s32.totalorder %s117, %s120
      %p129 = scmp.eq.s32.totalorder %s20, 1
      %p130 = por %p128, %p129
      %p131 = scmp.ne.s32.totalorder %s120, %s121
      %p132 = scmp.eq.s32.totalorder %s20, 0
      %p133 = por %p131, %p132
      %p134 = scmp.ne.s32.totalorder %s120, %s121
      %p135 = scmp.eq.s32.totalorder %s21, 1
      %p136 = por %p134, %p135
      %p138 = scmp.ne.s32.totalorder %s121, %s137
      %p139 = scmp.eq.s32.totalorder %s21, 0
      %p140 = por %p138, %p139
      %s141 = ssub.s32 %s22, %s34
      %p142 = scmp.eq.s32.totalorder %s141, 0
      %s144 = sadd.s32 %s143, 1
      %s145 = scalar_select %p142, %s143, %s144
      %p148 = pneg %p142
      %p149 = scmp.eq.s32.totalorder %s15, 1
      %p150 = por %p148, %p149
      %p151 = scmp.ne.s32.totalorder %s143, %s146
      %p152 = scmp.eq.s32.totalorder %s15, 0
      %p153 = por %p151, %p152
      %p154 = scmp.ne.s32.totalorder %s143, %s146
      %p155 = scmp.eq.s32.totalorder %s20, 1
      %p156 = por %p154, %p155
      %p157 = scmp.ne.s32.totalorder %s146, %s147
      %p158 = scmp.eq.s32.totalorder %s20, 0
      %p159 = por %p157, %p158
      %p160 = scmp.ne.s32.totalorder %s146, %s147
      %p161 = scmp.eq.s32.totalorder %s21, 1
      %p162 = por %p160, %p161
      %p164 = scmp.ne.s32.totalorder %s147, %s163
      %p165 = scmp.eq.s32.totalorder %s21, 0
      %p166 = por %p164, %p165
      %p167 = scmp.le.s32.totalorder 1, %s15
      %p168 = scmp.lt.s32.totalorder %s15, 3
      %p169 = pnand %p167, %p168
      %p170 = pneg %p169
      // Predicated region
      $region9: #{_conv3x3_jit.1} parent=5 // pred_check
        _
      $region10: #{_conv3x3_jit.1} parent=5 // pred_check_branch
        %172 = sbr.rel (%p169) target = $region12
      $region11: #{_conv3x3_jit.1} parent=5 // pred_region
        %s173 = ssub.s32 %s15, 1
        // Predicated region
        $region13: #{_conv3x3_jit.1} parent=11 // pred_check
          %p174 = pneg %p79
        $region14: #{_conv3x3_jit.1} parent=11 // pred_check_branch
          %176 = sbr.rel (%p174) target = $region16
        $region15: #{_conv3x3_jit.1} parent=11 // pred_region
          %p177 = scmp.lt.s32.totalorder %s24, 0
          %s178 = scalar_select %p177, %s24, 0
          %s179 = smul.addr %s178, 2
          %s180 = scalar_lea.vmem %s1, %s179
        $region16: #{_conv3x3_jit.1} parent=11 // pred_fallthru
          _
      $region12: #{_conv3x3_jit.1} parent=5 // pred_fallthru
        _
      %p181 = scmp.lt.s32.totalorder %s15, 2
      // Predicated region
      $region17: #{_conv3x3_jit.1} parent=5 // pred_check
        %p182 = pneg %p181
      $region18: #{_conv3x3_jit.1} parent=5 // pred_check_branch
        %184 = sbr.rel (%p182) target = $region20
      $region19: #{_conv3x3_jit.1} parent=5 // pred_region
        // Predicated region
        $region21: #{_conv3x3_jit.1} parent=19 // pred_check
          %p185 = pneg %p47
        $region22: #{_conv3x3_jit.1} parent=19 // pred_check_branch
          %187 = sbr.rel (%p185) target = $region24
        $region23: #{_conv3x3_jit.1} parent=19 // pred_region
          %p188 = scmp.lt.s32.totalorder %s23, 1
          %s189 = scalar_select %p188, %s23, 1
          %s190 = smul.addr %s189, 170
          %s191 = smul.addr %s190, 8
          %s192 = scalar_lea.vmem %s0, %s191
        $region24: #{_conv3x3_jit.1} parent=19 // pred_fallthru
          _
      $region20: #{_conv3x3_jit.1} parent=5 // pred_fallthru
        _
      %p193 = scmp.le.s32.totalorder 1, %s15
      %p194 = scmp.lt.s32.totalorder %s15, 3
      %p195 = pnand %p193, %p194
      %p196 = pneg %p195
      // Predicated region
      $region25: #{_conv3x3_jit.1} parent=5 // pred_check
        _
      $region26: #{_conv3x3_jit.1} parent=5 // pred_check_branch
        %198 = sbr.rel (%p195) target = $region28
      $region27: #{_conv3x3_jit.1} parent=5 // pred_region
        %s199 = ssub.s32 %s15, 1
        %p200 = scmp.lt.s32.totalorder %s25, 1
        %s201 = scalar_select %p200, %s25, 1
        %s202 = smul.addr %s201, 170
        %s203 = smul.addr %s202, 8
        %s204 = scalar_lea.vmem %s0, %s203
        %p205 = pneg %p53
        %p206 = pneg %p50
        %p207 = scmp.lt.s32.totalorder %s24, 0
        %s208 = scalar_select %p207, %s24, 0
        %s209 = smul.addr %s208, 2
        %s210 = scalar_lea.vmem %s1, %s209
        %p211 = pneg %p79
        %p212 = pneg %p76
        %p213 = pneg %p107
        %p214 = pneg %p104
        %s215 = sand.u32 %s94, 1
        %s216 = scalar_lea.sflag [#allocation3], %s215
        %s217 = sand.u32 %s94, 1
        %s218 = smul.addr %s217, 1024
        %s219 = scalar_lea.vmem [#allocation2], %s218
        %p220 = pneg %p133
        %p221 = pneg %p130
        %p222 = pneg %p159
        %p223 = pneg %p156
        %p224 = scmp.lt.s32.totalorder %s25, 1
        %s225 = scalar_select %p224, %s25, 1
        %s226 = smul.addr %s225, 170
        %s227 = smul.addr %s226, 8
        %s228 = scalar_lea.vmem %s0, %s227
        %p229 = scmp.lt.s32.totalorder %s24, 0
        %s230 = scalar_select %p229, %s24, 0
        %s231 = smul.addr %s230, 2
        %s232 = scalar_lea.vmem %s1, %s231
        %v234 = vld [vmem:[%s228] sm:$0xff]
        %v235 = vld [vmem:[%s228 + $0x8] sm:$0xff]
        %v236 = vld [vmem:[%s228 + $0x10] sm:$0xff]
        %v237 = vld [vmem:[%s228 + $0x18] sm:$0xff]
        %v238 = vld [vmem:[%s228 + $0x28] sm:$0xff]
        %v239 = vld [vmem:[%s228 + $0x30] sm:$0xff]
        %v240 = vld [vmem:[%s228 + $0x38] sm:$0xff]
        %v241 = vld [vmem:[%s228 + $0x40] sm:$0xff]
        %v242 = vld [vmem:[%s228 + $0x50] sm:$0xff]
        %v243 = vld [vmem:[%s228 + $0x58] sm:$0xff]
        %v244 = vld [vmem:[%s228 + $0x60] sm:$0xff]
        %v245 = vld [vmem:[%s228 + $0x68] sm:$0xff]
        %v246 = vld [vmem:[%s228 + $0x78] sm:$0xff]
        %v247 = vld [vmem:[%s228 + $0x80] sm:$0xff]
        %v248 = vld [vmem:[%s228 + $0x88] sm:$0xff]
        %v249 = vld [vmem:[%s228 + $0x90] sm:$0xff]
        %v250 = vld [vmem:[%s228 + $0xa0] sm:$0xff]
        %v251 = vld [vmem:[%s228 + $0xa8] sm:$0xff]
        %v252 = vld [vmem:[%s228 + $0xb0] sm:$0xff]
        %v253 = vld [vmem:[%s228 + $0xb8] sm:$0xff]
        %v254 = vld [vmem:[%s228 + $0xc8] sm:$0xff]
        %v255 = vld [vmem:[%s228 + $0xd0] sm:$0xff]
        %v256 = vld [vmem:[%s228 + $0xd8] sm:$0xff]
        %v257 = vld [vmem:[%s228 + $0xe0] sm:$0xff]
        %v258 = vld [vmem:[%s228 + $0xf0] sm:$0xff]
        %v259 = vld [vmem:[%s228 + $0xf8] sm:$0xff]
        %v260 = vld [vmem:[%s228 + $0x100] sm:$0xff]
        %v261 = vld [vmem:[%s228 + $0x108] sm:$0xff]
        %v262 = vld [vmem:[%s228 + $0x118] sm:$0xff]
        %v263 = vld [vmem:[%s228 + $0x120] sm:$0xff]
        %v264 = vld [vmem:[%s228 + $0x128] sm:$0xff]
        %v265 = vld [vmem:[%s228 + $0x130] sm:$0xff]
        %v266 = vld [vmem:[%s228 + $0x140] sm:$0xff]
        %v267 = vld [vmem:[%s228 + $0x148] sm:$0xff]
        %v268 = vld [vmem:[%s228 + $0x150] sm:$0xff]
        %v269 = vld [vmem:[%s228 + $0x158] sm:$0xff]
        %v270 = vld [vmem:[%s228 + $0x168] sm:$0xff]
        %v271 = vld [vmem:[%s228 + $0x170] sm:$0xff]
        %v272 = vld [vmem:[%s228 + $0x178] sm:$0xff]
        %v273 = vld [vmem:[%s228 + $0x180] sm:$0xff]
        %v274 = vld [vmem:[%s228 + $0x190] sm:$0xff]
        %v275 = vld [vmem:[%s228 + $0x198] sm:$0xff]
        %v276 = vld [vmem:[%s228 + $0x1a0] sm:$0xff]
        %v277 = vld [vmem:[%s228 + $0x1a8] sm:$0xff]
        %v278 = vld [vmem:[%s228 + $0x1b8] sm:$0xff]
        %v279 = vld [vmem:[%s228 + $0x1c0] sm:$0xff]
        %v280 = vld [vmem:[%s228 + $0x1c8] sm:$0xff]
        %v281 = vld [vmem:[%s228 + $0x1d0] sm:$0xff]
        %v282 = vld [vmem:[%s228 + $0x1e0] sm:$0xff]
        %v283 = vld [vmem:[%s228 + $0x1e8] sm:$0xff]
        %v284 = vld [vmem:[%s228 + $0x1f0] sm:$0xff]
        %v285 = vld [vmem:[%s228 + $0x1f8] sm:$0xff]
        %v286 = vld [vmem:[%s228 + $0x208] sm:$0xff]
        %v287 = vld [vmem:[%s228 + $0x210] sm:$0xff]
        %v288 = vld [vmem:[%s228 + $0x218] sm:$0xff]
        %v289 = vld [vmem:[%s228 + $0x220] sm:$0xff]
        %v290 = vld [vmem:[%s228 + $0x230] sm:$0xff]
        %v291 = vld [vmem:[%s228 + $0x238] sm:$0xff]
        %v292 = vld [vmem:[%s228 + $0x240] sm:$0xff]
        %v293 = vld [vmem:[%s228 + $0x248] sm:$0xff]
        %v294 = vld [vmem:[%s228 + $0x258] sm:$0xff]
        %v295 = vld [vmem:[%s228 + $0x260] sm:$0xff]
        %v296 = vld [vmem:[%s228 + $0x268] sm:$0xff]
        %v297 = vld [vmem:[%s228 + $0x270] sm:$0xff]
        %v298 = vld [vmem:[%s228 + $0x280] sm:$0xff]
        %v299 = vld [vmem:[%s228 + $0x288] sm:$0xff]
        %v300 = vld [vmem:[%s228 + $0x290] sm:$0xff]
        %v301 = vld [vmem:[%s228 + $0x298] sm:$0xff]
        %v302 = vld [vmem:[%s228 + $0x2a8] sm:$0xff]
        %v303 = vld [vmem:[%s228 + $0x2b0] sm:$0xff]
        %v304 = vld [vmem:[%s228 + $0x2b8] sm:$0xff]
        %v305 = vld [vmem:[%s228 + $0x2c0] sm:$0xff]
        %v306 = vld [vmem:[%s228 + $0x2d0] sm:$0xff]
        %v307 = vld [vmem:[%s228 + $0x2d8] sm:$0xff]
        %v308 = vld [vmem:[%s228 + $0x2e0] sm:$0xff]
        %v309 = vld [vmem:[%s228 + $0x2e8] sm:$0xff]
        %v310 = vld [vmem:[%s228 + $0x2f8] sm:$0xff]
        %v311 = vld [vmem:[%s228 + $0x300] sm:$0xff]
        %v312 = vld [vmem:[%s228 + $0x308] sm:$0xff]
        %v313 = vld [vmem:[%s228 + $0x310] sm:$0xff]
        %v314 = vld [vmem:[%s228 + $0x320] sm:$0xff]
        %v315 = vld [vmem:[%s228 + $0x328] sm:$0xff]
        %v316 = vld [vmem:[%s228 + $0x330] sm:$0xff]
        %v317 = vld [vmem:[%s228 + $0x338] sm:$0xff]
        %v318 = vld [vmem:[%s228 + $0x348] sm:$0xff]
        %v319 = vld [vmem:[%s228 + $0x350] sm:$0xff]
        %v320 = vld [vmem:[%s228 + $0x358] sm:$0xff]
        %v321 = vld [vmem:[%s228 + $0x360] sm:$0xff]
        %v322 = vld [vmem:[%s228 + $0x370] sm:$0xff]
        %v323 = vld [vmem:[%s228 + $0x378] sm:$0xff]
        %v324 = vld [vmem:[%s228 + $0x380] sm:$0xff]
        %v325 = vld [vmem:[%s228 + $0x388] sm:$0xff]
        %v326 = vld [vmem:[%s228 + $0x398] sm:$0xff]
        %v327 = vld [vmem:[%s228 + $0x3a0] sm:$0xff]
        %v328 = vld [vmem:[%s228 + $0x3a8] sm:$0xff]
        %v329 = vld [vmem:[%s228 + $0x3b0] sm:$0xff]
        %v330 = vld [vmem:[%s228 + $0x3c0] sm:$0xff]
        %v331 = vld [vmem:[%s228 + $0x3c8] sm:$0xff]
        %v332 = vld [vmem:[%s228 + $0x3d0] sm:$0xff]
        %v333 = vld [vmem:[%s228 + $0x3d8] sm:$0xff]
        %v334 = vld [vmem:[%s228 + $0x3e8] sm:$0xff]
        %v335 = vld [vmem:[%s228 + $0x3f0] sm:$0xff]
        %v336 = vld [vmem:[%s228 + $0x3f8] sm:$0xff]
        %v337 = vld [vmem:[%s228 + $0x400] sm:$0xff]
        %v338 = vld [vmem:[%s228 + $0x410] sm:$0xff]
        %v339 = vld [vmem:[%s228 + $0x418] sm:$0xff]
        %v340 = vld [vmem:[%s228 + $0x420] sm:$0xff]
        %v341 = vld [vmem:[%s228 + $0x428] sm:$0xff]
        %v342 = vld [vmem:[%s228 + $0x438] sm:$0xff]
        %v343 = vld [vmem:[%s228 + $0x440] sm:$0xff]
        %v344 = vld [vmem:[%s228 + $0x448] sm:$0xff]
        %v345 = vld [vmem:[%s228 + $0x450] sm:$0xff]
        %v346 = vld [vmem:[%s228 + $0x460] sm:$0xff]
        %v347 = vld [vmem:[%s228 + $0x468] sm:$0xff]
        %v348 = vld [vmem:[%s228 + $0x470] sm:$0xff]
        %v349 = vld [vmem:[%s228 + $0x478] sm:$0xff]
        %v350 = vld [vmem:[%s228 + $0x488] sm:$0xff]
        %v351 = vld [vmem:[%s228 + $0x490] sm:$0xff]
        %v352 = vld [vmem:[%s228 + $0x498] sm:$0xff]
        %v353 = vld [vmem:[%s228 + $0x4a0] sm:$0xff]
        %v354 = vld [vmem:[%s228 + $0x4b0] sm:$0xff]
        %v355 = vld [vmem:[%s228 + $0x4b8] sm:$0xff]
        %v356 = vld [vmem:[%s228 + $0x4c0] sm:$0xff]
        %v357 = vld [vmem:[%s228 + $0x4c8] sm:$0xff]
        %v358 = vld [vmem:[%s228 + $0x4d8] sm:$0xff]
        %v359 = vld [vmem:[%s228 + $0x4e0] sm:$0xff]
        %v360 = vld [vmem:[%s228 + $0x4e8] sm:$0xff]
        %v361 = vld [vmem:[%s228 + $0x4f0] sm:$0xff]
        %v362 = vpack.c.bf16 %v235, %v234
        %v363 = vpack.c.bf16 %v237, %v236
        %v364 = vpack.c.bf16 %v239, %v238
        %v365 = vpack.c.bf16 %v241, %v240
        %v366 = vpack.c.bf16 %v243, %v242
        %v367 = vpack.c.bf16 %v245, %v244
        %v368 = vpack.c.bf16 %v247, %v246
        %v369 = vpack.c.bf16 %v249, %v248
        %v370 = vpack.c.bf16 %v251, %v250
        %v371 = vpack.c.bf16 %v253, %v252
        %v372 = vpack.c.bf16 %v255, %v254
        %v373 = vpack.c.bf16 %v257, %v256
        %v374 = vpack.c.bf16 %v259, %v258
        %v375 = vpack.c.bf16 %v261, %v260
        %v376 = vpack.c.bf16 %v263, %v262
        %v377 = vpack.c.bf16 %v265, %v264
        %v378 = vpack.c.bf16 %v267, %v266
        %v379 = vpack.c.bf16 %v269, %v268
        %v380 = vpack.c.bf16 %v271, %v270
        %v381 = vpack.c.bf16 %v273, %v272
        %v382 = vpack.c.bf16 %v275, %v274
        %v383 = vpack.c.bf16 %v277, %v276
        %v384 = vpack.c.bf16 %v279, %v278
        %v385 = vpack.c.bf16 %v281, %v280
        %v386 = vpack.c.bf16 %v283, %v282
        %v387 = vpack.c.bf16 %v285, %v284
        %v388 = vpack.c.bf16 %v287, %v286
        %v389 = vpack.c.bf16 %v289, %v288
        %v390 = vpack.c.bf16 %v291, %v290
        %v391 = vpack.c.bf16 %v293, %v292
        %v392 = vpack.c.bf16 %v295, %v294
        %v393 = vpack.c.bf16 %v297, %v296
        %v394 = vpack.c.bf16 %v299, %v298
        %v395 = vpack.c.bf16 %v301, %v300
        %v396 = vpack.c.bf16 %v303, %v302
        %v397 = vpack.c.bf16 %v305, %v304
        %v398 = vpack.c.bf16 %v307, %v306
        %v399 = vpack.c.bf16 %v309, %v308
        %v400 = vpack.c.bf16 %v311, %v310
        %v401 = vpack.c.bf16 %v313, %v312
        %v402 = vpack.c.bf16 %v315, %v314
        %v403 = vpack.c.bf16 %v317, %v316
        %v404 = vpack.c.bf16 %v319, %v318
        %v405 = vpack.c.bf16 %v321, %v320
        %v406 = vpack.c.bf16 %v323, %v322
        %v407 = vpack.c.bf16 %v325, %v324
        %v408 = vpack.c.bf16 %v327, %v326
        %v409 = vpack.c.bf16 %v329, %v328
        %v410 = vpack.c.bf16 %v331, %v330
        %v411 = vpack.c.bf16 %v333, %v332
        %v412 = vpack.c.bf16 %v335, %v334
        %v413 = vpack.c.bf16 %v337, %v336
        %v414 = vpack.c.bf16 %v339, %v338
        %v415 = vpack.c.bf16 %v341, %v340
        %v416 = vpack.c.bf16 %v343, %v342
        %v417 = vpack.c.bf16 %v345, %v344
        %v418 = vpack.c.bf16 %v347, %v346
        %v419 = vpack.c.bf16 %v349, %v348
        %v420 = vpack.c.bf16 %v351, %v350
        %v421 = vpack.c.bf16 %v353, %v352
        %v422 = vpack.c.bf16 %v355, %v354
        %v423 = vpack.c.bf16 %v357, %v356
        %v424 = vpack.c.bf16 %v359, %v358
        %v425 = vpack.c.bf16 %v361, %v360
        %v426 = vld [vmem:[%s232] sm:$0x3]
        %v427 = vld [vmem:[%s228 + $0x1] sm:$0xff]
        %v428 = vld [vmem:[%s228 + $0x9] sm:$0xff]
        %v429 = vld [vmem:[%s228 + $0x11] sm:$0xff]
        %v430 = vld [vmem:[%s228 + $0x19] sm:$0xff]
        %v431 = vld [vmem:[%s228 + $0x29] sm:$0xff]
        %v432 = vld [vmem:[%s228 + $0x31] sm:$0xff]
        %v433 = vld [vmem:[%s228 + $0x39] sm:$0xff]
        %v434 = vld [vmem:[%s228 + $0x41] sm:$0xff]
        %v435 = vld [vmem:[%s228 + $0x51] sm:$0xff]
        %v436 = vld [vmem:[%s228 + $0x59] sm:$0xff]
        %v437 = vld [vmem:[%s228 + $0x61] sm:$0xff]
        %v438 = vld [vmem:[%s228 + $0x69] sm:$0xff]
        %v439 = vld [vmem:[%s228 + $0x79] sm:$0xff]
        %v440 = vld [vmem:[%s228 + $0x81] sm:$0xff]
        %v441 = vld [vmem:[%s228 + $0x89] sm:$0xff]
        %v442 = vld [vmem:[%s228 + $0x91] sm:$0xff]
        %v443 = vld [vmem:[%s228 + $0xa1] sm:$0xff]
        %v444 = vld [vmem:[%s228 + $0xa9] sm:$0xff]
        %v445 = vld [vmem:[%s228 + $0xb1] sm:$0xff]
        %v446 = vld [vmem:[%s228 + $0xb9] sm:$0xff]
        %v447 = vld [vmem:[%s228 + $0xc9] sm:$0xff]
        %v448 = vld [vmem:[%s228 + $0xd1] sm:$0xff]
        %v449 = vld [vmem:[%s228 + $0xd9] sm:$0xff]
        %v450 = vld [vmem:[%s228 + $0xe1] sm:$0xff]
        %v451 = vld [vmem:[%s228 + $0xf1] sm:$0xff]
        %v452 = vld [vmem:[%s228 + $0xf9] sm:$0xff]
        %v453 = vld [vmem:[%s228 + $0x101] sm:$0xff]
        %v454 = vld [vmem:[%s228 + $0x109] sm:$0xff]
        %v455 = vld [vmem:[%s228 + $0x119] sm:$0xff]
        %v456 = vld [vmem:[%s228 + $0x121] sm:$0xff]
        %v457 = vld [vmem:[%s228 + $0x129] sm:$0xff]
        %v458 = vld [vmem:[%s228 + $0x131] sm:$0xff]
        %v459 = vld [vmem:[%s228 + $0x141] sm:$0xff]
        %v460 = vld [vmem:[%s228 + $0x149] sm:$0xff]
        %v461 = vld [vmem:[%s228 + $0x151] sm:$0xff]
        %v462 = vld [vmem:[%s228 + $0x159] sm:$0xff]
        %v463 = vld [vmem:[%s228 + $0x169] sm:$0xff]
        %v464 = vld [vmem:[%s228 + $0x171] sm:$0xff]
        %v465 = vld [vmem:[%s228 + $0x179] sm:$0xff]
        %v466 = vld [vmem:[%s228 + $0x181] sm:$0xff]
        %v467 = vld [vmem:[%s228 + $0x191] sm:$0xff]
        %v468 = vld [vmem:[%s228 + $0x199] sm:$0xff]
        %v469 = vld [vmem:[%s228 + $0x1a1] sm:$0xff]
        %v470 = vld [vmem:[%s228 + $0x1a9] sm:$0xff]
        %v471 = vld [vmem:[%s228 + $0x1b9] sm:$0xff]
        %v472 = vld [vmem:[%s228 + $0x1c1] sm:$0xff]
        %v473 = vld [vmem:[%s228 + $0x1c9] sm:$0xff]
        %v474 = vld [vmem:[%s228 + $0x1d1] sm:$0xff]
        %v475 = vld [vmem:[%s228 + $0x1e1] sm:$0xff]
        %v476 = vld [vmem:[%s228 + $0x1e9] sm:$0xff]
        %v477 = vld [vmem:[%s228 + $0x1f1] sm:$0xff]
        %v478 = vld [vmem:[%s228 + $0x1f9] sm:$0xff]
        %v479 = vld [vmem:[%s228 + $0x209] sm:$0xff]
        %v480 = vld [vmem:[%s228 + $0x211] sm:$0xff]
        %v481 = vld [vmem:[%s228 + $0x219] sm:$0xff]
        %v482 = vld [vmem:[%s228 + $0x221] sm:$0xff]
        %v483 = vld [vmem:[%s228 + $0x231] sm:$0xff]
        %v484 = vld [vmem:[%s228 + $0x239] sm:$0xff]
        %v485 = vld [vmem:[%s228 + $0x241] sm:$0xff]
        %v486 = vld [vmem:[%s228 + $0x249] sm:$0xff]
        %v487 = vld [vmem:[%s228 + $0x259] sm:$0xff]
        %v488 = vld [vmem:[%s228 + $0x261] sm:$0xff]
        %v489 = vld [vmem:[%s228 + $0x269] sm:$0xff]
        %v490 = vld [vmem:[%s228 + $0x271] sm:$0xff]
        %v491 = vld [vmem:[%s228 + $0x281] sm:$0xff]
        %v492 = vld [vmem:[%s228 + $0x289] sm:$0xff]
        %v493 = vld [vmem:[%s228 + $0x291] sm:$0xff]
        %v494 = vld [vmem:[%s228 + $0x299] sm:$0xff]
        %v495 = vld [vmem:[%s228 + $0x2a9] sm:$0xff]
        %v496 = vld [vmem:[%s228 + $0x2b1] sm:$0xff]
        %v497 = vld [vmem:[%s228 + $0x2b9] sm:$0xff]
        %v498 = vld [vmem:[%s228 + $0x2c1] sm:$0xff]
        %v499 = vld [vmem:[%s228 + $0x2d1] sm:$0xff]
        %v500 = vld [vmem:[%s228 + $0x2d9] sm:$0xff]
        %v501 = vld [vmem:[%s228 + $0x2e1] sm:$0xff]
        %v502 = vld [vmem:[%s228 + $0x2e9] sm:$0xff]
        %v503 = vld [vmem:[%s228 + $0x2f9] sm:$0xff]
        %v504 = vld [vmem:[%s228 + $0x301] sm:$0xff]
        %v505 = vld [vmem:[%s228 + $0x309] sm:$0xff]
        %v506 = vld [vmem:[%s228 + $0x311] sm:$0xff]
        %v507 = vld [vmem:[%s228 + $0x321] sm:$0xff]
        %v508 = vld [vmem:[%s228 + $0x329] sm:$0xff]
        %v509 = vld [vmem:[%s228 + $0x331] sm:$0xff]
        %v510 = vld [vmem:[%s228 + $0x339] sm:$0xff]
        %v511 = vld [vmem:[%s228 + $0x349] sm:$0xff]
        %v512 = vld [vmem:[%s228 + $0x351] sm:$0xff]
        %v513 = vld [vmem:[%s228 + $0x359] sm:$0xff]
        %v514 = vld [vmem:[%s228 + $0x361] sm:$0xff]
        %v515 = vld [vmem:[%s228 + $0x371] sm:$0xff]
        %v516 = vld [vmem:[%s228 + $0x379] sm:$0xff]
        %v517 = vld [vmem:[%s228 + $0x381] sm:$0xff]
        %v518 = vld [vmem:[%s228 + $0x389] sm:$0xff]
        %v519 = vld [vmem:[%s228 + $0x399] sm:$0xff]
        %v520 = vld [vmem:[%s228 + $0x3a1] sm:$0xff]
        %v521 = vld [vmem:[%s228 + $0x3a9] sm:$0xff]
        %v522 = vld [vmem:[%s228 + $0x3b1] sm:$0xff]
        %v523 = vld [vmem:[%s228 + $0x3c1] sm:$0xff]
        %v524 = vld [vmem:[%s228 + $0x3c9] sm:$0xff]
        %v525 = vld [vmem:[%s228 + $0x3d1] sm:$0xff]
        %v526 = vld [vmem:[%s228 + $0x3d9] sm:$0xff]
        %v527 = vld [vmem:[%s228 + $0x3e9] sm:$0xff]
        %v528 = vld [vmem:[%s228 + $0x3f1] sm:$0xff]
        %v529 = vld [vmem:[%s228 + $0x3f9] sm:$0xff]
        %v530 = vld [vmem:[%s228 + $0x401] sm:$0xff]
        %v531 = vld [vmem:[%s228 + $0x411] sm:$0xff]
        %v532 = vld [vmem:[%s228 + $0x419] sm:$0xff]
        %v533 = vld [vmem:[%s228 + $0x421] sm:$0xff]
        %v534 = vld [vmem:[%s228 + $0x429] sm:$0xff]
        %v535 = vld [vmem:[%s228 + $0x439] sm:$0xff]
        %v536 = vld [vmem:[%s228 + $0x441] sm:$0xff]
        %v537 = vld [vmem:[%s228 + $0x449] sm:$0xff]
        %v538 = vld [vmem:[%s228 + $0x451] sm:$0xff]
        %v539 = vld [vmem:[%s228 + $0x461] sm:$0xff]
        %v540 = vld [vmem:[%s228 + $0x469] sm:$0xff]
        %v541 = vld [vmem:[%s228 + $0x471] sm:$0xff]
        %v542 = vld [vmem:[%s228 + $0x479] sm:$0xff]
        %v543 = vld [vmem:[%s228 + $0x489] sm:$0xff]
        %v544 = vld [vmem:[%s228 + $0x491] sm:$0xff]
        %v545 = vld [vmem:[%s228 + $0x499] sm:$0xff]
        %v546 = vld [vmem:[%s228 + $0x4a1] sm:$0xff]
        %v547 = vld [vmem:[%s228 + $0x4b1] sm:$0xff]
        %v548 = vld [vmem:[%s228 + $0x4b9] sm:$0xff]
        %v549 = vld [vmem:[%s228 + $0x4c1] sm:$0xff]
        %v550 = vld [vmem:[%s228 + $0x4c9] sm:$0xff]
        %v551 = vld [vmem:[%s228 + $0x4d9] sm:$0xff]
        %v552 = vld [vmem:[%s228 + $0x4e1] sm:$0xff]
        %v553 = vld [vmem:[%s228 + $0x4e9] sm:$0xff]
        %v554 = vld [vmem:[%s228 + $0x4f1] sm:$0xff]
        %v555 = vpack.c.bf16 %v428, %v427
        %v556 = vpack.c.bf16 %v430, %v429
        %v557 = vpack.c.bf16 %v432, %v431
        %v558 = vpack.c.bf16 %v434, %v433
        %v559 = vpack.c.bf16 %v436, %v435
        %v560 = vpack.c.bf16 %v438, %v437
        %v561 = vpack.c.bf16 %v440, %v439
        %v562 = vpack.c.bf16 %v442, %v441
        %v563 = vpack.c.bf16 %v444, %v443
        %v564 = vpack.c.bf16 %v446, %v445
        %v565 = vpack.c.bf16 %v448, %v447
        %v566 = vpack.c.bf16 %v450, %v449
        %v567 = vpack.c.bf16 %v452, %v451
        %v568 = vpack.c.bf16 %v454, %v453
        %v569 = vpack.c.bf16 %v456, %v455
        %v570 = vpack.c.bf16 %v458, %v457
        %v571 = vpack.c.bf16 %v460, %v459
        %v572 = vpack.c.bf16 %v462, %v461
        %v573 = vpack.c.bf16 %v464, %v463
        %v574 = vpack.c.bf16 %v466, %v465
        %v575 = vpack.c.bf16 %v468, %v467
        %v576 = vpack.c.bf16 %v470, %v469
        %v577 = vpack.c.bf16 %v472, %v471
        %v578 = vpack.c.bf16 %v474, %v473
        %v579 = vpack.c.bf16 %v476, %v475
        %v580 = vpack.c.bf16 %v478, %v477
        %v581 = vpack.c.bf16 %v480, %v479
        %v582 = vpack.c.bf16 %v482, %v481
        %v583 = vpack.c.bf16 %v484, %v483
        %v584 = vpack.c.bf16 %v486, %v485
        %v585 = vpack.c.bf16 %v488, %v487
        %v586 = vpack.c.bf16 %v490, %v489
        %v587 = vpack.c.bf16 %v492, %v491
        %v588 = vpack.c.bf16 %v494, %v493
        %v589 = vpack.c.bf16 %v496, %v495
        %v590 = vpack.c.bf16 %v498, %v497
        %v591 = vpack.c.bf16 %v500, %v499
        %v592 = vpack.c.bf16 %v502, %v501
        %v593 = vpack.c.bf16 %v504, %v503
        %v594 = vpack.c.bf16 %v506, %v505
        %v595 = vpack.c.bf16 %v508, %v507
        %v596 = vpack.c.bf16 %v510, %v509
        %v597 = vpack.c.bf16 %v512, %v511
        %v598 = vpack.c.bf16 %v514, %v513
        %v599 = vpack.c.bf16 %v516, %v515
        %v600 = vpack.c.bf16 %v518, %v517
        %v601 = vpack.c.bf16 %v520, %v519
        %v602 = vpack.c.bf16 %v522, %v521
        %v603 = vpack.c.bf16 %v524, %v523
        %v604 = vpack.c.bf16 %v526, %v525
        %v605 = vpack.c.bf16 %v528, %v527
        %v606 = vpack.c.bf16 %v530, %v529
        %v607 = vpack.c.bf16 %v532, %v531
        %v608 = vpack.c.bf16 %v534, %v533
        %v609 = vpack.c.bf16 %v536, %v535
        %v610 = vpack.c.bf16 %v538, %v537
        %v611 = vpack.c.bf16 %v540, %v539
        %v612 = vpack.c.bf16 %v542, %v541
        %v613 = vpack.c.bf16 %v544, %v543
        %v614 = vpack.c.bf16 %v546, %v545
        %v615 = vpack.c.bf16 %v548, %v547
        %v616 = vpack.c.bf16 %v550, %v549
        %v617 = vpack.c.bf16 %v552, %v551
        %v618 = vpack.c.bf16 %v554, %v553
        %s619 = scalar_lea.vmem %s232, 2
        %v620 = vld [vmem:[%s619] sm:$0x3]
        %vm621 = vcmask 23552
        %v623 = vsel %vm621, %v555, 0
        %v626 = vsel %vm621, %v556, 0
        %v629 = vsel %vm621, %v557, 0
        %v632 = vsel %vm621, %v558, 0
        %v635 = vsel %vm621, %v559, 0
        %v638 = vsel %vm621, %v560, 0
        %v641 = vsel %vm621, %v561, 0
        %v644 = vsel %vm621, %v562, 0
        %v647 = vsel %vm621, %v563, 0
        %v650 = vsel %vm621, %v564, 0
        %v653 = vsel %vm621, %v565, 0
        %v656 = vsel %vm621, %v566, 0
        %v659 = vsel %vm621, %v567, 0
        %v662 = vsel %vm621, %v568, 0
        %v665 = vsel %vm621, %v569, 0
        %v668 = vsel %vm621, %v570, 0
        %v671 = vsel %vm621, %v571, 0
        %v674 = vsel %vm621, %v572, 0
        %v677 = vsel %vm621, %v573, 0
        %v680 = vsel %vm621, %v574, 0
        %v683 = vsel %vm621, %v575, 0
        %v686 = vsel %vm621, %v576, 0
        %v689 = vsel %vm621, %v577, 0
        %v692 = vsel %vm621, %v578, 0
        %v695 = vsel %vm621, %v579, 0
        %v698 = vsel %vm621, %v580, 0
        %v701 = vsel %vm621, %v581, 0
        %v704 = vsel %vm621, %v582, 0
        %v707 = vsel %vm621, %v583, 0
        %v710 = vsel %vm621, %v584, 0
        %v713 = vsel %vm621, %v585, 0
        %v716 = vsel %vm621, %v586, 0
        %v719 = vsel %vm621, %v587, 0
        %v722 = vsel %vm621, %v588, 0
        %v725 = vsel %vm621, %v589, 0
        %v728 = vsel %vm621, %v590, 0
        %v731 = vsel %vm621, %v591, 0
        %v734 = vsel %vm621, %v592, 0
        %v737 = vsel %vm621, %v593, 0
        %v740 = vsel %vm621, %v594, 0
        %v743 = vsel %vm621, %v595, 0
        %v746 = vsel %vm621, %v596, 0
        %v749 = vsel %vm621, %v597, 0
        %v752 = vsel %vm621, %v598, 0
        %v755 = vsel %vm621, %v599, 0
        %v758 = vsel %vm621, %v600, 0
        %v761 = vsel %vm621, %v601, 0
        %v764 = vsel %vm621, %v602, 0
        %v767 = vsel %vm621, %v603, 0
        %v770 = vsel %vm621, %v604, 0
        %v773 = vsel %vm621, %v605, 0
        %v776 = vsel %vm621, %v606, 0
        %v779 = vsel %vm621, %v607, 0
        %v782 = vsel %vm621, %v608, 0
        %v785 = vsel %vm621, %v609, 0
        %v788 = vsel %vm621, %v610, 0
        %v791 = vsel %vm621, %v611, 0
        %v794 = vsel %vm621, %v612, 0
        %v797 = vsel %vm621, %v613, 0
        %v800 = vsel %vm621, %v614, 0
        %v803 = vsel %vm621, %v615, 0
        %v806 = vsel %vm621, %v616, 0
        %v809 = vsel %vm621, %v617, 0
        %v812 = vsel %vm621, %v618, 0
        %vm814 = vcmask 1040384
        %vm815 = vcmask 1041408
        %v816 = vsel %vm814, 4294967295, 65535
        %v817 = vsel %vm815, %v816, 0
        %v819 = vand.u32 %v620, %v817
        %821 = vmatprep.subr.bf16.mxu0 0
        %822 = vmatpush1.bf16.msra.mxu0 %v819
        %823 = vmatprep.subr.bf16.mxu0 0
        %824 = vmatpush1.bf16.msra.mxu0 0
        %825 = vmatprep.subr.bf16.mxu0 0
        %826 = vmatpush1.bf16.msra.mxu0 0
        %827 = vmatprep.subr.bf16.mxu0 0
        %828 = vmatpush1.bf16.msra.mxu0 0
        %829 = vmatprep.subr.bf16.mxu0 0
        %830 = vmatpush1.bf16.msra.mxu0 0
        %831 = vmatprep.subr.bf16.mxu0 0
        %832 = vmatpush1.bf16.msra.mxu0 0
        %833 = vmatprep.subr.bf16.mxu0 0
        %834 = vmatpush1.bf16.msra.mxu0 0
        %835 = vmatprep.subr.bf16.mxu0 0
        %836 = vmatpush1.bf16.msra.mxu0 0
        %837 = vmatprep.subr.bf16.mxu0 0
        %838 = vmatpush1.bf16.msra.mxu0 0
        %839 = vmatprep.subr.bf16.mxu0 0
        %840 = vmatpush1.bf16.msra.mxu0 0
        %841 = vmatprep.subr.bf16.mxu0 0
        %842 = vmatpush1.bf16.msra.mxu0 0
        %843 = vmatprep.subr.bf16.mxu0 0
        %844 = vmatpush1.bf16.msra.mxu0 0
        %845 = vmatprep.subr.bf16.mxu0 0
        %846 = vmatpush1.bf16.msra.mxu0 0
        %847 = vmatprep.subr.bf16.mxu0 0
        %848 = vmatpush1.bf16.msra.mxu0 0
        %849 = vmatprep.subr.bf16.mxu0 0
        %850 = vmatpush1.bf16.msra.mxu0 0
        %851 = vmatprep.subr.bf16.mxu0 0
        %852 = vmatpush1.bf16.msra.mxu0 0
        %853 = vmatprep.mubr.bf16.mxu0 0
        %854 = vmatmul.mubr.bf16.gmra.mrb[0].mxu0 %v623
        %v855 = vpop.f32.mrb[0].mxu0
        %v856 = vadd.f32 0.0, %v855
        %v857 = vpop.f32.mrb[0].mxu0
        %v858 = vpop.f32.mrb[0].mxu0
        %v859 = vadd.f32 0.0, %v858
        %v860 = vpop.f32.mrb[0].mxu0
        %861 = vmatprep.mubr.bf16.mxu0 0
        %862 = vmatmul.mubr.bf16.gmra.mrb[0].mxu0 %v626
        %v863 = vpop.f32.mrb[0].mxu0
        %v864 = vadd.f32 0.0, %v863
        %v865 = vpop.f32.mrb[0].mxu0
        %v866 = vpop.f32.mrb[0].mxu0
        %v867 = vadd.f32 0.0, %v866
        %v868 = vpop.f32.mrb[0].mxu0
        %869 = vmatprep.mubr.bf16.mxu0 0
        %870 = vmatmul.mubr.bf16.gmra.mrb[0].mxu0 %v629
        %v871 = vpop.f32.mrb[0].mxu0
        %v872 = vadd.f32 0.0, %v871
        %v873 = vpop.f32.mrb[0].mxu0
        %v874 = vpop.f32.mrb[0].mxu0
        %v875 = vadd.f32 0.0, %v874
        %v876 = vpop.f32.mrb[0].mxu0
        %877 = vmatprep.mubr.bf16.mxu0 0
        %878 = vmatmul.mubr.bf16.gmra.mrb[0].mxu0 %v632
        %v879 = vpop.f32.mrb[0].mxu0
        %v880 = vadd.f32 0.0, %v879
        %v881 = vpop.f32.mrb[0].mxu0
        %v882 = vpop.f32.mrb[0].mxu0
        %v883 = vadd.f32 0.0, %v882
        %v884 = vpop.f32.mrb[0].mxu0
        %885 = vmatprep.mubr.bf16.mxu0 0
        %886 = vmatmul.mubr.bf16.gmra.mrb[0].mxu0 %v635
        %v887 = vpop.f32.mrb[0].mxu0
        %v888 = vadd.f32 0.0, %v887
        %v889 = vpop.f32.mrb[0].mxu0
        %v890 = vpop.f32.mrb[0].mxu0
        %v891 = vadd.f32 0.0, %v890
        %v892 = vpop.f32.mrb[0].mxu0
        %893 = vmatprep.mubr.bf16.mxu0 0
        %894 = vmatmul.mubr.bf16.gmra.mrb[0].mxu0 %v638
        %v895 = vpop.f32.mrb[0].mxu0
        %v896 = vadd.f32 0.0, %v895
        %v897 = vpop.f32.mrb[0].mxu0
        %v898 = vpop.f32.mrb[0].mxu0
        %v899 = vadd.f32 0.0, %v898
        %v900 = vpop.f32.mrb[0].mxu0
        %901 = vmatprep.mubr.bf16.mxu0 0
        %902 = vmatmul.mubr.bf16.gmra.mrb[0].mxu0 %v641
        %v903 = vpop.f32.mrb[0].mxu0
        %v904 = vadd.f32 0.0, %v903
        %v905 = vpop.f32.mrb[0].mxu0
        %v906 = vpop.f32.mrb[0].mxu0
        %v907 = vadd.f32 0.0, %v906
        %v908 = vpop.f32.mrb[0].mxu0
        %909 = vmatprep.mubr.bf16.mxu0 0
        %910 = vmatmul.mubr.bf16.gmra.mrb[0].mxu0 %v644
        %v911 = vpop.f32.mrb[0].mxu0
        %v912 = vadd.f32 0.0, %v911
        %v913 = vpop.f32.mrb[0].mxu0
        %v914 = vpop.f32.mrb[0].mxu0
        %v915 = vadd.f32 0.0, %v914
        %v916 = vpop.f32.mrb[0].mxu0
        %917 = vmatprep.mubr.bf16.mxu0 0
        %918 = vmatmul.mubr.bf16.gmra.mrb[0].mxu0 %v647
        %v919 = vpop.f32.mrb[0].mxu0
        %v920 = vadd.f32 0.0, %v919
        %v921 = vpop.f32.mrb[0].mxu0
        %v922 = vpop.f32.mrb[0].mxu0
        %v923 = vadd.f32 0.0, %v922
        %v924 = vpop.f32.mrb[0].mxu0
        %925 = vmatprep.mubr.bf16.mxu0 0
        %926 = vmatmul.mubr.bf16.gmra.mrb[0].mxu0 %v650
        %v927 = vpop.f32.mrb[0].mxu0
        %v928 = vadd.f32 0.0, %v927
        %v929 = vpop.f32.mrb[0].mxu0
        %v930 = vpop.f32.mrb[0].mxu0
        %v931 = vadd.f32 0.0, %v930
        %v932 = vpop.f32.mrb[0].mxu0
        %933 = vmatprep.mubr.bf16.mxu0 0
        %934 = vmatmul.mubr.bf16.gmra.mrb[0].mxu0 %v653
        %v935 = vpop.f32.mrb[0].mxu0
        %v936 = vadd.f32 0.0, %v935
        %v937 = vpop.f32.mrb[0].mxu0
        %v938 = vpop.f32.mrb[0].mxu0
        %v939 = vadd.f32 0.0, %v938
        %v940 = vpop.f32.mrb[0].mxu0
        %941 = vmatprep.mubr.bf16.mxu0 0
        %942 = vmatmul.mubr.bf16.gmra.mrb[0].mxu0 %v656
        %v943 = vpop.f32.mrb[0].mxu0
        %v944 = vadd.f32 0.0, %v943
        %v945 = vpop.f32.mrb[0].mxu0
        %v946 = vpop.f32.mrb[0].mxu0
        %v947 = vadd.f32 0.0, %v946
        %v948 = vpop.f32.mrb[0].mxu0
        %949 = vmatprep.mubr.bf16.mxu0 0
        %950 = vmatmul.mubr.bf16.gmra.mrb[0].mxu0 %v659
        %v951 = vpop.f32.mrb[0].mxu0
        %v952 = vadd.f32 0.0, %v951
        %v953 = vpop.f32.mrb[0].mxu0
        %v954 = vpop.f32.mrb[0].mxu0
        %v955 = vadd.f32 0.0, %v954
        %v956 = vpop.f32.mrb[0].mxu0
        %957 = vmatprep.mubr.bf16.mxu0 0
        %958 = vmatmul.mubr.bf16.gmra.mrb[0].mxu0 %v662
        %v959 = vpop.f32.mrb[0].mxu0
        %v960 = vadd.f32 0.0, %v959
        %v961 = vpop.f32.mrb[0].mxu0
        %v962 = vpop.f32.mrb[0].mxu0
        %v963 = vadd.f32 0.0, %v962
        %v964 = vpop.f32.mrb[0].mxu0
        %965 = vmatprep.mubr.bf16.mxu0 0
        %966 = vmatmul.mubr.bf16.gmra.mrb[0].mxu0 %v665
        %v967 = vpop.f32.mrb[0].mxu0
        %v968 = vadd.f32 0.0, %v967
        %v969 = vpop.f32.mrb[0].mxu0
        %v970 = vpop.f32.mrb[0].mxu0
        %v971 = vadd.f32 0.0, %v970
        %v972 = vpop.f32.mrb[0].mxu0
        %973 = vmatprep.mubr.bf16.mxu0 0
        %974 = vmatmul.mubr.bf16.gmra.mrb[0].mxu0 %v668
        %v975 = vpop.f32.mrb[0].mxu0
        %v976 = vadd.f32 0.0, %v975
        %v977 = vpop.f32.mrb[0].mxu0
        %v978 = vpop.f32.mrb[0].mxu0
        %v979 = vadd.f32 0.0, %v978
        %v980 = vpop.f32.mrb[0].mxu0
        %981 = vmatprep.mubr.bf16.mxu0 0
        %982 = vmatmul.mubr.bf16.gmra.mrb[0].mxu0 %v671
        %v983 = vpop.f32.mrb[0].mxu0
        %v984 = vadd.f32 0.0, %v983
        %v985 = vpop.f32.mrb[0].mxu0
        %v986 = vpop.f32.mrb[0].mxu0
        %v987 = vadd.f32 0.0, %v986
        %v988 = vpop.f32.mrb[0].mxu0
        %989 = vmatprep.mubr.bf16.mxu0 0
        %990 = vmatmul.mubr.bf16.gmra.mrb[0].mxu0 %v674
        %v991 = vpop.f32.mrb[0].mxu0
        %v992 = vadd.f32 0.0, %v991
        %v993 = vpop.f32.mrb[0].mxu0
        %v994 = vpop.f32.mrb[0].mxu0
        %v995 = vadd.f32 0.0, %v994
        %v996 = vpop.f32.mrb[0].mxu0
        %997 = vmatprep.mubr.bf16.mxu0 0
        %998 = vmatmul.mubr.bf16.gmra.mrb[0].mxu0 %v677
        %v999 = vpop.f32.mrb[0].mxu0
        %v1000 = vadd.f32 0.0, %v999
        %v1001 = vpop.f32.mrb[0].mxu0
        %v1002 = vpop.f32.mrb[0].mxu0
        %v1003 = vadd.f32 0.0, %v1002
        %v1004 = vpop.f32.mrb[0].mxu0
        %1005 = vmatprep.mubr.bf16.mxu0 0
        %1006 = vmatmul.mubr.bf16.gmra.mrb[0].mxu0 %v680
        %v1007 = vpop.f32.mrb[0].mxu0
        %v1008 = vadd.f32 0.0, %v1007
        %v1009 = vpop.f32.mrb[0].mxu0
        %v1010 = vpop.f32.mrb[0].mxu0
        %v1011 = vadd.f32 0.0, %v1010
        %v1012 = vpop.f32.mrb[0].mxu0
        %1013 = vmatprep.mubr.bf16.mxu0 0
        %1014 = vmatmul.mubr.bf16.gmra.mrb[0].mxu0 %v683
        %v1015 = vpop.f32.mrb[0].mxu0
        %v1016 = vadd.f32 0.0, %v1015
        %v1017 = vpop.f32.mrb[0].mxu0
        %v1018 = vpop.f32.mrb[0].mxu0
        %v1019 = vadd.f32 0.0, %v1018
        %v1020 = vpop.f32.mrb[0].mxu0
        %1021 = vmatprep.mubr.bf16.mxu0 0
        %1022 = vmatmul.mubr.bf16.gmra.mrb[0].mxu0 %v686
        %v1023 = vpop.f32.mrb[0].mxu0
        %v1024 = vadd.f32 0.0, %v1023
        %v1025 = vpop.f32.mrb[0].mxu0
        %v1026 = vpop.f32.mrb[0].mxu0
        %v1027 = vadd.f32 0.0, %v1026
        %v1028 = vpop.f32.mrb[0].mxu0
        %1029 = vmatprep.mubr.bf16.mxu0 0
        %1030 = vmatmul.mubr.bf16.gmra.mrb[0].mxu0 %v689
        %v1031 = vpop.f32.mrb[0].mxu0
        %v1032 = vadd.f32 0.0, %v1031
        %v1033 = vpop.f32.mrb[0].mxu0
        %v1034 = vpop.f32.mrb[0].mxu0
        %v1035 = vadd.f32 0.0, %v1034
        %v1036 = vpop.f32.mrb[0].mxu0
        %1037 = vmatprep.mubr.bf16.mxu0 0
        %1038 = vmatmul.mubr.bf16.gmra.mrb[0].mxu0 %v692
        %v1039 = vpop.f32.mrb[0].mxu0
        %v1040 = vadd.f32 0.0, %v1039
        %v1041 = vpop.f32.mrb[0].mxu0
        %v1042 = vpop.f32.mrb[0].mxu0
        %v1043 = vadd.f32 0.0, %v1042
        %v1044 = vpop.f32.mrb[0].mxu0
        %1045 = vmatprep.mubr.bf16.mxu0 0
        %1046 = vmatmul.mubr.bf16.gmra.mrb[0].mxu0 %v695
        %v1047 = vpop.f32.mrb[0].mxu0
        %v1048 = vadd.f32 0.0, %v1047
        %v1049 = vpop.f32.mrb[0].mxu0
        %v1050 = vpop.f32.mrb[0].mxu0
        %v1051 = vadd.f32 0.0, %v1050
        %v1052 = vpop.f32.mrb[0].mxu0
        %1053 = vmatprep.mubr.bf16.mxu0 0
        %1054 = vmatmul.mubr.bf16.gmra.mrb[0].mxu0 %v698
        %v1055 = vpop.f32.mrb[0].mxu0
        %v1056 = vadd.f32 0.0, %v1055
        %v1057 = vpop.f32.mrb[0].mxu0
        %v1058 = vpop.f32.mrb[0].mxu0
        %v1059 = vadd.f32 0.0, %v1058
        %v1060 = vpop.f32.mrb[0].mxu0
        %1061 = vmatprep.mubr.bf16.mxu0 0
        %1062 = vmatmul.mubr.bf16.gmra.mrb[0].mxu0 %v701
        %v1063 = vpop.f32.mrb[0].mxu0
        %v1064 = vadd.f32 0.0, %v1063
        %v1065 = vpop.f32.mrb[0].mxu0
        %v1066 = vpop.f32.mrb[0].mxu0
        %v1067 = vadd.f32 0.0, %v1066
        %v1068 = vpop.f32.mrb[0].mxu0
        %1069 = vmatprep.mubr.bf16.mxu0 0
        %1070 = vmatmul.mubr.bf16.gmra.mrb[0].mxu0 %v704
        %v1071 = vpop.f32.mrb[0].mxu0
        %v1072 = vadd.f32 0.0, %v1071
        %v1073 = vpop.f32.mrb[0].mxu0
        %v1074 = vpop.f32.mrb[0].mxu0
        %v1075 = vadd.f32 0.0, %v1074
        %v1076 = vpop.f32.mrb[0].mxu0
        %1077 = vmatprep.mubr.bf16.mxu0 0
        %1078 = vmatmul.mubr.bf16.gmra.mrb[0].mxu0 %v707
        %v1079 = vpop.f32.mrb[0].mxu0
        %v1080 = vadd.f32 0.0, %v1079
        %v1081 = vpop.f32.mrb[0].mxu0
        %v1082 = vpop.f32.mrb[0].mxu0
        %v1083 = vadd.f32 0.0, %v1082
        %v1084 = vpop.f32.mrb[0].mxu0
        %1085 = vmatprep.mubr.bf16.mxu0 0
        %1086 = vmatmul.mubr.bf16.gmra.mrb[0].mxu0 %v710
        %v1087 = vpop.f32.mrb[0].mxu0
        %v1088 = vadd.f32 0.0, %v1087
        %v1089 = vpop.f32.mrb[0].mxu0
        %v1090 = vpop.f32.mrb[0].mxu0
        %v1091 = vadd.f32 0.0, %v1090
        %v1092 = vpop.f32.mrb[0].mxu0
        %1093 = vmatprep.mubr.bf16.mxu0 0
        %1094 = vmatmul.mubr.bf16.gmra.mrb[0].mxu0 %v713
        %v1095 = vpop.f32.mrb[0].mxu0
        %v1096 = vadd.f32 0.0, %v1095
        %v1097 = vpop.f32.mrb[0].mxu0
        %v1098 = vpop.f32.mrb[0].mxu0
        %v1099 = vadd.f32 0.0, %v1098
        %v1100 = vpop.f32.mrb[0].mxu0
        %1101 = vmatprep.mubr.bf16.mxu0 0
        %1102 = vmatmul.mubr.bf16.gmra.mrb[0].mxu0 %v716
        %v1103 = vpop.f32.mrb[0].mxu0
        %v1104 = vadd.f32 0.0, %v1103
        %v1105 = vpop.f32.mrb[0].mxu0
        %v1106 = vpop.f32.mrb[0].mxu0
        %v1107 = vadd.f32 0.0, %v1106
        %v1108 = vpop.f32.mrb[0].mxu0
        %1109 = vmatprep.mubr.bf16.mxu0 0
        %1110 = vmatmul.mubr.bf16.gmra.mrb[0].mxu0 %v719
        %v1111 = vpop.f32.mrb[0].mxu0
        %v1112 = vadd.f32 0.0, %v1111
        %v1113 = vpop.f32.mrb[0].mxu0
        %v1114 = vpop.f32.mrb[0].mxu0
        %v1115 = vadd.f32 0.0, %v1114
        %v1116 = vpop.f32.mrb[0].mxu0
        %1117 = vmatprep.mubr.bf16.mxu0 0
        %1118 = vmatmul.mubr.bf16.gmra.mrb[0].mxu0 %v722
        %v1119 = vpop.f32.mrb[0].mxu0
        %v1120 = vadd.f32 0.0, %v1119
        %v1121 = vpop.f32.mrb[0].mxu0
        %v1122 = vpop.f32.mrb[0].mxu0
        %v1123 = vadd.f32 0.0, %v1122
        %v1124 = vpop.f32.mrb[0].mxu0
        %1125 = vmatprep.mubr.bf16.mxu0 0
        %1126 = vmatmul.mubr.bf16.gmra.mrb[0].mxu0 %v725
        %v1127 = vpop.f32.mrb[0].mxu0
        %v1128 = vadd.f32 0.0, %v1127
        %v1129 = vpop.f32.mrb[0].mxu0
        %v1130 = vpop.f32.mrb[0].mxu0
        %v1131 = vadd.f32 0.0, %v1130
        %v1132 = vpop.f32.mrb[0].mxu0
        %1133 = vmatprep.mubr.bf16.mxu0 0
        %1134 = vmatmul.mubr.bf16.gmra.mrb[0].mxu0 %v728
        %v1135 = vpop.f32.mrb[0].mxu0
        %v1136 = vadd.f32 0.0, %v1135
        %v1137 = vpop.f32.mrb[0].mxu0
        %v1138 = vpop.f32.mrb[0].mxu0
        %v1139 = vadd.f32 0.0, %v1138
        %v1140 = vpop.f32.mrb[0].mxu0
        %1141 = vmatprep.mubr.bf16.mxu0 0
        %1142 = vmatmul.mubr.bf16.gmra.mrb[0].mxu0 %v731
        %v1143 = vpop.f32.mrb[0].mxu0
        %v1144 = vadd.f32 0.0, %v1143
        %v1145 = vpop.f32.mrb[0].mxu0
        %v1146 = vpop.f32.mrb[0].mxu0
        %v1147 = vadd.f32 0.0, %v1146
        %v1148 = vpop.f32.mrb[0].mxu0
        %1149 = vmatprep.mubr.bf16.mxu0 0
        %1150 = vmatmul.mubr.bf16.gmra.mrb[0].mxu0 %v734
        %v1151 = vpop.f32.mrb[0].mxu0
        %v1152 = vadd.f32 0.0, %v1151
        %v1153 = vpop.f32.mrb[0].mxu0
        %v1154 = vpop.f32.mrb[0].mxu0
        %v1155 = vadd.f32 0.0, %v1154
        %v1156 = vpop.f32.mrb[0].mxu0
        %1157 = vmatprep.mubr.bf16.mxu0 0
        %1158 = vmatmul.mubr.bf16.gmra.mrb[0].mxu0 %v737
        %v1159 = vpop.f32.mrb[0].mxu0
        %v1160 = vadd.f32 0.0, %v1159
        %v1161 = vpop.f32.mrb[0].mxu0
        %v1162 = vpop.f32.mrb[0].mxu0
        %v1163 = vadd.f32 0.0, %v1162
        %v1164 = vpop.f32.mrb[0].mxu0
        %1165 = vmatprep.mubr.bf16.mxu0 0
        %1166 = vmatmul.mubr.bf16.gmra.mrb[0].mxu0 %v740
        %v1167 = vpop.f32.mrb[0].mxu0
        %v1168 = vadd.f32 0.0, %v1167
        %v1169 = vpop.f32.mrb[0].mxu0
        %v1170 = vpop.f32.mrb[0].mxu0
        %v1171 = vadd.f32 0.0, %v1170
        %v1172 = vpop.f32.mrb[0].mxu0
        %1173 = vmatprep.mubr.bf16.mxu0 0
        %1174 = vmatmul.mubr.bf16.gmra.mrb[0].mxu0 %v743
        %v1175 = vpop.f32.mrb[0].mxu0
        %v1176 = vadd.f32 0.0, %v1175
        %v1177 = vpop.f32.mrb[0].mxu0
        %v1178 = vpop.f32.mrb[0].mxu0
        %v1179 = vadd.f32 0.0, %v1178
        %v1180 = vpop.f32.mrb[0].mxu0
        %1181 = vmatprep.mubr.bf16.mxu0 0
        %1182 = vmatmul.mubr.bf16.gmra.mrb[0].mxu0 %v746
        %v1183 = vpop.f32.mrb[0].mxu0
        %v1184 = vadd.f32 0.0, %v1183
        %v1185 = vpop.f32.mrb[0].mxu0
        %v1186 = vpop.f32.mrb[0].mxu0
        %v1187 = vadd.f32 0.0, %v1186
        %v1188 = vpop.f32.mrb[0].mxu0
        %1189 = vmatprep.mubr.bf16.mxu0 0
        %1190 = vmatmul.mubr.bf16.gmra.mrb[0].mxu0 %v749
        %v1191 = vpop.f32.mrb[0].mxu0
        %v1192 = vadd.f32 0.0, %v1191
        %v1193 = vpop.f32.mrb[0].mxu0
        %v1194 = vpop.f32.mrb[0].mxu0
        %v1195 = vadd.f32 0.0, %v1194
        %v1196 = vpop.f32.mrb[0].mxu0
        %1197 = vmatprep.mubr.bf16.mxu0 0
        %1198 = vmatmul.mubr.bf16.gmra.mrb[0].mxu0 %v752
        %v1199 = vpop.f32.mrb[0].mxu0
        %v1200 = vadd.f32 0.0, %v1199
        %v1201 = vpop.f32.mrb[0].mxu0
        %v1202 = vpop.f32.mrb[0].mxu0
        %v1203 = vadd.f32 0.0, %v1202
        %v1204 = vpop.f32.mrb[0].mxu0
        %1205 = vmatprep.mubr.bf16.mxu0 0
        %1206 = vmatmul.mubr.bf16.gmra.mrb[0].mxu0 %v755
        %v1207 = vpop.f32.mrb[0].mxu0
        %v1208 = vadd.f32 0.0, %v1207
        %v1209 = vpop.f32.mrb[0].mxu0
        %v1210 = vpop.f32.mrb[0].mxu0
        %v1211 = vadd.f32 0.0, %v1210
        %v1212 = vpop.f32.mrb[0].mxu0
        %1213 = vmatprep.mubr.bf16.mxu0 0
        %1214 = vmatmul.mubr.bf16.gmra.mrb[0].mxu0 %v758
        %v1215 = vpop.f32.mrb[0].mxu0
        %v1216 = vadd.f32 0.0, %v1215
        %v1217 = vpop.f32.mrb[0].mxu0
        %v1218 = vpop.f32.mrb[0].mxu0
        %v1219 = vadd.f32 0.0, %v1218
        %v1220 = vpop.f32.mrb[0].mxu0
        %1221 = vmatprep.mubr.bf16.mxu0 0
        %1222 = vmatmul.mubr.bf16.gmra.mrb[0].mxu0 %v761
        %v1223 = vpop.f32.mrb[0].mxu0
        %v1224 = vadd.f32 0.0, %v1223
        %v1225 = vpop.f32.mrb[0].mxu0
        %v1226 = vpop.f32.mrb[0].mxu0
        %v1227 = vadd.f32 0.0, %v1226
        %v1228 = vpop.f32.mrb[0].mxu0
        %1229 = vmatprep.mubr.bf16.mxu0 0
        %1230 = vmatmul.mubr.bf16.gmra.mrb[0].mxu0 %v764
        %v1231 = vpop.f32.mrb[0].mxu0
        %v1232 = vadd.f32 0.0, %v1231
        %v1233 = vpop.f32.mrb[0].mxu0
        %v1234 = vpop.f32.mrb[0].mxu0
        %v1235 = vadd.f32 0.0, %v1234
        %v1236 = vpop.f32.mrb[0].mxu0
        %1237 = vmatprep.mubr.bf16.mxu0 0
        %1238 = vmatmul.mubr.bf16.gmra.mrb[0].mxu0 %v767
        %v1239 = vpop.f32.mrb[0].mxu0
        %v1240 = vadd.f32 0.0, %v1239
        %v1241 = vpop.f32.mrb[0].mxu0
        %v1242 = vpop.f32.mrb[0].mxu0
        %v1243 = vadd.f32 0.0, %v1242
        %v1244 = vpop.f32.mrb[0].mxu0
        %1245 = vmatprep.mubr.bf16.mxu0 0
        %1246 = vmatmul.mubr.bf16.gmra.mrb[0].mxu0 %v770
        %v1247 = vpop.f32.mrb[0].mxu0
        %v1248 = vadd.f32 0.0, %v1247
        %v1249 = vpop.f32.mrb[0].mxu0
        %v1250 = vpop.f32.mrb[0].mxu0
        %v1251 = vadd.f32 0.0, %v1250
        %v1252 = vpop.f32.mrb[0].mxu0
        %1253 = vmatprep.mubr.bf16.mxu0 0
        %1254 = vmatmul.mubr.bf16.gmra.mrb[0].mxu0 %v773
        %v1255 = vpop.f32.mrb[0].mxu0
        %v1256 = vadd.f32 0.0, %v1255
        %v1257 = vpop.f32.mrb[0].mxu0
        %v1258 = vpop.f32.mrb[0].mxu0
        %v1259 = vadd.f32 0.0, %v1258
        %v1260 = vpop.f32.mrb[0].mxu0
        %1261 = vmatprep.mubr.bf16.mxu0 0
        %1262 = vmatmul.mubr.bf16.gmra.mrb[0].mxu0 %v776
        %v1263 = vpop.f32.mrb[0].mxu0
        %v1264 = vadd.f32 0.0, %v1263
        %v1265 = vpop.f32.mrb[0].mxu0
        %v1266 = vpop.f32.mrb[0].mxu0
        %v1267 = vadd.f32 0.0, %v1266
        %v1268 = vpop.f32.mrb[0].mxu0
        %1269 = vmatprep.mubr.bf16.mxu0 0
        %1270 = vmatmul.mubr.bf16.gmra.mrb[0].mxu0 %v779
        %v1271 = vpop.f32.mrb[0].mxu0
        %v1272 = vadd.f32 0.0, %v1271
        %v1273 = vpop.f32.mrb[0].mxu0
        %v1274 = vpop.f32.mrb[0].mxu0
        %v1275 = vadd.f32 0.0, %v1274
        %v1276 = vpop.f32.mrb[0].mxu0
        %1277 = vmatprep.mubr.bf16.mxu0 0
        %1278 = vmatmul.mubr.bf16.gmra.mrb[0].mxu0 %v782
        %v1279 = vpop.f32.mrb[0].mxu0
        %v1280 = vadd.f32 0.0, %v1279
        %v1281 = vpop.f32.mrb[0].mxu0
        %v1282 = vpop.f32.mrb[0].mxu0
        %v1283 = vadd.f32 0.0, %v1282
        %v1284 = vpop.f32.mrb[0].mxu0
        %1285 = vmatprep.mubr.bf16.mxu0 0
        %1286 = vmatmul.mubr.bf16.gmra.mrb[0].mxu0 %v785
        %v1287 = vpop.f32.mrb[0].mxu0
        %v1288 = vadd.f32 0.0, %v1287
        %v1289 = vpop.f32.mrb[0].mxu0
        %v1290 = vpop.f32.mrb[0].mxu0
        %v1291 = vadd.f32 0.0, %v1290
        %v1292 = vpop.f32.mrb[0].mxu0
        %1293 = vmatprep.mubr.bf16.mxu0 0
        %1294 = vmatmul.mubr.bf16.gmra.mrb[0].mxu0 %v788
        %v1295 = vpop.f32.mrb[0].mxu0
        %v1296 = vadd.f32 0.0, %v1295
        %v1297 = vpop.f32.mrb[0].mxu0
        %v1298 = vpop.f32.mrb[0].mxu0
        %v1299 = vadd.f32 0.0, %v1298
        %v1300 = vpop.f32.mrb[0].mxu0
        %1301 = vmatprep.mubr.bf16.mxu0 0
        %1302 = vmatmul.mubr.bf16.gmra.mrb[0].mxu0 %v791
        %v1303 = vpop.f32.mrb[0].mxu0
        %v1304 = vadd.f32 0.0, %v1303
        %v1305 = vpop.f32.mrb[0].mxu0
        %v1306 = vpop.f32.mrb[0].mxu0
        %v1307 = vadd.f32 0.0, %v1306
        %v1308 = vpop.f32.mrb[0].mxu0
        %1309 = vmatprep.mubr.bf16.mxu0 0
        %1310 = vmatmul.mubr.bf16.gmra.mrb[0].mxu0 %v794
        %v1311 = vpop.f32.mrb[0].mxu0
        %v1312 = vadd.f32 0.0, %v1311
        %v1313 = vpop.f32.mrb[0].mxu0
        %v1314 = vpop.f32.mrb[0].mxu0
        %v1315 = vadd.f32 0.0, %v1314
        %v1316 = vpop.f32.mrb[0].mxu0
        %1317 = vmatprep.mubr.bf16.mxu0 0
        %1318 = vmatmul.mubr.bf16.gmra.mrb[0].mxu0 %v797
        %v1319 = vpop.f32.mrb[0].mxu0
        %v1320 = vadd.f32 0.0, %v1319
        %v1321 = vpop.f32.mrb[0].mxu0
        %v1322 = vpop.f32.mrb[0].mxu0
        %v1323 = vadd.f32 0.0, %v1322
        %v1324 = vpop.f32.mrb[0].mxu0
        %1325 = vmatprep.mubr.bf16.mxu0 0
        %1326 = vmatmul.mubr.bf16.gmra.mrb[0].mxu0 %v800
        %v1327 = vpop.f32.mrb[0].mxu0
        %v1328 = vadd.f32 0.0, %v1327
        %v1329 = vpop.f32.mrb[0].mxu0
        %v1330 = vpop.f32.mrb[0].mxu0
        %v1331 = vadd.f32 0.0, %v1330
        %v1332 = vpop.f32.mrb[0].mxu0
        %1333 = vmatprep.mubr.bf16.mxu0 0
        %1334 = vmatmul.mubr.bf16.gmra.mrb[0].mxu0 %v803
        %v1335 = vpop.f32.mrb[0].mxu0
        %v1336 = vadd.f32 0.0, %v1335
        %v1337 = vpop.f32.mrb[0].mxu0
        %v1338 = vpop.f32.mrb[0].mxu0
        %v1339 = vadd.f32 0.0, %v1338
        %v1340 = vpop.f32.mrb[0].mxu0
        %1341 = vmatprep.mubr.bf16.mxu0 0
        %1342 = vmatmul.mubr.bf16.gmra.mrb[0].mxu0 %v806
        %v1343 = vpop.f32.mrb[0].mxu0
        %v1344 = vadd.f32 0.0, %v1343
        %v1345 = vpop.f32.mrb[0].mxu0
        %v1346 = vpop.f32.mrb[0].mxu0
        %v1347 = vadd.f32 0.0, %v1346
        %v1348 = vpop.f32.mrb[0].mxu0
        %1349 = vmatprep.mubr.bf16.mxu0 0
        %1350 = vmatmul.mubr.bf16.gmra.mrb[0].mxu0 %v809
        %v1351 = vpop.f32.mrb[0].mxu0
        %v1352 = vadd.f32 0.0, %v1351
        %v1353 = vpop.f32.mrb[0].mxu0
        %v1354 = vpop.f32.mrb[0].mxu0
        %v1355 = vadd.f32 0.0, %v1354
        %v1356 = vpop.f32.mrb[0].mxu0
        %1357 = vmatprep.mubr.bf16.mxu0 0
        %1358 = vmatmul.mubr.bf16.gmra.mrb[0].mxu0 %v812
        %v1359 = vpop.f32.mrb[0].mxu0
        %v1360 = vadd.f32 0.0, %v1359
        %v1361 = vpop.f32.mrb[0].mxu0
        %v1362 = vpop.f32.mrb[0].mxu0
        %v1363 = vadd.f32 0.0, %v1362
        %v1364 = vpop.f32.mrb[0].mxu0
        %1365 = vdwg.mxu0
        %v1367 = vsel %vm621, %v362, 0
        %v1370 = vsel %vm621, %v363, 0
        %v1373 = vsel %vm621, %v364, 0
        %v1376 = vsel %vm621, %v365, 0
        %v1379 = vsel %vm621, %v366, 0
        %v1382 = vsel %vm621, %v367, 0
        %v1385 = vsel %vm621, %v368, 0
        %v1388 = vsel %vm621, %v369, 0
        %v1391 = vsel %vm621, %v370, 0
        %v1394 = vsel %vm621, %v371, 0
        %v1397 = vsel %vm621, %v372, 0
        %v1400 = vsel %vm621, %v373, 0
        %v1403 = vsel %vm621, %v374, 0
        %v1406 = vsel %vm621, %v375, 0
        %v1409 = vsel %vm621, %v376, 0
        %v1412 = vsel %vm621, %v377, 0
        %v1415 = vsel %vm621, %v378, 0
        %v1418 = vsel %vm621, %v379, 0
        %v1421 = vsel %vm621, %v380, 0
        %v1424 = vsel %vm621, %v381, 0
        %v1427 = vsel %vm621, %v382, 0
        %v1430 = vsel %vm621, %v383, 0
        %v1433 = vsel %vm621, %v384, 0
        %v1436 = vsel %vm621, %v385, 0
        %v1439 = vsel %vm621, %v386, 0
        %v1442 = vsel %vm621, %v387, 0
        %v1445 = vsel %vm621, %v388, 0
        %v1448 = vsel %vm621, %v389, 0
        %v1451 = vsel %vm621, %v390, 0
        %v1454 = vsel %vm621, %v391, 0
        %v1457 = vsel %vm621, %v392, 0
        %v1460 = vsel %vm621, %v393, 0
        %v1463 = vsel %vm621, %v394, 0
        %v1466 = vsel %vm621, %v395, 0
        %v1469 = vsel %vm621, %v396, 0
        %v1472 = vsel %vm621, %v397, 0
        %v1475 = vsel %vm621, %v398, 0
        %v1478 = vsel %vm621, %v399, 0
        %v1481 = vsel %vm621, %v400, 0
        %v1484 = vsel %vm621, %v401, 0
        %v1487 = vsel %vm621, %v402, 0
        %v1490 = vsel %vm621, %v403, 0
        %v1493 = vsel %vm621, %v404, 0
        %v1496 = vsel %vm621, %v405, 0
        %v1499 = vsel %vm621, %v406, 0
        %v1502 = vsel %vm621, %v407, 0
        %v1505 = vsel %vm621, %v408, 0
        %v1508 = vsel %vm621, %v409, 0
        %v1511 = vsel %vm621, %v410, 0
        %v1514 = vsel %vm621, %v411, 0
        %v1517 = vsel %vm621, %v412, 0
        %v1520 = vsel %vm621, %v413, 0
        %v1523 = vsel %vm621, %v414, 0
        %v1526 = vsel %vm621, %v415, 0
        %v1529 = vsel %vm621, %v416, 0
        %v1532 = vsel %vm621, %v417, 0
        %v1535 = vsel %vm621, %v418, 0
        %v1538 = vsel %vm621, %v419, 0
        %v1541 = vsel %vm621, %v420, 0
        %v1544 = vsel %vm621, %v421, 0
        %v1547 = vsel %vm621, %v422, 0
        %v1550 = vsel %vm621, %v423, 0
        %v1553 = vsel %vm621, %v424, 0
        %v1556 = vsel %vm621, %v425, 0
        %v1559 = vand.u32 %v426, %v817
        %1561 = vmatprep.subr.bf16.mxu0 0
        %1562 = vmatpush1.bf16.msra.mxu0 %v1559
        %1563 = vmatprep.subr.bf16.mxu0 0
        %1564 = vmatpush1.bf16.msra.mxu0 0
        %1565 = vmatprep.subr.bf16.mxu0 0
        %1566 = vmatpush1.bf16.msra.mxu0 0
        %1567 = vmatprep.subr.bf16.mxu0 0
        %1568 = vmatpush1.bf16.msra.mxu0 0
        %1569 = vmatprep.subr.bf16.mxu0 0
        %1570 = vmatpush1.bf16.msra.mxu0 0
        %1571 = vmatprep.subr.bf16.mxu0 0
        %1572 = vmatpush1.bf16.msra.mxu0 0
        %1573 = vmatprep.subr.bf16.mxu0 0
        %1574 = vmatpush1.bf16.msra.mxu0 0
        %1575 = vmatprep.subr.bf16.mxu0 0
        %1576 = vmatpush1.bf16.msra.mxu0 0
        %1577 = vmatprep.subr.bf16.mxu0 0
        %1578 = vmatpush1.bf16.msra.mxu0 0
        %1579 = vmatprep.subr.bf16.mxu0 0
        %1580 = vmatpush1.bf16.msra.mxu0 0
        %1581 = vmatprep.subr.bf16.mxu0 0
        %1582 = vmatpush1.bf16.msra.mxu0 0
        %1583 = vmatprep.subr.bf16.mxu0 0
        %1584 = vmatpush1.bf16.msra.mxu0 0
        %1585 = vmatprep.subr.bf16.mxu0 0
        %1586 = vmatpush1.bf16.msra.mxu0 0
        %1587 = vmatprep.subr.bf16.mxu0 0
        %1588 = vmatpush1.bf16.msra.mxu0 0
        %1589 = vmatprep.subr.bf16.mxu0 0
        %1590 = vmatpush1.bf16.msra.mxu0 0
        %1591 = vmatprep.subr.bf16.mxu0 0
        %1592 = vmatpush1.bf16.msra.mxu0 0
        %1593 = vmatprep.mubr.bf16.mxu0 0
        %1594 = vmatmul.mubr.bf16.gmra.mrb[0].mxu0 %v1367
        %v1595 = vpop.f32.mrb[0].mxu0
        %v1596 = vadd.f32 %v856, %v1595
        %v1597 = vpop.f32.mrb[0].mxu0
        %v1598 = vpop.f32.mrb[0].mxu0
        %v1599 = vadd.f32 %v859, %v1598
        %v1600 = vpop.f32.mrb[0].mxu0
        %1601 = vmatprep.mubr.bf16.mxu0 0
        %1602 = vmatmul.mubr.bf16.gmra.mrb[0].mxu0 %v1370
        %v1603 = vpop.f32.mrb[0].mxu0
        %v1604 = vadd.f32 %v864, %v1603
        %v1605 = vpop.f32.mrb[0].mxu0
        %v1606 = vpop.f32.mrb[0].mxu0
        %v1607 = vadd.f32 %v867, %v1606
        %v1608 = vpop.f32.mrb[0].mxu0
        %1609 = vmatprep.mubr.bf16.mxu0 0
        %1610 = vmatmul.mubr.bf16.gmra.mrb[0].mxu0 %v1373
        %v1611 = vpop.f32.mrb[0].mxu0
        %v1612 = vadd.f32 %v872, %v1611
        %v1613 = vpop.f32.mrb[0].mxu0
        %v1614 = vpop.f32.mrb[0].mxu0
        %v1615 = vadd.f32 %v875, %v1614
        %v1616 = vpop.f32.mrb[0].mxu0
        %1617 = vmatprep.mubr.bf16.mxu0 0
        %1618 = vmatmul.mubr.bf16.gmra.mrb[0].mxu0 %v1376
        %v1619 = vpop.f32.mrb[0].mxu0
        %v1620 = vadd.f32 %v880, %v1619
        %v1621 = vpop.f32.mrb[0].mxu0
        %v1622 = vpop.f32.mrb[0].mxu0
        %v1623 = vadd.f32 %v883, %v1622
        %v1624 = vpop.f32.mrb[0].mxu0
        %1625 = vmatprep.mubr.bf16.mxu0 0
        %1626 = vmatmul.mubr.bf16.gmra.mrb[0].mxu0 %v1379
        %v1627 = vpop.f32.mrb[0].mxu0
        %v1628 = vadd.f32 %v888, %v1627
        %v1629 = vpop.f32.mrb[0].mxu0
        %v1630 = vpop.f32.mrb[0].mxu0
        %v1631 = vadd.f32 %v891, %v1630
        %v1632 = vpop.f32.mrb[0].mxu0
        %1633 = vmatprep.mubr.bf16.mxu0 0
        %1634 = vmatmul.mubr.bf16.gmra.mrb[0].mxu0 %v1382
        %v1635 = vpop.f32.mrb[0].mxu0
        %v1636 = vadd.f32 %v896, %v1635
        %v1637 = vpop.f32.mrb[0].mxu0
        %v1638 = vpop.f32.mrb[0].mxu0
        %v1639 = vadd.f32 %v899, %v1638
        %v1640 = vpop.f32.mrb[0].mxu0
        %1641 = vmatprep.mubr.bf16.mxu0 0
        %1642 = vmatmul.mubr.bf16.gmra.mrb[0].mxu0 %v1385
        %v1643 = vpop.f32.mrb[0].mxu0
        %v1644 = vadd.f32 %v904, %v1643
        %v1645 = vpop.f32.mrb[0].mxu0
        %v1646 = vpop.f32.mrb[0].mxu0
        %v1647 = vadd.f32 %v907, %v1646
        %v1648 = vpop.f32.mrb[0].mxu0
        %1649 = vmatprep.mubr.bf16.mxu0 0
        %1650 = vmatmul.mubr.bf16.gmra.mrb[0].mxu0 %v1388
        %v1651 = vpop.f32.mrb[0].mxu0
        %v1652 = vadd.f32 %v912, %v1651
        %v1653 = vpop.f32.mrb[0].mxu0
        %v1654 = vpop.f32.mrb[0].mxu0
        %v1655 = vadd.f32 %v915, %v1654
        %v1656 = vpop.f32.mrb[0].mxu0
        %1657 = vmatprep.mubr.bf16.mxu0 0
        %1658 = vmatmul.mubr.bf16.gmra.mrb[0].mxu0 %v1391
        %v1659 = vpop.f32.mrb[0].mxu0
        %v1660 = vadd.f32 %v920, %v1659
        %v1661 = vpop.f32.mrb[0].mxu0
        %v1662 = vpop.f32.mrb[0].mxu0
        %v1663 = vadd.f32 %v923, %v1662
        %v1664 = vpop.f32.mrb[0].mxu0
        %1665 = vmatprep.mubr.bf16.mxu0 0
        %1666 = vmatmul.mubr.bf16.gmra.mrb[0].mxu0 %v1394
        %v1667 = vpop.f32.mrb[0].mxu0
        %v1668 = vadd.f32 %v928, %v1667
        %v1669 = vpop.f32.mrb[0].mxu0
        %v1670 = vpop.f32.mrb[0].mxu0
        %v1671 = vadd.f32 %v931, %v1670
        %v1672 = vpop.f32.mrb[0].mxu0
        %1673 = vmatprep.mubr.bf16.mxu0 0
        %1674 = vmatmul.mubr.bf16.gmra.mrb[0].mxu0 %v1397
        %v1675 = vpop.f32.mrb[0].mxu0
        %v1676 = vadd.f32 %v936, %v1675
        %v1677 = vpop.f32.mrb[0].mxu0
        %v1678 = vpop.f32.mrb[0].mxu0
        %v1679 = vadd.f32 %v939, %v1678
        %v1680 = vpop.f32.mrb[0].mxu0
        %1681 = vmatprep.mubr.bf16.mxu0 0
        %1682 = vmatmul.mubr.bf16.gmra.mrb[0].mxu0 %v1400
        %v1683 = vpop.f32.mrb[0].mxu0
        %v1684 = vadd.f32 %v944, %v1683
        %v1685 = vpop.f32.mrb[0].mxu0
        %v1686 = vpop.f32.mrb[0].mxu0
        %v1687 = vadd.f32 %v947, %v1686
        %v1688 = vpop.f32.mrb[0].mxu0
        %1689 = vmatprep.mubr.bf16.mxu0 0
        %1690 = vmatmul.mubr.bf16.gmra.mrb[0].mxu0 %v1403
        %v1691 = vpop.f32.mrb[0].mxu0
        %v1692 = vadd.f32 %v952, %v1691
        %v1693 = vpop.f32.mrb[0].mxu0
        %v1694 = vpop.f32.mrb[0].mxu0
        %v1695 = vadd.f32 %v955, %v1694
        %v1696 = vpop.f32.mrb[0].mxu0
        %1697 = vmatprep.mubr.bf16.mxu0 0
        %1698 = vmatmul.mubr.bf16.gmra.mrb[0].mxu0 %v1406
        %v1699 = vpop.f32.mrb[0].mxu0
        %v1700 = vadd.f32 %v960, %v1699
        %v1701 = vpop.f32.mrb[0].mxu0
        %v1702 = vpop.f32.mrb[0].mxu0
        %v1703 = vadd.f32 %v963, %v1702
        %v1704 = vpop.f32.mrb[0].mxu0
        %1705 = vmatprep.mubr.bf16.mxu0 0
        %1706 = vmatmul.mubr.bf16.gmra.mrb[0].mxu0 %v1409
        %v1707 = vpop.f32.mrb[0].mxu0
        %v1708 = vadd.f32 %v968, %v1707
        %v1709 = vpop.f32.mrb[0].mxu0
        %v1710 = vpop.f32.mrb[0].mxu0
        %v1711 = vadd.f32 %v971, %v1710
        %v1712 = vpop.f32.mrb[0].mxu0
        %1713 = vmatprep.mubr.bf16.mxu0 0
        %1714 = vmatmul.mubr.bf16.gmra.mrb[0].mxu0 %v1412
        %v1715 = vpop.f32.mrb[0].mxu0
        %v1716 = vadd.f32 %v976, %v1715
        %v1717 = vpop.f32.mrb[0].mxu0
        %v1718 = vpop.f32.mrb[0].mxu0
        %v1719 = vadd.f32 %v979, %v1718
        %v1720 = vpop.f32.mrb[0].mxu0
        %1721 = vmatprep.mubr.bf16.mxu0 0
        %1722 = vmatmul.mubr.bf16.gmra.mrb[0].mxu0 %v1415
        %v1723 = vpop.f32.mrb[0].mxu0
        %v1724 = vadd.f32 %v984, %v1723
        %v1725 = vpop.f32.mrb[0].mxu0
        %v1726 = vpop.f32.mrb[0].mxu0
        %v1727 = vadd.f32 %v987, %v1726
        %v1728 = vpop.f32.mrb[0].mxu0
        %1729 = vmatprep.mubr.bf16.mxu0 0
        %1730 = vmatmul.mubr.bf16.gmra.mrb[0].mxu0 %v1418
        %v1731 = vpop.f32.mrb[0].mxu0
        %v1732 = vadd.f32 %v992, %v1731
        %v1733 = vpop.f32.mrb[0].mxu0
        %v1734 = vpop.f32.mrb[0].mxu0
        %v1735 = vadd.f32 %v995, %v1734
        %v1736 = vpop.f32.mrb[0].mxu0
        %1737 = vmatprep.mubr.bf16.mxu0 0
        %1738 = vmatmul.mubr.bf16.gmra.mrb[0].mxu0 %v1421
        %v1739 = vpop.f32.mrb[0].mxu0
        %v1740 = vadd.f32 %v1000, %v1739
        %v1741 = vpop.f32.mrb[0].mxu0
        %v1742 = vpop.f32.mrb[0].mxu0
        %v1743 = vadd.f32 %v1003, %v1742
        %v1744 = vpop.f32.mrb[0].mxu0
        %1745 = vmatprep.mubr.bf16.mxu0 0
        %1746 = vmatmul.mubr.bf16.gmra.mrb[0].mxu0 %v1424
        %v1747 = vpop.f32.mrb[0].mxu0
        %v1748 = vadd.f32 %v1008, %v1747
        %v1749 = vpop.f32.mrb[0].mxu0
        %v1750 = vpop.f32.mrb[0].mxu0
        %v1751 = vadd.f32 %v1011, %v1750
        %v1752 = vpop.f32.mrb[0].mxu0
        %1753 = vmatprep.mubr.bf16.mxu0 0
        %1754 = vmatmul.mubr.bf16.gmra.mrb[0].mxu0 %v1427
        %v1755 = vpop.f32.mrb[0].mxu0
        %v1756 = vadd.f32 %v1016, %v1755
        %v1757 = vpop.f32.mrb[0].mxu0
        %v1758 = vpop.f32.mrb[0].mxu0
        %v1759 = vadd.f32 %v1019, %v1758
        %v1760 = vpop.f32.mrb[0].mxu0
        %1761 = vmatprep.mubr.bf16.mxu0 0
        %1762 = vmatmul.mubr.bf16.gmra.mrb[0].mxu0 %v1430
        %v1763 = vpop.f32.mrb[0].mxu0
        %v1764 = vadd.f32 %v1024, %v1763
        %v1765 = vpop.f32.mrb[0].mxu0
        %v1766 = vpop.f32.mrb[0].mxu0
        %v1767 = vadd.f32 %v1027, %v1766
        %v1768 = vpop.f32.mrb[0].mxu0
        %1769 = vmatprep.mubr.bf16.mxu0 0
        %1770 = vmatmul.mubr.bf16.gmra.mrb[0].mxu0 %v1433
        %v1771 = vpop.f32.mrb[0].mxu0
        %v1772 = vadd.f32 %v1032, %v1771
        %v1773 = vpop.f32.mrb[0].mxu0
        %v1774 = vpop.f32.mrb[0].mxu0
        %v1775 = vadd.f32 %v1035, %v1774
        %v1776 = vpop.f32.mrb[0].mxu0
        %1777 = vmatprep.mubr.bf16.mxu0 0
        %1778 = vmatmul.mubr.bf16.gmra.mrb[0].mxu0 %v1436
        %v1779 = vpop.f32.mrb[0].mxu0
        %v1780 = vadd.f32 %v1040, %v1779
        %v1781 = vpop.f32.mrb[0].mxu0
        %v1782 = vpop.f32.mrb[0].mxu0
        %v1783 = vadd.f32 %v1043, %v1782
        %v1784 = vpop.f32.mrb[0].mxu0
        %1785 = vmatprep.mubr.bf16.mxu0 0
        %1786 = vmatmul.mubr.bf16.gmra.mrb[0].mxu0 %v1439
        %v1787 = vpop.f32.mrb[0].mxu0
        %v1788 = vadd.f32 %v1048, %v1787
        %v1789 = vpop.f32.mrb[0].mxu0
        %v1790 = vpop.f32.mrb[0].mxu0
        %v1791 = vadd.f32 %v1051, %v1790
        %v1792 = vpop.f32.mrb[0].mxu0
        %1793 = vmatprep.mubr.bf16.mxu0 0
        %1794 = vmatmul.mubr.bf16.gmra.mrb[0].mxu0 %v1442
        %v1795 = vpop.f32.mrb[0].mxu0
        %v1796 = vadd.f32 %v1056, %v1795
        %v1797 = vpop.f32.mrb[0].mxu0
        %v1798 = vpop.f32.mrb[0].mxu0
        %v1799 = vadd.f32 %v1059, %v1798
        %v1800 = vpop.f32.mrb[0].mxu0
        %1801 = vmatprep.mubr.bf16.mxu0 0
        %1802 = vmatmul.mubr.bf16.gmra.mrb[0].mxu0 %v1445
        %v1803 = vpop.f32.mrb[0].mxu0
        %v1804 = vadd.f32 %v1064, %v1803
        %v1805 = vpop.f32.mrb[0].mxu0
        %v1806 = vpop.f32.mrb[0].mxu0
        %v1807 = vadd.f32 %v1067, %v1806
        %v1808 = vpop.f32.mrb[0].mxu0
        %1809 = vmatprep.mubr.bf16.mxu0 0
        %1810 = vmatmul.mubr.bf16.gmra.mrb[0].mxu0 %v1448
        %v1811 = vpop.f32.mrb[0].mxu0
        %v1812 = vadd.f32 %v1072, %v1811
        %v1813 = vpop.f32.mrb[0].mxu0
        %v1814 = vpop.f32.mrb[0].mxu0
        %v1815 = vadd.f32 %v1075, %v1814
        %v1816 = vpop.f32.mrb[0].mxu0
        %1817 = vmatprep.mubr.bf16.mxu0 0
        %1818 = vmatmul.mubr.bf16.gmra.mrb[0].mxu0 %v1451
        %v1819 = vpop.f32.mrb[0].mxu0
        %v1820 = vadd.f32 %v1080, %v1819
        %v1821 = vpop.f32.mrb[0].mxu0
        %v1822 = vpop.f32.mrb[0].mxu0
        %v1823 = vadd.f32 %v1083, %v1822
        %v1824 = vpop.f32.mrb[0].mxu0
        %1825 = vmatprep.mubr.bf16.mxu0 0
        %1826 = vmatmul.mubr.bf16.gmra.mrb[0].mxu0 %v1454
        %v1827 = vpop.f32.mrb[0].mxu0
        %v1828 = vadd.f32 %v1088, %v1827
        %v1829 = vpop.f32.mrb[0].mxu0
        %v1830 = vpop.f32.mrb[0].mxu0
        %v1831 = vadd.f32 %v1091, %v1830
        %v1832 = vpop.f32.mrb[0].mxu0
        %1833 = vmatprep.mubr.bf16.mxu0 0
        %1834 = vmatmul.mubr.bf16.gmra.mrb[0].mxu0 %v1457
        %v1835 = vpop.f32.mrb[0].mxu0
        %v1836 = vadd.f32 %v1096, %v1835
        %v1837 = vpop.f32.mrb[0].mxu0
        %v1838 = vpop.f32.mrb[0].mxu0
        %v1839 = vadd.f32 %v1099, %v1838
        %v1840 = vpop.f32.mrb[0].mxu0
        %1841 = vmatprep.mubr.bf16.mxu0 0
        %1842 = vmatmul.mubr.bf16.gmra.mrb[0].mxu0 %v1460
        %v1843 = vpop.f32.mrb[0].mxu0
        %v1844 = vadd.f32 %v1104, %v1843
        %v1845 = vpop.f32.mrb[0].mxu0
        %v1846 = vpop.f32.mrb[0].mxu0
        %v1847 = vadd.f32 %v1107, %v1846
        %v1848 = vpop.f32.mrb[0].mxu0
        %1849 = vmatprep.mubr.bf16.mxu0 0
        %1850 = vmatmul.mubr.bf16.gmra.mrb[0].mxu0 %v1463
        %v1851 = vpop.f32.mrb[0].mxu0
        %v1852 = vadd.f32 %v1112, %v1851
        %v1853 = vpop.f32.mrb[0].mxu0
        %v1854 = vpop.f32.mrb[0].mxu0
        %v1855 = vadd.f32 %v1115, %v1854
        %v1856 = vpop.f32.mrb[0].mxu0
        %1857 = vmatprep.mubr.bf16.mxu0 0
        %1858 = vmatmul.mubr.bf16.gmra.mrb[0].mxu0 %v1466
        %v1859 = vpop.f32.mrb[0].mxu0
        %v1860 = vadd.f32 %v1120, %v1859
        %v1861 = vpop.f32.mrb[0].mxu0
        %v1862 = vpop.f32.mrb[0].mxu0
        %v1863 = vadd.f32 %v1123, %v1862
        %v1864 = vpop.f32.mrb[0].mxu0
        %1865 = vmatprep.mubr.bf16.mxu0 0
        %1866 = vmatmul.mubr.bf16.gmra.mrb[0].mxu0 %v1469
        %v1867 = vpop.f32.mrb[0].mxu0
        %v1868 = vadd.f32 %v1128, %v1867
        %v1869 = vpop.f32.mrb[0].mxu0
        %v1870 = vpop.f32.mrb[0].mxu0
        %v1871 = vadd.f32 %v1131, %v1870
        %v1872 = vpop.f32.mrb[0].mxu0
        %1873 = vmatprep.mubr.bf16.mxu0 0
        %1874 = vmatmul.mubr.bf16.gmra.mrb[0].mxu0 %v1472
        %v1875 = vpop.f32.mrb[0].mxu0
        %v1876 = vadd.f32 %v1136, %v1875
        %v1877 = vpop.f32.mrb[0].mxu0
        %v1878 = vpop.f32.mrb[0].mxu0
        %v1879 = vadd.f32 %v1139, %v1878
        %v1880 = vpop.f32.mrb[0].mxu0
        %1881 = vmatprep.mubr.bf16.mxu0 0
        %1882 = vmatmul.mubr.bf16.gmra.mrb[0].mxu0 %v1475
        %v1883 = vpop.f32.mrb[0].mxu0
        %v1884 = vadd.f32 %v1144, %v1883
        %v1885 = vpop.f32.mrb[0].mxu0
        %v1886 = vpop.f32.mrb[0].mxu0
        %v1887 = vadd.f32 %v1147, %v1886
        %v1888 = vpop.f32.mrb[0].mxu0
        %1889 = vmatprep.mubr.bf16.mxu0 0
        %1890 = vmatmul.mubr.bf16.gmra.mrb[0].mxu0 %v1478
        %v1891 = vpop.f32.mrb[0].mxu0
        %v1892 = vadd.f32 %v1152, %v1891
        %v1893 = vpop.f32.mrb[0].mxu0
        %v1894 = vpop.f32.mrb[0].mxu0
        %v1895 = vadd.f32 %v1155, %v1894
        %v1896 = vpop.f32.mrb[0].mxu0
        %1897 = vmatprep.mubr.bf16.mxu0 0
        %1898 = vmatmul.mubr.bf16.gmra.mrb[0].mxu0 %v1481
        %v1899 = vpop.f32.mrb[0].mxu0
        %v1900 = vadd.f32 %v1160, %v1899
        %v1901 = vpop.f32.mrb[0].mxu0
        %v1902 = vpop.f32.mrb[0].mxu0
        %v1903 = vadd.f32 %v1163, %v1902
        %v1904 = vpop.f32.mrb[0].mxu0
        %1905 = vmatprep.mubr.bf16.mxu0 0
        %1906 = vmatmul.mubr.bf16.gmra.mrb[0].mxu0 %v1484
        %v1907 = vpop.f32.mrb[0].mxu0
        %v1908 = vadd.f32 %v1168, %v1907
        %v1909 = vpop.f32.mrb[0].mxu0
        %v1910 = vpop.f32.mrb[0].mxu0
        %v1911 = vadd.f32 %v1171, %v1910
        %v1912 = vpop.f32.mrb[0].mxu0
        %1913 = vmatprep.mubr.bf16.mxu0 0
        %1914 = vmatmul.mubr.bf16.gmra.mrb[0].mxu0 %v1487
        %v1915 = vpop.f32.mrb[0].mxu0
        %v1916 = vadd.f32 %v1176, %v1915
        %v1917 = vpop.f32.mrb[0].mxu0
        %v1918 = vpop.f32.mrb[0].mxu0
        %v1919 = vadd.f32 %v1179, %v1918
        %v1920 = vpop.f32.mrb[0].mxu0
        %1921 = vmatprep.mubr.bf16.mxu0 0
        %1922 = vmatmul.mubr.bf16.gmra.mrb[0].mxu0 %v1490
        %v1923 = vpop.f32.mrb[0].mxu0
        %v1924 = vadd.f32 %v1184, %v1923
        %v1925 = vpop.f32.mrb[0].mxu0
        %v1926 = vpop.f32.mrb[0].mxu0
        %v1927 = vadd.f32 %v1187, %v1926
        %v1928 = vpop.f32.mrb[0].mxu0
        %1929 = vmatprep.mubr.bf16.mxu0 0
        %1930 = vmatmul.mubr.bf16.gmra.mrb[0].mxu0 %v1493
        %v1931 = vpop.f32.mrb[0].mxu0
        %v1932 = vadd.f32 %v1192, %v1931
        %v1933 = vpop.f32.mrb[0].mxu0
        %v1934 = vpop.f32.mrb[0].mxu0
        %v1935 = vadd.f32 %v1195, %v1934
        %v1936 = vpop.f32.mrb[0].mxu0
        %1937 = vmatprep.mubr.bf16.mxu0 0
        %1938 = vmatmul.mubr.bf16.gmra.mrb[0].mxu0 %v1496
        %v1939 = vpop.f32.mrb[0].mxu0
        %v1940 = vadd.f32 %v1200, %v1939
        %v1941 = vpop.f32.mrb[0].mxu0
        %v1942 = vpop.f32.mrb[0].mxu0
        %v1943 = vadd.f32 %v1203, %v1942
        %v1944 = vpop.f32.mrb[0].mxu0
        %1945 = vmatprep.mubr.bf16.mxu0 0
        %1946 = vmatmul.mubr.bf16.gmra.mrb[0].mxu0 %v1499
        %v1947 = vpop.f32.mrb[0].mxu0
        %v1948 = vadd.f32 %v1208, %v1947
        %v1949 = vpop.f32.mrb[0].mxu0
        %v1950 = vpop.f32.mrb[0].mxu0
        %v1951 = vadd.f32 %v1211, %v1950
        %v1952 = vpop.f32.mrb[0].mxu0
        %1953 = vmatprep.mubr.bf16.mxu0 0
        %1954 = vmatmul.mubr.bf16.gmra.mrb[0].mxu0 %v1502
        %v1955 = vpop.f32.mrb[0].mxu0
        %v1956 = vadd.f32 %v1216, %v1955
        %v1957 = vpop.f32.mrb[0].mxu0
        %v1958 = vpop.f32.mrb[0].mxu0
        %v1959 = vadd.f32 %v1219, %v1958
        %v1960 = vpop.f32.mrb[0].mxu0
        %1961 = vmatprep.mubr.bf16.mxu0 0
        %1962 = vmatmul.mubr.bf16.gmra.mrb[0].mxu0 %v1505
        %v1963 = vpop.f32.mrb[0].mxu0
        %v1964 = vadd.f32 %v1224, %v1963
        %v1965 = vpop.f32.mrb[0].mxu0
        %v1966 = vpop.f32.mrb[0].mxu0
        %v1967 = vadd.f32 %v1227, %v1966
        %v1968 = vpop.f32.mrb[0].mxu0
        %1969 = vmatprep.mubr.bf16.mxu0 0
        %1970 = vmatmul.mubr.bf16.gmra.mrb[0].mxu0 %v1508
        %v1971 = vpop.f32.mrb[0].mxu0
        %v1972 = vadd.f32 %v1232, %v1971
        %v1973 = vpop.f32.mrb[0].mxu0
        %v1974 = vpop.f32.mrb[0].mxu0
        %v1975 = vadd.f32 %v1235, %v1974
        %v1976 = vpop.f32.mrb[0].mxu0
        %1977 = vmatprep.mubr.bf16.mxu0 0
        %1978 = vmatmul.mubr.bf16.gmra.mrb[0].mxu0 %v1511
        %v1979 = vpop.f32.mrb[0].mxu0
        %v1980 = vadd.f32 %v1240, %v1979
        %v1981 = vpop.f32.mrb[0].mxu0
        %v1982 = vpop.f32.mrb[0].mxu0
        %v1983 = vadd.f32 %v1243, %v1982
        %v1984 = vpop.f32.mrb[0].mxu0
        %1985 = vmatprep.mubr.bf16.mxu0 0
        %1986 = vmatmul.mubr.bf16.gmra.mrb[0].mxu0 %v1514
        %v1987 = vpop.f32.mrb[0].mxu0
        %v1988 = vadd.f32 %v1248, %v1987
        %v1989 = vpop.f32.mrb[0].mxu0
        %v1990 = vpop.f32.mrb[0].mxu0
        %v1991 = vadd.f32 %v1251, %v1990
        %v1992 = vpop.f32.mrb[0].mxu0
        %1993 = vmatprep.mubr.bf16.mxu0 0
        %1994 = vmatmul.mubr.bf16.gmra.mrb[0].mxu0 %v1517
        %v1995 = vpop.f32.mrb[0].mxu0
        %v1996 = vadd.f32 %v1256, %v1995
        %v1997 = vpop.f32.mrb[0].mxu0
        %v1998 = vpop.f32.mrb[0].mxu0
        %v1999 = vadd.f32 %v1259, %v1998
        %v2000 = vpop.f32.mrb[0].mxu0
        %2001 = vmatprep.mubr.bf16.mxu0 0
        %2002 = vmatmul.mubr.bf16.gmra.mrb[0].mxu0 %v1520
        %v2003 = vpop.f32.mrb[0].mxu0
        %v2004 = vadd.f32 %v1264, %v2003
        %v2005 = vpop.f32.mrb[0].mxu0
        %v2006 = vpop.f32.mrb[0].mxu0
        %v2007 = vadd.f32 %v1267, %v2006
        %v2008 = vpop.f32.mrb[0].mxu0
        %2009 = vmatprep.mubr.bf16.mxu0 0
        %2010 = vmatmul.mubr.bf16.gmra.mrb[0].mxu0 %v1523
        %v2011 = vpop.f32.mrb[0].mxu0
        %v2012 = vadd.f32 %v1272, %v2011
        %v2013 = vpop.f32.mrb[0].mxu0
        %v2014 = vpop.f32.mrb[0].mxu0
        %v2015 = vadd.f32 %v1275, %v2014
        %v2016 = vpop.f32.mrb[0].mxu0
        %2017 = vmatprep.mubr.bf16.mxu0 0
        %2018 = vmatmul.mubr.bf16.gmra.mrb[0].mxu0 %v1526
        %v2019 = vpop.f32.mrb[0].mxu0
        %v2020 = vadd.f32 %v1280, %v2019
        %v2021 = vpop.f32.mrb[0].mxu0
        %v2022 = vpop.f32.mrb[0].mxu0
        %v2023 = vadd.f32 %v1283, %v2022
        %v2024 = vpop.f32.mrb[0].mxu0
        %2025 = vmatprep.mubr.bf16.mxu0 0
        %2026 = vmatmul.mubr.bf16.gmra.mrb[0].mxu0 %v1529
        %v2027 = vpop.f32.mrb[0].mxu0
        %v2028 = vadd.f32 %v1288, %v2027
        %v2029 = vpop.f32.mrb[0].mxu0
        %v2030 = vpop.f32.mrb[0].mxu0
        %v2031 = vadd.f32 %v1291, %v2030
        %v2032 = vpop.f32.mrb[0].mxu0
        %2033 = vmatprep.mubr.bf16.mxu0 0
        %2034 = vmatmul.mubr.bf16.gmra.mrb[0].mxu0 %v1532
        %v2035 = vpop.f32.mrb[0].mxu0
        %v2036 = vadd.f32 %v1296, %v2035
        %v2037 = vpop.f32.mrb[0].mxu0
        %v2038 = vpop.f32.mrb[0].mxu0
        %v2039 = vadd.f32 %v1299, %v2038
        %v2040 = vpop.f32.mrb[0].mxu0
        %2041 = vmatprep.mubr.bf16.mxu0 0
        %2042 = vmatmul.mubr.bf16.gmra.mrb[0].mxu0 %v1535
        %v2043 = vpop.f32.mrb[0].mxu0
        %v2044 = vadd.f32 %v1304, %v2043
        %v2045 = vpop.f32.mrb[0].mxu0
        %v2046 = vpop.f32.mrb[0].mxu0
        %v2047 = vadd.f32 %v1307, %v2046
        %v2048 = vpop.f32.mrb[0].mxu0
        %2049 = vmatprep.mubr.bf16.mxu0 0
        %2050 = vmatmul.mubr.bf16.gmra.mrb[0].mxu0 %v1538
        %v2051 = vpop.f32.mrb[0].mxu0
        %v2052 = vadd.f32 %v1312, %v2051
        %v2053 = vpop.f32.mrb[0].mxu0
        %v2054 = vpop.f32.mrb[0].mxu0
        %v2055 = vadd.f32 %v1315, %v2054
        %v2056 = vpop.f32.mrb[0].mxu0
        %2057 = vmatprep.mubr.bf16.mxu0 0
        %2058 = vmatmul.mubr.bf16.gmra.mrb[0].mxu0 %v1541
        %v2059 = vpop.f32.mrb[0].mxu0
        %v2060 = vadd.f32 %v1320, %v2059
        %v2061 = vpop.f32.mrb[0].mxu0
        %v2062 = vpop.f32.mrb[0].mxu0
        %v2063 = vadd.f32 %v1323, %v2062
        %v2064 = vpop.f32.mrb[0].mxu0
        %2065 = vmatprep.mubr.bf16.mxu0 0
        %2066 = vmatmul.mubr.bf16.gmra.mrb[0].mxu0 %v1544
        %v2067 = vpop.f32.mrb[0].mxu0
        %v2068 = vadd.f32 %v1328, %v2067
        %v2069 = vpop.f32.mrb[0].mxu0
        %v2070 = vpop.f32.mrb[0].mxu0
        %v2071 = vadd.f32 %v1331, %v2070
        %v2072 = vpop.f32.mrb[0].mxu0
        %2073 = vmatprep.mubr.bf16.mxu0 0
        %2074 = vmatmul.mubr.bf16.gmra.mrb[0].mxu0 %v1547
        %v2075 = vpop.f32.mrb[0].mxu0
        %v2076 = vadd.f32 %v1336, %v2075
        %v2077 = vpop.f32.mrb[0].mxu0
        %v2078 = vpop.f32.mrb[0].mxu0
        %v2079 = vadd.f32 %v1339, %v2078
        %v2080 = vpop.f32.mrb[0].mxu0
        %2081 = vmatprep.mubr.bf16.mxu0 0
        %2082 = vmatmul.mubr.bf16.gmra.mrb[0].mxu0 %v1550
        %v2083 = vpop.f32.mrb[0].mxu0
        %v2084 = vadd.f32 %v1344, %v2083
        %v2085 = vpop.f32.mrb[0].mxu0
        %v2086 = vpop.f32.mrb[0].mxu0
        %v2087 = vadd.f32 %v1347, %v2086
        %v2088 = vpop.f32.mrb[0].mxu0
        %2089 = vmatprep.mubr.bf16.mxu0 0
        %2090 = vmatmul.mubr.bf16.gmra.mrb[0].mxu0 %v1553
        %v2091 = vpop.f32.mrb[0].mxu0
        %v2092 = vadd.f32 %v1352, %v2091
        %v2093 = vpop.f32.mrb[0].mxu0
        %v2094 = vpop.f32.mrb[0].mxu0
        %v2095 = vadd.f32 %v1355, %v2094
        %v2096 = vpop.f32.mrb[0].mxu0
        %2097 = vmatprep.mubr.bf16.mxu0 0
        %2098 = vmatmul.mubr.bf16.gmra.mrb[0].mxu0 %v1556
        %v2099 = vpop.f32.mrb[0].mxu0
        %v2100 = vadd.f32 %v1360, %v2099
        %v2101 = vpop.f32.mrb[0].mxu0
        %v2102 = vpop.f32.mrb[0].mxu0
        %v2103 = vadd.f32 %v1363, %v2102
        %v2104 = vpop.f32.mrb[0].mxu0
        %2105 = vdwg.mxu0
        %v2106 = vld [vmem:[%s228 + $0x2] sm:$0xff]
        %v2107 = vld [vmem:[%s228 + $0xa] sm:$0xff]
        %v2108 = vld [vmem:[%s228 + $0x12] sm:$0xff]
        %v2109 = vld [vmem:[%s228 + $0x1a] sm:$0xff]
        %v2110 = vld [vmem:[%s228 + $0x2a] sm:$0xff]
        %v2111 = vld [vmem:[%s228 + $0x32] sm:$0xff]
        %v2112 = vld [vmem:[%s228 + $0x3a] sm:$0xff]
        %v2113 = vld [vmem:[%s228 + $0x42] sm:$0xff]
        %v2114 = vld [vmem:[%s228 + $0x52] sm:$0xff]
        %v2115 = vld [vmem:[%s228 + $0x5a] sm:$0xff]
        %v2116 = vld [vmem:[%s228 + $0x62] sm:$0xff]
        %v2117 = vld [vmem:[%s228 + $0x6a] sm:$0xff]
        %v2118 = vld [vmem:[%s228 + $0x7a] sm:$0xff]
        %v2119 = vld [vmem:[%s228 + $0x82] sm:$0xff]
        %v2120 = vld [vmem:[%s228 + $0x8a] sm:$0xff]
        %v2121 = vld [vmem:[%s228 + $0x92] sm:$0xff]
        %v2122 = vld [vmem:[%s228 + $0xa2] sm:$0xff]
        %v2123 = vld [vmem:[%s228 + $0xaa] sm:$0xff]
        %v2124 = vld [vmem:[%s228 + $0xb2] sm:$0xff]
        %v2125 = vld [vmem:[%s228 + $0xba] sm:$0xff]
        %v2126 = vld [vmem:[%s228 + $0xca] sm:$0xff]
        %v2127 = vld [vmem:[%s228 + $0xd2] sm:$0xff]
        %v2128 = vld [vmem:[%s228 + $0xda] sm:$0xff]
        %v2129 = vld [vmem:[%s228 + $0xe2] sm:$0xff]
        %v2130 = vld [vmem:[%s228 + $0xf2] sm:$0xff]
        %v2131 = vld [vmem:[%s228 + $0xfa] sm:$0xff]
        %v2132 = vld [vmem:[%s228 + $0x102] sm:$0xff]
        %v2133 = vld [vmem:[%s228 + $0x10a] sm:$0xff]
        %v2134 = vld [vmem:[%s228 + $0x11a] sm:$0xff]
        %v2135 = vld [vmem:[%s228 + $0x122] sm:$0xff]
        %v2136 = vld [vmem:[%s228 + $0x12a] sm:$0xff]
        %v2137 = vld [vmem:[%s228 + $0x132] sm:$0xff]
        %v2138 = vld [vmem:[%s228 + $0x142] sm:$0xff]
        %v2139 = vld [vmem:[%s228 + $0x14a] sm:$0xff]
        %v2140 = vld [vmem:[%s228 + $0x152] sm:$0xff]
        %v2141 = vld [vmem:[%s228 + $0x15a] sm:$0xff]
        %v2142 = vld [vmem:[%s228 + $0x16a] sm:$0xff]
        %v2143 = vld [vmem:[%s228 + $0x172] sm:$0xff]
        %v2144 = vld [vmem:[%s228 + $0x17a] sm:$0xff]
        %v2145 = vld [vmem:[%s228 + $0x182] sm:$0xff]
        %v2146 = vld [vmem:[%s228 + $0x192] sm:$0xff]
        %v2147 = vld [vmem:[%s228 + $0x19a] sm:$0xff]
        %v2148 = vld [vmem:[%s228 + $0x1a2] sm:$0xff]
        %v2149 = vld [vmem:[%s228 + $0x1aa] sm:$0xff]
        %v2150 = vld [vmem:[%s228 + $0x1ba] sm:$0xff]
        %v2151 = vld [vmem:[%s228 + $0x1c2] sm:$0xff]
        %v2152 = vld [vmem:[%s228 + $0x1ca] sm:$0xff]
        %v2153 = vld [vmem:[%s228 + $0x1d2] sm:$0xff]
        %v2154 = vld [vmem:[%s228 + $0x1e2] sm:$0xff]
        %v2155 = vld [vmem:[%s228 + $0x1ea] sm:$0xff]
        %v2156 = vld [vmem:[%s228 + $0x1f2] sm:$0xff]
        %v2157 = vld [vmem:[%s228 + $0x1fa] sm:$0xff]
        %v2158 = vld [vmem:[%s228 + $0x20a] sm:$0xff]
        %v2159 = vld [vmem:[%s228 + $0x212] sm:$0xff]
        %v2160 = vld [vmem:[%s228 + $0x21a] sm:$0xff]
        %v2161 = vld [vmem:[%s228 + $0x222] sm:$0xff]
        %v2162 = vld [vmem:[%s228 + $0x232] sm:$0xff]
        %v2163 = vld [vmem:[%s228 + $0x23a] sm:$0xff]
        %v2164 = vld [vmem:[%s228 + $0x242] sm:$0xff]
        %v2165 = vld [vmem:[%s228 + $0x24a] sm:$0xff]
        %v2166 = vld [vmem:[%s228 + $0x25a] sm:$0xff]
        %v2167 = vld [vmem:[%s228 + $0x262] sm:$0xff]
        %v2168 = vld [vmem:[%s228 + $0x26a] sm:$0xff]
        %v2169 = vld [vmem:[%s228 + $0x272] sm:$0xff]
        %v2170 = vld [vmem:[%s228 + $0x282] sm:$0xff]
        %v2171 = vld [vmem:[%s228 + $0x28a] sm:$0xff]
        %v2172 = vld [vmem:[%s228 + $0x292] sm:$0xff]
        %v2173 = vld [vmem:[%s228 + $0x29a] sm:$0xff]
        %v2174 = vld [vmem:[%s228 + $0x2aa] sm:$0xff]
        %v2175 = vld [vmem:[%s228 + $0x2b2] sm:$0xff]
        %v2176 = vld [vmem:[%s228 + $0x2ba] sm:$0xff]
        %v2177 = vld [vmem:[%s228 + $0x2c2] sm:$0xff]
        %v2178 = vld [vmem:[%s228 + $0x2d2] sm:$0xff]
        %v2179 = vld [vmem:[%s228 + $0x2da] sm:$0xff]
        %v2180 = vld [vmem:[%s228 + $0x2e2] sm:$0xff]
        %v2181 = vld [vmem:[%s228 + $0x2ea] sm:$0xff]
        %v2182 = vld [vmem:[%s228 + $0x2fa] sm:$0xff]
        %v2183 = vld [vmem:[%s228 + $0x302] sm:$0xff]
        %v2184 = vld [vmem:[%s228 + $0x30a] sm:$0xff]
        %v2185 = vld [vmem:[%s228 + $0x312] sm:$0xff]
        %v2186 = vld [vmem:[%s228 + $0x322] sm:$0xff]
        %v2187 = vld [vmem:[%s228 + $0x32a] sm:$0xff]
        %v2188 = vld [vmem:[%s228 + $0x332] sm:$0xff]
        %v2189 = vld [vmem:[%s228 + $0x33a] sm:$0xff]
        %v2190 = vld [vmem:[%s228 + $0x34a] sm:$0xff]
        %v2191 = vld [vmem:[%s228 + $0x352] sm:$0xff]
        %v2192 = vld [vmem:[%s228 + $0x35a] sm:$0xff]
        %v2193 = vld [vmem:[%s228 + $0x362] sm:$0xff]
        %v2194 = vld [vmem:[%s228 + $0x372] sm:$0xff]
        %v2195 = vld [vmem:[%s228 + $0x37a] sm:$0xff]
        %v2196 = vld [vmem:[%s228 + $0x382] sm:$0xff]
        %v2197 = vld [vmem:[%s228 + $0x38a] sm:$0xff]
        %v2198 = vld [vmem:[%s228 + $0x39a] sm:$0xff]
        %v2199 = vld [vmem:[%s228 + $0x3a2] sm:$0xff]
        %v2200 = vld [vmem:[%s228 + $0x3aa] sm:$0xff]
        %v2201 = vld [vmem:[%s228 + $0x3b2] sm:$0xff]
        %v2202 = vld [vmem:[%s228 + $0x3c2] sm:$0xff]
        %v2203 = vld [vmem:[%s228 + $0x3ca] sm:$0xff]
        %v2204 = vld [vmem:[%s228 + $0x3d2] sm:$0xff]
        %v2205 = vld [vmem:[%s228 + $0x3da] sm:$0xff]
        %v2206 = vld [vmem:[%s228 + $0x3ea] sm:$0xff]
        %v2207 = vld [vmem:[%s228 + $0x3f2] sm:$0xff]
        %v2208 = vld [vmem:[%s228 + $0x3fa] sm:$0xff]
        %v2209 = vld [vmem:[%s228 + $0x402] sm:$0xff]
        %v2210 = vld [vmem:[%s228 + $0x412] sm:$0xff]
        %v2211 = vld [vmem:[%s228 + $0x41a] sm:$0xff]
        %v2212 = vld [vmem:[%s228 + $0x422] sm:$0xff]
        %v2213 = vld [vmem:[%s228 + $0x42a] sm:$0xff]
        %v2214 = vld [vmem:[%s228 + $0x43a] sm:$0xff]
        %v2215 = vld [vmem:[%s228 + $0x442] sm:$0xff]
        %v2216 = vld [vmem:[%s228 + $0x44a] sm:$0xff]
        %v2217 = vld [vmem:[%s228 + $0x452] sm:$0xff]
        %v2218 = vld [vmem:[%s228 + $0x462] sm:$0xff]
        %v2219 = vld [vmem:[%s228 + $0x46a] sm:$0xff]
        %v2220 = vld [vmem:[%s228 + $0x472] sm:$0xff]
        %v2221 = vld [vmem:[%s228 + $0x47a] sm:$0xff]
        %v2222 = vld [vmem:[%s228 + $0x48a] sm:$0xff]
        %v2223 = vld [vmem:[%s228 + $0x492] sm:$0xff]
        %v2224 = vld [vmem:[%s228 + $0x49a] sm:$0xff]
        %v2225 = vld [vmem:[%s228 + $0x4a2] sm:$0xff]
        %v2226 = vld [vmem:[%s228 + $0x4b2] sm:$0xff]
        %v2227 = vld [vmem:[%s228 + $0x4ba] sm:$0xff]
        %v2228 = vld [vmem:[%s228 + $0x4c2] sm:$0xff]
        %v2229 = vld [vmem:[%s228 + $0x4ca] sm:$0xff]
        %v2230 = vld [vmem:[%s228 + $0x4da] sm:$0xff]
        %v2231 = vld [vmem:[%s228 + $0x4e2] sm:$0xff]
        %v2232 = vld [vmem:[%s228 + $0x4ea] sm:$0xff]
        %v2233 = vld [vmem:[%s228 + $0x4f2] sm:$0xff]
        %v2234 = vpack.c.bf16 %v2107, %v2106
        %v2235 = vpack.c.bf16 %v2109, %v2108
        %v2236 = vpack.c.bf16 %v2111, %v2110
        %v2237 = vpack.c.bf16 %v2113, %v2112
        %v2238 = vpack.c.bf16 %v2115, %v2114
        %v2239 = vpack.c.bf16 %v2117, %v2116
        %v2240 = vpack.c.bf16 %v2119, %v2118
        %v2241 = vpack.c.bf16 %v2121, %v2120
        %v2242 = vpack.c.bf16 %v2123, %v2122
        %v2243 = vpack.c.bf16 %v2125, %v2124
        %v2244 = vpack.c.bf16 %v2127, %v2126
        %v2245 = vpack.c.bf16 %v2129, %v2128
        %v2246 = vpack.c.bf16 %v2131, %v2130
        %v2247 = vpack.c.bf16 %v2133, %v2132
        %v2248 = vpack.c.bf16 %v2135, %v2134
        %v2249 = vpack.c.bf16 %v2137, %v2136
        %v2250 = vpack.c.bf16 %v2139, %v2138
        %v2251 = vpack.c.bf16 %v2141, %v2140
        %v2252 = vpack.c.bf16 %v2143, %v2142
        %v2253 = vpack.c.bf16 %v2145, %v2144
        %v2254 = vpack.c.bf16 %v2147, %v2146
        %v2255 = vpack.c.bf16 %v2149, %v2148
        %v2256 = vpack.c.bf16 %v2151, %v2150
        %v2257 = vpack.c.bf16 %v2153, %v2152
        %v2258 = vpack.c.bf16 %v2155, %v2154
        %v2259 = vpack.c.bf16 %v2157, %v2156
        %v2260 = vpack.c.bf16 %v2159, %v2158
        %v2261 = vpack.c.bf16 %v2161, %v2160
        %v2262 = vpack.c.bf16 %v2163, %v2162
        %v2263 = vpack.c.bf16 %v2165, %v2164
        %v2264 = vpack.c.bf16 %v2167, %v2166
        %v2265 = vpack.c.bf16 %v2169, %v2168
        %v2266 = vpack.c.bf16 %v2171, %v2170
        %v2267 = vpack.c.bf16 %v2173, %v2172
        %v2268 = vpack.c.bf16 %v2175, %v2174
        %v2269 = vpack.c.bf16 %v2177, %v2176
        %v2270 = vpack.c.bf16 %v2179, %v2178
        %v2271 = vpack.c.bf16 %v2181, %v2180
        %v2272 = vpack.c.bf16 %v2183, %v2182
        %v2273 = vpack.c.bf16 %v2185, %v2184
        %v2274 = vpack.c.bf16 %v2187, %v2186
        %v2275 = vpack.c.bf16 %v2189, %v2188
        %v2276 = vpack.c.bf16 %v2191, %v2190
        %v2277 = vpack.c.bf16 %v2193, %v2192
        %v2278 = vpack.c.bf16 %v2195, %v2194
        %v2279 = vpack.c.bf16 %v2197, %v2196
        %v2280 = vpack.c.bf16 %v2199, %v2198
        %v2281 = vpack.c.bf16 %v2201, %v2200
        %v2282 = vpack.c.bf16 %v2203, %v2202
        %v2283 = vpack.c.bf16 %v2205, %v2204
        %v2284 = vpack.c.bf16 %v2207, %v2206
        %v2285 = vpack.c.bf16 %v2209, %v2208
        %v2286 = vpack.c.bf16 %v2211, %v2210
        %v2287 = vpack.c.bf16 %v2213, %v2212
        %v2288 = vpack.c.bf16 %v2215, %v2214
        %v2289 = vpack.c.bf16 %v2217, %v2216
        %v2290 = vpack.c.bf16 %v2219, %v2218
        %v2291 = vpack.c.bf16 %v2221, %v2220
        %v2292 = vpack.c.bf16 %v2223, %v2222
        %v2293 = vpack.c.bf16 %v2225, %v2224
        %v2294 = vpack.c.bf16 %v2227, %v2226
        %v2295 = vpack.c.bf16 %v2229, %v2228
        %v2296 = vpack.c.bf16 %v2231, %v2230
        %v2297 = vpack.c.bf16 %v2233, %v2232
        %s2298 = scalar_lea.vmem %s232, 4
        %v2299 = vld [vmem:[%s2298] sm:$0x3]
        %v2301 = vsel %vm621, %v2234, 0
        %v2304 = vsel %vm621, %v2235, 0
        %v2307 = vsel %vm621, %v2236, 0
        %v2310 = vsel %vm621, %v2237, 0
        %v2313 = vsel %vm621, %v2238, 0
        %v2316 = vsel %vm621, %v2239, 0
        %v2319 = vsel %vm621, %v2240, 0
        %v2322 = vsel %vm621, %v2241, 0
        %v2325 = vsel %vm621, %v2242, 0
        %v2328 = vsel %vm621, %v2243, 0
        %v2331 = vsel %vm621, %v2244, 0
        %v2334 = vsel %vm621, %v2245, 0
        %v2337 = vsel %vm621, %v2246, 0
        %v2340 = vsel %vm621, %v2247, 0
        %v2343 = vsel %vm621, %v2248, 0
        %v2346 = vsel %vm621, %v2249, 0
        %v2349 = vsel %vm621, %v2250, 0
        %v2352 = vsel %vm621, %v2251, 0
        %v2355 = vsel %vm621, %v2252, 0
        %v2358 = vsel %vm621, %v2253, 0
        %v2361 = vsel %vm621, %v2254, 0
        %v2364 = vsel %vm621, %v2255, 0
        %v2367 = vsel %vm621, %v2256, 0
        %v2370 = vsel %vm621, %v2257, 0
        %v2373 = vsel %vm621, %v2258, 0
        %v2376 = vsel %vm621, %v2259, 0
        %v2379 = vsel %vm621, %v2260, 0
        %v2382 = vsel %vm621, %v2261, 0
        %v2385 = vsel %vm621, %v2262, 0
        %v2388 = vsel %vm621, %v2263, 0
        %v2391 = vsel %vm621, %v2264, 0
        %v2394 = vsel %vm621, %v2265, 0
        %v2397 = vsel %vm621, %v2266, 0
        %v2400 = vsel %vm621, %v2267, 0
        %v2403 = vsel %vm621, %v2268, 0
        %v2406 = vsel %vm621, %v2269, 0
        %v2409 = vsel %vm621, %v2270, 0
        %v2412 = vsel %vm621, %v2271, 0
        %v2415 = vsel %vm621, %v2272, 0
        %v2418 = vsel %vm621, %v2273, 0
        %v2421 = vsel %vm621, %v2274, 0
        %v2424 = vsel %vm621, %v2275, 0
        %v2427 = vsel %vm621, %v2276, 0
        %v2430 = vsel %vm621, %v2277, 0
        %v2433 = vsel %vm621, %v2278, 0
        %v2436 = vsel %vm621, %v2279, 0
        %v2439 = vsel %vm621, %v2280, 0
        %v2442 = vsel %vm621, %v2281, 0
        %v2445 = vsel %vm621, %v2282, 0
        %v2448 = vsel %vm621, %v2283, 0
        %v2451 = vsel %vm621, %v2284, 0
        %v2454 = vsel %vm621, %v2285, 0
        %v2457 = vsel %vm621, %v2286, 0
        %v2460 = vsel %vm621, %v2287, 0
        %v2463 = vsel %vm621, %v2288, 0
        %v2466 = vsel %vm621, %v2289, 0
        %v2469 = vsel %vm621, %v2290, 0
        %v2472 = vsel %vm621, %v2291, 0
        %v2475 = vsel %vm621, %v2292, 0
        %v2478 = vsel %vm621, %v2293, 0
        %v2481 = vsel %vm621, %v2294, 0
        %v2484 = vsel %vm621, %v2295, 0
        %v2487 = vsel %vm621, %v2296, 0
        %v2490 = vsel %vm621, %v2297, 0
        %v2493 = vand.u32 %v2299, %v817
        %2495 = vmatprep.subr.bf16.mxu0 0
        %2496 = vmatpush1.bf16.msra.mxu0 %v2493
        %2497 = vmatprep.subr.bf16.mxu0 0
        %2498 = vmatpush1.bf16.msra.mxu0 0
        %2499 = vmatprep.subr.bf16.mxu0 0
        %2500 = vmatpush1.bf16.msra.mxu0 0
        %2501 = vmatprep.subr.bf16.mxu0 0
        %2502 = vmatpush1.bf16.msra.mxu0 0
        %2503 = vmatprep.subr.bf16.mxu0 0
        %2504 = vmatpush1.bf16.msra.mxu0 0
        %2505 = vmatprep.subr.bf16.mxu0 0
        %2506 = vmatpush1.bf16.msra.mxu0 0
        %2507 = vmatprep.subr.bf16.mxu0 0
        %2508 = vmatpush1.bf16.msra.mxu0 0
        %2509 = vmatprep.subr.bf16.mxu0 0
        %2510 = vmatpush1.bf16.msra.mxu0 0
        %2511 = vmatprep.subr.bf16.mxu0 0
        %2512 = vmatpush1.bf16.msra.mxu0 0
        %2513 = vmatprep.subr.bf16.mxu0 0
        %2514 = vmatpush1.bf16.msra.mxu0 0
        %2515 = vmatprep.subr.bf16.mxu0 0
        %2516 = vmatpush1.bf16.msra.mxu0 0
        %2517 = vmatprep.subr.bf16.mxu0 0
        %2518 = vmatpush1.bf16.msra.mxu0 0
        %2519 = vmatprep.subr.bf16.mxu0 0
        %2520 = vmatpush1.bf16.msra.mxu0 0
        %2521 = vmatprep.subr.bf16.mxu0 0
        %2522 = vmatpush1.bf16.msra.mxu0 0
        %2523 = vmatprep.subr.bf16.mxu0 0
        %2524 = vmatpush1.bf16.msra.mxu0 0
        %2525 = vmatprep.subr.bf16.mxu0 0
        %2526 = vmatpush1.bf16.msra.mxu0 0
        %2527 = vmatprep.mubr.bf16.mxu0 0
        %2528 = vmatmul.mubr.bf16.gmra.mrb[0].mxu0 %v2301
        %v2529 = vpop.f32.mrb[0].mxu0
        %v2530 = vadd.f32 0.0, %v2529
        %v2531 = vpop.f32.mrb[0].mxu0
        %v2532 = vpop.f32.mrb[0].mxu0
        %v2533 = vadd.f32 0.0, %v2532
        %v2534 = vpop.f32.mrb[0].mxu0
        %2535 = vmatprep.mubr.bf16.mxu0 0
        %2536 = vmatmul.mubr.bf16.gmra.mrb[0].mxu0 %v2304
        %v2537 = vpop.f32.mrb[0].mxu0
        %v2538 = vadd.f32 0.0, %v2537
        %v2539 = vpop.f32.mrb[0].mxu0
        %v2540 = vpop.f32.mrb[0].mxu0
        %v2541 = vadd.f32 0.0, %v2540
        %v2542 = vpop.f32.mrb[0].mxu0
        %2543 = vmatprep.mubr.bf16.mxu0 0
        %2544 = vmatmul.mubr.bf16.gmra.mrb[0].mxu0 %v2307
        %v2545 = vpop.f32.mrb[0].mxu0
        %v2546 = vadd.f32 0.0, %v2545
        %v2547 = vpop.f32.mrb[0].mxu0
        %v2548 = vpop.f32.mrb[0].mxu0
        %v2549 = vadd.f32 0.0, %v2548
        %v2550 = vpop.f32.mrb[0].mxu0
        %2551 = vmatprep.mubr.bf16.mxu0 0
        %2552 = vmatmul.mubr.bf16.gmra.mrb[0].mxu0 %v2310
        %v2553 = vpop.f32.mrb[0].mxu0
        %v2554 = vadd.f32 0.0, %v2553
        %v2555 = vpop.f32.mrb[0].mxu0
        %v2556 = vpop.f32.mrb[0].mxu0
        %v2557 = vadd.f32 0.0, %v2556
        %v2558 = vpop.f32.mrb[0].mxu0
        %2559 = vmatprep.mubr.bf16.mxu0 0
        %2560 = vmatmul.mubr.bf16.gmra.mrb[0].mxu0 %v2313
        %v2561 = vpop.f32.mrb[0].mxu0
        %v2562 = vadd.f32 0.0, %v2561
        %v2563 = vpop.f32.mrb[0].mxu0
        %v2564 = vpop.f32.mrb[0].mxu0
        %v2565 = vadd.f32 0.0, %v2564
        %v2566 = vpop.f32.mrb[0].mxu0
        %2567 = vmatprep.mubr.bf16.mxu0 0
        %2568 = vmatmul.mubr.bf16.gmra.mrb[0].mxu0 %v2316
        %v2569 = vpop.f32.mrb[0].mxu0
        %v2570 = vadd.f32 0.0, %v2569
        %v2571 = vpop.f32.mrb[0].mxu0
        %v2572 = vpop.f32.mrb[0].mxu0
        %v2573 = vadd.f32 0.0, %v2572
        %v2574 = vpop.f32.mrb[0].mxu0
        %2575 = vmatprep.mubr.bf16.mxu0 0
        %2576 = vmatmul.mubr.bf16.gmra.mrb[0].mxu0 %v2319
        %v2577 = vpop.f32.mrb[0].mxu0
        %v2578 = vadd.f32 0.0, %v2577
        %v2579 = vpop.f32.mrb[0].mxu0
        %v2580 = vpop.f32.mrb[0].mxu0
        %v2581 = vadd.f32 0.0, %v2580
        %v2582 = vpop.f32.mrb[0].mxu0
        %2583 = vmatprep.mubr.bf16.mxu0 0
        %2584 = vmatmul.mubr.bf16.gmra.mrb[0].mxu0 %v2322
        %v2585 = vpop.f32.mrb[0].mxu0
        %v2586 = vadd.f32 0.0, %v2585
        %v2587 = vpop.f32.mrb[0].mxu0
        %v2588 = vpop.f32.mrb[0].mxu0
        %v2589 = vadd.f32 0.0, %v2588
        %v2590 = vpop.f32.mrb[0].mxu0
        %2591 = vmatprep.mubr.bf16.mxu0 0
        %2592 = vmatmul.mubr.bf16.gmra.mrb[0].mxu0 %v2325
        %v2593 = vpop.f32.mrb[0].mxu0
        %v2594 = vadd.f32 0.0, %v2593
        %v2595 = vpop.f32.mrb[0].mxu0
        %v2596 = vpop.f32.mrb[0].mxu0
        %v2597 = vadd.f32 0.0, %v2596
        %v2598 = vpop.f32.mrb[0].mxu0
        %2599 = vmatprep.mubr.bf16.mxu0 0
        %2600 = vmatmul.mubr.bf16.gmra.mrb[0].mxu0 %v2328
        %v2601 = vpop.f32.mrb[0].mxu0
        %v2602 = vadd.f32 0.0, %v2601
        %v2603 = vpop.f32.mrb[0].mxu0
        %v2604 = vpop.f32.mrb[0].mxu0
        %v2605 = vadd.f32 0.0, %v2604
        %v2606 = vpop.f32.mrb[0].mxu0
        %2607 = vmatprep.mubr.bf16.mxu0 0
        %2608 = vmatmul.mubr.bf16.gmra.mrb[0].mxu0 %v2331
        %v2609 = vpop.f32.mrb[0].mxu0
        %v2610 = vadd.f32 0.0, %v2609
        %v2611 = vpop.f32.mrb[0].mxu0
        %v2612 = vpop.f32.mrb[0].mxu0
        %v2613 = vadd.f32 0.0, %v2612
        %v2614 = vpop.f32.mrb[0].mxu0
        %2615 = vmatprep.mubr.bf16.mxu0 0
        %2616 = vmatmul.mubr.bf16.gmra.mrb[0].mxu0 %v2334
        %v2617 = vpop.f32.mrb[0].mxu0
        %v2618 = vadd.f32 0.0, %v2617
        %v2619 = vpop.f32.mrb[0].mxu0
        %v2620 = vpop.f32.mrb[0].mxu0
        %v2621 = vadd.f32 0.0, %v2620
        %v2622 = vpop.f32.mrb[0].mxu0
        %2623 = vmatprep.mubr.bf16.mxu0 0
        %2624 = vmatmul.mubr.bf16.gmra.mrb[0].mxu0 %v2337
        %v2625 = vpop.f32.mrb[0].mxu0
        %v2626 = vadd.f32 0.0, %v2625
        %v2627 = vpop.f32.mrb[0].mxu0
        %v2628 = vpop.f32.mrb[0].mxu0
        %v2629 = vadd.f32 0.0, %v2628
        %v2630 = vpop.f32.mrb[0].mxu0
        %2631 = vmatprep.mubr.bf16.mxu0 0
        %2632 = vmatmul.mubr.bf16.gmra.mrb[0].mxu0 %v2340
        %v2633 = vpop.f32.mrb[0].mxu0
        %v2634 = vadd.f32 0.0, %v2633
        %v2635 = vpop.f32.mrb[0].mxu0
        %v2636 = vpop.f32.mrb[0].mxu0
        %v2637 = vadd.f32 0.0, %v2636
        %v2638 = vpop.f32.mrb[0].mxu0
        %2639 = vmatprep.mubr.bf16.mxu0 0
        %2640 = vmatmul.mubr.bf16.gmra.mrb[0].mxu0 %v2343
        %v2641 = vpop.f32.mrb[0].mxu0
        %v2642 = vadd.f32 0.0, %v2641
        %v2643 = vpop.f32.mrb[0].mxu0
        %v2644 = vpop.f32.mrb[0].mxu0
        %v2645 = vadd.f32 0.0, %v2644
        %v2646 = vpop.f32.mrb[0].mxu0
        %2647 = vmatprep.mubr.bf16.mxu0 0
        %2648 = vmatmul.mubr.bf16.gmra.mrb[0].mxu0 %v2346
        %v2649 = vpop.f32.mrb[0].mxu0
        %v2650 = vadd.f32 0.0, %v2649
        %v2651 = vpop.f32.mrb[0].mxu0
        %v2652 = vpop.f32.mrb[0].mxu0
        %v2653 = vadd.f32 0.0, %v2652
        %v2654 = vpop.f32.mrb[0].mxu0
        %2655 = vmatprep.mubr.bf16.mxu0 0
        %2656 = vmatmul.mubr.bf16.gmra.mrb[0].mxu0 %v2349
        %v2657 = vpop.f32.mrb[0].mxu0
        %v2658 = vadd.f32 0.0, %v2657
        %v2659 = vpop.f32.mrb[0].mxu0
        %v2660 = vpop.f32.mrb[0].mxu0
        %v2661 = vadd.f32 0.0, %v2660
        %v2662 = vpop.f32.mrb[0].mxu0
        %2663 = vmatprep.mubr.bf16.mxu0 0
        %2664 = vmatmul.mubr.bf16.gmra.mrb[0].mxu0 %v2352
        %v2665 = vpop.f32.mrb[0].mxu0
        %v2666 = vadd.f32 0.0, %v2665
        %v2667 = vpop.f32.mrb[0].mxu0
        %v2668 = vpop.f32.mrb[0].mxu0
        %v2669 = vadd.f32 0.0, %v2668
        %v2670 = vpop.f32.mrb[0].mxu0
        %2671 = vmatprep.mubr.bf16.mxu0 0
        %2672 = vmatmul.mubr.bf16.gmra.mrb[0].mxu0 %v2355
        %v2673 = vpop.f32.mrb[0].mxu0
        %v2674 = vadd.f32 0.0, %v2673
        %v2675 = vpop.f32.mrb[0].mxu0
        %v2676 = vpop.f32.mrb[0].mxu0
        %v2677 = vadd.f32 0.0, %v2676
        %v2678 = vpop.f32.mrb[0].mxu0
        %2679 = vmatprep.mubr.bf16.mxu0 0
        %2680 = vmatmul.mubr.bf16.gmra.mrb[0].mxu0 %v2358
        %v2681 = vpop.f32.mrb[0].mxu0
        %v2682 = vadd.f32 0.0, %v2681
        %v2683 = vpop.f32.mrb[0].mxu0
        %v2684 = vpop.f32.mrb[0].mxu0
        %v2685 = vadd.f32 0.0, %v2684
        %v2686 = vpop.f32.mrb[0].mxu0
        %2687 = vmatprep.mubr.bf16.mxu0 0
        %2688 = vmatmul.mubr.bf16.gmra.mrb[0].mxu0 %v2361
        %v2689 = vpop.f32.mrb[0].mxu0
        %v2690 = vadd.f32 0.0, %v2689
        %v2691 = vpop.f32.mrb[0].mxu0
        %v2692 = vpop.f32.mrb[0].mxu0
        %v2693 = vadd.f32 0.0, %v2692
        %v2694 = vpop.f32.mrb[0].mxu0
        %2695 = vmatprep.mubr.bf16.mxu0 0
        %2696 = vmatmul.mubr.bf16.gmra.mrb[0].mxu0 %v2364
        %v2697 = vpop.f32.mrb[0].mxu0
        %v2698 = vadd.f32 0.0, %v2697
        %v2699 = vpop.f32.mrb[0].mxu0
        %v2700 = vpop.f32.mrb[0].mxu0
        %v2701 = vadd.f32 0.0, %v2700
        %v2702 = vpop.f32.mrb[0].mxu0
        %2703 = vmatprep.mubr.bf16.mxu0 0
        %2704 = vmatmul.mubr.bf16.gmra.mrb[0].mxu0 %v2367
        %v2705 = vpop.f32.mrb[0].mxu0
        %v2706 = vadd.f32 0.0, %v2705
        %v2707 = vpop.f32.mrb[0].mxu0
        %v2708 = vpop.f32.mrb[0].mxu0
        %v2709 = vadd.f32 0.0, %v2708
        %v2710 = vpop.f32.mrb[0].mxu0
        %2711 = vmatprep.mubr.bf16.mxu0 0
        %2712 = vmatmul.mubr.bf16.gmra.mrb[0].mxu0 %v2370
        %v2713 = vpop.f32.mrb[0].mxu0
        %v2714 = vadd.f32 0.0, %v2713
        %v2715 = vpop.f32.mrb[0].mxu0
        %v2716 = vpop.f32.mrb[0].mxu0
        %v2717 = vadd.f32 0.0, %v2716
        %v2718 = vpop.f32.mrb[0].mxu0
        %2719 = vmatprep.mubr.bf16.mxu0 0
        %2720 = vmatmul.mubr.bf16.gmra.mrb[0].mxu0 %v2373
        %v2721 = vpop.f32.mrb[0].mxu0
        %v2722 = vadd.f32 0.0, %v2721
        %v2723 = vpop.f32.mrb[0].mxu0
        %v2724 = vpop.f32.mrb[0].mxu0
        %v2725 = vadd.f32 0.0, %v2724
        %v2726 = vpop.f32.mrb[0].mxu0
        %2727 = vmatprep.mubr.bf16.mxu0 0
        %2728 = vmatmul.mubr.bf16.gmra.mrb[0].mxu0 %v2376
        %v2729 = vpop.f32.mrb[0].mxu0
        %v2730 = vadd.f32 0.0, %v2729
        %v2731 = vpop.f32.mrb[0].mxu0
        %v2732 = vpop.f32.mrb[0].mxu0
        %v2733 = vadd.f32 0.0, %v2732
        %v2734 = vpop.f32.mrb[0].mxu0
        %2735 = vmatprep.mubr.bf16.mxu0 0
        %2736 = vmatmul.mubr.bf16.gmra.mrb[0].mxu0 %v2379
        %v2737 = vpop.f32.mrb[0].mxu0
        %v2738 = vadd.f32 0.0, %v2737
        %v2739 = vpop.f32.mrb[0].mxu0
        %v2740 = vpop.f32.mrb[0].mxu0
        %v2741 = vadd.f32 0.0, %v2740
        %v2742 = vpop.f32.mrb[0].mxu0
        %2743 = vmatprep.mubr.bf16.mxu0 0
        %2744 = vmatmul.mubr.bf16.gmra.mrb[0].mxu0 %v2382
        %v2745 = vpop.f32.mrb[0].mxu0
        %v2746 = vadd.f32 0.0, %v2745
        %v2747 = vpop.f32.mrb[0].mxu0
        %v2748 = vpop.f32.mrb[0].mxu0
        %v2749 = vadd.f32 0.0, %v2748
        %v2750 = vpop.f32.mrb[0].mxu0
        %2751 = vmatprep.mubr.bf16.mxu0 0
        %2752 = vmatmul.mubr.bf16.gmra.mrb[0].mxu0 %v2385
        %v2753 = vpop.f32.mrb[0].mxu0
        %v2754 = vadd.f32 0.0, %v2753
        %v2755 = vpop.f32.mrb[0].mxu0
        %v2756 = vpop.f32.mrb[0].mxu0
        %v2757 = vadd.f32 0.0, %v2756
        %v2758 = vpop.f32.mrb[0].mxu0
        %2759 = vmatprep.mubr.bf16.mxu0 0
        %2760 = vmatmul.mubr.bf16.gmra.mrb[0].mxu0 %v2388
        %v2761 = vpop.f32.mrb[0].mxu0
        %v2762 = vadd.f32 0.0, %v2761
        %v2763 = vpop.f32.mrb[0].mxu0
        %v2764 = vpop.f32.mrb[0].mxu0
        %v2765 = vadd.f32 0.0, %v2764
        %v2766 = vpop.f32.mrb[0].mxu0
        %2767 = vmatprep.mubr.bf16.mxu0 0
        %2768 = vmatmul.mubr.bf16.gmra.mrb[0].mxu0 %v2391
        %v2769 = vpop.f32.mrb[0].mxu0
        %v2770 = vadd.f32 0.0, %v2769
        %v2771 = vpop.f32.mrb[0].mxu0
        %v2772 = vpop.f32.mrb[0].mxu0
        %v2773 = vadd.f32 0.0, %v2772
        %v2774 = vpop.f32.mrb[0].mxu0
        %2775 = vmatprep.mubr.bf16.mxu0 0
        %2776 = vmatmul.mubr.bf16.gmra.mrb[0].mxu0 %v2394
        %v2777 = vpop.f32.mrb[0].mxu0
        %v2778 = vadd.f32 0.0, %v2777
        %v2779 = vpop.f32.mrb[0].mxu0
        %v2780 = vpop.f32.mrb[0].mxu0
        %v2781 = vadd.f32 0.0, %v2780
        %v2782 = vpop.f32.mrb[0].mxu0
        %2783 = vmatprep.mubr.bf16.mxu0 0
        %2784 = vmatmul.mubr.bf16.gmra.mrb[0].mxu0 %v2397
        %v2785 = vpop.f32.mrb[0].mxu0
        %v2786 = vadd.f32 0.0, %v2785
        %v2787 = vpop.f32.mrb[0].mxu0
        %v2788 = vpop.f32.mrb[0].mxu0
        %v2789 = vadd.f32 0.0, %v2788
        %v2790 = vpop.f32.mrb[0].mxu0
        %2791 = vmatprep.mubr.bf16.mxu0 0
        %2792 = vmatmul.mubr.bf16.gmra.mrb[0].mxu0 %v2400
        %v2793 = vpop.f32.mrb[0].mxu0
        %v2794 = vadd.f32 0.0, %v2793
        %v2795 = vpop.f32.mrb[0].mxu0
        %v2796 = vpop.f32.mrb[0].mxu0
        %v2797 = vadd.f32 0.0, %v2796
        %v2798 = vpop.f32.mrb[0].mxu0
        %2799 = vmatprep.mubr.bf16.mxu0 0
        %2800 = vmatmul.mubr.bf16.gmra.mrb[0].mxu0 %v2403
        %v2801 = vpop.f32.mrb[0].mxu0
        %v2802 = vadd.f32 0.0, %v2801
        %v2803 = vpop.f32.mrb[0].mxu0
        %v2804 = vpop.f32.mrb[0].mxu0
        %v2805 = vadd.f32 0.0, %v2804
        %v2806 = vpop.f32.mrb[0].mxu0
        %2807 = vmatprep.mubr.bf16.mxu0 0
        %2808 = vmatmul.mubr.bf16.gmra.mrb[0].mxu0 %v2406
        %v2809 = vpop.f32.mrb[0].mxu0
        %v2810 = vadd.f32 0.0, %v2809
        %v2811 = vpop.f32.mrb[0].mxu0
        %v2812 = vpop.f32.mrb[0].mxu0
        %v2813 = vadd.f32 0.0, %v2812
        %v2814 = vpop.f32.mrb[0].mxu0
        %2815 = vmatprep.mubr.bf16.mxu0 0
        %2816 = vmatmul.mubr.bf16.gmra.mrb[0].mxu0 %v2409
        %v2817 = vpop.f32.mrb[0].mxu0
        %v2818 = vadd.f32 0.0, %v2817
        %v2819 = vpop.f32.mrb[0].mxu0
        %v2820 = vpop.f32.mrb[0].mxu0
        %v2821 = vadd.f32 0.0, %v2820
        %v2822 = vpop.f32.mrb[0].mxu0
        %2823 = vmatprep.mubr.bf16.mxu0 0
        %2824 = vmatmul.mubr.bf16.gmra.mrb[0].mxu0 %v2412
        %v2825 = vpop.f32.mrb[0].mxu0
        %v2826 = vadd.f32 0.0, %v2825
        %v2827 = vpop.f32.mrb[0].mxu0
        %v2828 = vpop.f32.mrb[0].mxu0
        %v2829 = vadd.f32 0.0, %v2828
        %v2830 = vpop.f32.mrb[0].mxu0
        %2831 = vmatprep.mubr.bf16.mxu0 0
        %2832 = vmatmul.mubr.bf16.gmra.mrb[0].mxu0 %v2415
        %v2833 = vpop.f32.mrb[0].mxu0
        %v2834 = vadd.f32 0.0, %v2833
        %v2835 = vpop.f32.mrb[0].mxu0
        %v2836 = vpop.f32.mrb[0].mxu0
        %v2837 = vadd.f32 0.0, %v2836
        %v2838 = vpop.f32.mrb[0].mxu0
        %2839 = vmatprep.mubr.bf16.mxu0 0
        %2840 = vmatmul.mubr.bf16.gmra.mrb[0].mxu0 %v2418
        %v2841 = vpop.f32.mrb[0].mxu0
        %v2842 = vadd.f32 0.0, %v2841
        %v2843 = vpop.f32.mrb[0].mxu0
        %v2844 = vpop.f32.mrb[0].mxu0
        %v2845 = vadd.f32 0.0, %v2844
        %v2846 = vpop.f32.mrb[0].mxu0
        %2847 = vmatprep.mubr.bf16.mxu0 0
        %2848 = vmatmul.mubr.bf16.gmra.mrb[0].mxu0 %v2421
        %v2849 = vpop.f32.mrb[0].mxu0
        %v2850 = vadd.f32 0.0, %v2849
        %v2851 = vpop.f32.mrb[0].mxu0
        %v2852 = vpop.f32.mrb[0].mxu0
        %v2853 = vadd.f32 0.0, %v2852
        %v2854 = vpop.f32.mrb[0].mxu0
        %2855 = vmatprep.mubr.bf16.mxu0 0
        %2856 = vmatmul.mubr.bf16.gmra.mrb[0].mxu0 %v2424
        %v2857 = vpop.f32.mrb[0].mxu0
        %v2858 = vadd.f32 0.0, %v2857
        %v2859 = vpop.f32.mrb[0].mxu0
        %v2860 = vpop.f32.mrb[0].mxu0
        %v2861 = vadd.f32 0.0, %v2860
        %v2862 = vpop.f32.mrb[0].mxu0
        %2863 = vmatprep.mubr.bf16.mxu0 0
        %2864 = vmatmul.mubr.bf16.gmra.mrb[0].mxu0 %v2427
        %v2865 = vpop.f32.mrb[0].mxu0
        %v2866 = vadd.f32 0.0, %v2865
        %v2867 = vpop.f32.mrb[0].mxu0
        %v2868 = vpop.f32.mrb[0].mxu0
        %v2869 = vadd.f32 0.0, %v2868
        %v2870 = vpop.f32.mrb[0].mxu0
        %2871 = vmatprep.mubr.bf16.mxu0 0
        %2872 = vmatmul.mubr.bf16.gmra.mrb[0].mxu0 %v2430
        %v2873 = vpop.f32.mrb[0].mxu0
        %v2874 = vadd.f32 0.0, %v2873
        %v2875 = vpop.f32.mrb[0].mxu0
        %v2876 = vpop.f32.mrb[0].mxu0
        %v2877 = vadd.f32 0.0, %v2876
        %v2878 = vpop.f32.mrb[0].mxu0
        %2879 = vmatprep.mubr.bf16.mxu0 0
        %2880 = vmatmul.mubr.bf16.gmra.mrb[0].mxu0 %v2433
        %v2881 = vpop.f32.mrb[0].mxu0
        %v2882 = vadd.f32 0.0, %v2881
        %v2883 = vpop.f32.mrb[0].mxu0
        %v2884 = vpop.f32.mrb[0].mxu0
        %v2885 = vadd.f32 0.0, %v2884
        %v2886 = vpop.f32.mrb[0].mxu0
        %2887 = vmatprep.mubr.bf16.mxu0 0
        %2888 = vmatmul.mubr.bf16.gmra.mrb[0].mxu0 %v2436
        %v2889 = vpop.f32.mrb[0].mxu0
        %v2890 = vadd.f32 0.0, %v2889
        %v2891 = vpop.f32.mrb[0].mxu0
        %v2892 = vpop.f32.mrb[0].mxu0
        %v2893 = vadd.f32 0.0, %v2892
        %v2894 = vpop.f32.mrb[0].mxu0
        %2895 = vmatprep.mubr.bf16.mxu0 0
        %2896 = vmatmul.mubr.bf16.gmra.mrb[0].mxu0 %v2439
        %v2897 = vpop.f32.mrb[0].mxu0
        %v2898 = vadd.f32 0.0, %v2897
        %v2899 = vpop.f32.mrb[0].mxu0
        %v2900 = vpop.f32.mrb[0].mxu0
        %v2901 = vadd.f32 0.0, %v2900
        %v2902 = vpop.f32.mrb[0].mxu0
        %2903 = vmatprep.mubr.bf16.mxu0 0
        %2904 = vmatmul.mubr.bf16.gmra.mrb[0].mxu0 %v2442
        %v2905 = vpop.f32.mrb[0].mxu0
        %v2906 = vadd.f32 0.0, %v2905
        %v2907 = vpop.f32.mrb[0].mxu0
        %v2908 = vpop.f32.mrb[0].mxu0
        %v2909 = vadd.f32 0.0, %v2908
        %v2910 = vpop.f32.mrb[0].mxu0
        %2911 = vmatprep.mubr.bf16.mxu0 0
        %2912 = vmatmul.mubr.bf16.gmra.mrb[0].mxu0 %v2445
        %v2913 = vpop.f32.mrb[0].mxu0
        %v2914 = vadd.f32 0.0, %v2913
        %v2915 = vpop.f32.mrb[0].mxu0
        %v2916 = vpop.f32.mrb[0].mxu0
        %v2917 = vadd.f32 0.0, %v2916
        %v2918 = vpop.f32.mrb[0].mxu0
        %2919 = vmatprep.mubr.bf16.mxu0 0
        %2920 = vmatmul.mubr.bf16.gmra.mrb[0].mxu0 %v2448
        %v2921 = vpop.f32.mrb[0].mxu0
        %v2922 = vadd.f32 0.0, %v2921
        %v2923 = vpop.f32.mrb[0].mxu0
        %v2924 = vpop.f32.mrb[0].mxu0
        %v2925 = vadd.f32 0.0, %v2924
        %v2926 = vpop.f32.mrb[0].mxu0
        %2927 = vmatprep.mubr.bf16.mxu0 0
        %2928 = vmatmul.mubr.bf16.gmra.mrb[0].mxu0 %v2451
        %v2929 = vpop.f32.mrb[0].mxu0
        %v2930 = vadd.f32 0.0, %v2929
        %v2931 = vpop.f32.mrb[0].mxu0
        %v2932 = vpop.f32.mrb[0].mxu0
        %v2933 = vadd.f32 0.0, %v2932
        %v2934 = vpop.f32.mrb[0].mxu0
        %2935 = vmatprep.mubr.bf16.mxu0 0
        %2936 = vmatmul.mubr.bf16.gmra.mrb[0].mxu0 %v2454
        %v2937 = vpop.f32.mrb[0].mxu0
        %v2938 = vadd.f32 0.0, %v2937
        %v2939 = vpop.f32.mrb[0].mxu0
        %v2940 = vpop.f32.mrb[0].mxu0
        %v2941 = vadd.f32 0.0, %v2940
        %v2942 = vpop.f32.mrb[0].mxu0
        %2943 = vmatprep.mubr.bf16.mxu0 0
        %2944 = vmatmul.mubr.bf16.gmra.mrb[0].mxu0 %v2457
        %v2945 = vpop.f32.mrb[0].mxu0
        %v2946 = vadd.f32 0.0, %v2945
        %v2947 = vpop.f32.mrb[0].mxu0
        %v2948 = vpop.f32.mrb[0].mxu0
        %v2949 = vadd.f32 0.0, %v2948
        %v2950 = vpop.f32.mrb[0].mxu0
        %2951 = vmatprep.mubr.bf16.mxu0 0
        %2952 = vmatmul.mubr.bf16.gmra.mrb[0].mxu0 %v2460
        %v2953 = vpop.f32.mrb[0].mxu0
        %v2954 = vadd.f32 0.0, %v2953
        %v2955 = vpop.f32.mrb[0].mxu0
        %v2956 = vpop.f32.mrb[0].mxu0
        %v2957 = vadd.f32 0.0, %v2956
        %v2958 = vpop.f32.mrb[0].mxu0
        %2959 = vmatprep.mubr.bf16.mxu0 0
        %2960 = vmatmul.mubr.bf16.gmra.mrb[0].mxu0 %v2463
        %v2961 = vpop.f32.mrb[0].mxu0
        %v2962 = vadd.f32 0.0, %v2961
        %v2963 = vpop.f32.mrb[0].mxu0
        %v2964 = vpop.f32.mrb[0].mxu0
        %v2965 = vadd.f32 0.0, %v2964
        %v2966 = vpop.f32.mrb[0].mxu0
        %2967 = vmatprep.mubr.bf16.mxu0 0
        %2968 = vmatmul.mubr.bf16.gmra.mrb[0].mxu0 %v2466
        %v2969 = vpop.f32.mrb[0].mxu0
        %v2970 = vadd.f32 0.0, %v2969
        %v2971 = vpop.f32.mrb[0].mxu0
        %v2972 = vpop.f32.mrb[0].mxu0
        %v2973 = vadd.f32 0.0, %v2972
        %v2974 = vpop.f32.mrb[0].mxu0
        %2975 = vmatprep.mubr.bf16.mxu0 0
        %2976 = vmatmul.mubr.bf16.gmra.mrb[0].mxu0 %v2469
        %v2977 = vpop.f32.mrb[0].mxu0
        %v2978 = vadd.f32 0.0, %v2977
        %v2979 = vpop.f32.mrb[0].mxu0
        %v2980 = vpop.f32.mrb[0].mxu0
        %v2981 = vadd.f32 0.0, %v2980
        %v2982 = vpop.f32.mrb[0].mxu0
        %2983 = vmatprep.mubr.bf16.mxu0 0
        %2984 = vmatmul.mubr.bf16.gmra.mrb[0].mxu0 %v2472
        %v2985 = vpop.f32.mrb[0].mxu0
        %v2986 = vadd.f32 0.0, %v2985
        %v2987 = vpop.f32.mrb[0].mxu0
        %v2988 = vpop.f32.mrb[0].mxu0
        %v2989 = vadd.f32 0.0, %v2988
        %v2990 = vpop.f32.mrb[0].mxu0
        %2991 = vmatprep.mubr.bf16.mxu0 0
        %2992 = vmatmul.mubr.bf16.gmra.mrb[0].mxu0 %v2475
        %v2993 = vpop.f32.mrb[0].mxu0
        %v2994 = vadd.f32 0.0, %v2993
        %v2995 = vpop.f32.mrb[0].mxu0
        %v2996 = vpop.f32.mrb[0].mxu0
        %v2997 = vadd.f32 0.0, %v2996
        %v2998 = vpop.f32.mrb[0].mxu0
        %2999 = vmatprep.mubr.bf16.mxu0 0
        %3000 = vmatmul.mubr.bf16.gmra.mrb[0].mxu0 %v2478
        %v3001 = vpop.f32.mrb[0].mxu0
        %v3002 = vadd.f32 0.0, %v3001
        %v3003 = vpop.f32.mrb[0].mxu0
        %v3004 = vpop.f32.mrb[0].mxu0
        %v3005 = vadd.f32 0.0, %v3004
        %v3006 = vpop.f32.mrb[0].mxu0
        %3007 = vmatprep.mubr.bf16.mxu0 0
        %3008 = vmatmul.mubr.bf16.gmra.mrb[0].mxu0 %v2481
        %v3009 = vpop.f32.mrb[0].mxu0
        %v3010 = vadd.f32 0.0, %v3009
        %v3011 = vpop.f32.mrb[0].mxu0
        %v3012 = vpop.f32.mrb[0].mxu0
        %v3013 = vadd.f32 0.0, %v3012
        %v3014 = vpop.f32.mrb[0].mxu0
        %3015 = vmatprep.mubr.bf16.mxu0 0
        %3016 = vmatmul.mubr.bf16.gmra.mrb[0].mxu0 %v2484
        %v3017 = vpop.f32.mrb[0].mxu0
        %v3018 = vadd.f32 0.0, %v3017
        %v3019 = vpop.f32.mrb[0].mxu0
        %v3020 = vpop.f32.mrb[0].mxu0
        %v3021 = vadd.f32 0.0, %v3020
        %v3022 = vpop.f32.mrb[0].mxu0
        %3023 = vmatprep.mubr.bf16.mxu0 0
        %3024 = vmatmul.mubr.bf16.gmra.mrb[0].mxu0 %v2487
        %v3025 = vpop.f32.mrb[0].mxu0
        %v3026 = vadd.f32 0.0, %v3025
        %v3027 = vpop.f32.mrb[0].mxu0
        %v3028 = vpop.f32.mrb[0].mxu0
        %v3029 = vadd.f32 0.0, %v3028
        %v3030 = vpop.f32.mrb[0].mxu0
        %3031 = vmatprep.mubr.bf16.mxu0 0
        %3032 = vmatmul.mubr.bf16.gmra.mrb[0].mxu0 %v2490
        %v3033 = vpop.f32.mrb[0].mxu0
        %v3034 = vadd.f32 0.0, %v3033
        %v3035 = vpop.f32.mrb[0].mxu0
        %v3036 = vpop.f32.mrb[0].mxu0
        %v3037 = vadd.f32 0.0, %v3036
        %v3038 = vpop.f32.mrb[0].mxu0
        %3039 = vdwg.mxu0
        %v3040 = vadd.f32 %v1596, %v2530
        %v3041 = vadd.f32 %v1599, %v2533
        %v3042 = vadd.f32 %v1604, %v2538
        %v3043 = vadd.f32 %v1607, %v2541
        %v3044 = vadd.f32 %v1612, %v2546
        %v3045 = vadd.f32 %v1615, %v2549
        %v3046 = vadd.f32 %v1620, %v2554
        %v3047 = vadd.f32 %v1623, %v2557
        %v3048 = vadd.f32 %v1628, %v2562
        %v3049 = vadd.f32 %v1631, %v2565
        %v3050 = vadd.f32 %v1636, %v2570
        %v3051 = vadd.f32 %v1639, %v2573
        %v3052 = vadd.f32 %v1644, %v2578
        %v3053 = vadd.f32 %v1647, %v2581
        %v3054 = vadd.f32 %v1652, %v2586
        %v3055 = vadd.f32 %v1655, %v2589
        %v3056 = vadd.f32 %v1660, %v2594
        %v3057 = vadd.f32 %v1663, %v2597
        %v3058 = vadd.f32 %v1668, %v2602
        %v3059 = vadd.f32 %v1671, %v2605
        %v3060 = vadd.f32 %v1676, %v2610
        %v3061 = vadd.f32 %v1679, %v2613
        %v3062 = vadd.f32 %v1684, %v2618
        %v3063 = vadd.f32 %v1687, %v2621
        %v3064 = vadd.f32 %v1692, %v2626
        %v3065 = vadd.f32 %v1695, %v2629
        %v3066 = vadd.f32 %v1700, %v2634
        %v3067 = vadd.f32 %v1703, %v2637
        %v3068 = vadd.f32 %v1708, %v2642
        %v3069 = vadd.f32 %v1711, %v2645
        %v3070 = vadd.f32 %v1716, %v2650
        %v3071 = vadd.f32 %v1719, %v2653
        %v3072 = vadd.f32 %v1724, %v2658
        %v3073 = vadd.f32 %v1727, %v2661
        %v3074 = vadd.f32 %v1732, %v2666
        %v3075 = vadd.f32 %v1735, %v2669
        %v3076 = vadd.f32 %v1740, %v2674
        %v3077 = vadd.f32 %v1743, %v2677
        %v3078 = vadd.f32 %v1748, %v2682
        %v3079 = vadd.f32 %v1751, %v2685
        %v3080 = vadd.f32 %v1756, %v2690
        %v3081 = vadd.f32 %v1759, %v2693
        %v3082 = vadd.f32 %v1764, %v2698
        %v3083 = vadd.f32 %v1767, %v2701
        %v3084 = vadd.f32 %v1772, %v2706
        %v3085 = vadd.f32 %v1775, %v2709
        %v3086 = vadd.f32 %v1780, %v2714
        %v3087 = vadd.f32 %v1783, %v2717
        %v3088 = vadd.f32 %v1788, %v2722
        %v3089 = vadd.f32 %v1791, %v2725
        %v3090 = vadd.f32 %v1796, %v2730
        %v3091 = vadd.f32 %v1799, %v2733
        %v3092 = vadd.f32 %v1804, %v2738
        %v3093 = vadd.f32 %v1807, %v2741
        %v3094 = vadd.f32 %v1812, %v2746
        %v3095 = vadd.f32 %v1815, %v2749
        %v3096 = vadd.f32 %v1820, %v2754
        %v3097 = vadd.f32 %v1823, %v2757
        %v3098 = vadd.f32 %v1828, %v2762
        %v3099 = vadd.f32 %v1831, %v2765
        %v3100 = vadd.f32 %v1836, %v2770
        %v3101 = vadd.f32 %v1839, %v2773
        %v3102 = vadd.f32 %v1844, %v2778
        %v3103 = vadd.f32 %v1847, %v2781
        %v3104 = vadd.f32 %v1852, %v2786
        %v3105 = vadd.f32 %v1855, %v2789
        %v3106 = vadd.f32 %v1860, %v2794
        %v3107 = vadd.f32 %v1863, %v2797
        %v3108 = vadd.f32 %v1868, %v2802
        %v3109 = vadd.f32 %v1871, %v2805
        %v3110 = vadd.f32 %v1876, %v2810
        %v3111 = vadd.f32 %v1879, %v2813
        %v3112 = vadd.f32 %v1884, %v2818
        %v3113 = vadd.f32 %v1887, %v2821
        %v3114 = vadd.f32 %v1892, %v2826
        %v3115 = vadd.f32 %v1895, %v2829
        %v3116 = vadd.f32 %v1900, %v2834
        %v3117 = vadd.f32 %v1903, %v2837
        %v3118 = vadd.f32 %v1908, %v2842
        %v3119 = vadd.f32 %v1911, %v2845
        %v3120 = vadd.f32 %v1916, %v2850
        %v3121 = vadd.f32 %v1919, %v2853
        %v3122 = vadd.f32 %v1924, %v2858
        %v3123 = vadd.f32 %v1927, %v2861
        %v3124 = vadd.f32 %v1932, %v2866
        %v3125 = vadd.f32 %v1935, %v2869
        %v3126 = vadd.f32 %v1940, %v2874
        %v3127 = vadd.f32 %v1943, %v2877
        %v3128 = vadd.f32 %v1948, %v2882
        %v3129 = vadd.f32 %v1951, %v2885
        %v3130 = vadd.f32 %v1956, %v2890
        %v3131 = vadd.f32 %v1959, %v2893
        %v3132 = vadd.f32 %v1964, %v2898
        %v3133 = vadd.f32 %v1967, %v2901
        %v3134 = vadd.f32 %v1972, %v2906
        %v3135 = vadd.f32 %v1975, %v2909
        %v3136 = vadd.f32 %v1980, %v2914
        %v3137 = vadd.f32 %v1983, %v2917
        %v3138 = vadd.f32 %v1988, %v2922
        %v3139 = vadd.f32 %v1991, %v2925
        %v3140 = vadd.f32 %v1996, %v2930
        %v3141 = vadd.f32 %v1999, %v2933
        %v3142 = vadd.f32 %v2004, %v2938
        %v3143 = vadd.f32 %v2007, %v2941
        %v3144 = vadd.f32 %v2012, %v2946
        %v3145 = vadd.f32 %v2015, %v2949
        %v3146 = vadd.f32 %v2020, %v2954
        %v3147 = vadd.f32 %v2023, %v2957
        %v3148 = vadd.f32 %v2028, %v2962
        %v3149 = vadd.f32 %v2031, %v2965
        %v3150 = vadd.f32 %v2036, %v2970
        %v3151 = vadd.f32 %v2039, %v2973
        %v3152 = vadd.f32 %v2044, %v2978
        %v3153 = vadd.f32 %v2047, %v2981
        %v3154 = vadd.f32 %v2052, %v2986
        %v3155 = vadd.f32 %v2055, %v2989
        %v3156 = vadd.f32 %v2060, %v2994
        %v3157 = vadd.f32 %v2063, %v2997
        %v3158 = vadd.f32 %v2068, %v3002
        %v3159 = vadd.f32 %v2071, %v3005
        %v3160 = vadd.f32 %v2076, %v3010
        %v3161 = vadd.f32 %v2079, %v3013
        %v3162 = vadd.f32 %v2084, %v3018
        %v3163 = vadd.f32 %v2087, %v3021
        %v3164 = vadd.f32 %v2092, %v3026
        %v3165 = vadd.f32 %v2095, %v3029
        %v3166 = vadd.f32 %v2100, %v3034
        %v3167 = vadd.f32 %v2103, %v3037
        %s3168 = scalar_lea.vmem %s228, 40
        %v3169 = vld [vmem:[%s3168] sm:$0xff]
        %v3170 = vld [vmem:[%s3168 + $0x8] sm:$0xff]
        %v3171 = vld [vmem:[%s3168 + $0x10] sm:$0xff]
        %v3172 = vld [vmem:[%s3168 + $0x18] sm:$0xff]
        %v3173 = vld [vmem:[%s3168 + $0x28] sm:$0xff]
        %v3174 = vld [vmem:[%s3168 + $0x30] sm:$0xff]
        %v3175 = vld [vmem:[%s3168 + $0x38] sm:$0xff]
        %v3176 = vld [vmem:[%s3168 + $0x40] sm:$0xff]
        %v3177 = vld [vmem:[%s3168 + $0x50] sm:$0xff]
        %v3178 = vld [vmem:[%s3168 + $0x58] sm:$0xff]
        %v3179 = vld [vmem:[%s3168 + $0x60] sm:$0xff]
        %v3180 = vld [vmem:[%s3168 + $0x68] sm:$0xff]
        %v3181 = vld [vmem:[%s3168 + $0x78] sm:$0xff]
        %v3182 = vld [vmem:[%s3168 + $0x80] sm:$0xff]
        %v3183 = vld [vmem:[%s3168 + $0x88] sm:$0xff]
        %v3184 = vld [vmem:[%s3168 + $0x90] sm:$0xff]
        %v3185 = vld [vmem:[%s3168 + $0xa0] sm:$0xff]
        %v3186 = vld [vmem:[%s3168 + $0xa8] sm:$0xff]
        %v3187 = vld [vmem:[%s3168 + $0xb0] sm:$0xff]
        %v3188 = vld [vmem:[%s3168 + $0xb8] sm:$0xff]
        %v3189 = vld [vmem:[%s3168 + $0xc8] sm:$0xff]
        %v3190 = vld [vmem:[%s3168 + $0xd0] sm:$0xff]
        %v3191 = vld [vmem:[%s3168 + $0xd8] sm:$0xff]
        %v3192 = vld [vmem:[%s3168 + $0xe0] sm:$0xff]
        %v3193 = vld [vmem:[%s3168 + $0xf0] sm:$0xff]
        %v3194 = vld [vmem:[%s3168 + $0xf8] sm:$0xff]
        %v3195 = vld [vmem:[%s3168 + $0x100] sm:$0xff]
        %v3196 = vld [vmem:[%s3168 + $0x108] sm:$0xff]
        %v3197 = vld [vmem:[%s3168 + $0x118] sm:$0xff]
        %v3198 = vld [vmem:[%s3168 + $0x120] sm:$0xff]
        %v3199 = vld [vmem:[%s3168 + $0x128] sm:$0xff]
        %v3200 = vld [vmem:[%s3168 + $0x130] sm:$0xff]
        %v3201 = vld [vmem:[%s3168 + $0x140] sm:$0xff]
        %v3202 = vld [vmem:[%s3168 + $0x148] sm:$0xff]
        %v3203 = vld [vmem:[%s3168 + $0x150] sm:$0xff]
        %v3204 = vld [vmem:[%s3168 + $0x158] sm:$0xff]
        %v3205 = vld [vmem:[%s3168 + $0x168] sm:$0xff]
        %v3206 = vld [vmem:[%s3168 + $0x170] sm:$0xff]
        %v3207 = vld [vmem:[%s3168 + $0x178] sm:$0xff]
        %v3208 = vld [vmem:[%s3168 + $0x180] sm:$0xff]
        %v3209 = vld [vmem:[%s3168 + $0x190] sm:$0xff]
        %v3210 = vld [vmem:[%s3168 + $0x198] sm:$0xff]
        %v3211 = vld [vmem:[%s3168 + $0x1a0] sm:$0xff]
        %v3212 = vld [vmem:[%s3168 + $0x1a8] sm:$0xff]
        %v3213 = vld [vmem:[%s3168 + $0x1b8] sm:$0xff]
        %v3214 = vld [vmem:[%s3168 + $0x1c0] sm:$0xff]
        %v3215 = vld [vmem:[%s3168 + $0x1c8] sm:$0xff]
        %v3216 = vld [vmem:[%s3168 + $0x1d0] sm:$0xff]
        %v3217 = vld [vmem:[%s3168 + $0x1e0] sm:$0xff]
        %v3218 = vld [vmem:[%s3168 + $0x1e8] sm:$0xff]
        %v3219 = vld [vmem:[%s3168 + $0x1f0] sm:$0xff]
        %v3220 = vld [vmem:[%s3168 + $0x1f8] sm:$0xff]
        %v3221 = vld [vmem:[%s3168 + $0x208] sm:$0xff]
        %v3222 = vld [vmem:[%s3168 + $0x210] sm:$0xff]
        %v3223 = vld [vmem:[%s3168 + $0x218] sm:$0xff]
        %v3224 = vld [vmem:[%s3168 + $0x220] sm:$0xff]
        %v3225 = vld [vmem:[%s3168 + $0x230] sm:$0xff]
        %v3226 = vld [vmem:[%s3168 + $0x238] sm:$0xff]
        %v3227 = vld [vmem:[%s3168 + $0x240] sm:$0xff]
        %v3228 = vld [vmem:[%s3168 + $0x248] sm:$0xff]
        %v3229 = vld [vmem:[%s3168 + $0x258] sm:$0xff]
        %v3230 = vld [vmem:[%s3168 + $0x260] sm:$0xff]
        %v3231 = vld [vmem:[%s3168 + $0x268] sm:$0xff]
        %v3232 = vld [vmem:[%s3168 + $0x270] sm:$0xff]
        %v3233 = vld [vmem:[%s3168 + $0x280] sm:$0xff]
        %v3234 = vld [vmem:[%s3168 + $0x288] sm:$0xff]
        %v3235 = vld [vmem:[%s3168 + $0x290] sm:$0xff]
        %v3236 = vld [vmem:[%s3168 + $0x298] sm:$0xff]
        %v3237 = vld [vmem:[%s3168 + $0x2a8] sm:$0xff]
        %v3238 = vld [vmem:[%s3168 + $0x2b0] sm:$0xff]
        %v3239 = vld [vmem:[%s3168 + $0x2b8] sm:$0xff]
        %v3240 = vld [vmem:[%s3168 + $0x2c0] sm:$0xff]
        %v3241 = vld [vmem:[%s3168 + $0x2d0] sm:$0xff]
        %v3242 = vld [vmem:[%s3168 + $0x2d8] sm:$0xff]
        %v3243 = vld [vmem:[%s3168 + $0x2e0] sm:$0xff]
        %v3244 = vld [vmem:[%s3168 + $0x2e8] sm:$0xff]
        %v3245 = vld [vmem:[%s3168 + $0x2f8] sm:$0xff]
        %v3246 = vld [vmem:[%s3168 + $0x300] sm:$0xff]
        %v3247 = vld [vmem:[%s3168 + $0x308] sm:$0xff]
        %v3248 = vld [vmem:[%s3168 + $0x310] sm:$0xff]
        %v3249 = vld [vmem:[%s3168 + $0x320] sm:$0xff]
        %v3250 = vld [vmem:[%s3168 + $0x328] sm:$0xff]
        %v3251 = vld [vmem:[%s3168 + $0x330] sm:$0xff]
        %v3252 = vld [vmem:[%s3168 + $0x338] sm:$0xff]
        %v3253 = vld [vmem:[%s3168 + $0x348] sm:$0xff]
        %v3254 = vld [vmem:[%s3168 + $0x350] sm:$0xff]
        %v3255 = vld [vmem:[%s3168 + $0x358] sm:$0xff]
        %v3256 = vld [vmem:[%s3168 + $0x360] sm:$0xff]
        %v3257 = vld [vmem:[%s3168 + $0x370] sm:$0xff]
        %v3258 = vld [vmem:[%s3168 + $0x378] sm:$0xff]
        %v3259 = vld [vmem:[%s3168 + $0x380] sm:$0xff]
        %v3260 = vld [vmem:[%s3168 + $0x388] sm:$0xff]
        %v3261 = vld [vmem:[%s3168 + $0x398] sm:$0xff]
        %v3262 = vld [vmem:[%s3168 + $0x3a0] sm:$0xff]
        %v3263 = vld [vmem:[%s3168 + $0x3a8] sm:$0xff]
        %v3264 = vld [vmem:[%s3168 + $0x3b0] sm:$0xff]
        %v3265 = vld [vmem:[%s3168 + $0x3c0] sm:$0xff]
        %v3266 = vld [vmem:[%s3168 + $0x3c8] sm:$0xff]
        %v3267 = vld [vmem:[%s3168 + $0x3d0] sm:$0xff]
        %v3268 = vld [vmem:[%s3168 + $0x3d8] sm:$0xff]
        %v3269 = vld [vmem:[%s3168 + $0x3e8] sm:$0xff]
        %v3270 = vld [vmem:[%s3168 + $0x3f0] sm:$0xff]
        %v3271 = vld [vmem:[%s3168 + $0x3f8] sm:$0xff]
        %v3272 = vld [vmem:[%s3168 + $0x400] sm:$0xff]
        %v3273 = vld [vmem:[%s3168 + $0x410] sm:$0xff]
        %v3274 = vld [vmem:[%s3168 + $0x418] sm:$0xff]
        %v3275 = vld [vmem:[%s3168 + $0x420] sm:$0xff]
        %v3276 = vld [vmem:[%s3168 + $0x428] sm:$0xff]
        %v3277 = vld [vmem:[%s3168 + $0x438] sm:$0xff]
        %v3278 = vld [vmem:[%s3168 + $0x440] sm:$0xff]
        %v3279 = vld [vmem:[%s3168 + $0x448] sm:$0xff]
        %v3280 = vld [vmem:[%s3168 + $0x450] sm:$0xff]
        %v3281 = vld [vmem:[%s3168 + $0x460] sm:$0xff]
        %v3282 = vld [vmem:[%s3168 + $0x468] sm:$0xff]
        %v3283 = vld [vmem:[%s3168 + $0x470] sm:$0xff]
        %v3284 = vld [vmem:[%s3168 + $0x478] sm:$0xff]
        %v3285 = vld [vmem:[%s3168 + $0x488] sm:$0xff]
        %v3286 = vld [vmem:[%s3168 + $0x490] sm:$0xff]
        %v3287 = vld [vmem:[%s3168 + $0x498] sm:$0xff]
        %v3288 = vld [vmem:[%s3168 + $0x4a0] sm:$0xff]
        %v3289 = vld [vmem:[%s3168 + $0x4b0] sm:$0xff]
        %v3290 = vld [vmem:[%s3168 + $0x4b8] sm:$0xff]
        %v3291 = vld [vmem:[%s3168 + $0x4c0] sm:$0xff]
        %v3292 = vld [vmem:[%s3168 + $0x4c8] sm:$0xff]
        %v3293 = vld [vmem:[%s3168 + $0x4d8] sm:$0xff]
        %v3294 = vld [vmem:[%s3168 + $0x4e0] sm:$0xff]
        %v3295 = vld [vmem:[%s3168 + $0x4e8] sm:$0xff]
        %v3296 = vld [vmem:[%s3168 + $0x4f0] sm:$0xff]
        %v3297 = vpack.c.bf16 %v3170, %v3169
        %v3298 = vpack.c.bf16 %v3172, %v3171
        %v3299 = vpack.c.bf16 %v3174, %v3173
        %v3300 = vpack.c.bf16 %v3176, %v3175
        %v3301 = vpack.c.bf16 %v3178, %v3177
        %v3302 = vpack.c.bf16 %v3180, %v3179
        %v3303 = vpack.c.bf16 %v3182, %v3181
        %v3304 = vpack.c.bf16 %v3184, %v3183
        %v3305 = vpack.c.bf16 %v3186, %v3185
        %v3306 = vpack.c.bf16 %v3188, %v3187
        %v3307 = vpack.c.bf16 %v3190, %v3189
        %v3308 = vpack.c.bf16 %v3192, %v3191
        %v3309 = vpack.c.bf16 %v3194, %v3193
        %v3310 = vpack.c.bf16 %v3196, %v3195
        %v3311 = vpack.c.bf16 %v3198, %v3197
        %v3312 = vpack.c.bf16 %v3200, %v3199
        %v3313 = vpack.c.bf16 %v3202, %v3201
        %v3314 = vpack.c.bf16 %v3204, %v3203
        %v3315 = vpack.c.bf16 %v3206, %v3205
        %v3316 = vpack.c.bf16 %v3208, %v3207
        %v3317 = vpack.c.bf16 %v3210, %v3209
        %v3318 = vpack.c.bf16 %v3212, %v3211
        %v3319 = vpack.c.bf16 %v3214, %v3213
        %v3320 = vpack.c.bf16 %v3216, %v3215
        %v3321 = vpack.c.bf16 %v3218, %v3217
        %v3322 = vpack.c.bf16 %v3220, %v3219
        %v3323 = vpack.c.bf16 %v3222, %v3221
        %v3324 = vpack.c.bf16 %v3224, %v3223
        %v3325 = vpack.c.bf16 %v3226, %v3225
        %v3326 = vpack.c.bf16 %v3228, %v3227
        %v3327 = vpack.c.bf16 %v3230, %v3229
        %v3328 = vpack.c.bf16 %v3232, %v3231
        %v3329 = vpack.c.bf16 %v3234, %v3233
        %v3330 = vpack.c.bf16 %v3236, %v3235
        %v3331 = vpack.c.bf16 %v3238, %v3237
        %v3332 = vpack.c.bf16 %v3240, %v3239
        %v3333 = vpack.c.bf16 %v3242, %v3241
        %v3334 = vpack.c.bf16 %v3244, %v3243
        %v3335 = vpack.c.bf16 %v3246, %v3245
        %v3336 = vpack.c.bf16 %v3248, %v3247
        %v3337 = vpack.c.bf16 %v3250, %v3249
        %v3338 = vpack.c.bf16 %v3252, %v3251
        %v3339 = vpack.c.bf16 %v3254, %v3253
        %v3340 = vpack.c.bf16 %v3256, %v3255
        %v3341 = vpack.c.bf16 %v3258, %v3257
        %v3342 = vpack.c.bf16 %v3260, %v3259
        %v3343 = vpack.c.bf16 %v3262, %v3261
        %v3344 = vpack.c.bf16 %v3264, %v3263
        %v3345 = vpack.c.bf16 %v3266, %v3265
        %v3346 = vpack.c.bf16 %v3268, %v3267
        %v3347 = vpack.c.bf16 %v3270, %v3269
        %v3348 = vpack.c.bf16 %v3272, %v3271
        %v3349 = vpack.c.bf16 %v3274, %v3273
        %v3350 = vpack.c.bf16 %v3276, %v3275
        %v3351 = vpack.c.bf16 %v3278, %v3277
        %v3352 = vpack.c.bf16 %v3280, %v3279
        %v3353 = vpack.c.bf16 %v3282, %v3281
        %v3354 = vpack.c.bf16 %v3284, %v3283
        %v3355 = vpack.c.bf16 %v3286, %v3285
        %v3356 = vpack.c.bf16 %v3288, %v3287
        %v3357 = vpack.c.bf16 %v3290, %v3289
        %v3358 = vpack.c.bf16 %v3292, %v3291
        %v3359 = vpack.c.bf16 %v3294, %v3293
        %v3360 = vpack.c.bf16 %v3296, %v3295
        %s3361 = scalar_lea.vmem %s232, 6
        %v3362 = vld [vmem:[%s3361] sm:$0x3]
        %v3364 = vsel %vm621, %v3297, 0
        %v3367 = vsel %vm621, %v3298, 0
        %v3370 = vsel %vm621, %v3299, 0
        %v3373 = vsel %vm621, %v3300, 0
        %v3376 = vsel %vm621, %v3301, 0
        %v3379 = vsel %vm621, %v3302, 0
        %v3382 = vsel %vm621, %v3303, 0
        %v3385 = vsel %vm621, %v3304, 0
        %v3388 = vsel %vm621, %v3305, 0
        %v3391 = vsel %vm621, %v3306, 0
        %v3394 = vsel %vm621, %v3307, 0
        %v3397 = vsel %vm621, %v3308, 0
        %v3400 = vsel %vm621, %v3309, 0
        %v3403 = vsel %vm621, %v3310, 0
        %v3406 = vsel %vm621, %v3311, 0
        %v3409 = vsel %vm621, %v3312, 0
        %v3412 = vsel %vm621, %v3313, 0
        %v3415 = vsel %vm621, %v3314, 0
        %v3418 = vsel %vm621, %v3315, 0
        %v3421 = vsel %vm621, %v3316, 0
        %v3424 = vsel %vm621, %v3317, 0
        %v3427 = vsel %vm621, %v3318, 0
        %v3430 = vsel %vm621, %v3319, 0
        %v3433 = vsel %vm621, %v3320, 0
        %v3436 = vsel %vm621, %v3321, 0
        %v3439 = vsel %vm621, %v3322, 0
        %v3442 = vsel %vm621, %v3323, 0
        %v3445 = vsel %vm621, %v3324, 0
        %v3448 = vsel %vm621, %v3325, 0
        %v3451 = vsel %vm621, %v3326, 0
        %v3454 = vsel %vm621, %v3327, 0
        %v3457 = vsel %vm621, %v3328, 0
        %v3460 = vsel %vm621, %v3329, 0
        %v3463 = vsel %vm621, %v3330, 0
        %v3466 = vsel %vm621, %v3331, 0
        %v3469 = vsel %vm621, %v3332, 0
        %v3472 = vsel %vm621, %v3333, 0
        %v3475 = vsel %vm621, %v3334, 0
        %v3478 = vsel %vm621, %v3335, 0
        %v3481 = vsel %vm621, %v3336, 0
        %v3484 = vsel %vm621, %v3337, 0
        %v3487 = vsel %vm621, %v3338, 0
        %v3490 = vsel %vm621, %v3339, 0
        %v3493 = vsel %vm621, %v3340, 0
        %v3496 = vsel %vm621, %v3341, 0
        %v3499 = vsel %vm621, %v3342, 0
        %v3502 = vsel %vm621, %v3343, 0
        %v3505 = vsel %vm621, %v3344, 0
        %v3508 = vsel %vm621, %v3345, 0
        %v3511 = vsel %vm621, %v3346, 0
        %v3514 = vsel %vm621, %v3347, 0
        %v3517 = vsel %vm621, %v3348, 0
        %v3520 = vsel %vm621, %v3349, 0
        %v3523 = vsel %vm621, %v3350, 0
        %v3526 = vsel %vm621, %v3351, 0
        %v3529 = vsel %vm621, %v3352, 0
        %v3532 = vsel %vm621, %v3353, 0
        %v3535 = vsel %vm621, %v3354, 0
        %v3538 = vsel %vm621, %v3355, 0
        %v3541 = vsel %vm621, %v3356, 0
        %v3544 = vsel %vm621, %v3357, 0
        %v3547 = vsel %vm621, %v3358, 0
        %v3550 = vsel %vm621, %v3359, 0
        %v3553 = vsel %vm621, %v3360, 0
        %v3556 = vand.u32 %v3362, %v817
        %3558 = vmatprep.subr.bf16.mxu0 0
        %3559 = vmatpush1.bf16.msra.mxu0 %v3556
        %3560 = vmatprep.subr.bf16.mxu0 0
        %3561 = vmatpush1.bf16.msra.mxu0 0
        %3562 = vmatprep.subr.bf16.mxu0 0
        %3563 = vmatpush1.bf16.msra.mxu0 0
        %3564 = vmatprep.subr.bf16.mxu0 0
        %3565 = vmatpush1.bf16.msra.mxu0 0
        %3566 = vmatprep.subr.bf16.mxu0 0
        %3567 = vmatpush1.bf16.msra.mxu0 0
        %3568 = vmatprep.subr.bf16.mxu0 0
        %3569 = vmatpush1.bf16.msra.mxu0 0
        %3570 = vmatprep.subr.bf16.mxu0 0
        %3571 = vmatpush1.bf16.msra.mxu0 0
        %3572 = vmatprep.subr.bf16.mxu0 0
        %3573 = vmatpush1.bf16.msra.mxu0 0
        %3574 = vmatprep.subr.bf16.mxu0 0
        %3575 = vmatpush1.bf16.msra.mxu0 0
        %3576 = vmatprep.subr.bf16.mxu0 0
        %3577 = vmatpush1.bf16.msra.mxu0 0
        %3578 = vmatprep.subr.bf16.mxu0 0
        %3579 = vmatpush1.bf16.msra.mxu0 0
        %3580 = vmatprep.subr.bf16.mxu0 0
        %3581 = vmatpush1.bf16.msra.mxu0 0
        %3582 = vmatprep.subr.bf16.mxu0 0
        %3583 = vmatpush1.bf16.msra.mxu0 0
        %3584 = vmatprep.subr.bf16.mxu0 0
        %3585 = vmatpush1.bf16.msra.mxu0 0
        %3586 = vmatprep.subr.bf16.mxu0 0
        %3587 = vmatpush1.bf16.msra.mxu0 0
        %3588 = vmatprep.subr.bf16.mxu0 0
        %3589 = vmatpush1.bf16.msra.mxu0 0
        %3590 = vmatprep.mubr.bf16.mxu0 0
        %3591 = vmatmul.mubr.bf16.gmra.mrb[0].mxu0 %v3364
        %v3592 = vpop.f32.mrb[0].mxu0
        %v3593 = vadd.f32 0.0, %v3592
        %v3594 = vpop.f32.mrb[0].mxu0
        %v3595 = vpop.f32.mrb[0].mxu0
        %v3596 = vadd.f32 0.0, %v3595
        %v3597 = vpop.f32.mrb[0].mxu0
        %3598 = vmatprep.mubr.bf16.mxu0 0
        %3599 = vmatmul.mubr.bf16.gmra.mrb[0].mxu0 %v3367
        %v3600 = vpop.f32.mrb[0].mxu0
        %v3601 = vadd.f32 0.0, %v3600
        %v3602 = vpop.f32.mrb[0].mxu0
        %v3603 = vpop.f32.mrb[0].mxu0
        %v3604 = vadd.f32 0.0, %v3603
        %v3605 = vpop.f32.mrb[0].mxu0
        %3606 = vmatprep.mubr.bf16.mxu0 0
        %3607 = vmatmul.mubr.bf16.gmra.mrb[0].mxu0 %v3370
        %v3608 = vpop.f32.mrb[0].mxu0
        %v3609 = vadd.f32 0.0, %v3608
        %v3610 = vpop.f32.mrb[0].mxu0
        %v3611 = vpop.f32.mrb[0].mxu0
        %v3612 = vadd.f32 0.0, %v3611
        %v3613 = vpop.f32.mrb[0].mxu0
        %3614 = vmatprep.mubr.bf16.mxu0 0
        %3615 = vmatmul.mubr.bf16.gmra.mrb[0].mxu0 %v3373
        %v3616 = vpop.f32.mrb[0].mxu0
        %v3617 = vadd.f32 0.0, %v3616
        %v3618 = vpop.f32.mrb[0].mxu0
        %v3619 = vpop.f32.mrb[0].mxu0
        %v3620 = vadd.f32 0.0, %v3619
        %v3621 = vpop.f32.mrb[0].mxu0
        %3622 = vmatprep.mubr.bf16.mxu0 0
        %3623 = vmatmul.mubr.bf16.gmra.mrb[0].mxu0 %v3376
        %v3624 = vpop.f32.mrb[0].mxu0
        %v3625 = vadd.f32 0.0, %v3624
        %v3626 = vpop.f32.mrb[0].mxu0
        %v3627 = vpop.f32.mrb[0].mxu0
        %v3628 = vadd.f32 0.0, %v3627
        %v3629 = vpop.f32.mrb[0].mxu0
        %3630 = vmatprep.mubr.bf16.mxu0 0
        %3631 = vmatmul.mubr.bf16.gmra.mrb[0].mxu0 %v3379
        %v3632 = vpop.f32.mrb[0].mxu0
        %v3633 = vadd.f32 0.0, %v3632
        %v3634 = vpop.f32.mrb[0].mxu0
        %v3635 = vpop.f32.mrb[0].mxu0
        %v3636 = vadd.f32 0.0, %v3635
        %v3637 = vpop.f32.mrb[0].mxu0
        %3638 = vmatprep.mubr.bf16.mxu0 0
        %3639 = vmatmul.mubr.bf16.gmra.mrb[0].mxu0 %v3382
        %v3640 = vpop.f32.mrb[0].mxu0
        %v3641 = vadd.f32 0.0, %v3640
        %v3642 = vpop.f32.mrb[0].mxu0
        %v3643 = vpop.f32.mrb[0].mxu0
        %v3644 = vadd.f32 0.0, %v3643
        %v3645 = vpop.f32.mrb[0].mxu0
        %3646 = vmatprep.mubr.bf16.mxu0 0
        %3647 = vmatmul.mubr.bf16.gmra.mrb[0].mxu0 %v3385
        %v3648 = vpop.f32.mrb[0].mxu0
        %v3649 = vadd.f32 0.0, %v3648
        %v3650 = vpop.f32.mrb[0].mxu0
        %v3651 = vpop.f32.mrb[0].mxu0
        %v3652 = vadd.f32 0.0, %v3651
        %v3653 = vpop.f32.mrb[0].mxu0
        %3654 = vmatprep.mubr.bf16.mxu0 0
        %3655 = vmatmul.mubr.bf16.gmra.mrb[0].mxu0 %v3388
        %v3656 = vpop.f32.mrb[0].mxu0
        %v3657 = vadd.f32 0.0, %v3656
        %v3658 = vpop.f32.mrb[0].mxu0
        %v3659 = vpop.f32.mrb[0].mxu0
        %v3660 = vadd.f32 0.0, %v3659
        %v3661 = vpop.f32.mrb[0].mxu0
        %3662 = vmatprep.mubr.bf16.mxu0 0
        %3663 = vmatmul.mubr.bf16.gmra.mrb[0].mxu0 %v3391
        %v3664 = vpop.f32.mrb[0].mxu0
        %v3665 = vadd.f32 0.0, %v3664
        %v3666 = vpop.f32.mrb[0].mxu0
        %v3667 = vpop.f32.mrb[0].mxu0
        %v3668 = vadd.f32 0.0, %v3667
        %v3669 = vpop.f32.mrb[0].mxu0
        %3670 = vmatprep.mubr.bf16.mxu0 0
        %3671 = vmatmul.mubr.bf16.gmra.mrb[0].mxu0 %v3394
        %v3672 = vpop.f32.mrb[0].mxu0
        %v3673 = vadd.f32 0.0, %v3672
        %v3674 = vpop.f32.mrb[0].mxu0
        %v3675 = vpop.f32.mrb[0].mxu0
        %v3676 = vadd.f32 0.0, %v3675
        %v3677 = vpop.f32.mrb[0].mxu0
        %3678 = vmatprep.mubr.bf16.mxu0 0
        %3679 = vmatmul.mubr.bf16.gmra.mrb[0].mxu0 %v3397
        %v3680 = vpop.f32.mrb[0].mxu0
        %v3681 = vadd.f32 0.0, %v3680
        %v3682 = vpop.f32.mrb[0].mxu0
        %v3683 = vpop.f32.mrb[0].mxu0
        %v3684 = vadd.f32 0.0, %v3683
        %v3685 = vpop.f32.mrb[0].mxu0
        %3686 = vmatprep.mubr.bf16.mxu0 0
        %3687 = vmatmul.mubr.bf16.gmra.mrb[0].mxu0 %v3400
        %v3688 = vpop.f32.mrb[0].mxu0
        %v3689 = vadd.f32 0.0, %v3688
        %v3690 = vpop.f32.mrb[0].mxu0
        %v3691 = vpop.f32.mrb[0].mxu0
        %v3692 = vadd.f32 0.0, %v3691
        %v3693 = vpop.f32.mrb[0].mxu0
        %3694 = vmatprep.mubr.bf16.mxu0 0
        %3695 = vmatmul.mubr.bf16.gmra.mrb[0].mxu0 %v3403
        %v3696 = vpop.f32.mrb[0].mxu0
        %v3697 = vadd.f32 0.0, %v3696
        %v3698 = vpop.f32.mrb[0].mxu0
        %v3699 = vpop.f32.mrb[0].mxu0
        %v3700 = vadd.f32 0.0, %v3699
        %v3701 = vpop.f32.mrb[0].mxu0
        %3702 = vmatprep.mubr.bf16.mxu0 0
        %3703 = vmatmul.mubr.bf16.gmra.mrb[0].mxu0 %v3406
        %v3704 = vpop.f32.mrb[0].mxu0
        %v3705 = vadd.f32 0.0, %v3704
        %v3706 = vpop.f32.mrb[0].mxu0
        %v3707 = vpop.f32.mrb[0].mxu0
        %v3708 = vadd.f32 0.0, %v3707
        %v3709 = vpop.f32.mrb[0].mxu0
        %3710 = vmatprep.mubr.bf16.mxu0 0
        %3711 = vmatmul.mubr.bf16.gmra.mrb[0].mxu0 %v3409
        %v3712 = vpop.f32.mrb[0].mxu0
        %v3713 = vadd.f32 0.0, %v3712
        %v3714 = vpop.f32.mrb[0].mxu0
        %v3715 = vpop.f32.mrb[0].mxu0
        %v3716 = vadd.f32 0.0, %v3715
        %v3717 = vpop.f32.mrb[0].mxu0
        %3718 = vmatprep.mubr.bf16.mxu0 0
        %3719 = vmatmul.mubr.bf16.gmra.mrb[0].mxu0 %v3412
        %v3720 = vpop.f32.mrb[0].mxu0
        %v3721 = vadd.f32 0.0, %v3720
        %v3722 = vpop.f32.mrb[0].mxu0
        %v3723 = vpop.f32.mrb[0].mxu0
        %v3724 = vadd.f32 0.0, %v3723
        %v3725 = vpop.f32.mrb[0].mxu0
        %3726 = vmatprep.mubr.bf16.mxu0 0
        %3727 = vmatmul.mubr.bf16.gmra.mrb[0].mxu0 %v3415
        %v3728 = vpop.f32.mrb[0].mxu0
        %v3729 = vadd.f32 0.0, %v3728
        %v3730 = vpop.f32.mrb[0].mxu0
        %v3731 = vpop.f32.mrb[0].mxu0
        %v3732 = vadd.f32 0.0, %v3731
        %v3733 = vpop.f32.mrb[0].mxu0
        %3734 = vmatprep.mubr.bf16.mxu0 0
        %3735 = vmatmul.mubr.bf16.gmra.mrb[0].mxu0 %v3418
        %v3736 = vpop.f32.mrb[0].mxu0
        %v3737 = vadd.f32 0.0, %v3736
        %v3738 = vpop.f32.mrb[0].mxu0
        %v3739 = vpop.f32.mrb[0].mxu0
        %v3740 = vadd.f32 0.0, %v3739
        %v3741 = vpop.f32.mrb[0].mxu0
        %3742 = vmatprep.mubr.bf16.mxu0 0
        %3743 = vmatmul.mubr.bf16.gmra.mrb[0].mxu0 %v3421
        %v3744 = vpop.f32.mrb[0].mxu0
        %v3745 = vadd.f32 0.0, %v3744
        %v3746 = vpop.f32.mrb[0].mxu0
        %v3747 = vpop.f32.mrb[0].mxu0
        %v3748 = vadd.f32 0.0, %v3747
        %v3749 = vpop.f32.mrb[0].mxu0
        %3750 = vmatprep.mubr.bf16.mxu0 0
        %3751 = vmatmul.mubr.bf16.gmra.mrb[0].mxu0 %v3424
        %v3752 = vpop.f32.mrb[0].mxu0
        %v3753 = vadd.f32 0.0, %v3752
        %v3754 = vpop.f32.mrb[0].mxu0
        %v3755 = vpop.f32.mrb[0].mxu0
        %v3756 = vadd.f32 0.0, %v3755
        %v3757 = vpop.f32.mrb[0].mxu0
        %3758 = vmatprep.mubr.bf16.mxu0 0
        %3759 = vmatmul.mubr.bf16.gmra.mrb[0].mxu0 %v3427
        %v3760 = vpop.f32.mrb[0].mxu0
        %v3761 = vadd.f32 0.0, %v3760
        %v3762 = vpop.f32.mrb[0].mxu0
        %v3763 = vpop.f32.mrb[0].mxu0
        %v3764 = vadd.f32 0.0, %v3763
        %v3765 = vpop.f32.mrb[0].mxu0
        %3766 = vmatprep.mubr.bf16.mxu0 0
        %3767 = vmatmul.mubr.bf16.gmra.mrb[0].mxu0 %v3430
        %v3768 = vpop.f32.mrb[0].mxu0
        %v3769 = vadd.f32 0.0, %v3768
        %v3770 = vpop.f32.mrb[0].mxu0
        %v3771 = vpop.f32.mrb[0].mxu0
        %v3772 = vadd.f32 0.0, %v3771
        %v3773 = vpop.f32.mrb[0].mxu0
        %3774 = vmatprep.mubr.bf16.mxu0 0
        %3775 = vmatmul.mubr.bf16.gmra.mrb[0].mxu0 %v3433
        %v3776 = vpop.f32.mrb[0].mxu0
        %v3777 = vadd.f32 0.0, %v3776
        %v3778 = vpop.f32.mrb[0].mxu0
        %v3779 = vpop.f32.mrb[0].mxu0
        %v3780 = vadd.f32 0.0, %v3779
        %v3781 = vpop.f32.mrb[0].mxu0
        %3782 = vmatprep.mubr.bf16.mxu0 0
        %3783 = vmatmul.mubr.bf16.gmra.mrb[0].mxu0 %v3436
        %v3784 = vpop.f32.mrb[0].mxu0
        %v3785 = vadd.f32 0.0, %v3784
        %v3786 = vpop.f32.mrb[0].mxu0
        %v3787 = vpop.f32.mrb[0].mxu0
        %v3788 = vadd.f32 0.0, %v3787
        %v3789 = vpop.f32.mrb[0].mxu0
        %3790 = vmatprep.mubr.bf16.mxu0 0
        %3791 = vmatmul.mubr.bf16.gmra.mrb[0].mxu0 %v3439
        %v3792 = vpop.f32.mrb[0].mxu0
        %v3793 = vadd.f32 0.0, %v3792
        %v3794 = vpop.f32.mrb[0].mxu0
        %v3795 = vpop.f32.mrb[0].mxu0
        %v3796 = vadd.f32 0.0, %v3795
        %v3797 = vpop.f32.mrb[0].mxu0
        %3798 = vmatprep.mubr.bf16.mxu0 0
        %3799 = vmatmul.mubr.bf16.gmra.mrb[0].mxu0 %v3442
        %v3800 = vpop.f32.mrb[0].mxu0
        %v3801 = vadd.f32 0.0, %v3800
        %v3802 = vpop.f32.mrb[0].mxu0
        %v3803 = vpop.f32.mrb[0].mxu0
        %v3804 = vadd.f32 0.0, %v3803
        %v3805 = vpop.f32.mrb[0].mxu0
        %3806 = vmatprep.mubr.bf16.mxu0 0
        %3807 = vmatmul.mubr.bf16.gmra.mrb[0].mxu0 %v3445
        %v3808 = vpop.f32.mrb[0].mxu0
        %v3809 = vadd.f32 0.0, %v3808
        %v3810 = vpop.f32.mrb[0].mxu0
        %v3811 = vpop.f32.mrb[0].mxu0
        %v3812 = vadd.f32 0.0, %v3811
        %v3813 = vpop.f32.mrb[0].mxu0
        %3814 = vmatprep.mubr.bf16.mxu0 0
        %3815 = vmatmul.mubr.bf16.gmra.mrb[0].mxu0 %v3448
        %v3816 = vpop.f32.mrb[0].mxu0
        %v3817 = vadd.f32 0.0, %v3816
        %v3818 = vpop.f32.mrb[0].mxu0
        %v3819 = vpop.f32.mrb[0].mxu0
        %v3820 = vadd.f32 0.0, %v3819
        %v3821 = vpop.f32.mrb[0].mxu0
        %3822 = vmatprep.mubr.bf16.mxu0 0
        %3823 = vmatmul.mubr.bf16.gmra.mrb[0].mxu0 %v3451
        %v3824 = vpop.f32.mrb[0].mxu0
        %v3825 = vadd.f32 0.0, %v3824
        %v3826 = vpop.f32.mrb[0].mxu0
        %v3827 = vpop.f32.mrb[0].mxu0
        %v3828 = vadd.f32 0.0, %v3827
        %v3829 = vpop.f32.mrb[0].mxu0
        %3830 = vmatprep.mubr.bf16.mxu0 0
        %3831 = vmatmul.mubr.bf16.gmra.mrb[0].mxu0 %v3454
        %v3832 = vpop.f32.mrb[0].mxu0
        %v3833 = vadd.f32 0.0, %v3832
        %v3834 = vpop.f32.mrb[0].mxu0
        %v3835 = vpop.f32.mrb[0].mxu0
        %v3836 = vadd.f32 0.0, %v3835
        %v3837 = vpop.f32.mrb[0].mxu0
        %3838 = vmatprep.mubr.bf16.mxu0 0
        %3839 = vmatmul.mubr.bf16.gmra.mrb[0].mxu0 %v3457
        %v3840 = vpop.f32.mrb[0].mxu0
        %v3841 = vadd.f32 0.0, %v3840
        %v3842 = vpop.f32.mrb[0].mxu0
        %v3843 = vpop.f32.mrb[0].mxu0
        %v3844 = vadd.f32 0.0, %v3843
        %v3845 = vpop.f32.mrb[0].mxu0
        %3846 = vmatprep.mubr.bf16.mxu0 0
        %3847 = vmatmul.mubr.bf16.gmra.mrb[0].mxu0 %v3460
        %v3848 = vpop.f32.mrb[0].mxu0
        %v3849 = vadd.f32 0.0, %v3848
        %v3850 = vpop.f32.mrb[0].mxu0
        %v3851 = vpop.f32.mrb[0].mxu0
        %v3852 = vadd.f32 0.0, %v3851
        %v3853 = vpop.f32.mrb[0].mxu0
        %3854 = vmatprep.mubr.bf16.mxu0 0
        %3855 = vmatmul.mubr.bf16.gmra.mrb[0].mxu0 %v3463
        %v3856 = vpop.f32.mrb[0].mxu0
        %v3857 = vadd.f32 0.0, %v3856
        %v3858 = vpop.f32.mrb[0].mxu0
        %v3859 = vpop.f32.mrb[0].mxu0
        %v3860 = vadd.f32 0.0, %v3859
        %v3861 = vpop.f32.mrb[0].mxu0
        %3862 = vmatprep.mubr.bf16.mxu0 0
        %3863 = vmatmul.mubr.bf16.gmra.mrb[0].mxu0 %v3466
        %v3864 = vpop.f32.mrb[0].mxu0
        %v3865 = vadd.f32 0.0, %v3864
        %v3866 = vpop.f32.mrb[0].mxu0
        %v3867 = vpop.f32.mrb[0].mxu0
        %v3868 = vadd.f32 0.0, %v3867
        %v3869 = vpop.f32.mrb[0].mxu0
        %3870 = vmatprep.mubr.bf16.mxu0 0
        %3871 = vmatmul.mubr.bf16.gmra.mrb[0].mxu0 %v3469
        %v3872 = vpop.f32.mrb[0].mxu0
        %v3873 = vadd.f32 0.0, %v3872
        %v3874 = vpop.f32.mrb[0].mxu0
        %v3875 = vpop.f32.mrb[0].mxu0
        %v3876 = vadd.f32 0.0, %v3875
        %v3877 = vpop.f32.mrb[0].mxu0
        %3878 = vmatprep.mubr.bf16.mxu0 0
        %3879 = vmatmul.mubr.bf16.gmra.mrb[0].mxu0 %v3472
        %v3880 = vpop.f32.mrb[0].mxu0
        %v3881 = vadd.f32 0.0, %v3880
        %v3882 = vpop.f32.mrb[0].mxu0
        %v3883 = vpop.f32.mrb[0].mxu0
        %v3884 = vadd.f32 0.0, %v3883
        %v3885 = vpop.f32.mrb[0].mxu0
        %3886 = vmatprep.mubr.bf16.mxu0 0
        %3887 = vmatmul.mubr.bf16.gmra.mrb[0].mxu0 %v3475
        %v3888 = vpop.f32.mrb[0].mxu0
        %v3889 = vadd.f32 0.0, %v3888
        %v3890 = vpop.f32.mrb[0].mxu0
        %v3891 = vpop.f32.mrb[0].mxu0
        %v3892 = vadd.f32 0.0, %v3891
        %v3893 = vpop.f32.mrb[0].mxu0
        %3894 = vmatprep.mubr.bf16.mxu0 0
        %3895 = vmatmul.mubr.bf16.gmra.mrb[0].mxu0 %v3478
        %v3896 = vpop.f32.mrb[0].mxu0
        %v3897 = vadd.f32 0.0, %v3896
        %v3898 = vpop.f32.mrb[0].mxu0
        %v3899 = vpop.f32.mrb[0].mxu0
        %v3900 = vadd.f32 0.0, %v3899
        %v3901 = vpop.f32.mrb[0].mxu0
        %3902 = vmatprep.mubr.bf16.mxu0 0
        %3903 = vmatmul.mubr.bf16.gmra.mrb[0].mxu0 %v3481
        %v3904 = vpop.f32.mrb[0].mxu0
        %v3905 = vadd.f32 0.0, %v3904
        %v3906 = vpop.f32.mrb[0].mxu0
        %v3907 = vpop.f32.mrb[0].mxu0
        %v3908 = vadd.f32 0.0, %v3907
        %v3909 = vpop.f32.mrb[0].mxu0
        %3910 = vmatprep.mubr.bf16.mxu0 0
        %3911 = vmatmul.mubr.bf16.gmra.mrb[0].mxu0 %v3484
        %v3912 = vpop.f32.mrb[0].mxu0
        %v3913 = vadd.f32 0.0, %v3912
        %v3914 = vpop.f32.mrb[0].mxu0
        %v3915 = vpop.f32.mrb[0].mxu0
        %v3916 = vadd.f32 0.0, %v3915
        %v3917 = vpop.f32.mrb[0].mxu0
        %3918 = vmatprep.mubr.bf16.mxu0 0
        %3919 = vmatmul.mubr.bf16.gmra.mrb[0].mxu0 %v3487
        %v3920 = vpop.f32.mrb[0].mxu0
        %v3921 = vadd.f32 0.0, %v3920
        %v3922 = vpop.f32.mrb[0].mxu0
        %v3923 = vpop.f32.mrb[0].mxu0
        %v3924 = vadd.f32 0.0, %v3923
        %v3925 = vpop.f32.mrb[0].mxu0
        %3926 = vmatprep.mubr.bf16.mxu0 0
        %3927 = vmatmul.mubr.bf16.gmra.mrb[0].mxu0 %v3490
        %v3928 = vpop.f32.mrb[0].mxu0
        %v3929 = vadd.f32 0.0, %v3928
        %v3930 = vpop.f32.mrb[0].mxu0
        %v3931 = vpop.f32.mrb[0].mxu0
        %v3932 = vadd.f32 0.0, %v3931
        %v3933 = vpop.f32.mrb[0].mxu0
        %3934 = vmatprep.mubr.bf16.mxu0 0
        %3935 = vmatmul.mubr.bf16.gmra.mrb[0].mxu0 %v3493
        %v3936 = vpop.f32.mrb[0].mxu0
        %v3937 = vadd.f32 0.0, %v3936
        %v3938 = vpop.f32.mrb[0].mxu0
        %v3939 = vpop.f32.mrb[0].mxu0
        %v3940 = vadd.f32 0.0, %v3939
        %v3941 = vpop.f32.mrb[0].mxu0
        %3942 = vmatprep.mubr.bf16.mxu0 0
        %3943 = vmatmul.mubr.bf16.gmra.mrb[0].mxu0 %v3496
        %v3944 = vpop.f32.mrb[0].mxu0
        %v3945 = vadd.f32 0.0, %v3944
        %v3946 = vpop.f32.mrb[0].mxu0
        %v3947 = vpop.f32.mrb[0].mxu0
        %v3948 = vadd.f32 0.0, %v3947
        %v3949 = vpop.f32.mrb[0].mxu0
        %3950 = vmatprep.mubr.bf16.mxu0 0
        %3951 = vmatmul.mubr.bf16.gmra.mrb[0].mxu0 %v3499
        %v3952 = vpop.f32.mrb[0].mxu0
        %v3953 = vadd.f32 0.0, %v3952
        %v3954 = vpop.f32.mrb[0].mxu0
        %v3955 = vpop.f32.mrb[0].mxu0
        %v3956 = vadd.f32 0.0, %v3955
        %v3957 = vpop.f32.mrb[0].mxu0
        %3958 = vmatprep.mubr.bf16.mxu0 0
        %3959 = vmatmul.mubr.bf16.gmra.mrb[0].mxu0 %v3502
        %v3960 = vpop.f32.mrb[0].mxu0
        %v3961 = vadd.f32 0.0, %v3960
        %v3962 = vpop.f32.mrb[0].mxu0
        %v3963 = vpop.f32.mrb[0].mxu0
        %v3964 = vadd.f32 0.0, %v3963
        %v3965 = vpop.f32.mrb[0].mxu0
        %3966 = vmatprep.mubr.bf16.mxu0 0
        %3967 = vmatmul.mubr.bf16.gmra.mrb[0].mxu0 %v3505
        %v3968 = vpop.f32.mrb[0].mxu0
        %v3969 = vadd.f32 0.0, %v3968
        %v3970 = vpop.f32.mrb[0].mxu0
        %v3971 = vpop.f32.mrb[0].mxu0
        %v3972 = vadd.f32 0.0, %v3971
        %v3973 = vpop.f32.mrb[0].mxu0
        %3974 = vmatprep.mubr.bf16.mxu0 0
        %3975 = vmatmul.mubr.bf16.gmra.mrb[0].mxu0 %v3508
        %v3976 = vpop.f32.mrb[0].mxu0
        %v3977 = vadd.f32 0.0, %v3976
        %v3978 = vpop.f32.mrb[0].mxu0
        %v3979 = vpop.f32.mrb[0].mxu0
        %v3980 = vadd.f32 0.0, %v3979
        %v3981 = vpop.f32.mrb[0].mxu0
        %3982 = vmatprep.mubr.bf16.mxu0 0
        %3983 = vmatmul.mubr.bf16.gmra.mrb[0].mxu0 %v3511
        %v3984 = vpop.f32.mrb[0].mxu0
        %v3985 = vadd.f32 0.0, %v3984
        %v3986 = vpop.f32.mrb[0].mxu0
        %v3987 = vpop.f32.mrb[0].mxu0
        %v3988 = vadd.f32 0.0, %v3987
        %v3989 = vpop.f32.mrb[0].mxu0
        %3990 = vmatprep.mubr.bf16.mxu0 0
        %3991 = vmatmul.mubr.bf16.gmra.mrb[0].mxu0 %v3514
        %v3992 = vpop.f32.mrb[0].mxu0
        %v3993 = vadd.f32 0.0, %v3992
        %v3994 = vpop.f32.mrb[0].mxu0
        %v3995 = vpop.f32.mrb[0].mxu0
        %v3996 = vadd.f32 0.0, %v3995
        %v3997 = vpop.f32.mrb[0].mxu0
        %3998 = vmatprep.mubr.bf16.mxu0 0
        %3999 = vmatmul.mubr.bf16.gmra.mrb[0].mxu0 %v3517
        %v4000 = vpop.f32.mrb[0].mxu0
        %v4001 = vadd.f32 0.0, %v4000
        %v4002 = vpop.f32.mrb[0].mxu0
        %v4003 = vpop.f32.mrb[0].mxu0
        %v4004 = vadd.f32 0.0, %v4003
        %v4005 = vpop.f32.mrb[0].mxu0
        %4006 = vmatprep.mubr.bf16.mxu0 0
        %4007 = vmatmul.mubr.bf16.gmra.mrb[0].mxu0 %v3520
        %v4008 = vpop.f32.mrb[0].mxu0
        %v4009 = vadd.f32 0.0, %v4008
        %v4010 = vpop.f32.mrb[0].mxu0
        %v4011 = vpop.f32.mrb[0].mxu0
        %v4012 = vadd.f32 0.0, %v4011
        %v4013 = vpop.f32.mrb[0].mxu0
        %4014 = vmatprep.mubr.bf16.mxu0 0
        %4015 = vmatmul.mubr.bf16.gmra.mrb[0].mxu0 %v3523
        %v4016 = vpop.f32.mrb[0].mxu0
        %v4017 = vadd.f32 0.0, %v4016
        %v4018 = vpop.f32.mrb[0].mxu0
        %v4019 = vpop.f32.mrb[0].mxu0
        %v4020 = vadd.f32 0.0, %v4019
        %v4021 = vpop.f32.mrb[0].mxu0
        %4022 = vmatprep.mubr.bf16.mxu0 0
        %4023 = vmatmul.mubr.bf16.gmra.mrb[0].mxu0 %v3526
        %v4024 = vpop.f32.mrb[0].mxu0
        %v4025 = vadd.f32 0.0, %v4024
        %v4026 = vpop.f32.mrb[0].mxu0
        %v4027 = vpop.f32.mrb[0].mxu0
        %v4028 = vadd.f32 0.0, %v4027
        %v4029 = vpop.f32.mrb[0].mxu0
        %4030 = vmatprep.mubr.bf16.mxu0 0
        %4031 = vmatmul.mubr.bf16.gmra.mrb[0].mxu0 %v3529
        %v4032 = vpop.f32.mrb[0].mxu0
        %v4033 = vadd.f32 0.0, %v4032
        %v4034 = vpop.f32.mrb[0].mxu0
        %v4035 = vpop.f32.mrb[0].mxu0
        %v4036 = vadd.f32 0.0, %v4035
        %v4037 = vpop.f32.mrb[0].mxu0
        %4038 = vmatprep.mubr.bf16.mxu0 0
        %4039 = vmatmul.mubr.bf16.gmra.mrb[0].mxu0 %v3532
        %v4040 = vpop.f32.mrb[0].mxu0
        %v4041 = vadd.f32 0.0, %v4040
        %v4042 = vpop.f32.mrb[0].mxu0
        %v4043 = vpop.f32.mrb[0].mxu0
        %v4044 = vadd.f32 0.0, %v4043
        %v4045 = vpop.f32.mrb[0].mxu0
        %4046 = vmatprep.mubr.bf16.mxu0 0
        %4047 = vmatmul.mubr.bf16.gmra.mrb[0].mxu0 %v3535
        %v4048 = vpop.f32.mrb[0].mxu0
        %v4049 = vadd.f32 0.0, %v4048
        %v4050 = vpop.f32.mrb[0].mxu0
        %v4051 = vpop.f32.mrb[0].mxu0
        %v4052 = vadd.f32 0.0, %v4051
        %v4053 = vpop.f32.mrb[0].mxu0
        %4054 = vmatprep.mubr.bf16.mxu0 0
        %4055 = vmatmul.mubr.bf16.gmra.mrb[0].mxu0 %v3538
        %v4056 = vpop.f32.mrb[0].mxu0
        %v4057 = vadd.f32 0.0, %v4056
        %v4058 = vpop.f32.mrb[0].mxu0
        %v4059 = vpop.f32.mrb[0].mxu0
        %v4060 = vadd.f32 0.0, %v4059
        %v4061 = vpop.f32.mrb[0].mxu0
        %4062 = vmatprep.mubr.bf16.mxu0 0
        %4063 = vmatmul.mubr.bf16.gmra.mrb[0].mxu0 %v3541
        %v4064 = vpop.f32.mrb[0].mxu0
        %v4065 = vadd.f32 0.0, %v4064
        %v4066 = vpop.f32.mrb[0].mxu0
        %v4067 = vpop.f32.mrb[0].mxu0
        %v4068 = vadd.f32 0.0, %v4067
        %v4069 = vpop.f32.mrb[0].mxu0
        %4070 = vmatprep.mubr.bf16.mxu0 0
        %4071 = vmatmul.mubr.bf16.gmra.mrb[0].mxu0 %v3544
        %v4072 = vpop.f32.mrb[0].mxu0
        %v4073 = vadd.f32 0.0, %v4072
        %v4074 = vpop.f32.mrb[0].mxu0
        %v4075 = vpop.f32.mrb[0].mxu0
        %v4076 = vadd.f32 0.0, %v4075
        %v4077 = vpop.f32.mrb[0].mxu0
        %4078 = vmatprep.mubr.bf16.mxu0 0
        %4079 = vmatmul.mubr.bf16.gmra.mrb[0].mxu0 %v3547
        %v4080 = vpop.f32.mrb[0].mxu0
        %v4081 = vadd.f32 0.0, %v4080
        %v4082 = vpop.f32.mrb[0].mxu0
        %v4083 = vpop.f32.mrb[0].mxu0
        %v4084 = vadd.f32 0.0, %v4083
        %v4085 = vpop.f32.mrb[0].mxu0
        %4086 = vmatprep.mubr.bf16.mxu0 0
        %4087 = vmatmul.mubr.bf16.gmra.mrb[0].mxu0 %v3550
        %v4088 = vpop.f32.mrb[0].mxu0
        %v4089 = vadd.f32 0.0, %v4088
        %v4090 = vpop.f32.mrb[0].mxu0
        %v4091 = vpop.f32.mrb[0].mxu0
        %v4092 = vadd.f32 0.0, %v4091
        %v4093 = vpop.f32.mrb[0].mxu0
        %4094 = vmatprep.mubr.bf16.mxu0 0
        %4095 = vmatmul.mubr.bf16.gmra.mrb[0].mxu0 %v3553
        %v4096 = vpop.f32.mrb[0].mxu0
        %v4097 = vadd.f32 0.0, %v4096
        %v4098 = vpop.f32.mrb[0].mxu0
        %v4099 = vpop.f32.mrb[0].mxu0
        %v4100 = vadd.f32 0.0, %v4099
        %v4101 = vpop.f32.mrb[0].mxu0
        %4102 = vdwg.mxu0
        %v4103 = vadd.f32 %v3040, %v3593
        %v4104 = vadd.f32 %v3041, %v3596
        %v4105 = vadd.f32 %v3042, %v3601
        %v4106 = vadd.f32 %v3043, %v3604
        %v4107 = vadd.f32 %v3044, %v3609
        %v4108 = vadd.f32 %v3045, %v3612
        %v4109 = vadd.f32 %v3046, %v3617
        %v4110 = vadd.f32 %v3047, %v3620
        %v4111 = vadd.f32 %v3048, %v3625
        %v4112 = vadd.f32 %v3049, %v3628
        %v4113 = vadd.f32 %v3050, %v3633
        %v4114 = vadd.f32 %v3051, %v3636
        %v4115 = vadd.f32 %v3052, %v3641
        %v4116 = vadd.f32 %v3053, %v3644
        %v4117 = vadd.f32 %v3054, %v3649
        %v4118 = vadd.f32 %v3055, %v3652
        %v4119 = vadd.f32 %v3056, %v3657
        %v4120 = vadd.f32 %v3057, %v3660
        %v4121 = vadd.f32 %v3058, %v3665
        %v4122 = vadd.f32 %v3059, %v3668
        %v4123 = vadd.f32 %v3060, %v3673
        %v4124 = vadd.f32 %v3061, %v3676
        %v4125 = vadd.f32 %v3062, %v3681
        %v4126 = vadd.f32 %v3063, %v3684
        %v4127 = vadd.f32 %v3064, %v3689
        %v4128 = vadd.f32 %v3065, %v3692
        %v4129 = vadd.f32 %v3066, %v3697
        %v4130 = vadd.f32 %v3067, %v3700
        %v4131 = vadd.f32 %v3068, %v3705
        %v4132 = vadd.f32 %v3069, %v3708
        %v4133 = vadd.f32 %v3070, %v3713
        %v4134 = vadd.f32 %v3071, %v3716
        %v4135 = vadd.f32 %v3072, %v3721
        %v4136 = vadd.f32 %v3073, %v3724
        %v4137 = vadd.f32 %v3074, %v3729
        %v4138 = vadd.f32 %v3075, %v3732
        %v4139 = vadd.f32 %v3076, %v3737
        %v4140 = vadd.f32 %v3077, %v3740
        %v4141 = vadd.f32 %v3078, %v3745
        %v4142 = vadd.f32 %v3079, %v3748
        %v4143 = vadd.f32 %v3080, %v3753
        %v4144 = vadd.f32 %v3081, %v3756
        %v4145 = vadd.f32 %v3082, %v3761
        %v4146 = vadd.f32 %v3083, %v3764
        %v4147 = vadd.f32 %v3084, %v3769
        %v4148 = vadd.f32 %v3085, %v3772
        %v4149 = vadd.f32 %v3086, %v3777
        %v4150 = vadd.f32 %v3087, %v3780
        %v4151 = vadd.f32 %v3088, %v3785
        %v4152 = vadd.f32 %v3089, %v3788
        %v4153 = vadd.f32 %v3090, %v3793
        %v4154 = vadd.f32 %v3091, %v3796
        %v4155 = vadd.f32 %v3092, %v3801
        %v4156 = vadd.f32 %v3093, %v3804
        %v4157 = vadd.f32 %v3094, %v3809
        %v4158 = vadd.f32 %v3095, %v3812
        %v4159 = vadd.f32 %v3096, %v3817
        %v4160 = vadd.f32 %v3097, %v3820
        %v4161 = vadd.f32 %v3098, %v3825
        %v4162 = vadd.f32 %v3099, %v3828
        %v4163 = vadd.f32 %v3100, %v3833
        %v4164 = vadd.f32 %v3101, %v3836
        %v4165 = vadd.f32 %v3102, %v3841
        %v4166 = vadd.f32 %v3103, %v3844
        %v4167 = vadd.f32 %v3104, %v3849
        %v4168 = vadd.f32 %v3105, %v3852
        %v4169 = vadd.f32 %v3106, %v3857
        %v4170 = vadd.f32 %v3107, %v3860
        %v4171 = vadd.f32 %v3108, %v3865
        %v4172 = vadd.f32 %v3109, %v3868
        %v4173 = vadd.f32 %v3110, %v3873
        %v4174 = vadd.f32 %v3111, %v3876
        %v4175 = vadd.f32 %v3112, %v3881
        %v4176 = vadd.f32 %v3113, %v3884
        %v4177 = vadd.f32 %v3114, %v3889
        %v4178 = vadd.f32 %v3115, %v3892
        %v4179 = vadd.f32 %v3116, %v3897
        %v4180 = vadd.f32 %v3117, %v3900
        %v4181 = vadd.f32 %v3118, %v3905
        %v4182 = vadd.f32 %v3119, %v3908
        %v4183 = vadd.f32 %v3120, %v3913
        %v4184 = vadd.f32 %v3121, %v3916
        %v4185 = vadd.f32 %v3122, %v3921
        %v4186 = vadd.f32 %v3123, %v3924
        %v4187 = vadd.f32 %v3124, %v3929
        %v4188 = vadd.f32 %v3125, %v3932
        %v4189 = vadd.f32 %v3126, %v3937
        %v4190 = vadd.f32 %v3127, %v3940
        %v4191 = vadd.f32 %v3128, %v3945
        %v4192 = vadd.f32 %v3129, %v3948
        %v4193 = vadd.f32 %v3130, %v3953
        %v4194 = vadd.f32 %v3131, %v3956
        %v4195 = vadd.f32 %v3132, %v3961
        %v4196 = vadd.f32 %v3133, %v3964
        %v4197 = vadd.f32 %v3134, %v3969
        %v4198 = vadd.f32 %v3135, %v3972
        %v4199 = vadd.f32 %v3136, %v3977
        %v4200 = vadd.f32 %v3137, %v3980
        %v4201 = vadd.f32 %v3138, %v3985
        %v4202 = vadd.f32 %v3139, %v3988
        %v4203 = vadd.f32 %v3140, %v3993
        %v4204 = vadd.f32 %v3141, %v3996
        %v4205 = vadd.f32 %v3142, %v4001
        %v4206 = vadd.f32 %v3143, %v4004
        %v4207 = vadd.f32 %v3144, %v4009
        %v4208 = vadd.f32 %v3145, %v4012
        %v4209 = vadd.f32 %v3146, %v4017
        %v4210 = vadd.f32 %v3147, %v4020
        %v4211 = vadd.f32 %v3148, %v4025
        %v4212 = vadd.f32 %v3149, %v4028
        %v4213 = vadd.f32 %v3150, %v4033
        %v4214 = vadd.f32 %v3151, %v4036
        %v4215 = vadd.f32 %v3152, %v4041
        %v4216 = vadd.f32 %v3153, %v4044
        %v4217 = vadd.f32 %v3154, %v4049
        %v4218 = vadd.f32 %v3155, %v4052
        %v4219 = vadd.f32 %v3156, %v4057
        %v4220 = vadd.f32 %v3157, %v4060
        %v4221 = vadd.f32 %v3158, %v4065
        %v4222 = vadd.f32 %v3159, %v4068
        %v4223 = vadd.f32 %v3160, %v4073
        %v4224 = vadd.f32 %v3161, %v4076
        %v4225 = vadd.f32 %v3162, %v4081
        %v4226 = vadd.f32 %v3163, %v4084
        %v4227 = vadd.f32 %v3164, %v4089
        %v4228 = vadd.f32 %v3165, %v4092
        %v4229 = vadd.f32 %v3166, %v4097
        %v4230 = vadd.f32 %v3167, %v4100
        %v4231 = vld [vmem:[%s3168 + $0x1] sm:$0xff]
        %v4232 = vld [vmem:[%s3168 + $0x9] sm:$0xff]
        %v4233 = vld [vmem:[%s3168 + $0x11] sm:$0xff]
        %v4234 = vld [vmem:[%s3168 + $0x19] sm:$0xff]
        %v4235 = vld [vmem:[%s3168 + $0x29] sm:$0xff]
        %v4236 = vld [vmem:[%s3168 + $0x31] sm:$0xff]
        %v4237 = vld [vmem:[%s3168 + $0x39] sm:$0xff]
        %v4238 = vld [vmem:[%s3168 + $0x41] sm:$0xff]
        %v4239 = vld [vmem:[%s3168 + $0x51] sm:$0xff]
        %v4240 = vld [vmem:[%s3168 + $0x59] sm:$0xff]
        %v4241 = vld [vmem:[%s3168 + $0x61] sm:$0xff]
        %v4242 = vld [vmem:[%s3168 + $0x69] sm:$0xff]
        %v4243 = vld [vmem:[%s3168 + $0x79] sm:$0xff]
        %v4244 = vld [vmem:[%s3168 + $0x81] sm:$0xff]
        %v4245 = vld [vmem:[%s3168 + $0x89] sm:$0xff]
        %v4246 = vld [vmem:[%s3168 + $0x91] sm:$0xff]
        %v4247 = vld [vmem:[%s3168 + $0xa1] sm:$0xff]
        %v4248 = vld [vmem:[%s3168 + $0xa9] sm:$0xff]
        %v4249 = vld [vmem:[%s3168 + $0xb1] sm:$0xff]
        %v4250 = vld [vmem:[%s3168 + $0xb9] sm:$0xff]
        %v4251 = vld [vmem:[%s3168 + $0xc9] sm:$0xff]
        %v4252 = vld [vmem:[%s3168 + $0xd1] sm:$0xff]
        %v4253 = vld [vmem:[%s3168 + $0xd9] sm:$0xff]
        %v4254 = vld [vmem:[%s3168 + $0xe1] sm:$0xff]
        %v4255 = vld [vmem:[%s3168 + $0xf1] sm:$0xff]
        %v4256 = vld [vmem:[%s3168 + $0xf9] sm:$0xff]
        %v4257 = vld [vmem:[%s3168 + $0x101] sm:$0xff]
        %v4258 = vld [vmem:[%s3168 + $0x109] sm:$0xff]
        %v4259 = vld [vmem:[%s3168 + $0x119] sm:$0xff]
        %v4260 = vld [vmem:[%s3168 + $0x121] sm:$0xff]
        %v4261 = vld [vmem:[%s3168 + $0x129] sm:$0xff]
        %v4262 = vld [vmem:[%s3168 + $0x131] sm:$0xff]
        %v4263 = vld [vmem:[%s3168 + $0x141] sm:$0xff]
        %v4264 = vld [vmem:[%s3168 + $0x149] sm:$0xff]
        %v4265 = vld [vmem:[%s3168 + $0x151] sm:$0xff]
        %v4266 = vld [vmem:[%s3168 + $0x159] sm:$0xff]
        %v4267 = vld [vmem:[%s3168 + $0x169] sm:$0xff]
        %v4268 = vld [vmem:[%s3168 + $0x171] sm:$0xff]
        %v4269 = vld [vmem:[%s3168 + $0x179] sm:$0xff]
        %v4270 = vld [vmem:[%s3168 + $0x181] sm:$0xff]
        %v4271 = vld [vmem:[%s3168 + $0x191] sm:$0xff]
        %v4272 = vld [vmem:[%s3168 + $0x199] sm:$0xff]
        %v4273 = vld [vmem:[%s3168 + $0x1a1] sm:$0xff]
        %v4274 = vld [vmem:[%s3168 + $0x1a9] sm:$0xff]
        %v4275 = vld [vmem:[%s3168 + $0x1b9] sm:$0xff]
        %v4276 = vld [vmem:[%s3168 + $0x1c1] sm:$0xff]
        %v4277 = vld [vmem:[%s3168 + $0x1c9] sm:$0xff]
        %v4278 = vld [vmem:[%s3168 + $0x1d1] sm:$0xff]
        %v4279 = vld [vmem:[%s3168 + $0x1e1] sm:$0xff]
        %v4280 = vld [vmem:[%s3168 + $0x1e9] sm:$0xff]
        %v4281 = vld [vmem:[%s3168 + $0x1f1] sm:$0xff]
        %v4282 = vld [vmem:[%s3168 + $0x1f9] sm:$0xff]
        %v4283 = vld [vmem:[%s3168 + $0x209] sm:$0xff]
        %v4284 = vld [vmem:[%s3168 + $0x211] sm:$0xff]
        %v4285 = vld [vmem:[%s3168 + $0x219] sm:$0xff]
        %v4286 = vld [vmem:[%s3168 + $0x221] sm:$0xff]
        %v4287 = vld [vmem:[%s3168 + $0x231] sm:$0xff]
        %v4288 = vld [vmem:[%s3168 + $0x239] sm:$0xff]
        %v4289 = vld [vmem:[%s3168 + $0x241] sm:$0xff]
        %v4290 = vld [vmem:[%s3168 + $0x249] sm:$0xff]
        %v4291 = vld [vmem:[%s3168 + $0x259] sm:$0xff]
        %v4292 = vld [vmem:[%s3168 + $0x261] sm:$0xff]
        %v4293 = vld [vmem:[%s3168 + $0x269] sm:$0xff]
        %v4294 = vld [vmem:[%s3168 + $0x271] sm:$0xff]
        %v4295 = vld [vmem:[%s3168 + $0x281] sm:$0xff]
        %v4296 = vld [vmem:[%s3168 + $0x289] sm:$0xff]
        %v4297 = vld [vmem:[%s3168 + $0x291] sm:$0xff]
        %v4298 = vld [vmem:[%s3168 + $0x299] sm:$0xff]
        %v4299 = vld [vmem:[%s3168 + $0x2a9] sm:$0xff]
        %v4300 = vld [vmem:[%s3168 + $0x2b1] sm:$0xff]
        %v4301 = vld [vmem:[%s3168 + $0x2b9] sm:$0xff]
        %v4302 = vld [vmem:[%s3168 + $0x2c1] sm:$0xff]
        %v4303 = vld [vmem:[%s3168 + $0x2d1] sm:$0xff]
        %v4304 = vld [vmem:[%s3168 + $0x2d9] sm:$0xff]
        %v4305 = vld [vmem:[%s3168 + $0x2e1] sm:$0xff]
        %v4306 = vld [vmem:[%s3168 + $0x2e9] sm:$0xff]
        %v4307 = vld [vmem:[%s3168 + $0x2f9] sm:$0xff]
        %v4308 = vld [vmem:[%s3168 + $0x301] sm:$0xff]
        %v4309 = vld [vmem:[%s3168 + $0x309] sm:$0xff]
        %v4310 = vld [vmem:[%s3168 + $0x311] sm:$0xff]
        %v4311 = vld [vmem:[%s3168 + $0x321] sm:$0xff]
        %v4312 = vld [vmem:[%s3168 + $0x329] sm:$0xff]
        %v4313 = vld [vmem:[%s3168 + $0x331] sm:$0xff]
        %v4314 = vld [vmem:[%s3168 + $0x339] sm:$0xff]
        %v4315 = vld [vmem:[%s3168 + $0x349] sm:$0xff]
        %v4316 = vld [vmem:[%s3168 + $0x351] sm:$0xff]
        %v4317 = vld [vmem:[%s3168 + $0x359] sm:$0xff]
        %v4318 = vld [vmem:[%s3168 + $0x361] sm:$0xff]
        %v4319 = vld [vmem:[%s3168 + $0x371] sm:$0xff]
        %v4320 = vld [vmem:[%s3168 + $0x379] sm:$0xff]
        %v4321 = vld [vmem:[%s3168 + $0x381] sm:$0xff]
        %v4322 = vld [vmem:[%s3168 + $0x389] sm:$0xff]
        %v4323 = vld [vmem:[%s3168 + $0x399] sm:$0xff]
        %v4324 = vld [vmem:[%s3168 + $0x3a1] sm:$0xff]
        %v4325 = vld [vmem:[%s3168 + $0x3a9] sm:$0xff]
        %v4326 = vld [vmem:[%s3168 + $0x3b1] sm:$0xff]
        %v4327 = vld [vmem:[%s3168 + $0x3c1] sm:$0xff]
        %v4328 = vld [vmem:[%s3168 + $0x3c9] sm:$0xff]
        %v4329 = vld [vmem:[%s3168 + $0x3d1] sm:$0xff]
        %v4330 = vld [vmem:[%s3168 + $0x3d9] sm:$0xff]
        %v4331 = vld [vmem:[%s3168 + $0x3e9] sm:$0xff]
        %v4332 = vld [vmem:[%s3168 + $0x3f1] sm:$0xff]
        %v4333 = vld [vmem:[%s3168 + $0x3f9] sm:$0xff]
        %v4334 = vld [vmem:[%s3168 + $0x401] sm:$0xff]
        %v4335 = vld [vmem:[%s3168 + $0x411] sm:$0xff]
        %v4336 = vld [vmem:[%s3168 + $0x419] sm:$0xff]
        %v4337 = vld [vmem:[%s3168 + $0x421] sm:$0xff]
        %v4338 = vld [vmem:[%s3168 + $0x429] sm:$0xff]
        %v4339 = vld [vmem:[%s3168 + $0x439] sm:$0xff]
        %v4340 = vld [vmem:[%s3168 + $0x441] sm:$0xff]
        %v4341 = vld [vmem:[%s3168 + $0x449] sm:$0xff]
        %v4342 = vld [vmem:[%s3168 + $0x451] sm:$0xff]
        %v4343 = vld [vmem:[%s3168 + $0x461] sm:$0xff]
        %v4344 = vld [vmem:[%s3168 + $0x469] sm:$0xff]
        %v4345 = vld [vmem:[%s3168 + $0x471] sm:$0xff]
        %v4346 = vld [vmem:[%s3168 + $0x479] sm:$0xff]
        %v4347 = vld [vmem:[%s3168 + $0x489] sm:$0xff]
        %v4348 = vld [vmem:[%s3168 + $0x491] sm:$0xff]
        %v4349 = vld [vmem:[%s3168 + $0x499] sm:$0xff]
        %v4350 = vld [vmem:[%s3168 + $0x4a1] sm:$0xff]
        %v4351 = vld [vmem:[%s3168 + $0x4b1] sm:$0xff]
        %v4352 = vld [vmem:[%s3168 + $0x4b9] sm:$0xff]
        %v4353 = vld [vmem:[%s3168 + $0x4c1] sm:$0xff]
        %v4354 = vld [vmem:[%s3168 + $0x4c9] sm:$0xff]
        %v4355 = vld [vmem:[%s3168 + $0x4d9] sm:$0xff]
        %v4356 = vld [vmem:[%s3168 + $0x4e1] sm:$0xff]
        %v4357 = vld [vmem:[%s3168 + $0x4e9] sm:$0xff]
        %v4358 = vld [vmem:[%s3168 + $0x4f1] sm:$0xff]
        %v4359 = vpack.c.bf16 %v4232, %v4231
        %v4360 = vpack.c.bf16 %v4234, %v4233
        %v4361 = vpack.c.bf16 %v4236, %v4235
        %v4362 = vpack.c.bf16 %v4238, %v4237
        %v4363 = vpack.c.bf16 %v4240, %v4239
        %v4364 = vpack.c.bf16 %v4242, %v4241
        %v4365 = vpack.c.bf16 %v4244, %v4243
        %v4366 = vpack.c.bf16 %v4246, %v4245
        %v4367 = vpack.c.bf16 %v4248, %v4247
        %v4368 = vpack.c.bf16 %v4250, %v4249
        %v4369 = vpack.c.bf16 %v4252, %v4251
        %v4370 = vpack.c.bf16 %v4254, %v4253
        %v4371 = vpack.c.bf16 %v4256, %v4255
        %v4372 = vpack.c.bf16 %v4258, %v4257
        %v4373 = vpack.c.bf16 %v4260, %v4259
        %v4374 = vpack.c.bf16 %v4262, %v4261
        %v4375 = vpack.c.bf16 %v4264, %v4263
        %v4376 = vpack.c.bf16 %v4266, %v4265
        %v4377 = vpack.c.bf16 %v4268, %v4267
        %v4378 = vpack.c.bf16 %v4270, %v4269
        %v4379 = vpack.c.bf16 %v4272, %v4271
        %v4380 = vpack.c.bf16 %v4274, %v4273
        %v4381 = vpack.c.bf16 %v4276, %v4275
        %v4382 = vpack.c.bf16 %v4278, %v4277
        %v4383 = vpack.c.bf16 %v4280, %v4279
        %v4384 = vpack.c.bf16 %v4282, %v4281
        %v4385 = vpack.c.bf16 %v4284, %v4283
        %v4386 = vpack.c.bf16 %v4286, %v4285
        %v4387 = vpack.c.bf16 %v4288, %v4287
        %v4388 = vpack.c.bf16 %v4290, %v4289
        %v4389 = vpack.c.bf16 %v4292, %v4291
        %v4390 = vpack.c.bf16 %v4294, %v4293
        %v4391 = vpack.c.bf16 %v4296, %v4295
        %v4392 = vpack.c.bf16 %v4298, %v4297
        %v4393 = vpack.c.bf16 %v4300, %v4299
        %v4394 = vpack.c.bf16 %v4302, %v4301
        %v4395 = vpack.c.bf16 %v4304, %v4303
        %v4396 = vpack.c.bf16 %v4306, %v4305
        %v4397 = vpack.c.bf16 %v4308, %v4307
        %v4398 = vpack.c.bf16 %v4310, %v4309
        %v4399 = vpack.c.bf16 %v4312, %v4311
        %v4400 = vpack.c.bf16 %v4314, %v4313
        %v4401 = vpack.c.bf16 %v4316, %v4315
        %v4402 = vpack.c.bf16 %v4318, %v4317
        %v4403 = vpack.c.bf16 %v4320, %v4319
        %v4404 = vpack.c.bf16 %v4322, %v4321
        %v4405 = vpack.c.bf16 %v4324, %v4323
        %v4406 = vpack.c.bf16 %v4326, %v4325
        %v4407 = vpack.c.bf16 %v4328, %v4327
        %v4408 = vpack.c.bf16 %v4330, %v4329
        %v4409 = vpack.c.bf16 %v4332, %v4331
        %v4410 = vpack.c.bf16 %v4334, %v4333
        %v4411 = vpack.c.bf16 %v4336, %v4335
        %v4412 = vpack.c.bf16 %v4338, %v4337
        %v4413 = vpack.c.bf16 %v4340, %v4339
        %v4414 = vpack.c.bf16 %v4342, %v4341
        %v4415 = vpack.c.bf16 %v4344, %v4343
        %v4416 = vpack.c.bf16 %v4346, %v4345
        %v4417 = vpack.c.bf16 %v4348, %v4347
        %v4418 = vpack.c.bf16 %v4350, %v4349
        %v4419 = vpack.c.bf16 %v4352, %v4351
        %v4420 = vpack.c.bf16 %v4354, %v4353
        %v4421 = vpack.c.bf16 %v4356, %v4355
        %v4422 = vpack.c.bf16 %v4358, %v4357
        %s4423 = scalar_lea.vmem %s232, 8
        %v4424 = vld [vmem:[%s4423] sm:$0x3]
        %v4426 = vsel %vm621, %v4359, 0
        %v4429 = vsel %vm621, %v4360, 0
        %v4432 = vsel %vm621, %v4361, 0
        %v4435 = vsel %vm621, %v4362, 0
        %v4438 = vsel %vm621, %v4363, 0
        %v4441 = vsel %vm621, %v4364, 0
        %v4444 = vsel %vm621, %v4365, 0
        %v4447 = vsel %vm621, %v4366, 0
        %v4450 = vsel %vm621, %v4367, 0
        %v4453 = vsel %vm621, %v4368, 0
        %v4456 = vsel %vm621, %v4369, 0
        %v4459 = vsel %vm621, %v4370, 0
        %v4462 = vsel %vm621, %v4371, 0
        %v4465 = vsel %vm621, %v4372, 0
        %v4468 = vsel %vm621, %v4373, 0
        %v4471 = vsel %vm621, %v4374, 0
        %v4474 = vsel %vm621, %v4375, 0
        %v4477 = vsel %vm621, %v4376, 0
        %v4480 = vsel %vm621, %v4377, 0
        %v4483 = vsel %vm621, %v4378, 0
        %v4486 = vsel %vm621, %v4379, 0
        %v4489 = vsel %vm621, %v4380, 0
        %v4492 = vsel %vm621, %v4381, 0
        %v4495 = vsel %vm621, %v4382, 0
        %v4498 = vsel %vm621, %v4383, 0
        %v4501 = vsel %vm621, %v4384, 0
        %v4504 = vsel %vm621, %v4385, 0
        %v4507 = vsel %vm621, %v4386, 0
        %v4510 = vsel %vm621, %v4387, 0
        %v4513 = vsel %vm621, %v4388, 0
        %v4516 = vsel %vm621, %v4389, 0
        %v4519 = vsel %vm621, %v4390, 0
        %v4522 = vsel %vm621, %v4391, 0
        %v4525 = vsel %vm621, %v4392, 0
        %v4528 = vsel %vm621, %v4393, 0
        %v4531 = vsel %vm621, %v4394, 0
        %v4534 = vsel %vm621, %v4395, 0
        %v4537 = vsel %vm621, %v4396, 0
        %v4540 = vsel %vm621, %v4397, 0
        %v4543 = vsel %vm621, %v4398, 0
        %v4546 = vsel %vm621, %v4399, 0
        %v4549 = vsel %vm621, %v4400, 0
        %v4552 = vsel %vm621, %v4401, 0
        %v4555 = vsel %vm621, %v4402, 0
        %v4558 = vsel %vm621, %v4403, 0
        %v4561 = vsel %vm621, %v4404, 0
        %v4564 = vsel %vm621, %v4405, 0
        %v4567 = vsel %vm621, %v4406, 0
        %v4570 = vsel %vm621, %v4407, 0
        %v4573 = vsel %vm621, %v4408, 0
        %v4576 = vsel %vm621, %v4409, 0
        %v4579 = vsel %vm621, %v4410, 0
        %v4582 = vsel %vm621, %v4411, 0
        %v4585 = vsel %vm621, %v4412, 0
        %v4588 = vsel %vm621, %v4413, 0
        %v4591 = vsel %vm621, %v4414, 0
        %v4594 = vsel %vm621, %v4415, 0
        %v4597 = vsel %vm621, %v4416, 0
        %v4600 = vsel %vm621, %v4417, 0
        %v4603 = vsel %vm621, %v4418, 0
        %v4606 = vsel %vm621, %v4419, 0
        %v4609 = vsel %vm621, %v4420, 0
        %v4612 = vsel %vm621, %v4421, 0
        %v4615 = vsel %vm621, %v4422, 0
        %v4618 = vand.u32 %v4424, %v817
        %4620 = vmatprep.subr.bf16.mxu0 0
        %4621 = vmatpush1.bf16.msra.mxu0 %v4618
        %4622 = vmatprep.subr.bf16.mxu0 0
        %4623 = vmatpush1.bf16.msra.mxu0 0
        %4624 = vmatprep.subr.bf16.mxu0 0
        %4625 = vmatpush1.bf16.msra.mxu0 0
        %4626 = vmatprep.subr.bf16.mxu0 0
        %4627 = vmatpush1.bf16.msra.mxu0 0
        %4628 = vmatprep.subr.bf16.mxu0 0
        %4629 = vmatpush1.bf16.msra.mxu0 0
        %4630 = vmatprep.subr.bf16.mxu0 0
        %4631 = vmatpush1.bf16.msra.mxu0 0
        %4632 = vmatprep.subr.bf16.mxu0 0
        %4633 = vmatpush1.bf16.msra.mxu0 0
        %4634 = vmatprep.subr.bf16.mxu0 0
        %4635 = vmatpush1.bf16.msra.mxu0 0
        %4636 = vmatprep.subr.bf16.mxu0 0
        %4637 = vmatpush1.bf16.msra.mxu0 0
        %4638 = vmatprep.subr.bf16.mxu0 0
        %4639 = vmatpush1.bf16.msra.mxu0 0
        %4640 = vmatprep.subr.bf16.mxu0 0
        %4641 = vmatpush1.bf16.msra.mxu0 0
        %4642 = vmatprep.subr.bf16.mxu0 0
        %4643 = vmatpush1.bf16.msra.mxu0 0
        %4644 = vmatprep.subr.bf16.mxu0 0
        %4645 = vmatpush1.bf16.msra.mxu0 0
        %4646 = vmatprep.subr.bf16.mxu0 0
        %4647 = vmatpush1.bf16.msra.mxu0 0
        %4648 = vmatprep.subr.bf16.mxu0 0
        %4649 = vmatpush1.bf16.msra.mxu0 0
        %4650 = vmatprep.subr.bf16.mxu0 0
        %4651 = vmatpush1.bf16.msra.mxu0 0
        %4652 = vmatprep.mubr.bf16.mxu0 0
        %4653 = vmatmul.mubr.bf16.gmra.mrb[0].mxu0 %v4426
        %v4654 = vpop.f32.mrb[0].mxu0
        %v4655 = vadd.f32 0.0, %v4654
        %v4656 = vpop.f32.mrb[0].mxu0
        %v4657 = vpop.f32.mrb[0].mxu0
        %v4658 = vadd.f32 0.0, %v4657
        %v4659 = vpop.f32.mrb[0].mxu0
        %4660 = vmatprep.mubr.bf16.mxu0 0
        %4661 = vmatmul.mubr.bf16.gmra.mrb[0].mxu0 %v4429
        %v4662 = vpop.f32.mrb[0].mxu0
        %v4663 = vadd.f32 0.0, %v4662
        %v4664 = vpop.f32.mrb[0].mxu0
        %v4665 = vpop.f32.mrb[0].mxu0
        %v4666 = vadd.f32 0.0, %v4665
        %v4667 = vpop.f32.mrb[0].mxu0
        %4668 = vmatprep.mubr.bf16.mxu0 0
        %4669 = vmatmul.mubr.bf16.gmra.mrb[0].mxu0 %v4432
        %v4670 = vpop.f32.mrb[0].mxu0
        %v4671 = vadd.f32 0.0, %v4670
        %v4672 = vpop.f32.mrb[0].mxu0
        %v4673 = vpop.f32.mrb[0].mxu0
        %v4674 = vadd.f32 0.0, %v4673
        %v4675 = vpop.f32.mrb[0].mxu0
        %4676 = vmatprep.mubr.bf16.mxu0 0
        %4677 = vmatmul.mubr.bf16.gmra.mrb[0].mxu0 %v4435
        %v4678 = vpop.f32.mrb[0].mxu0
        %v4679 = vadd.f32 0.0, %v4678
        %v4680 = vpop.f32.mrb[0].mxu0
        %v4681 = vpop.f32.mrb[0].mxu0
        %v4682 = vadd.f32 0.0, %v4681
        %v4683 = vpop.f32.mrb[0].mxu0
        %4684 = vmatprep.mubr.bf16.mxu0 0
        %4685 = vmatmul.mubr.bf16.gmra.mrb[0].mxu0 %v4438
        %v4686 = vpop.f32.mrb[0].mxu0
        %v4687 = vadd.f32 0.0, %v4686
        %v4688 = vpop.f32.mrb[0].mxu0
        %v4689 = vpop.f32.mrb[0].mxu0
        %v4690 = vadd.f32 0.0, %v4689
        %v4691 = vpop.f32.mrb[0].mxu0
        %4692 = vmatprep.mubr.bf16.mxu0 0
        %4693 = vmatmul.mubr.bf16.gmra.mrb[0].mxu0 %v4441
        %v4694 = vpop.f32.mrb[0].mxu0
        %v4695 = vadd.f32 0.0, %v4694
        %v4696 = vpop.f32.mrb[0].mxu0
        %v4697 = vpop.f32.mrb[0].mxu0
        %v4698 = vadd.f32 0.0, %v4697
        %v4699 = vpop.f32.mrb[0].mxu0
        %4700 = vmatprep.mubr.bf16.mxu0 0
        %4701 = vmatmul.mubr.bf16.gmra.mrb[0].mxu0 %v4444
        %v4702 = vpop.f32.mrb[0].mxu0
        %v4703 = vadd.f32 0.0, %v4702
        %v4704 = vpop.f32.mrb[0].mxu0
        %v4705 = vpop.f32.mrb[0].mxu0
        %v4706 = vadd.f32 0.0, %v4705
        %v4707 = vpop.f32.mrb[0].mxu0
        %4708 = vmatprep.mubr.bf16.mxu0 0
        %4709 = vmatmul.mubr.bf16.gmra.mrb[0].mxu0 %v4447
        %v4710 = vpop.f32.mrb[0].mxu0
        %v4711 = vadd.f32 0.0, %v4710
        %v4712 = vpop.f32.mrb[0].mxu0
        %v4713 = vpop.f32.mrb[0].mxu0
        %v4714 = vadd.f32 0.0, %v4713
        %v4715 = vpop.f32.mrb[0].mxu0
        %4716 = vmatprep.mubr.bf16.mxu0 0
        %4717 = vmatmul.mubr.bf16.gmra.mrb[0].mxu0 %v4450
        %v4718 = vpop.f32.mrb[0].mxu0
        %v4719 = vadd.f32 0.0, %v4718
        %v4720 = vpop.f32.mrb[0].mxu0
        %v4721 = vpop.f32.mrb[0].mxu0
        %v4722 = vadd.f32 0.0, %v4721
        %v4723 = vpop.f32.mrb[0].mxu0
        %4724 = vmatprep.mubr.bf16.mxu0 0
        %4725 = vmatmul.mubr.bf16.gmra.mrb[0].mxu0 %v4453
        %v4726 = vpop.f32.mrb[0].mxu0
        %v4727 = vadd.f32 0.0, %v4726
        %v4728 = vpop.f32.mrb[0].mxu0
        %v4729 = vpop.f32.mrb[0].mxu0
        %v4730 = vadd.f32 0.0, %v4729
        %v4731 = vpop.f32.mrb[0].mxu0
        %4732 = vmatprep.mubr.bf16.mxu0 0
        %4733 = vmatmul.mubr.bf16.gmra.mrb[0].mxu0 %v4456
        %v4734 = vpop.f32.mrb[0].mxu0
        %v4735 = vadd.f32 0.0, %v4734
        %v4736 = vpop.f32.mrb[0].mxu0
        %v4737 = vpop.f32.mrb[0].mxu0
        %v4738 = vadd.f32 0.0, %v4737
        %v4739 = vpop.f32.mrb[0].mxu0
        %4740 = vmatprep.mubr.bf16.mxu0 0
        %4741 = vmatmul.mubr.bf16.gmra.mrb[0].mxu0 %v4459
        %v4742 = vpop.f32.mrb[0].mxu0
        %v4743 = vadd.f32 0.0, %v4742
        %v4744 = vpop.f32.mrb[0].mxu0
        %v4745 = vpop.f32.mrb[0].mxu0
        %v4746 = vadd.f32 0.0, %v4745
        %v4747 = vpop.f32.mrb[0].mxu0
        %4748 = vmatprep.mubr.bf16.mxu0 0
        %4749 = vmatmul.mubr.bf16.gmra.mrb[0].mxu0 %v4462
        %v4750 = vpop.f32.mrb[0].mxu0
        %v4751 = vadd.f32 0.0, %v4750
        %v4752 = vpop.f32.mrb[0].mxu0
        %v4753 = vpop.f32.mrb[0].mxu0
        %v4754 = vadd.f32 0.0, %v4753
        %v4755 = vpop.f32.mrb[0].mxu0
        %4756 = vmatprep.mubr.bf16.mxu0 0
        %4757 = vmatmul.mubr.bf16.gmra.mrb[0].mxu0 %v4465
        %v4758 = vpop.f32.mrb[0].mxu0
        %v4759 = vadd.f32 0.0, %v4758
        %v4760 = vpop.f32.mrb[0].mxu0
        %v4761 = vpop.f32.mrb[0].mxu0
        %v4762 = vadd.f32 0.0, %v4761
        %v4763 = vpop.f32.mrb[0].mxu0
        %4764 = vmatprep.mubr.bf16.mxu0 0
        %4765 = vmatmul.mubr.bf16.gmra.mrb[0].mxu0 %v4468
        %v4766 = vpop.f32.mrb[0].mxu0
        %v4767 = vadd.f32 0.0, %v4766
        %v4768 = vpop.f32.mrb[0].mxu0
        %v4769 = vpop.f32.mrb[0].mxu0
        %v4770 = vadd.f32 0.0, %v4769
        %v4771 = vpop.f32.mrb[0].mxu0
        %4772 = vmatprep.mubr.bf16.mxu0 0
        %4773 = vmatmul.mubr.bf16.gmra.mrb[0].mxu0 %v4471
        %v4774 = vpop.f32.mrb[0].mxu0
        %v4775 = vadd.f32 0.0, %v4774
        %v4776 = vpop.f32.mrb[0].mxu0
        %v4777 = vpop.f32.mrb[0].mxu0
        %v4778 = vadd.f32 0.0, %v4777
        %v4779 = vpop.f32.mrb[0].mxu0
        %4780 = vmatprep.mubr.bf16.mxu0 0
        %4781 = vmatmul.mubr.bf16.gmra.mrb[0].mxu0 %v4474
        %v4782 = vpop.f32.mrb[0].mxu0
        %v4783 = vadd.f32 0.0, %v4782
        %v4784 = vpop.f32.mrb[0].mxu0
        %v4785 = vpop.f32.mrb[0].mxu0
        %v4786 = vadd.f32 0.0, %v4785
        %v4787 = vpop.f32.mrb[0].mxu0
        %4788 = vmatprep.mubr.bf16.mxu0 0
        %4789 = vmatmul.mubr.bf16.gmra.mrb[0].mxu0 %v4477
        %v4790 = vpop.f32.mrb[0].mxu0
        %v4791 = vadd.f32 0.0, %v4790
        %v4792 = vpop.f32.mrb[0].mxu0
        %v4793 = vpop.f32.mrb[0].mxu0
        %v4794 = vadd.f32 0.0, %v4793
        %v4795 = vpop.f32.mrb[0].mxu0
        %4796 = vmatprep.mubr.bf16.mxu0 0
        %4797 = vmatmul.mubr.bf16.gmra.mrb[0].mxu0 %v4480
        %v4798 = vpop.f32.mrb[0].mxu0
        %v4799 = vadd.f32 0.0, %v4798
        %v4800 = vpop.f32.mrb[0].mxu0
        %v4801 = vpop.f32.mrb[0].mxu0
        %v4802 = vadd.f32 0.0, %v4801
        %v4803 = vpop.f32.mrb[0].mxu0
        %4804 = vmatprep.mubr.bf16.mxu0 0
        %4805 = vmatmul.mubr.bf16.gmra.mrb[0].mxu0 %v4483
        %v4806 = vpop.f32.mrb[0].mxu0
        %v4807 = vadd.f32 0.0, %v4806
        %v4808 = vpop.f32.mrb[0].mxu0
        %v4809 = vpop.f32.mrb[0].mxu0
        %v4810 = vadd.f32 0.0, %v4809
        %v4811 = vpop.f32.mrb[0].mxu0
        %4812 = vmatprep.mubr.bf16.mxu0 0
        %4813 = vmatmul.mubr.bf16.gmra.mrb[0].mxu0 %v4486
        %v4814 = vpop.f32.mrb[0].mxu0
        %v4815 = vadd.f32 0.0, %v4814
        %v4816 = vpop.f32.mrb[0].mxu0
        %v4817 = vpop.f32.mrb[0].mxu0
        %v4818 = vadd.f32 0.0, %v4817
        %v4819 = vpop.f32.mrb[0].mxu0
        %4820 = vmatprep.mubr.bf16.mxu0 0
        %4821 = vmatmul.mubr.bf16.gmra.mrb[0].mxu0 %v4489
        %v4822 = vpop.f32.mrb[0].mxu0
        %v4823 = vadd.f32 0.0, %v4822
        %v4824 = vpop.f32.mrb[0].mxu0
        %v4825 = vpop.f32.mrb[0].mxu0
        %v4826 = vadd.f32 0.0, %v4825
        %v4827 = vpop.f32.mrb[0].mxu0
        %4828 = vmatprep.mubr.bf16.mxu0 0
        %4829 = vmatmul.mubr.bf16.gmra.mrb[0].mxu0 %v4492
        %v4830 = vpop.f32.mrb[0].mxu0
        %v4831 = vadd.f32 0.0, %v4830
        %v4832 = vpop.f32.mrb[0].mxu0
        %v4833 = vpop.f32.mrb[0].mxu0
        %v4834 = vadd.f32 0.0, %v4833
        %v4835 = vpop.f32.mrb[0].mxu0
        %4836 = vmatprep.mubr.bf16.mxu0 0
        %4837 = vmatmul.mubr.bf16.gmra.mrb[0].mxu0 %v4495
        %v4838 = vpop.f32.mrb[0].mxu0
        %v4839 = vadd.f32 0.0, %v4838
        %v4840 = vpop.f32.mrb[0].mxu0
        %v4841 = vpop.f32.mrb[0].mxu0
        %v4842 = vadd.f32 0.0, %v4841
        %v4843 = vpop.f32.mrb[0].mxu0
        %4844 = vmatprep.mubr.bf16.mxu0 0
        %4845 = vmatmul.mubr.bf16.gmra.mrb[0].mxu0 %v4498
        %v4846 = vpop.f32.mrb[0].mxu0
        %v4847 = vadd.f32 0.0, %v4846
        %v4848 = vpop.f32.mrb[0].mxu0
        %v4849 = vpop.f32.mrb[0].mxu0
        %v4850 = vadd.f32 0.0, %v4849
        %v4851 = vpop.f32.mrb[0].mxu0
        %4852 = vmatprep.mubr.bf16.mxu0 0
        %4853 = vmatmul.mubr.bf16.gmra.mrb[0].mxu0 %v4501
        %v4854 = vpop.f32.mrb[0].mxu0
        %v4855 = vadd.f32 0.0, %v4854
        %v4856 = vpop.f32.mrb[0].mxu0
        %v4857 = vpop.f32.mrb[0].mxu0
        %v4858 = vadd.f32 0.0, %v4857
        %v4859 = vpop.f32.mrb[0].mxu0
        %4860 = vmatprep.mubr.bf16.mxu0 0
        %4861 = vmatmul.mubr.bf16.gmra.mrb[0].mxu0 %v4504
        %v4862 = vpop.f32.mrb[0].mxu0
        %v4863 = vadd.f32 0.0, %v4862
        %v4864 = vpop.f32.mrb[0].mxu0
        %v4865 = vpop.f32.mrb[0].mxu0
        %v4866 = vadd.f32 0.0, %v4865
        %v4867 = vpop.f32.mrb[0].mxu0
        %4868 = vmatprep.mubr.bf16.mxu0 0
        %4869 = vmatmul.mubr.bf16.gmra.mrb[0].mxu0 %v4507
        %v4870 = vpop.f32.mrb[0].mxu0
        %v4871 = vadd.f32 0.0, %v4870
        %v4872 = vpop.f32.mrb[0].mxu0
        %v4873 = vpop.f32.mrb[0].mxu0
        %v4874 = vadd.f32 0.0, %v4873
        %v4875 = vpop.f32.mrb[0].mxu0
        %4876 = vmatprep.mubr.bf16.mxu0 0
        %4877 = vmatmul.mubr.bf16.gmra.mrb[0].mxu0 %v4510
        %v4878 = vpop.f32.mrb[0].mxu0
        %v4879 = vadd.f32 0.0, %v4878
        %v4880 = vpop.f32.mrb[0].mxu0
        %v4881 = vpop.f32.mrb[0].mxu0
        %v4882 = vadd.f32 0.0, %v4881
        %v4883 = vpop.f32.mrb[0].mxu0
        %4884 = vmatprep.mubr.bf16.mxu0 0
        %4885 = vmatmul.mubr.bf16.gmra.mrb[0].mxu0 %v4513
        %v4886 = vpop.f32.mrb[0].mxu0
        %v4887 = vadd.f32 0.0, %v4886
        %v4888 = vpop.f32.mrb[0].mxu0
        %v4889 = vpop.f32.mrb[0].mxu0
        %v4890 = vadd.f32 0.0, %v4889
        %v4891 = vpop.f32.mrb[0].mxu0
        %4892 = vmatprep.mubr.bf16.mxu0 0
        %4893 = vmatmul.mubr.bf16.gmra.mrb[0].mxu0 %v4516
        %v4894 = vpop.f32.mrb[0].mxu0
        %v4895 = vadd.f32 0.0, %v4894
        %v4896 = vpop.f32.mrb[0].mxu0
        %v4897 = vpop.f32.mrb[0].mxu0
        %v4898 = vadd.f32 0.0, %v4897
        %v4899 = vpop.f32.mrb[0].mxu0
        %4900 = vmatprep.mubr.bf16.mxu0 0
        %4901 = vmatmul.mubr.bf16.gmra.mrb[0].mxu0 %v4519
        %v4902 = vpop.f32.mrb[0].mxu0
        %v4903 = vadd.f32 0.0, %v4902
        %v4904 = vpop.f32.mrb[0].mxu0
        %v4905 = vpop.f32.mrb[0].mxu0
        %v4906 = vadd.f32 0.0, %v4905
        %v4907 = vpop.f32.mrb[0].mxu0
        %4908 = vmatprep.mubr.bf16.mxu0 0
        %4909 = vmatmul.mubr.bf16.gmra.mrb[0].mxu0 %v4522
        %v4910 = vpop.f32.mrb[0].mxu0
        %v4911 = vadd.f32 0.0, %v4910
        %v4912 = vpop.f32.mrb[0].mxu0
        %v4913 = vpop.f32.mrb[0].mxu0
        %v4914 = vadd.f32 0.0, %v4913
        %v4915 = vpop.f32.mrb[0].mxu0
        %4916 = vmatprep.mubr.bf16.mxu0 0
        %4917 = vmatmul.mubr.bf16.gmra.mrb[0].mxu0 %v4525
        %v4918 = vpop.f32.mrb[0].mxu0
        %v4919 = vadd.f32 0.0, %v4918
        %v4920 = vpop.f32.mrb[0].mxu0
        %v4921 = vpop.f32.mrb[0].mxu0
        %v4922 = vadd.f32 0.0, %v4921
        %v4923 = vpop.f32.mrb[0].mxu0
        %4924 = vmatprep.mubr.bf16.mxu0 0
        %4925 = vmatmul.mubr.bf16.gmra.mrb[0].mxu0 %v4528
        %v4926 = vpop.f32.mrb[0].mxu0
        %v4927 = vadd.f32 0.0, %v4926
        %v4928 = vpop.f32.mrb[0].mxu0
        %v4929 = vpop.f32.mrb[0].mxu0
        %v4930 = vadd.f32 0.0, %v4929
        %v4931 = vpop.f32.mrb[0].mxu0
        %4932 = vmatprep.mubr.bf16.mxu0 0
        %4933 = vmatmul.mubr.bf16.gmra.mrb[0].mxu0 %v4531
        %v4934 = vpop.f32.mrb[0].mxu0
        %v4935 = vadd.f32 0.0, %v4934
        %v4936 = vpop.f32.mrb[0].mxu0
        %v4937 = vpop.f32.mrb[0].mxu0
        %v4938 = vadd.f32 0.0, %v4937
        %v4939 = vpop.f32.mrb[0].mxu0
        %4940 = vmatprep.mubr.bf16.mxu0 0
        %4941 = vmatmul.mubr.bf16.gmra.mrb[0].mxu0 %v4534
        %v4942 = vpop.f32.mrb[0].mxu0
        %v4943 = vadd.f32 0.0, %v4942
        %v4944 = vpop.f32.mrb[0].mxu0
        %v4945 = vpop.f32.mrb[0].mxu0
        %v4946 = vadd.f32 0.0, %v4945
        %v4947 = vpop.f32.mrb[0].mxu0
        %4948 = vmatprep.mubr.bf16.mxu0 0
        %4949 = vmatmul.mubr.bf16.gmra.mrb[0].mxu0 %v4537
        %v4950 = vpop.f32.mrb[0].mxu0
        %v4951 = vadd.f32 0.0, %v4950
        %v4952 = vpop.f32.mrb[0].mxu0
        %v4953 = vpop.f32.mrb[0].mxu0
        %v4954 = vadd.f32 0.0, %v4953
        %v4955 = vpop.f32.mrb[0].mxu0
        %4956 = vmatprep.mubr.bf16.mxu0 0
        %4957 = vmatmul.mubr.bf16.gmra.mrb[0].mxu0 %v4540
        %v4958 = vpop.f32.mrb[0].mxu0
        %v4959 = vadd.f32 0.0, %v4958
        %v4960 = vpop.f32.mrb[0].mxu0
        %v4961 = vpop.f32.mrb[0].mxu0
        %v4962 = vadd.f32 0.0, %v4961
        %v4963 = vpop.f32.mrb[0].mxu0
        %4964 = vmatprep.mubr.bf16.mxu0 0
        %4965 = vmatmul.mubr.bf16.gmra.mrb[0].mxu0 %v4543
        %v4966 = vpop.f32.mrb[0].mxu0
        %v4967 = vadd.f32 0.0, %v4966
        %v4968 = vpop.f32.mrb[0].mxu0
        %v4969 = vpop.f32.mrb[0].mxu0
        %v4970 = vadd.f32 0.0, %v4969
        %v4971 = vpop.f32.mrb[0].mxu0
        %4972 = vmatprep.mubr.bf16.mxu0 0
        %4973 = vmatmul.mubr.bf16.gmra.mrb[0].mxu0 %v4546
        %v4974 = vpop.f32.mrb[0].mxu0
        %v4975 = vadd.f32 0.0, %v4974
        %v4976 = vpop.f32.mrb[0].mxu0
        %v4977 = vpop.f32.mrb[0].mxu0
        %v4978 = vadd.f32 0.0, %v4977
        %v4979 = vpop.f32.mrb[0].mxu0
        %4980 = vmatprep.mubr.bf16.mxu0 0
        %4981 = vmatmul.mubr.bf16.gmra.mrb[0].mxu0 %v4549
        %v4982 = vpop.f32.mrb[0].mxu0
        %v4983 = vadd.f32 0.0, %v4982
        %v4984 = vpop.f32.mrb[0].mxu0
        %v4985 = vpop.f32.mrb[0].mxu0
        %v4986 = vadd.f32 0.0, %v4985
        %v4987 = vpop.f32.mrb[0].mxu0
        %4988 = vmatprep.mubr.bf16.mxu0 0
        %4989 = vmatmul.mubr.bf16.gmra.mrb[0].mxu0 %v4552
        %v4990 = vpop.f32.mrb[0].mxu0
        %v4991 = vadd.f32 0.0, %v4990
        %v4992 = vpop.f32.mrb[0].mxu0
        %v4993 = vpop.f32.mrb[0].mxu0
        %v4994 = vadd.f32 0.0, %v4993
        %v4995 = vpop.f32.mrb[0].mxu0
        %4996 = vmatprep.mubr.bf16.mxu0 0
        %4997 = vmatmul.mubr.bf16.gmra.mrb[0].mxu0 %v4555
        %v4998 = vpop.f32.mrb[0].mxu0
        %v4999 = vadd.f32 0.0, %v4998
        %v5000 = vpop.f32.mrb[0].mxu0
        %v5001 = vpop.f32.mrb[0].mxu0
        %v5002 = vadd.f32 0.0, %v5001
        %v5003 = vpop.f32.mrb[0].mxu0
        %5004 = vmatprep.mubr.bf16.mxu0 0
        %5005 = vmatmul.mubr.bf16.gmra.mrb[0].mxu0 %v4558
        %v5006 = vpop.f32.mrb[0].mxu0
        %v5007 = vadd.f32 0.0, %v5006
        %v5008 = vpop.f32.mrb[0].mxu0
        %v5009 = vpop.f32.mrb[0].mxu0
        %v5010 = vadd.f32 0.0, %v5009
        %v5011 = vpop.f32.mrb[0].mxu0
        %5012 = vmatprep.mubr.bf16.mxu0 0
        %5013 = vmatmul.mubr.bf16.gmra.mrb[0].mxu0 %v4561
        %v5014 = vpop.f32.mrb[0].mxu0
        %v5015 = vadd.f32 0.0, %v5014
        %v5016 = vpop.f32.mrb[0].mxu0
        %v5017 = vpop.f32.mrb[0].mxu0
        %v5018 = vadd.f32 0.0, %v5017
        %v5019 = vpop.f32.mrb[0].mxu0
        %5020 = vmatprep.mubr.bf16.mxu0 0
        %5021 = vmatmul.mubr.bf16.gmra.mrb[0].mxu0 %v4564
        %v5022 = vpop.f32.mrb[0].mxu0
        %v5023 = vadd.f32 0.0, %v5022
        %v5024 = vpop.f32.mrb[0].mxu0
        %v5025 = vpop.f32.mrb[0].mxu0
        %v5026 = vadd.f32 0.0, %v5025
        %v5027 = vpop.f32.mrb[0].mxu0
        %5028 = vmatprep.mubr.bf16.mxu0 0
        %5029 = vmatmul.mubr.bf16.gmra.mrb[0].mxu0 %v4567
        %v5030 = vpop.f32.mrb[0].mxu0
        %v5031 = vadd.f32 0.0, %v5030
        %v5032 = vpop.f32.mrb[0].mxu0
        %v5033 = vpop.f32.mrb[0].mxu0
        %v5034 = vadd.f32 0.0, %v5033
        %v5035 = vpop.f32.mrb[0].mxu0
        %5036 = vmatprep.mubr.bf16.mxu0 0
        %5037 = vmatmul.mubr.bf16.gmra.mrb[0].mxu0 %v4570
        %v5038 = vpop.f32.mrb[0].mxu0
        %v5039 = vadd.f32 0.0, %v5038
        %v5040 = vpop.f32.mrb[0].mxu0
        %v5041 = vpop.f32.mrb[0].mxu0
        %v5042 = vadd.f32 0.0, %v5041
        %v5043 = vpop.f32.mrb[0].mxu0
        %5044 = vmatprep.mubr.bf16.mxu0 0
        %5045 = vmatmul.mubr.bf16.gmra.mrb[0].mxu0 %v4573
        %v5046 = vpop.f32.mrb[0].mxu0
        %v5047 = vadd.f32 0.0, %v5046
        %v5048 = vpop.f32.mrb[0].mxu0
        %v5049 = vpop.f32.mrb[0].mxu0
        %v5050 = vadd.f32 0.0, %v5049
        %v5051 = vpop.f32.mrb[0].mxu0
        %5052 = vmatprep.mubr.bf16.mxu0 0
        %5053 = vmatmul.mubr.bf16.gmra.mrb[0].mxu0 %v4576
        %v5054 = vpop.f32.mrb[0].mxu0
        %v5055 = vadd.f32 0.0, %v5054
        %v5056 = vpop.f32.mrb[0].mxu0
        %v5057 = vpop.f32.mrb[0].mxu0
        %v5058 = vadd.f32 0.0, %v5057
        %v5059 = vpop.f32.mrb[0].mxu0
        %5060 = vmatprep.mubr.bf16.mxu0 0
        %5061 = vmatmul.mubr.bf16.gmra.mrb[0].mxu0 %v4579
        %v5062 = vpop.f32.mrb[0].mxu0
        %v5063 = vadd.f32 0.0, %v5062
        %v5064 = vpop.f32.mrb[0].mxu0
        %v5065 = vpop.f32.mrb[0].mxu0
        %v5066 = vadd.f32 0.0, %v5065
        %v5067 = vpop.f32.mrb[0].mxu0
        %5068 = vmatprep.mubr.bf16.mxu0 0
        %5069 = vmatmul.mubr.bf16.gmra.mrb[0].mxu0 %v4582
        %v5070 = vpop.f32.mrb[0].mxu0
        %v5071 = vadd.f32 0.0, %v5070
        %v5072 = vpop.f32.mrb[0].mxu0
        %v5073 = vpop.f32.mrb[0].mxu0
        %v5074 = vadd.f32 0.0, %v5073
        %v5075 = vpop.f32.mrb[0].mxu0
        %5076 = vmatprep.mubr.bf16.mxu0 0
        %5077 = vmatmul.mubr.bf16.gmra.mrb[0].mxu0 %v4585
        %v5078 = vpop.f32.mrb[0].mxu0
        %v5079 = vadd.f32 0.0, %v5078
        %v5080 = vpop.f32.mrb[0].mxu0
        %v5081 = vpop.f32.mrb[0].mxu0
        %v5082 = vadd.f32 0.0, %v5081
        %v5083 = vpop.f32.mrb[0].mxu0
        %5084 = vmatprep.mubr.bf16.mxu0 0
        %5085 = vmatmul.mubr.bf16.gmra.mrb[0].mxu0 %v4588
        %v5086 = vpop.f32.mrb[0].mxu0
        %v5087 = vadd.f32 0.0, %v5086
        %v5088 = vpop.f32.mrb[0].mxu0
        %v5089 = vpop.f32.mrb[0].mxu0
        %v5090 = vadd.f32 0.0, %v5089
        %v5091 = vpop.f32.mrb[0].mxu0
        %5092 = vmatprep.mubr.bf16.mxu0 0
        %5093 = vmatmul.mubr.bf16.gmra.mrb[0].mxu0 %v4591
        %v5094 = vpop.f32.mrb[0].mxu0
        %v5095 = vadd.f32 0.0, %v5094
        %v5096 = vpop.f32.mrb[0].mxu0
        %v5097 = vpop.f32.mrb[0].mxu0
        %v5098 = vadd.f32 0.0, %v5097
        %v5099 = vpop.f32.mrb[0].mxu0
        %5100 = vmatprep.mubr.bf16.mxu0 0
        %5101 = vmatmul.mubr.bf16.gmra.mrb[0].mxu0 %v4594
        %v5102 = vpop.f32.mrb[0].mxu0
        %v5103 = vadd.f32 0.0, %v5102
        %v5104 = vpop.f32.mrb[0].mxu0
        %v5105 = vpop.f32.mrb[0].mxu0
        %v5106 = vadd.f32 0.0, %v5105
        %v5107 = vpop.f32.mrb[0].mxu0
        %5108 = vmatprep.mubr.bf16.mxu0 0
        %5109 = vmatmul.mubr.bf16.gmra.mrb[0].mxu0 %v4597
        %v5110 = vpop.f32.mrb[0].mxu0
        %v5111 = vadd.f32 0.0, %v5110
        %v5112 = vpop.f32.mrb[0].mxu0
        %v5113 = vpop.f32.mrb[0].mxu0
        %v5114 = vadd.f32 0.0, %v5113
        %v5115 = vpop.f32.mrb[0].mxu0
        %5116 = vmatprep.mubr.bf16.mxu0 0
        %5117 = vmatmul.mubr.bf16.gmra.mrb[0].mxu0 %v4600
        %v5118 = vpop.f32.mrb[0].mxu0
        %v5119 = vadd.f32 0.0, %v5118
        %v5120 = vpop.f32.mrb[0].mxu0
        %v5121 = vpop.f32.mrb[0].mxu0
        %v5122 = vadd.f32 0.0, %v5121
        %v5123 = vpop.f32.mrb[0].mxu0
        %5124 = vmatprep.mubr.bf16.mxu0 0
        %5125 = vmatmul.mubr.bf16.gmra.mrb[0].mxu0 %v4603
        %v5126 = vpop.f32.mrb[0].mxu0
        %v5127 = vadd.f32 0.0, %v5126
        %v5128 = vpop.f32.mrb[0].mxu0
        %v5129 = vpop.f32.mrb[0].mxu0
        %v5130 = vadd.f32 0.0, %v5129
        %v5131 = vpop.f32.mrb[0].mxu0
        %5132 = vmatprep.mubr.bf16.mxu0 0
        %5133 = vmatmul.mubr.bf16.gmra.mrb[0].mxu0 %v4606
        %v5134 = vpop.f32.mrb[0].mxu0
        %v5135 = vadd.f32 0.0, %v5134
        %v5136 = vpop.f32.mrb[0].mxu0
        %v5137 = vpop.f32.mrb[0].mxu0
        %v5138 = vadd.f32 0.0, %v5137
        %v5139 = vpop.f32.mrb[0].mxu0
        %5140 = vmatprep.mubr.bf16.mxu0 0
        %5141 = vmatmul.mubr.bf16.gmra.mrb[0].mxu0 %v4609
        %v5142 = vpop.f32.mrb[0].mxu0
        %v5143 = vadd.f32 0.0, %v5142
        %v5144 = vpop.f32.mrb[0].mxu0
        %v5145 = vpop.f32.mrb[0].mxu0
        %v5146 = vadd.f32 0.0, %v5145
        %v5147 = vpop.f32.mrb[0].mxu0
        %5148 = vmatprep.mubr.bf16.mxu0 0
        %5149 = vmatmul.mubr.bf16.gmra.mrb[0].mxu0 %v4612
        %v5150 = vpop.f32.mrb[0].mxu0
        %v5151 = vadd.f32 0.0, %v5150
        %v5152 = vpop.f32.mrb[0].mxu0
        %v5153 = vpop.f32.mrb[0].mxu0
        %v5154 = vadd.f32 0.0, %v5153
        %v5155 = vpop.f32.mrb[0].mxu0
        %5156 = vmatprep.mubr.bf16.mxu0 0
        %5157 = vmatmul.mubr.bf16.gmra.mrb[0].mxu0 %v4615
        %v5158 = vpop.f32.mrb[0].mxu0
        %v5159 = vadd.f32 0.0, %v5158
        %v5160 = vpop.f32.mrb[0].mxu0
        %v5161 = vpop.f32.mrb[0].mxu0
        %v5162 = vadd.f32 0.0, %v5161
        %v5163 = vpop.f32.mrb[0].mxu0
        %5164 = vdwg.mxu0
        %v5165 = vadd.f32 %v4103, %v4655
        %v5166 = vadd.f32 %v4104, %v4658
        %v5167 = vadd.f32 %v4105, %v4663
        %v5168 = vadd.f32 %v4106, %v4666
        %v5169 = vadd.f32 %v4107, %v4671
        %v5170 = vadd.f32 %v4108, %v4674
        %v5171 = vadd.f32 %v4109, %v4679
        %v5172 = vadd.f32 %v4110, %v4682
        %v5173 = vadd.f32 %v4111, %v4687
        %v5174 = vadd.f32 %v4112, %v4690
        %v5175 = vadd.f32 %v4113, %v4695
        %v5176 = vadd.f32 %v4114, %v4698
        %v5177 = vadd.f32 %v4115, %v4703
        %v5178 = vadd.f32 %v4116, %v4706
        %v5179 = vadd.f32 %v4117, %v4711
        %v5180 = vadd.f32 %v4118, %v4714
        %v5181 = vadd.f32 %v4119, %v4719
        %v5182 = vadd.f32 %v4120, %v4722
        %v5183 = vadd.f32 %v4121, %v4727
        %v5184 = vadd.f32 %v4122, %v4730
        %v5185 = vadd.f32 %v4123, %v4735
        %v5186 = vadd.f32 %v4124, %v4738
        %v5187 = vadd.f32 %v4125, %v4743
        %v5188 = vadd.f32 %v4126, %v4746
        %v5189 = vadd.f32 %v4127, %v4751
        %v5190 = vadd.f32 %v4128, %v4754
        %v5191 = vadd.f32 %v4129, %v4759
        %v5192 = vadd.f32 %v4130, %v4762
        %v5193 = vadd.f32 %v4131, %v4767
        %v5194 = vadd.f32 %v4132, %v4770
        %v5195 = vadd.f32 %v4133, %v4775
        %v5196 = vadd.f32 %v4134, %v4778
        %v5197 = vadd.f32 %v4135, %v4783
        %v5198 = vadd.f32 %v4136, %v4786
        %v5199 = vadd.f32 %v4137, %v4791
        %v5200 = vadd.f32 %v4138, %v4794
        %v5201 = vadd.f32 %v4139, %v4799
        %v5202 = vadd.f32 %v4140, %v4802
        %v5203 = vadd.f32 %v4141, %v4807
        %v5204 = vadd.f32 %v4142, %v4810
        %v5205 = vadd.f32 %v4143, %v4815
        %v5206 = vadd.f32 %v4144, %v4818
        %v5207 = vadd.f32 %v4145, %v4823
        %v5208 = vadd.f32 %v4146, %v4826
        %v5209 = vadd.f32 %v4147, %v4831
        %v5210 = vadd.f32 %v4148, %v4834
        %v5211 = vadd.f32 %v4149, %v4839
        %v5212 = vadd.f32 %v4150, %v4842
        %v5213 = vadd.f32 %v4151, %v4847
        %v5214 = vadd.f32 %v4152, %v4850
        %v5215 = vadd.f32 %v4153, %v4855
        %v5216 = vadd.f32 %v4154, %v4858
        %v5217 = vadd.f32 %v4155, %v4863
        %v5218 = vadd.f32 %v4156, %v4866
        %v5219 = vadd.f32 %v4157, %v4871
        %v5220 = vadd.f32 %v4158, %v4874
        %v5221 = vadd.f32 %v4159, %v4879
        %v5222 = vadd.f32 %v4160, %v4882
        %v5223 = vadd.f32 %v4161, %v4887
        %v5224 = vadd.f32 %v4162, %v4890
        %v5225 = vadd.f32 %v4163, %v4895
        %v5226 = vadd.f32 %v4164, %v4898
        %v5227 = vadd.f32 %v4165, %v4903
        %v5228 = vadd.f32 %v4166, %v4906
        %v5229 = vadd.f32 %v4167, %v4911
        %v5230 = vadd.f32 %v4168, %v4914
        %v5231 = vadd.f32 %v4169, %v4919
        %v5232 = vadd.f32 %v4170, %v4922
        %v5233 = vadd.f32 %v4171, %v4927
        %v5234 = vadd.f32 %v4172, %v4930
        %v5235 = vadd.f32 %v4173, %v4935
        %v5236 = vadd.f32 %v4174, %v4938
        %v5237 = vadd.f32 %v4175, %v4943
        %v5238 = vadd.f32 %v4176, %v4946
        %v5239 = vadd.f32 %v4177, %v4951
        %v5240 = vadd.f32 %v4178, %v4954
        %v5241 = vadd.f32 %v4179, %v4959
        %v5242 = vadd.f32 %v4180, %v4962
        %v5243 = vadd.f32 %v4181, %v4967
        %v5244 = vadd.f32 %v4182, %v4970
        %v5245 = vadd.f32 %v4183, %v4975
        %v5246 = vadd.f32 %v4184, %v4978
        %v5247 = vadd.f32 %v4185, %v4983
        %v5248 = vadd.f32 %v4186, %v4986
        %v5249 = vadd.f32 %v4187, %v4991
        %v5250 = vadd.f32 %v4188, %v4994
        %v5251 = vadd.f32 %v4189, %v4999
        %v5252 = vadd.f32 %v4190, %v5002
        %v5253 = vadd.f32 %v4191, %v5007
        %v5254 = vadd.f32 %v4192, %v5010
        %v5255 = vadd.f32 %v4193, %v5015
        %v5256 = vadd.f32 %v4194, %v5018
        %v5257 = vadd.f32 %v4195, %v5023
        %v5258 = vadd.f32 %v4196, %v5026
        %v5259 = vadd.f32 %v4197, %v5031
        %v5260 = vadd.f32 %v4198, %v5034
        %v5261 = vadd.f32 %v4199, %v5039
        %v5262 = vadd.f32 %v4200, %v5042
        %v5263 = vadd.f32 %v4201, %v5047
        %v5264 = vadd.f32 %v4202, %v5050
        %v5265 = vadd.f32 %v4203, %v5055
        %v5266 = vadd.f32 %v4204, %v5058
        %v5267 = vadd.f32 %v4205, %v5063
        %v5268 = vadd.f32 %v4206, %v5066
        %v5269 = vadd.f32 %v4207, %v5071
        %v5270 = vadd.f32 %v4208, %v5074
        %v5271 = vadd.f32 %v4209, %v5079
        %v5272 = vadd.f32 %v4210, %v5082
        %v5273 = vadd.f32 %v4211, %v5087
        %v5274 = vadd.f32 %v4212, %v5090
        %v5275 = vadd.f32 %v4213, %v5095
        %v5276 = vadd.f32 %v4214, %v5098
        %v5277 = vadd.f32 %v4215, %v5103
        %v5278 = vadd.f32 %v4216, %v5106
        %v5279 = vadd.f32 %v4217, %v5111
        %v5280 = vadd.f32 %v4218, %v5114
        %v5281 = vadd.f32 %v4219, %v5119
        %v5282 = vadd.f32 %v4220, %v5122
        %v5283 = vadd.f32 %v4221, %v5127
        %v5284 = vadd.f32 %v4222, %v5130
        %v5285 = vadd.f32 %v4223, %v5135
        %v5286 = vadd.f32 %v4224, %v5138
        %v5287 = vadd.f32 %v4225, %v5143
        %v5288 = vadd.f32 %v4226, %v5146
        %v5289 = vadd.f32 %v4227, %v5151
        %v5290 = vadd.f32 %v4228, %v5154
        %v5291 = vadd.f32 %v4229, %v5159
        %v5292 = vadd.f32 %v4230, %v5162
        %v5293 = vld [vmem:[%s3168 + $0x2] sm:$0xff]
        %v5294 = vld [vmem:[%s3168 + $0xa] sm:$0xff]
        %v5295 = vld [vmem:[%s3168 + $0x12] sm:$0xff]
        %v5296 = vld [vmem:[%s3168 + $0x1a] sm:$0xff]
        %v5297 = vld [vmem:[%s3168 + $0x2a] sm:$0xff]
        %v5298 = vld [vmem:[%s3168 + $0x32] sm:$0xff]
        %v5299 = vld [vmem:[%s3168 + $0x3a] sm:$0xff]
        %v5300 = vld [vmem:[%s3168 + $0x42] sm:$0xff]
        %v5301 = vld [vmem:[%s3168 + $0x52] sm:$0xff]
        %v5302 = vld [vmem:[%s3168 + $0x5a] sm:$0xff]
        %v5303 = vld [vmem:[%s3168 + $0x62] sm:$0xff]
        %v5304 = vld [vmem:[%s3168 + $0x6a] sm:$0xff]
        %v5305 = vld [vmem:[%s3168 + $0x7a] sm:$0xff]
        %v5306 = vld [vmem:[%s3168 + $0x82] sm:$0xff]
        %v5307 = vld [vmem:[%s3168 + $0x8a] sm:$0xff]
        %v5308 = vld [vmem:[%s3168 + $0x92] sm:$0xff]
        %v5309 = vld [vmem:[%s3168 + $0xa2] sm:$0xff]
        %v5310 = vld [vmem:[%s3168 + $0xaa] sm:$0xff]
        %v5311 = vld [vmem:[%s3168 + $0xb2] sm:$0xff]
        %v5312 = vld [vmem:[%s3168 + $0xba] sm:$0xff]
        %v5313 = vld [vmem:[%s3168 + $0xca] sm:$0xff]
        %v5314 = vld [vmem:[%s3168 + $0xd2] sm:$0xff]
        %v5315 = vld [vmem:[%s3168 + $0xda] sm:$0xff]
        %v5316 = vld [vmem:[%s3168 + $0xe2] sm:$0xff]
        %v5317 = vld [vmem:[%s3168 + $0xf2] sm:$0xff]
        %v5318 = vld [vmem:[%s3168 + $0xfa] sm:$0xff]
        %v5319 = vld [vmem:[%s3168 + $0x102] sm:$0xff]
        %v5320 = vld [vmem:[%s3168 + $0x10a] sm:$0xff]
        %v5321 = vld [vmem:[%s3168 + $0x11a] sm:$0xff]
        %v5322 = vld [vmem:[%s3168 + $0x122] sm:$0xff]
        %v5323 = vld [vmem:[%s3168 + $0x12a] sm:$0xff]
        %v5324 = vld [vmem:[%s3168 + $0x132] sm:$0xff]
        %v5325 = vld [vmem:[%s3168 + $0x142] sm:$0xff]
        %v5326 = vld [vmem:[%s3168 + $0x14a] sm:$0xff]
        %v5327 = vld [vmem:[%s3168 + $0x152] sm:$0xff]
        %v5328 = vld [vmem:[%s3168 + $0x15a] sm:$0xff]
        %v5329 = vld [vmem:[%s3168 + $0x16a] sm:$0xff]
        %v5330 = vld [vmem:[%s3168 + $0x172] sm:$0xff]
        %v5331 = vld [vmem:[%s3168 + $0x17a] sm:$0xff]
        %v5332 = vld [vmem:[%s3168 + $0x182] sm:$0xff]
        %v5333 = vld [vmem:[%s3168 + $0x192] sm:$0xff]
        %v5334 = vld [vmem:[%s3168 + $0x19a] sm:$0xff]
        %v5335 = vld [vmem:[%s3168 + $0x1a2] sm:$0xff]
        %v5336 = vld [vmem:[%s3168 + $0x1aa] sm:$0xff]
        %v5337 = vld [vmem:[%s3168 + $0x1ba] sm:$0xff]
        %v5338 = vld [vmem:[%s3168 + $0x1c2] sm:$0xff]
        %v5339 = vld [vmem:[%s3168 + $0x1ca] sm:$0xff]
        %v5340 = vld [vmem:[%s3168 + $0x1d2] sm:$0xff]
        %v5341 = vld [vmem:[%s3168 + $0x1e2] sm:$0xff]
        %v5342 = vld [vmem:[%s3168 + $0x1ea] sm:$0xff]
        %v5343 = vld [vmem:[%s3168 + $0x1f2] sm:$0xff]
        %v5344 = vld [vmem:[%s3168 + $0x1fa] sm:$0xff]
        %v5345 = vld [vmem:[%s3168 + $0x20a] sm:$0xff]
        %v5346 = vld [vmem:[%s3168 + $0x212] sm:$0xff]
        %v5347 = vld [vmem:[%s3168 + $0x21a] sm:$0xff]
        %v5348 = vld [vmem:[%s3168 + $0x222] sm:$0xff]
        %v5349 = vld [vmem:[%s3168 + $0x232] sm:$0xff]
        %v5350 = vld [vmem:[%s3168 + $0x23a] sm:$0xff]
        %v5351 = vld [vmem:[%s3168 + $0x242] sm:$0xff]
        %v5352 = vld [vmem:[%s3168 + $0x24a] sm:$0xff]
        %v5353 = vld [vmem:[%s3168 + $0x25a] sm:$0xff]
        %v5354 = vld [vmem:[%s3168 + $0x262] sm:$0xff]
        %v5355 = vld [vmem:[%s3168 + $0x26a] sm:$0xff]
        %v5356 = vld [vmem:[%s3168 + $0x272] sm:$0xff]
        %v5357 = vld [vmem:[%s3168 + $0x282] sm:$0xff]
        %v5358 = vld [vmem:[%s3168 + $0x28a] sm:$0xff]
        %v5359 = vld [vmem:[%s3168 + $0x292] sm:$0xff]
        %v5360 = vld [vmem:[%s3168 + $0x29a] sm:$0xff]
        %v5361 = vld [vmem:[%s3168 + $0x2aa] sm:$0xff]
        %v5362 = vld [vmem:[%s3168 + $0x2b2] sm:$0xff]
        %v5363 = vld [vmem:[%s3168 + $0x2ba] sm:$0xff]
        %v5364 = vld [vmem:[%s3168 + $0x2c2] sm:$0xff]
        %v5365 = vld [vmem:[%s3168 + $0x2d2] sm:$0xff]
        %v5366 = vld [vmem:[%s3168 + $0x2da] sm:$0xff]
        %v5367 = vld [vmem:[%s3168 + $0x2e2] sm:$0xff]
        %v5368 = vld [vmem:[%s3168 + $0x2ea] sm:$0xff]
        %v5369 = vld [vmem:[%s3168 + $0x2fa] sm:$0xff]
        %v5370 = vld [vmem:[%s3168 + $0x302] sm:$0xff]
        %v5371 = vld [vmem:[%s3168 + $0x30a] sm:$0xff]
        %v5372 = vld [vmem:[%s3168 + $0x312] sm:$0xff]
        %v5373 = vld [vmem:[%s3168 + $0x322] sm:$0xff]
        %v5374 = vld [vmem:[%s3168 + $0x32a] sm:$0xff]
        %v5375 = vld [vmem:[%s3168 + $0x332] sm:$0xff]
        %v5376 = vld [vmem:[%s3168 + $0x33a] sm:$0xff]
        %v5377 = vld [vmem:[%s3168 + $0x34a] sm:$0xff]
        %v5378 = vld [vmem:[%s3168 + $0x352] sm:$0xff]
        %v5379 = vld [vmem:[%s3168 + $0x35a] sm:$0xff]
        %v5380 = vld [vmem:[%s3168 + $0x362] sm:$0xff]
        %v5381 = vld [vmem:[%s3168 + $0x372] sm:$0xff]
        %v5382 = vld [vmem:[%s3168 + $0x37a] sm:$0xff]
        %v5383 = vld [vmem:[%s3168 + $0x382] sm:$0xff]
        %v5384 = vld [vmem:[%s3168 + $0x38a] sm:$0xff]
        %v5385 = vld [vmem:[%s3168 + $0x39a] sm:$0xff]
        %v5386 = vld [vmem:[%s3168 + $0x3a2] sm:$0xff]
        %v5387 = vld [vmem:[%s3168 + $0x3aa] sm:$0xff]
        %v5388 = vld [vmem:[%s3168 + $0x3b2] sm:$0xff]
        %v5389 = vld [vmem:[%s3168 + $0x3c2] sm:$0xff]
        %v5390 = vld [vmem:[%s3168 + $0x3ca] sm:$0xff]
        %v5391 = vld [vmem:[%s3168 + $0x3d2] sm:$0xff]
        %v5392 = vld [vmem:[%s3168 + $0x3da] sm:$0xff]
        %v5393 = vld [vmem:[%s3168 + $0x3ea] sm:$0xff]
        %v5394 = vld [vmem:[%s3168 + $0x3f2] sm:$0xff]
        %v5395 = vld [vmem:[%s3168 + $0x3fa] sm:$0xff]
        %v5396 = vld [vmem:[%s3168 + $0x402] sm:$0xff]
        %v5397 = vld [vmem:[%s3168 + $0x412] sm:$0xff]
        %v5398 = vld [vmem:[%s3168 + $0x41a] sm:$0xff]
        %v5399 = vld [vmem:[%s3168 + $0x422] sm:$0xff]
        %v5400 = vld [vmem:[%s3168 + $0x42a] sm:$0xff]
        %v5401 = vld [vmem:[%s3168 + $0x43a] sm:$0xff]
        %v5402 = vld [vmem:[%s3168 + $0x442] sm:$0xff]
        %v5403 = vld [vmem:[%s3168 + $0x44a] sm:$0xff]
        %v5404 = vld [vmem:[%s3168 + $0x452] sm:$0xff]
        %v5405 = vld [vmem:[%s3168 + $0x462] sm:$0xff]
        %v5406 = vld [vmem:[%s3168 + $0x46a] sm:$0xff]
        %v5407 = vld [vmem:[%s3168 + $0x472] sm:$0xff]
        %v5408 = vld [vmem:[%s3168 + $0x47a] sm:$0xff]
        %v5409 = vld [vmem:[%s3168 + $0x48a] sm:$0xff]
        %v5410 = vld [vmem:[%s3168 + $0x492] sm:$0xff]
        %v5411 = vld [vmem:[%s3168 + $0x49a] sm:$0xff]
        %v5412 = vld [vmem:[%s3168 + $0x4a2] sm:$0xff]
        %v5413 = vld [vmem:[%s3168 + $0x4b2] sm:$0xff]
        %v5414 = vld [vmem:[%s3168 + $0x4ba] sm:$0xff]
        %v5415 = vld [vmem:[%s3168 + $0x4c2] sm:$0xff]
        %v5416 = vld [vmem:[%s3168 + $0x4ca] sm:$0xff]
        %v5417 = vld [vmem:[%s3168 + $0x4da] sm:$0xff]
        %v5418 = vld [vmem:[%s3168 + $0x4e2] sm:$0xff]
        %v5419 = vld [vmem:[%s3168 + $0x4ea] sm:$0xff]
        %v5420 = vld [vmem:[%s3168 + $0x4f2] sm:$0xff]
        %v5421 = vpack.c.bf16 %v5294, %v5293
        %v5422 = vpack.c.bf16 %v5296, %v5295
        %v5423 = vpack.c.bf16 %v5298, %v5297
        %v5424 = vpack.c.bf16 %v5300, %v5299
        %v5425 = vpack.c.bf16 %v5302, %v5301
        %v5426 = vpack.c.bf16 %v5304, %v5303
        %v5427 = vpack.c.bf16 %v5306, %v5305
        %v5428 = vpack.c.bf16 %v5308, %v5307
        %v5429 = vpack.c.bf16 %v5310, %v5309
        %v5430 = vpack.c.bf16 %v5312, %v5311
        %v5431 = vpack.c.bf16 %v5314, %v5313
        %v5432 = vpack.c.bf16 %v5316, %v5315
        %v5433 = vpack.c.bf16 %v5318, %v5317
        %v5434 = vpack.c.bf16 %v5320, %v5319
        %v5435 = vpack.c.bf16 %v5322, %v5321
        %v5436 = vpack.c.bf16 %v5324, %v5323
        %v5437 = vpack.c.bf16 %v5326, %v5325
        %v5438 = vpack.c.bf16 %v5328, %v5327
        %v5439 = vpack.c.bf16 %v5330, %v5329
        %v5440 = vpack.c.bf16 %v5332, %v5331
        %v5441 = vpack.c.bf16 %v5334, %v5333
        %v5442 = vpack.c.bf16 %v5336, %v5335
        %v5443 = vpack.c.bf16 %v5338, %v5337
        %v5444 = vpack.c.bf16 %v5340, %v5339
        %v5445 = vpack.c.bf16 %v5342, %v5341
        %v5446 = vpack.c.bf16 %v5344, %v5343
        %v5447 = vpack.c.bf16 %v5346, %v5345
        %v5448 = vpack.c.bf16 %v5348, %v5347
        %v5449 = vpack.c.bf16 %v5350, %v5349
        %v5450 = vpack.c.bf16 %v5352, %v5351
        %v5451 = vpack.c.bf16 %v5354, %v5353
        %v5452 = vpack.c.bf16 %v5356, %v5355
        %v5453 = vpack.c.bf16 %v5358, %v5357
        %v5454 = vpack.c.bf16 %v5360, %v5359
        %v5455 = vpack.c.bf16 %v5362, %v5361
        %v5456 = vpack.c.bf16 %v5364, %v5363
        %v5457 = vpack.c.bf16 %v5366, %v5365
        %v5458 = vpack.c.bf16 %v5368, %v5367
        %v5459 = vpack.c.bf16 %v5370, %v5369
        %v5460 = vpack.c.bf16 %v5372, %v5371
        %v5461 = vpack.c.bf16 %v5374, %v5373
        %v5462 = vpack.c.bf16 %v5376, %v5375
        %v5463 = vpack.c.bf16 %v5378, %v5377
        %v5464 = vpack.c.bf16 %v5380, %v5379
        %v5465 = vpack.c.bf16 %v5382, %v5381
        %v5466 = vpack.c.bf16 %v5384, %v5383
        %v5467 = vpack.c.bf16 %v5386, %v5385
        %v5468 = vpack.c.bf16 %v5388, %v5387
        %v5469 = vpack.c.bf16 %v5390, %v5389
        %v5470 = vpack.c.bf16 %v5392, %v5391
        %v5471 = vpack.c.bf16 %v5394, %v5393
        %v5472 = vpack.c.bf16 %v5396, %v5395
        %v5473 = vpack.c.bf16 %v5398, %v5397
        %v5474 = vpack.c.bf16 %v5400, %v5399
        %v5475 = vpack.c.bf16 %v5402, %v5401
        %v5476 = vpack.c.bf16 %v5404, %v5403
        %v5477 = vpack.c.bf16 %v5406, %v5405
        %v5478 = vpack.c.bf16 %v5408, %v5407
        %v5479 = vpack.c.bf16 %v5410, %v5409
        %v5480 = vpack.c.bf16 %v5412, %v5411
        %v5481 = vpack.c.bf16 %v5414, %v5413
        %v5482 = vpack.c.bf16 %v5416, %v5415
        %v5483 = vpack.c.bf16 %v5418, %v5417
        %v5484 = vpack.c.bf16 %v5420, %v5419
        %s5485 = scalar_lea.vmem %s232, 10
        %v5486 = vld [vmem:[%s5485] sm:$0x3]
        %v5488 = vsel %vm621, %v5421, 0
        %v5491 = vsel %vm621, %v5422, 0
        %v5494 = vsel %vm621, %v5423, 0
        %v5497 = vsel %vm621, %v5424, 0
        %v5500 = vsel %vm621, %v5425, 0
        %v5503 = vsel %vm621, %v5426, 0
        %v5506 = vsel %vm621, %v5427, 0
        %v5509 = vsel %vm621, %v5428, 0
        %v5512 = vsel %vm621, %v5429, 0
        %v5515 = vsel %vm621, %v5430, 0
        %v5518 = vsel %vm621, %v5431, 0
        %v5521 = vsel %vm621, %v5432, 0
        %v5524 = vsel %vm621, %v5433, 0
        %v5527 = vsel %vm621, %v5434, 0
        %v5530 = vsel %vm621, %v5435, 0
        %v5533 = vsel %vm621, %v5436, 0
        %v5536 = vsel %vm621, %v5437, 0
        %v5539 = vsel %vm621, %v5438, 0
        %v5542 = vsel %vm621, %v5439, 0
        %v5545 = vsel %vm621, %v5440, 0
        %v5548 = vsel %vm621, %v5441, 0
        %v5551 = vsel %vm621, %v5442, 0
        %v5554 = vsel %vm621, %v5443, 0
        %v5557 = vsel %vm621, %v5444, 0
        %v5560 = vsel %vm621, %v5445, 0
        %v5563 = vsel %vm621, %v5446, 0
        %v5566 = vsel %vm621, %v5447, 0
        %v5569 = vsel %vm621, %v5448, 0
        %v5572 = vsel %vm621, %v5449, 0
        %v5575 = vsel %vm621, %v5450, 0
        %v5578 = vsel %vm621, %v5451, 0
        %v5581 = vsel %vm621, %v5452, 0
        %v5584 = vsel %vm621, %v5453, 0
        %v5587 = vsel %vm621, %v5454, 0
        %v5590 = vsel %vm621, %v5455, 0
        %v5593 = vsel %vm621, %v5456, 0
        %v5596 = vsel %vm621, %v5457, 0
        %v5599 = vsel %vm621, %v5458, 0
        %v5602 = vsel %vm621, %v5459, 0
        %v5605 = vsel %vm621, %v5460, 0
        %v5608 = vsel %vm621, %v5461, 0
        %v5611 = vsel %vm621, %v5462, 0
        %v5614 = vsel %vm621, %v5463, 0
        %v5617 = vsel %vm621, %v5464, 0
        %v5620 = vsel %vm621, %v5465, 0
        %v5623 = vsel %vm621, %v5466, 0
        %v5626 = vsel %vm621, %v5467, 0
        %v5629 = vsel %vm621, %v5468, 0
        %v5632 = vsel %vm621, %v5469, 0
        %v5635 = vsel %vm621, %v5470, 0
        %v5638 = vsel %vm621, %v5471, 0
        %v5641 = vsel %vm621, %v5472, 0
        %v5644 = vsel %vm621, %v5473, 0
        %v5647 = vsel %vm621, %v5474, 0
        %v5650 = vsel %vm621, %v5475, 0
        %v5653 = vsel %vm621, %v5476, 0
        %v5656 = vsel %vm621, %v5477, 0
        %v5659 = vsel %vm621, %v5478, 0
        %v5662 = vsel %vm621, %v5479, 0
        %v5665 = vsel %vm621, %v5480, 0
        %v5668 = vsel %vm621, %v5481, 0
        %v5671 = vsel %vm621, %v5482, 0
        %v5674 = vsel %vm621, %v5483, 0
        %v5677 = vsel %vm621, %v5484, 0
        %v5680 = vand.u32 %v5486, %v817
        %5682 = vmatprep.subr.bf16.mxu0 0
        %5683 = vmatpush1.bf16.msra.mxu0 %v5680
        %5684 = vmatprep.subr.bf16.mxu0 0
        %5685 = vmatpush1.bf16.msra.mxu0 0
        %5686 = vmatprep.subr.bf16.mxu0 0
        %5687 = vmatpush1.bf16.msra.mxu0 0
        %5688 = vmatprep.subr.bf16.mxu0 0
        %5689 = vmatpush1.bf16.msra.mxu0 0
        %5690 = vmatprep.subr.bf16.mxu0 0
        %5691 = vmatpush1.bf16.msra.mxu0 0
        %5692 = vmatprep.subr.bf16.mxu0 0
        %5693 = vmatpush1.bf16.msra.mxu0 0
        %5694 = vmatprep.subr.bf16.mxu0 0
        %5695 = vmatpush1.bf16.msra.mxu0 0
        %5696 = vmatprep.subr.bf16.mxu0 0
        %5697 = vmatpush1.bf16.msra.mxu0 0
        %5698 = vmatprep.subr.bf16.mxu0 0
        %5699 = vmatpush1.bf16.msra.mxu0 0
        %5700 = vmatprep.subr.bf16.mxu0 0
        %5701 = vmatpush1.bf16.msra.mxu0 0
        %5702 = vmatprep.subr.bf16.mxu0 0
        %5703 = vmatpush1.bf16.msra.mxu0 0
        %5704 = vmatprep.subr.bf16.mxu0 0
        %5705 = vmatpush1.bf16.msra.mxu0 0
        %5706 = vmatprep.subr.bf16.mxu0 0
        %5707 = vmatpush1.bf16.msra.mxu0 0
        %5708 = vmatprep.subr.bf16.mxu0 0
        %5709 = vmatpush1.bf16.msra.mxu0 0
        %5710 = vmatprep.subr.bf16.mxu0 0
        %5711 = vmatpush1.bf16.msra.mxu0 0
        %5712 = vmatprep.subr.bf16.mxu0 0
        %5713 = vmatpush1.bf16.msra.mxu0 0
        %5714 = vmatprep.mubr.bf16.mxu0 0
        %5715 = vmatmul.mubr.bf16.gmra.mrb[0].mxu0 %v5488
        %v5716 = vpop.f32.mrb[0].mxu0
        %v5717 = vadd.f32 0.0, %v5716
        %v5718 = vpop.f32.mrb[0].mxu0
        %v5719 = vpop.f32.mrb[0].mxu0
        %v5720 = vadd.f32 0.0, %v5719
        %v5721 = vpop.f32.mrb[0].mxu0
        %5722 = vmatprep.mubr.bf16.mxu0 0
        %5723 = vmatmul.mubr.bf16.gmra.mrb[0].mxu0 %v5491
        %v5724 = vpop.f32.mrb[0].mxu0
        %v5725 = vadd.f32 0.0, %v5724
        %v5726 = vpop.f32.mrb[0].mxu0
        %v5727 = vpop.f32.mrb[0].mxu0
        %v5728 = vadd.f32 0.0, %v5727
        %v5729 = vpop.f32.mrb[0].mxu0
        %5730 = vmatprep.mubr.bf16.mxu0 0
        %5731 = vmatmul.mubr.bf16.gmra.mrb[0].mxu0 %v5494
        %v5732 = vpop.f32.mrb[0].mxu0
        %v5733 = vadd.f32 0.0, %v5732
        %v5734 = vpop.f32.mrb[0].mxu0
        %v5735 = vpop.f32.mrb[0].mxu0
        %v5736 = vadd.f32 0.0, %v5735
        %v5737 = vpop.f32.mrb[0].mxu0
        %5738 = vmatprep.mubr.bf16.mxu0 0
        %5739 = vmatmul.mubr.bf16.gmra.mrb[0].mxu0 %v5497
        %v5740 = vpop.f32.mrb[0].mxu0
        %v5741 = vadd.f32 0.0, %v5740
        %v5742 = vpop.f32.mrb[0].mxu0
        %v5743 = vpop.f32.mrb[0].mxu0
        %v5744 = vadd.f32 0.0, %v5743
        %v5745 = vpop.f32.mrb[0].mxu0
        %5746 = vmatprep.mubr.bf16.mxu0 0
        %5747 = vmatmul.mubr.bf16.gmra.mrb[0].mxu0 %v5500
        %v5748 = vpop.f32.mrb[0].mxu0
        %v5749 = vadd.f32 0.0, %v5748
        %v5750 = vpop.f32.mrb[0].mxu0
        %v5751 = vpop.f32.mrb[0].mxu0
        %v5752 = vadd.f32 0.0, %v5751
        %v5753 = vpop.f32.mrb[0].mxu0
        %5754 = vmatprep.mubr.bf16.mxu0 0
        %5755 = vmatmul.mubr.bf16.gmra.mrb[0].mxu0 %v5503
        %v5756 = vpop.f32.mrb[0].mxu0
        %v5757 = vadd.f32 0.0, %v5756
        %v5758 = vpop.f32.mrb[0].mxu0
        %v5759 = vpop.f32.mrb[0].mxu0
        %v5760 = vadd.f32 0.0, %v5759
        %v5761 = vpop.f32.mrb[0].mxu0
        %5762 = vmatprep.mubr.bf16.mxu0 0
        %5763 = vmatmul.mubr.bf16.gmra.mrb[0].mxu0 %v5506
        %v5764 = vpop.f32.mrb[0].mxu0
        %v5765 = vadd.f32 0.0, %v5764
        %v5766 = vpop.f32.mrb[0].mxu0
        %v5767 = vpop.f32.mrb[0].mxu0
        %v5768 = vadd.f32 0.0, %v5767
        %v5769 = vpop.f32.mrb[0].mxu0
        %5770 = vmatprep.mubr.bf16.mxu0 0
        %5771 = vmatmul.mubr.bf16.gmra.mrb[0].mxu0 %v5509
        %v5772 = vpop.f32.mrb[0].mxu0
        %v5773 = vadd.f32 0.0, %v5772
        %v5774 = vpop.f32.mrb[0].mxu0
        %v5775 = vpop.f32.mrb[0].mxu0
        %v5776 = vadd.f32 0.0, %v5775
        %v5777 = vpop.f32.mrb[0].mxu0
        %5778 = vmatprep.mubr.bf16.mxu0 0
        %5779 = vmatmul.mubr.bf16.gmra.mrb[0].mxu0 %v5512
        %v5780 = vpop.f32.mrb[0].mxu0
        %v5781 = vadd.f32 0.0, %v5780
        %v5782 = vpop.f32.mrb[0].mxu0
        %v5783 = vpop.f32.mrb[0].mxu0
        %v5784 = vadd.f32 0.0, %v5783
        %v5785 = vpop.f32.mrb[0].mxu0
        %5786 = vmatprep.mubr.bf16.mxu0 0
        %5787 = vmatmul.mubr.bf16.gmra.mrb[0].mxu0 %v5515
        %v5788 = vpop.f32.mrb[0].mxu0
        %v5789 = vadd.f32 0.0, %v5788
        %v5790 = vpop.f32.mrb[0].mxu0
        %v5791 = vpop.f32.mrb[0].mxu0
        %v5792 = vadd.f32 0.0, %v5791
        %v5793 = vpop.f32.mrb[0].mxu0
        %5794 = vmatprep.mubr.bf16.mxu0 0
        %5795 = vmatmul.mubr.bf16.gmra.mrb[0].mxu0 %v5518
        %v5796 = vpop.f32.mrb[0].mxu0
        %v5797 = vadd.f32 0.0, %v5796
        %v5798 = vpop.f32.mrb[0].mxu0
        %v5799 = vpop.f32.mrb[0].mxu0
        %v5800 = vadd.f32 0.0, %v5799
        %v5801 = vpop.f32.mrb[0].mxu0
        %5802 = vmatprep.mubr.bf16.mxu0 0
        %5803 = vmatmul.mubr.bf16.gmra.mrb[0].mxu0 %v5521
        %v5804 = vpop.f32.mrb[0].mxu0
        %v5805 = vadd.f32 0.0, %v5804
        %v5806 = vpop.f32.mrb[0].mxu0
        %v5807 = vpop.f32.mrb[0].mxu0
        %v5808 = vadd.f32 0.0, %v5807
        %v5809 = vpop.f32.mrb[0].mxu0
        %5810 = vmatprep.mubr.bf16.mxu0 0
        %5811 = vmatmul.mubr.bf16.gmra.mrb[0].mxu0 %v5524
        %v5812 = vpop.f32.mrb[0].mxu0
        %v5813 = vadd.f32 0.0, %v5812
        %v5814 = vpop.f32.mrb[0].mxu0
        %v5815 = vpop.f32.mrb[0].mxu0
        %v5816 = vadd.f32 0.0, %v5815
        %v5817 = vpop.f32.mrb[0].mxu0
        %5818 = vmatprep.mubr.bf16.mxu0 0
        %5819 = vmatmul.mubr.bf16.gmra.mrb[0].mxu0 %v5527
        %v5820 = vpop.f32.mrb[0].mxu0
        %v5821 = vadd.f32 0.0, %v5820
        %v5822 = vpop.f32.mrb[0].mxu0
        %v5823 = vpop.f32.mrb[0].mxu0
        %v5824 = vadd.f32 0.0, %v5823
        %v5825 = vpop.f32.mrb[0].mxu0
        %5826 = vmatprep.mubr.bf16.mxu0 0
        %5827 = vmatmul.mubr.bf16.gmra.mrb[0].mxu0 %v5530
        %v5828 = vpop.f32.mrb[0].mxu0
        %v5829 = vadd.f32 0.0, %v5828
        %v5830 = vpop.f32.mrb[0].mxu0
        %v5831 = vpop.f32.mrb[0].mxu0
        %v5832 = vadd.f32 0.0, %v5831
        %v5833 = vpop.f32.mrb[0].mxu0
        %5834 = vmatprep.mubr.bf16.mxu0 0
        %5835 = vmatmul.mubr.bf16.gmra.mrb[0].mxu0 %v5533
        %v5836 = vpop.f32.mrb[0].mxu0
        %v5837 = vadd.f32 0.0, %v5836
        %v5838 = vpop.f32.mrb[0].mxu0
        %v5839 = vpop.f32.mrb[0].mxu0
        %v5840 = vadd.f32 0.0, %v5839
        %v5841 = vpop.f32.mrb[0].mxu0
        %5842 = vmatprep.mubr.bf16.mxu0 0
        %5843 = vmatmul.mubr.bf16.gmra.mrb[0].mxu0 %v5536
        %v5844 = vpop.f32.mrb[0].mxu0
        %v5845 = vadd.f32 0.0, %v5844
        %v5846 = vpop.f32.mrb[0].mxu0
        %v5847 = vpop.f32.mrb[0].mxu0
        %v5848 = vadd.f32 0.0, %v5847
        %v5849 = vpop.f32.mrb[0].mxu0
        %5850 = vmatprep.mubr.bf16.mxu0 0
        %5851 = vmatmul.mubr.bf16.gmra.mrb[0].mxu0 %v5539
        %v5852 = vpop.f32.mrb[0].mxu0
        %v5853 = vadd.f32 0.0, %v5852
        %v5854 = vpop.f32.mrb[0].mxu0
        %v5855 = vpop.f32.mrb[0].mxu0
        %v5856 = vadd.f32 0.0, %v5855
        %v5857 = vpop.f32.mrb[0].mxu0
        %5858 = vmatprep.mubr.bf16.mxu0 0
        %5859 = vmatmul.mubr.bf16.gmra.mrb[0].mxu0 %v5542
        %v5860 = vpop.f32.mrb[0].mxu0
        %v5861 = vadd.f32 0.0, %v5860
        %v5862 = vpop.f32.mrb[0].mxu0
        %v5863 = vpop.f32.mrb[0].mxu0
        %v5864 = vadd.f32 0.0, %v5863
        %v5865 = vpop.f32.mrb[0].mxu0
        %5866 = vmatprep.mubr.bf16.mxu0 0
        %5867 = vmatmul.mubr.bf16.gmra.mrb[0].mxu0 %v5545
        %v5868 = vpop.f32.mrb[0].mxu0
        %v5869 = vadd.f32 0.0, %v5868
        %v5870 = vpop.f32.mrb[0].mxu0
        %v5871 = vpop.f32.mrb[0].mxu0
        %v5872 = vadd.f32 0.0, %v5871
        %v5873 = vpop.f32.mrb[0].mxu0
        %5874 = vmatprep.mubr.bf16.mxu0 0
        %5875 = vmatmul.mubr.bf16.gmra.mrb[0].mxu0 %v5548
        %v5876 = vpop.f32.mrb[0].mxu0
        %v5877 = vadd.f32 0.0, %v5876
        %v5878 = vpop.f32.mrb[0].mxu0
        %v5879 = vpop.f32.mrb[0].mxu0
        %v5880 = vadd.f32 0.0, %v5879
        %v5881 = vpop.f32.mrb[0].mxu0
        %5882 = vmatprep.mubr.bf16.mxu0 0
        %5883 = vmatmul.mubr.bf16.gmra.mrb[0].mxu0 %v5551
        %v5884 = vpop.f32.mrb[0].mxu0
        %v5885 = vadd.f32 0.0, %v5884
        %v5886 = vpop.f32.mrb[0].mxu0
        %v5887 = vpop.f32.mrb[0].mxu0
        %v5888 = vadd.f32 0.0, %v5887
        %v5889 = vpop.f32.mrb[0].mxu0
        %5890 = vmatprep.mubr.bf16.mxu0 0
        %5891 = vmatmul.mubr.bf16.gmra.mrb[0].mxu0 %v5554
        %v5892 = vpop.f32.mrb[0].mxu0
        %v5893 = vadd.f32 0.0, %v5892
        %v5894 = vpop.f32.mrb[0].mxu0
        %v5895 = vpop.f32.mrb[0].mxu0
        %v5896 = vadd.f32 0.0, %v5895
        %v5897 = vpop.f32.mrb[0].mxu0
        %5898 = vmatprep.mubr.bf16.mxu0 0
        %5899 = vmatmul.mubr.bf16.gmra.mrb[0].mxu0 %v5557
        %v5900 = vpop.f32.mrb[0].mxu0
        %v5901 = vadd.f32 0.0, %v5900
        %v5902 = vpop.f32.mrb[0].mxu0
        %v5903 = vpop.f32.mrb[0].mxu0
        %v5904 = vadd.f32 0.0, %v5903
        %v5905 = vpop.f32.mrb[0].mxu0
        %5906 = vmatprep.mubr.bf16.mxu0 0
        %5907 = vmatmul.mubr.bf16.gmra.mrb[0].mxu0 %v5560
        %v5908 = vpop.f32.mrb[0].mxu0
        %v5909 = vadd.f32 0.0, %v5908
        %v5910 = vpop.f32.mrb[0].mxu0
        %v5911 = vpop.f32.mrb[0].mxu0
        %v5912 = vadd.f32 0.0, %v5911
        %v5913 = vpop.f32.mrb[0].mxu0
        %5914 = vmatprep.mubr.bf16.mxu0 0
        %5915 = vmatmul.mubr.bf16.gmra.mrb[0].mxu0 %v5563
        %v5916 = vpop.f32.mrb[0].mxu0
        %v5917 = vadd.f32 0.0, %v5916
        %v5918 = vpop.f32.mrb[0].mxu0
        %v5919 = vpop.f32.mrb[0].mxu0
        %v5920 = vadd.f32 0.0, %v5919
        %v5921 = vpop.f32.mrb[0].mxu0
        %5922 = vmatprep.mubr.bf16.mxu0 0
        %5923 = vmatmul.mubr.bf16.gmra.mrb[0].mxu0 %v5566
        %v5924 = vpop.f32.mrb[0].mxu0
        %v5925 = vadd.f32 0.0, %v5924
        %v5926 = vpop.f32.mrb[0].mxu0
        %v5927 = vpop.f32.mrb[0].mxu0
        %v5928 = vadd.f32 0.0, %v5927
        %v5929 = vpop.f32.mrb[0].mxu0
        %5930 = vmatprep.mubr.bf16.mxu0 0
        %5931 = vmatmul.mubr.bf16.gmra.mrb[0].mxu0 %v5569
        %v5932 = vpop.f32.mrb[0].mxu0
        %v5933 = vadd.f32 0.0, %v5932
        %v5934 = vpop.f32.mrb[0].mxu0
        %v5935 = vpop.f32.mrb[0].mxu0
        %v5936 = vadd.f32 0.0, %v5935
        %v5937 = vpop.f32.mrb[0].mxu0
        %5938 = vmatprep.mubr.bf16.mxu0 0
        %5939 = vmatmul.mubr.bf16.gmra.mrb[0].mxu0 %v5572
        %v5940 = vpop.f32.mrb[0].mxu0
        %v5941 = vadd.f32 0.0, %v5940
        %v5942 = vpop.f32.mrb[0].mxu0
        %v5943 = vpop.f32.mrb[0].mxu0
        %v5944 = vadd.f32 0.0, %v5943
        %v5945 = vpop.f32.mrb[0].mxu0
        %5946 = vmatprep.mubr.bf16.mxu0 0
        %5947 = vmatmul.mubr.bf16.gmra.mrb[0].mxu0 %v5575
        %v5948 = vpop.f32.mrb[0].mxu0
        %v5949 = vadd.f32 0.0, %v5948
        %v5950 = vpop.f32.mrb[0].mxu0
        %v5951 = vpop.f32.mrb[0].mxu0
        %v5952 = vadd.f32 0.0, %v5951
        %v5953 = vpop.f32.mrb[0].mxu0
        %5954 = vmatprep.mubr.bf16.mxu0 0
        %5955 = vmatmul.mubr.bf16.gmra.mrb[0].mxu0 %v5578
        %v5956 = vpop.f32.mrb[0].mxu0
        %v5957 = vadd.f32 0.0, %v5956
        %v5958 = vpop.f32.mrb[0].mxu0
        %v5959 = vpop.f32.mrb[0].mxu0
        %v5960 = vadd.f32 0.0, %v5959
        %v5961 = vpop.f32.mrb[0].mxu0
        %5962 = vmatprep.mubr.bf16.mxu0 0
        %5963 = vmatmul.mubr.bf16.gmra.mrb[0].mxu0 %v5581
        %v5964 = vpop.f32.mrb[0].mxu0
        %v5965 = vadd.f32 0.0, %v5964
        %v5966 = vpop.f32.mrb[0].mxu0
        %v5967 = vpop.f32.mrb[0].mxu0
        %v5968 = vadd.f32 0.0, %v5967
        %v5969 = vpop.f32.mrb[0].mxu0
        %5970 = vmatprep.mubr.bf16.mxu0 0
        %5971 = vmatmul.mubr.bf16.gmra.mrb[0].mxu0 %v5584
        %v5972 = vpop.f32.mrb[0].mxu0
        %v5973 = vadd.f32 0.0, %v5972
        %v5974 = vpop.f32.mrb[0].mxu0
        %v5975 = vpop.f32.mrb[0].mxu0
        %v5976 = vadd.f32 0.0, %v5975
        %v5977 = vpop.f32.mrb[0].mxu0
        %5978 = vmatprep.mubr.bf16.mxu0 0
        %5979 = vmatmul.mubr.bf16.gmra.mrb[0].mxu0 %v5587
        %v5980 = vpop.f32.mrb[0].mxu0
        %v5981 = vadd.f32 0.0, %v5980
        %v5982 = vpop.f32.mrb[0].mxu0
        %v5983 = vpop.f32.mrb[0].mxu0
        %v5984 = vadd.f32 0.0, %v5983
        %v5985 = vpop.f32.mrb[0].mxu0
        %5986 = vmatprep.mubr.bf16.mxu0 0
        %5987 = vmatmul.mubr.bf16.gmra.mrb[0].mxu0 %v5590
        %v5988 = vpop.f32.mrb[0].mxu0
        %v5989 = vadd.f32 0.0, %v5988
        %v5990 = vpop.f32.mrb[0].mxu0
        %v5991 = vpop.f32.mrb[0].mxu0
        %v5992 = vadd.f32 0.0, %v5991
        %v5993 = vpop.f32.mrb[0].mxu0
        %5994 = vmatprep.mubr.bf16.mxu0 0
        %5995 = vmatmul.mubr.bf16.gmra.mrb[0].mxu0 %v5593
        %v5996 = vpop.f32.mrb[0].mxu0
        %v5997 = vadd.f32 0.0, %v5996
        %v5998 = vpop.f32.mrb[0].mxu0
        %v5999 = vpop.f32.mrb[0].mxu0
        %v6000 = vadd.f32 0.0, %v5999
        %v6001 = vpop.f32.mrb[0].mxu0
        %6002 = vmatprep.mubr.bf16.mxu0 0
        %6003 = vmatmul.mubr.bf16.gmra.mrb[0].mxu0 %v5596
        %v6004 = vpop.f32.mrb[0].mxu0
        %v6005 = vadd.f32 0.0, %v6004
        %v6006 = vpop.f32.mrb[0].mxu0
        %v6007 = vpop.f32.mrb[0].mxu0
        %v6008 = vadd.f32 0.0, %v6007
        %v6009 = vpop.f32.mrb[0].mxu0
        %6010 = vmatprep.mubr.bf16.mxu0 0
        %6011 = vmatmul.mubr.bf16.gmra.mrb[0].mxu0 %v5599
        %v6012 = vpop.f32.mrb[0].mxu0
        %v6013 = vadd.f32 0.0, %v6012
        %v6014 = vpop.f32.mrb[0].mxu0
        %v6015 = vpop.f32.mrb[0].mxu0
        %v6016 = vadd.f32 0.0, %v6015
        %v6017 = vpop.f32.mrb[0].mxu0
        %6018 = vmatprep.mubr.bf16.mxu0 0
        %6019 = vmatmul.mubr.bf16.gmra.mrb[0].mxu0 %v5602
        %v6020 = vpop.f32.mrb[0].mxu0
        %v6021 = vadd.f32 0.0, %v6020
        %v6022 = vpop.f32.mrb[0].mxu0
        %v6023 = vpop.f32.mrb[0].mxu0
        %v6024 = vadd.f32 0.0, %v6023
        %v6025 = vpop.f32.mrb[0].mxu0
        %6026 = vmatprep.mubr.bf16.mxu0 0
        %6027 = vmatmul.mubr.bf16.gmra.mrb[0].mxu0 %v5605
        %v6028 = vpop.f32.mrb[0].mxu0
        %v6029 = vadd.f32 0.0, %v6028
        %v6030 = vpop.f32.mrb[0].mxu0
        %v6031 = vpop.f32.mrb[0].mxu0
        %v6032 = vadd.f32 0.0, %v6031
        %v6033 = vpop.f32.mrb[0].mxu0
        %6034 = vmatprep.mubr.bf16.mxu0 0
        %6035 = vmatmul.mubr.bf16.gmra.mrb[0].mxu0 %v5608
        %v6036 = vpop.f32.mrb[0].mxu0
        %v6037 = vadd.f32 0.0, %v6036
        %v6038 = vpop.f32.mrb[0].mxu0
        %v6039 = vpop.f32.mrb[0].mxu0
        %v6040 = vadd.f32 0.0, %v6039
        %v6041 = vpop.f32.mrb[0].mxu0
        %6042 = vmatprep.mubr.bf16.mxu0 0
        %6043 = vmatmul.mubr.bf16.gmra.mrb[0].mxu0 %v5611
        %v6044 = vpop.f32.mrb[0].mxu0
        %v6045 = vadd.f32 0.0, %v6044
        %v6046 = vpop.f32.mrb[0].mxu0
        %v6047 = vpop.f32.mrb[0].mxu0
        %v6048 = vadd.f32 0.0, %v6047
        %v6049 = vpop.f32.mrb[0].mxu0
        %6050 = vmatprep.mubr.bf16.mxu0 0
        %6051 = vmatmul.mubr.bf16.gmra.mrb[0].mxu0 %v5614
        %v6052 = vpop.f32.mrb[0].mxu0
        %v6053 = vadd.f32 0.0, %v6052
        %v6054 = vpop.f32.mrb[0].mxu0
        %v6055 = vpop.f32.mrb[0].mxu0
        %v6056 = vadd.f32 0.0, %v6055
        %v6057 = vpop.f32.mrb[0].mxu0
        %6058 = vmatprep.mubr.bf16.mxu0 0
        %6059 = vmatmul.mubr.bf16.gmra.mrb[0].mxu0 %v5617
        %v6060 = vpop.f32.mrb[0].mxu0
        %v6061 = vadd.f32 0.0, %v6060
        %v6062 = vpop.f32.mrb[0].mxu0
        %v6063 = vpop.f32.mrb[0].mxu0
        %v6064 = vadd.f32 0.0, %v6063
        %v6065 = vpop.f32.mrb[0].mxu0
        %6066 = vmatprep.mubr.bf16.mxu0 0
        %6067 = vmatmul.mubr.bf16.gmra.mrb[0].mxu0 %v5620
        %v6068 = vpop.f32.mrb[0].mxu0
        %v6069 = vadd.f32 0.0, %v6068
        %v6070 = vpop.f32.mrb[0].mxu0
        %v6071 = vpop.f32.mrb[0].mxu0
        %v6072 = vadd.f32 0.0, %v6071
        %v6073 = vpop.f32.mrb[0].mxu0
        %6074 = vmatprep.mubr.bf16.mxu0 0
        %6075 = vmatmul.mubr.bf16.gmra.mrb[0].mxu0 %v5623
        %v6076 = vpop.f32.mrb[0].mxu0
        %v6077 = vadd.f32 0.0, %v6076
        %v6078 = vpop.f32.mrb[0].mxu0
        %v6079 = vpop.f32.mrb[0].mxu0
        %v6080 = vadd.f32 0.0, %v6079
        %v6081 = vpop.f32.mrb[0].mxu0
        %6082 = vmatprep.mubr.bf16.mxu0 0
        %6083 = vmatmul.mubr.bf16.gmra.mrb[0].mxu0 %v5626
        %v6084 = vpop.f32.mrb[0].mxu0
        %v6085 = vadd.f32 0.0, %v6084
        %v6086 = vpop.f32.mrb[0].mxu0
        %v6087 = vpop.f32.mrb[0].mxu0
        %v6088 = vadd.f32 0.0, %v6087
        %v6089 = vpop.f32.mrb[0].mxu0
        %6090 = vmatprep.mubr.bf16.mxu0 0
        %6091 = vmatmul.mubr.bf16.gmra.mrb[0].mxu0 %v5629
        %v6092 = vpop.f32.mrb[0].mxu0
        %v6093 = vadd.f32 0.0, %v6092
        %v6094 = vpop.f32.mrb[0].mxu0
        %v6095 = vpop.f32.mrb[0].mxu0
        %v6096 = vadd.f32 0.0, %v6095
        %v6097 = vpop.f32.mrb[0].mxu0
        %6098 = vmatprep.mubr.bf16.mxu0 0
        %6099 = vmatmul.mubr.bf16.gmra.mrb[0].mxu0 %v5632
        %v6100 = vpop.f32.mrb[0].mxu0
        %v6101 = vadd.f32 0.0, %v6100
        %v6102 = vpop.f32.mrb[0].mxu0
        %v6103 = vpop.f32.mrb[0].mxu0
        %v6104 = vadd.f32 0.0, %v6103
        %v6105 = vpop.f32.mrb[0].mxu0
        %6106 = vmatprep.mubr.bf16.mxu0 0
        %6107 = vmatmul.mubr.bf16.gmra.mrb[0].mxu0 %v5635
        %v6108 = vpop.f32.mrb[0].mxu0
        %v6109 = vadd.f32 0.0, %v6108
        %v6110 = vpop.f32.mrb[0].mxu0
        %v6111 = vpop.f32.mrb[0].mxu0
        %v6112 = vadd.f32 0.0, %v6111
        %v6113 = vpop.f32.mrb[0].mxu0
        %6114 = vmatprep.mubr.bf16.mxu0 0
        %6115 = vmatmul.mubr.bf16.gmra.mrb[0].mxu0 %v5638
        %v6116 = vpop.f32.mrb[0].mxu0
        %v6117 = vadd.f32 0.0, %v6116
        %v6118 = vpop.f32.mrb[0].mxu0
        %v6119 = vpop.f32.mrb[0].mxu0
        %v6120 = vadd.f32 0.0, %v6119
        %v6121 = vpop.f32.mrb[0].mxu0
        %6122 = vmatprep.mubr.bf16.mxu0 0
        %6123 = vmatmul.mubr.bf16.gmra.mrb[0].mxu0 %v5641
        %v6124 = vpop.f32.mrb[0].mxu0
        %v6125 = vadd.f32 0.0, %v6124
        %v6126 = vpop.f32.mrb[0].mxu0
        %v6127 = vpop.f32.mrb[0].mxu0
        %v6128 = vadd.f32 0.0, %v6127
        %v6129 = vpop.f32.mrb[0].mxu0
        %6130 = vmatprep.mubr.bf16.mxu0 0
        %6131 = vmatmul.mubr.bf16.gmra.mrb[0].mxu0 %v5644
        %v6132 = vpop.f32.mrb[0].mxu0
        %v6133 = vadd.f32 0.0, %v6132
        %v6134 = vpop.f32.mrb[0].mxu0
        %v6135 = vpop.f32.mrb[0].mxu0
        %v6136 = vadd.f32 0.0, %v6135
        %v6137 = vpop.f32.mrb[0].mxu0
        %6138 = vmatprep.mubr.bf16.mxu0 0
        %6139 = vmatmul.mubr.bf16.gmra.mrb[0].mxu0 %v5647
        %v6140 = vpop.f32.mrb[0].mxu0
        %v6141 = vadd.f32 0.0, %v6140
        %v6142 = vpop.f32.mrb[0].mxu0
        %v6143 = vpop.f32.mrb[0].mxu0
        %v6144 = vadd.f32 0.0, %v6143
        %v6145 = vpop.f32.mrb[0].mxu0
        %6146 = vmatprep.mubr.bf16.mxu0 0
        %6147 = vmatmul.mubr.bf16.gmra.mrb[0].mxu0 %v5650
        %v6148 = vpop.f32.mrb[0].mxu0
        %v6149 = vadd.f32 0.0, %v6148
        %v6150 = vpop.f32.mrb[0].mxu0
        %v6151 = vpop.f32.mrb[0].mxu0
        %v6152 = vadd.f32 0.0, %v6151
        %v6153 = vpop.f32.mrb[0].mxu0
        %6154 = vmatprep.mubr.bf16.mxu0 0
        %6155 = vmatmul.mubr.bf16.gmra.mrb[0].mxu0 %v5653
        %v6156 = vpop.f32.mrb[0].mxu0
        %v6157 = vadd.f32 0.0, %v6156
        %v6158 = vpop.f32.mrb[0].mxu0
        %v6159 = vpop.f32.mrb[0].mxu0
        %v6160 = vadd.f32 0.0, %v6159
        %v6161 = vpop.f32.mrb[0].mxu0
        %6162 = vmatprep.mubr.bf16.mxu0 0
        %6163 = vmatmul.mubr.bf16.gmra.mrb[0].mxu0 %v5656
        %v6164 = vpop.f32.mrb[0].mxu0
        %v6165 = vadd.f32 0.0, %v6164
        %v6166 = vpop.f32.mrb[0].mxu0
        %v6167 = vpop.f32.mrb[0].mxu0
        %v6168 = vadd.f32 0.0, %v6167
        %v6169 = vpop.f32.mrb[0].mxu0
        %6170 = vmatprep.mubr.bf16.mxu0 0
        %6171 = vmatmul.mubr.bf16.gmra.mrb[0].mxu0 %v5659
        %v6172 = vpop.f32.mrb[0].mxu0
        %v6173 = vadd.f32 0.0, %v6172
        %v6174 = vpop.f32.mrb[0].mxu0
        %v6175 = vpop.f32.mrb[0].mxu0
        %v6176 = vadd.f32 0.0, %v6175
        %v6177 = vpop.f32.mrb[0].mxu0
        %6178 = vmatprep.mubr.bf16.mxu0 0
        %6179 = vmatmul.mubr.bf16.gmra.mrb[0].mxu0 %v5662
        %v6180 = vpop.f32.mrb[0].mxu0
        %v6181 = vadd.f32 0.0, %v6180
        %v6182 = vpop.f32.mrb[0].mxu0
        %v6183 = vpop.f32.mrb[0].mxu0
        %v6184 = vadd.f32 0.0, %v6183
        %v6185 = vpop.f32.mrb[0].mxu0
        %6186 = vmatprep.mubr.bf16.mxu0 0
        %6187 = vmatmul.mubr.bf16.gmra.mrb[0].mxu0 %v5665
        %v6188 = vpop.f32.mrb[0].mxu0
        %v6189 = vadd.f32 0.0, %v6188
        %v6190 = vpop.f32.mrb[0].mxu0
        %v6191 = vpop.f32.mrb[0].mxu0
        %v6192 = vadd.f32 0.0, %v6191
        %v6193 = vpop.f32.mrb[0].mxu0
        %6194 = vmatprep.mubr.bf16.mxu0 0
        %6195 = vmatmul.mubr.bf16.gmra.mrb[0].mxu0 %v5668
        %v6196 = vpop.f32.mrb[0].mxu0
        %v6197 = vadd.f32 0.0, %v6196
        %v6198 = vpop.f32.mrb[0].mxu0
        %v6199 = vpop.f32.mrb[0].mxu0
        %v6200 = vadd.f32 0.0, %v6199
        %v6201 = vpop.f32.mrb[0].mxu0
        %6202 = vmatprep.mubr.bf16.mxu0 0
        %6203 = vmatmul.mubr.bf16.gmra.mrb[0].mxu0 %v5671
        %v6204 = vpop.f32.mrb[0].mxu0
        %v6205 = vadd.f32 0.0, %v6204
        %v6206 = vpop.f32.mrb[0].mxu0
        %v6207 = vpop.f32.mrb[0].mxu0
        %v6208 = vadd.f32 0.0, %v6207
        %v6209 = vpop.f32.mrb[0].mxu0
        %6210 = vmatprep.mubr.bf16.mxu0 0
        %6211 = vmatmul.mubr.bf16.gmra.mrb[0].mxu0 %v5674
        %v6212 = vpop.f32.mrb[0].mxu0
        %v6213 = vadd.f32 0.0, %v6212
        %v6214 = vpop.f32.mrb[0].mxu0
        %v6215 = vpop.f32.mrb[0].mxu0
        %v6216 = vadd.f32 0.0, %v6215
        %v6217 = vpop.f32.mrb[0].mxu0
        %6218 = vmatprep.mubr.bf16.mxu0 0
        %6219 = vmatmul.mubr.bf16.gmra.mrb[0].mxu0 %v5677
        %v6220 = vpop.f32.mrb[0].mxu0
        %v6221 = vadd.f32 0.0, %v6220
        %v6222 = vpop.f32.mrb[0].mxu0
        %v6223 = vpop.f32.mrb[0].mxu0
        %v6224 = vadd.f32 0.0, %v6223
        %v6225 = vpop.f32.mrb[0].mxu0
        %6226 = vdwg.mxu0
        %v6227 = vadd.f32 %v5165, %v5717
        %v6228 = vadd.f32 %v5166, %v5720
        %v6229 = vadd.f32 %v5167, %v5725
        %v6230 = vadd.f32 %v5168, %v5728
        %v6231 = vadd.f32 %v5169, %v5733
        %v6232 = vadd.f32 %v5170, %v5736
        %v6233 = vadd.f32 %v5171, %v5741
        %v6234 = vadd.f32 %v5172, %v5744
        %v6235 = vadd.f32 %v5173, %v5749
        %v6236 = vadd.f32 %v5174, %v5752
        %v6237 = vadd.f32 %v5175, %v5757
        %v6238 = vadd.f32 %v5176, %v5760
        %v6239 = vadd.f32 %v5177, %v5765
        %v6240 = vadd.f32 %v5178, %v5768
        %v6241 = vadd.f32 %v5179, %v5773
        %v6242 = vadd.f32 %v5180, %v5776
        %v6243 = vadd.f32 %v5181, %v5781
        %v6244 = vadd.f32 %v5182, %v5784
        %v6245 = vadd.f32 %v5183, %v5789
        %v6246 = vadd.f32 %v5184, %v5792
        %v6247 = vadd.f32 %v5185, %v5797
        %v6248 = vadd.f32 %v5186, %v5800
        %v6249 = vadd.f32 %v5187, %v5805
        %v6250 = vadd.f32 %v5188, %v5808
        %v6251 = vadd.f32 %v5189, %v5813
        %v6252 = vadd.f32 %v5190, %v5816
        %v6253 = vadd.f32 %v5191, %v5821
        %v6254 = vadd.f32 %v5192, %v5824
        %v6255 = vadd.f32 %v5193, %v5829
        %v6256 = vadd.f32 %v5194, %v5832
        %v6257 = vadd.f32 %v5195, %v5837
        %v6258 = vadd.f32 %v5196, %v5840
        %v6259 = vadd.f32 %v5197, %v5845
        %v6260 = vadd.f32 %v5198, %v5848
        %v6261 = vadd.f32 %v5199, %v5853
        %v6262 = vadd.f32 %v5200, %v5856
        %v6263 = vadd.f32 %v5201, %v5861
        %v6264 = vadd.f32 %v5202, %v5864
        %v6265 = vadd.f32 %v5203, %v5869
        %v6266 = vadd.f32 %v5204, %v5872
        %v6267 = vadd.f32 %v5205, %v5877
        %v6268 = vadd.f32 %v5206, %v5880
        %v6269 = vadd.f32 %v5207, %v5885
        %v6270 = vadd.f32 %v5208, %v5888
        %v6271 = vadd.f32 %v5209, %v5893
        %v6272 = vadd.f32 %v5210, %v5896
        %v6273 = vadd.f32 %v5211, %v5901
        %v6274 = vadd.f32 %v5212, %v5904
        %v6275 = vadd.f32 %v5213, %v5909
        %v6276 = vadd.f32 %v5214, %v5912
        %v6277 = vadd.f32 %v5215, %v5917
        %v6278 = vadd.f32 %v5216, %v5920
        %v6279 = vadd.f32 %v5217, %v5925
        %v6280 = vadd.f32 %v5218, %v5928
        %v6281 = vadd.f32 %v5219, %v5933
        %v6282 = vadd.f32 %v5220, %v5936
        %v6283 = vadd.f32 %v5221, %v5941
        %v6284 = vadd.f32 %v5222, %v5944
        %v6285 = vadd.f32 %v5223, %v5949
        %v6286 = vadd.f32 %v5224, %v5952
        %v6287 = vadd.f32 %v5225, %v5957
        %v6288 = vadd.f32 %v5226, %v5960
        %v6289 = vadd.f32 %v5227, %v5965
        %v6290 = vadd.f32 %v5228, %v5968
        %v6291 = vadd.f32 %v5229, %v5973
        %v6292 = vadd.f32 %v5230, %v5976
        %v6293 = vadd.f32 %v5231, %v5981
        %v6294 = vadd.f32 %v5232, %v5984
        %v6295 = vadd.f32 %v5233, %v5989
        %v6296 = vadd.f32 %v5234, %v5992
        %v6297 = vadd.f32 %v5235, %v5997
        %v6298 = vadd.f32 %v5236, %v6000
        %v6299 = vadd.f32 %v5237, %v6005
        %v6300 = vadd.f32 %v5238, %v6008
        %v6301 = vadd.f32 %v5239, %v6013
        %v6302 = vadd.f32 %v5240, %v6016
        %v6303 = vadd.f32 %v5241, %v6021
        %v6304 = vadd.f32 %v5242, %v6024
        %v6305 = vadd.f32 %v5243, %v6029
        %v6306 = vadd.f32 %v5244, %v6032
        %v6307 = vadd.f32 %v5245, %v6037
        %v6308 = vadd.f32 %v5246, %v6040
        %v6309 = vadd.f32 %v5247, %v6045
        %v6310 = vadd.f32 %v5248, %v6048
        %v6311 = vadd.f32 %v5249, %v6053
        %v6312 = vadd.f32 %v5250, %v6056
        %v6313 = vadd.f32 %v5251, %v6061
        %v6314 = vadd.f32 %v5252, %v6064
        %v6315 = vadd.f32 %v5253, %v6069
        %v6316 = vadd.f32 %v5254, %v6072
        %v6317 = vadd.f32 %v5255, %v6077
        %v6318 = vadd.f32 %v5256, %v6080
        %v6319 = vadd.f32 %v5257, %v6085
        %v6320 = vadd.f32 %v5258, %v6088
        %v6321 = vadd.f32 %v5259, %v6093
        %v6322 = vadd.f32 %v5260, %v6096
        %v6323 = vadd.f32 %v5261, %v6101
        %v6324 = vadd.f32 %v5262, %v6104
        %v6325 = vadd.f32 %v5263, %v6109
        %v6326 = vadd.f32 %v5264, %v6112
        %v6327 = vadd.f32 %v5265, %v6117
        %v6328 = vadd.f32 %v5266, %v6120
        %v6329 = vadd.f32 %v5267, %v6125
        %v6330 = vadd.f32 %v5268, %v6128
        %v6331 = vadd.f32 %v5269, %v6133
        %v6332 = vadd.f32 %v5270, %v6136
        %v6333 = vadd.f32 %v5271, %v6141
        %v6334 = vadd.f32 %v5272, %v6144
        %v6335 = vadd.f32 %v5273, %v6149
        %v6336 = vadd.f32 %v5274, %v6152
        %v6337 = vadd.f32 %v5275, %v6157
        %v6338 = vadd.f32 %v5276, %v6160
        %v6339 = vadd.f32 %v5277, %v6165
        %v6340 = vadd.f32 %v5278, %v6168
        %v6341 = vadd.f32 %v5279, %v6173
        %v6342 = vadd.f32 %v5280, %v6176
        %v6343 = vadd.f32 %v5281, %v6181
        %v6344 = vadd.f32 %v5282, %v6184
        %v6345 = vadd.f32 %v5283, %v6189
        %v6346 = vadd.f32 %v5284, %v6192
        %v6347 = vadd.f32 %v5285, %v6197
        %v6348 = vadd.f32 %v5286, %v6200
        %v6349 = vadd.f32 %v5287, %v6205
        %v6350 = vadd.f32 %v5288, %v6208
        %v6351 = vadd.f32 %v5289, %v6213
        %v6352 = vadd.f32 %v5290, %v6216
        %v6353 = vadd.f32 %v5291, %v6221
        %v6354 = vadd.f32 %v5292, %v6224
        %s6355 = scalar_lea.vmem %s228, 80
        %v6356 = vld [vmem:[%s6355] sm:$0xff]
        %v6357 = vld [vmem:[%s6355 + $0x8] sm:$0xff]
        %v6358 = vld [vmem:[%s6355 + $0x10] sm:$0xff]
        %v6359 = vld [vmem:[%s6355 + $0x18] sm:$0xff]
        %v6360 = vld [vmem:[%s6355 + $0x28] sm:$0xff]
        %v6361 = vld [vmem:[%s6355 + $0x30] sm:$0xff]
        %v6362 = vld [vmem:[%s6355 + $0x38] sm:$0xff]
        %v6363 = vld [vmem:[%s6355 + $0x40] sm:$0xff]
        %v6364 = vld [vmem:[%s6355 + $0x50] sm:$0xff]
        %v6365 = vld [vmem:[%s6355 + $0x58] sm:$0xff]
        %v6366 = vld [vmem:[%s6355 + $0x60] sm:$0xff]
        %v6367 = vld [vmem:[%s6355 + $0x68] sm:$0xff]
        %v6368 = vld [vmem:[%s6355 + $0x78] sm:$0xff]
        %v6369 = vld [vmem:[%s6355 + $0x80] sm:$0xff]
        %v6370 = vld [vmem:[%s6355 + $0x88] sm:$0xff]
        %v6371 = vld [vmem:[%s6355 + $0x90] sm:$0xff]
        %v6372 = vld [vmem:[%s6355 + $0xa0] sm:$0xff]
        %v6373 = vld [vmem:[%s6355 + $0xa8] sm:$0xff]
        %v6374 = vld [vmem:[%s6355 + $0xb0] sm:$0xff]
        %v6375 = vld [vmem:[%s6355 + $0xb8] sm:$0xff]
        %v6376 = vld [vmem:[%s6355 + $0xc8] sm:$0xff]
        %v6377 = vld [vmem:[%s6355 + $0xd0] sm:$0xff]
        %v6378 = vld [vmem:[%s6355 + $0xd8] sm:$0xff]
        %v6379 = vld [vmem:[%s6355 + $0xe0] sm:$0xff]
        %v6380 = vld [vmem:[%s6355 + $0xf0] sm:$0xff]
        %v6381 = vld [vmem:[%s6355 + $0xf8] sm:$0xff]
        %v6382 = vld [vmem:[%s6355 + $0x100] sm:$0xff]
        %v6383 = vld [vmem:[%s6355 + $0x108] sm:$0xff]
        %v6384 = vld [vmem:[%s6355 + $0x118] sm:$0xff]
        %v6385 = vld [vmem:[%s6355 + $0x120] sm:$0xff]
        %v6386 = vld [vmem:[%s6355 + $0x128] sm:$0xff]
        %v6387 = vld [vmem:[%s6355 + $0x130] sm:$0xff]
        %v6388 = vld [vmem:[%s6355 + $0x140] sm:$0xff]
        %v6389 = vld [vmem:[%s6355 + $0x148] sm:$0xff]
        %v6390 = vld [vmem:[%s6355 + $0x150] sm:$0xff]
        %v6391 = vld [vmem:[%s6355 + $0x158] sm:$0xff]
        %v6392 = vld [vmem:[%s6355 + $0x168] sm:$0xff]
        %v6393 = vld [vmem:[%s6355 + $0x170] sm:$0xff]
        %v6394 = vld [vmem:[%s6355 + $0x178] sm:$0xff]
        %v6395 = vld [vmem:[%s6355 + $0x180] sm:$0xff]
        %v6396 = vld [vmem:[%s6355 + $0x190] sm:$0xff]
        %v6397 = vld [vmem:[%s6355 + $0x198] sm:$0xff]
        %v6398 = vld [vmem:[%s6355 + $0x1a0] sm:$0xff]
        %v6399 = vld [vmem:[%s6355 + $0x1a8] sm:$0xff]
        %v6400 = vld [vmem:[%s6355 + $0x1b8] sm:$0xff]
        %v6401 = vld [vmem:[%s6355 + $0x1c0] sm:$0xff]
        %v6402 = vld [vmem:[%s6355 + $0x1c8] sm:$0xff]
        %v6403 = vld [vmem:[%s6355 + $0x1d0] sm:$0xff]
        %v6404 = vld [vmem:[%s6355 + $0x1e0] sm:$0xff]
        %v6405 = vld [vmem:[%s6355 + $0x1e8] sm:$0xff]
        %v6406 = vld [vmem:[%s6355 + $0x1f0] sm:$0xff]
        %v6407 = vld [vmem:[%s6355 + $0x1f8] sm:$0xff]
        %v6408 = vld [vmem:[%s6355 + $0x208] sm:$0xff]
        %v6409 = vld [vmem:[%s6355 + $0x210] sm:$0xff]
        %v6410 = vld [vmem:[%s6355 + $0x218] sm:$0xff]
        %v6411 = vld [vmem:[%s6355 + $0x220] sm:$0xff]
        %v6412 = vld [vmem:[%s6355 + $0x230] sm:$0xff]
        %v6413 = vld [vmem:[%s6355 + $0x238] sm:$0xff]
        %v6414 = vld [vmem:[%s6355 + $0x240] sm:$0xff]
        %v6415 = vld [vmem:[%s6355 + $0x248] sm:$0xff]
        %v6416 = vld [vmem:[%s6355 + $0x258] sm:$0xff]
        %v6417 = vld [vmem:[%s6355 + $0x260] sm:$0xff]
        %v6418 = vld [vmem:[%s6355 + $0x268] sm:$0xff]
        %v6419 = vld [vmem:[%s6355 + $0x270] sm:$0xff]
        %v6420 = vld [vmem:[%s6355 + $0x280] sm:$0xff]
        %v6421 = vld [vmem:[%s6355 + $0x288] sm:$0xff]
        %v6422 = vld [vmem:[%s6355 + $0x290] sm:$0xff]
        %v6423 = vld [vmem:[%s6355 + $0x298] sm:$0xff]
        %v6424 = vld [vmem:[%s6355 + $0x2a8] sm:$0xff]
        %v6425 = vld [vmem:[%s6355 + $0x2b0] sm:$0xff]
        %v6426 = vld [vmem:[%s6355 + $0x2b8] sm:$0xff]
        %v6427 = vld [vmem:[%s6355 + $0x2c0] sm:$0xff]
        %v6428 = vld [vmem:[%s6355 + $0x2d0] sm:$0xff]
        %v6429 = vld [vmem:[%s6355 + $0x2d8] sm:$0xff]
        %v6430 = vld [vmem:[%s6355 + $0x2e0] sm:$0xff]
        %v6431 = vld [vmem:[%s6355 + $0x2e8] sm:$0xff]
        %v6432 = vld [vmem:[%s6355 + $0x2f8] sm:$0xff]
        %v6433 = vld [vmem:[%s6355 + $0x300] sm:$0xff]
        %v6434 = vld [vmem:[%s6355 + $0x308] sm:$0xff]
        %v6435 = vld [vmem:[%s6355 + $0x310] sm:$0xff]
        %v6436 = vld [vmem:[%s6355 + $0x320] sm:$0xff]
        %v6437 = vld [vmem:[%s6355 + $0x328] sm:$0xff]
        %v6438 = vld [vmem:[%s6355 + $0x330] sm:$0xff]
        %v6439 = vld [vmem:[%s6355 + $0x338] sm:$0xff]
        %v6440 = vld [vmem:[%s6355 + $0x348] sm:$0xff]
        %v6441 = vld [vmem:[%s6355 + $0x350] sm:$0xff]
        %v6442 = vld [vmem:[%s6355 + $0x358] sm:$0xff]
        %v6443 = vld [vmem:[%s6355 + $0x360] sm:$0xff]
        %v6444 = vld [vmem:[%s6355 + $0x370] sm:$0xff]
        %v6445 = vld [vmem:[%s6355 + $0x378] sm:$0xff]
        %v6446 = vld [vmem:[%s6355 + $0x380] sm:$0xff]
        %v6447 = vld [vmem:[%s6355 + $0x388] sm:$0xff]
        %v6448 = vld [vmem:[%s6355 + $0x398] sm:$0xff]
        %v6449 = vld [vmem:[%s6355 + $0x3a0] sm:$0xff]
        %v6450 = vld [vmem:[%s6355 + $0x3a8] sm:$0xff]
        %v6451 = vld [vmem:[%s6355 + $0x3b0] sm:$0xff]
        %v6452 = vld [vmem:[%s6355 + $0x3c0] sm:$0xff]
        %v6453 = vld [vmem:[%s6355 + $0x3c8] sm:$0xff]
        %v6454 = vld [vmem:[%s6355 + $0x3d0] sm:$0xff]
        %v6455 = vld [vmem:[%s6355 + $0x3d8] sm:$0xff]
        %v6456 = vld [vmem:[%s6355 + $0x3e8] sm:$0xff]
        %v6457 = vld [vmem:[%s6355 + $0x3f0] sm:$0xff]
        %v6458 = vld [vmem:[%s6355 + $0x3f8] sm:$0xff]
        %v6459 = vld [vmem:[%s6355 + $0x400] sm:$0xff]
        %v6460 = vld [vmem:[%s6355 + $0x410] sm:$0xff]
        %v6461 = vld [vmem:[%s6355 + $0x418] sm:$0xff]
        %v6462 = vld [vmem:[%s6355 + $0x420] sm:$0xff]
        %v6463 = vld [vmem:[%s6355 + $0x428] sm:$0xff]
        %v6464 = vld [vmem:[%s6355 + $0x438] sm:$0xff]
        %v6465 = vld [vmem:[%s6355 + $0x440] sm:$0xff]
        %v6466 = vld [vmem:[%s6355 + $0x448] sm:$0xff]
        %v6467 = vld [vmem:[%s6355 + $0x450] sm:$0xff]
        %v6468 = vld [vmem:[%s6355 + $0x460] sm:$0xff]
        %v6469 = vld [vmem:[%s6355 + $0x468] sm:$0xff]
        %v6470 = vld [vmem:[%s6355 + $0x470] sm:$0xff]
        %v6471 = vld [vmem:[%s6355 + $0x478] sm:$0xff]
        %v6472 = vld [vmem:[%s6355 + $0x488] sm:$0xff]
        %v6473 = vld [vmem:[%s6355 + $0x490] sm:$0xff]
        %v6474 = vld [vmem:[%s6355 + $0x498] sm:$0xff]
        %v6475 = vld [vmem:[%s6355 + $0x4a0] sm:$0xff]
        %v6476 = vld [vmem:[%s6355 + $0x4b0] sm:$0xff]
        %v6477 = vld [vmem:[%s6355 + $0x4b8] sm:$0xff]
        %v6478 = vld [vmem:[%s6355 + $0x4c0] sm:$0xff]
        %v6479 = vld [vmem:[%s6355 + $0x4c8] sm:$0xff]
        %v6480 = vld [vmem:[%s6355 + $0x4d8] sm:$0xff]
        %v6481 = vld [vmem:[%s6355 + $0x4e0] sm:$0xff]
        %v6482 = vld [vmem:[%s6355 + $0x4e8] sm:$0xff]
        %v6483 = vld [vmem:[%s6355 + $0x4f0] sm:$0xff]
        %v6484 = vpack.c.bf16 %v6357, %v6356
        %v6485 = vpack.c.bf16 %v6359, %v6358
        %v6486 = vpack.c.bf16 %v6361, %v6360
        %v6487 = vpack.c.bf16 %v6363, %v6362
        %v6488 = vpack.c.bf16 %v6365, %v6364
        %v6489 = vpack.c.bf16 %v6367, %v6366
        %v6490 = vpack.c.bf16 %v6369, %v6368
        %v6491 = vpack.c.bf16 %v6371, %v6370
        %v6492 = vpack.c.bf16 %v6373, %v6372
        %v6493 = vpack.c.bf16 %v6375, %v6374
        %v6494 = vpack.c.bf16 %v6377, %v6376
        %v6495 = vpack.c.bf16 %v6379, %v6378
        %v6496 = vpack.c.bf16 %v6381, %v6380
        %v6497 = vpack.c.bf16 %v6383, %v6382
        %v6498 = vpack.c.bf16 %v6385, %v6384
        %v6499 = vpack.c.bf16 %v6387, %v6386
        %v6500 = vpack.c.bf16 %v6389, %v6388
        %v6501 = vpack.c.bf16 %v6391, %v6390
        %v6502 = vpack.c.bf16 %v6393, %v6392
        %v6503 = vpack.c.bf16 %v6395, %v6394
        %v6504 = vpack.c.bf16 %v6397, %v6396
        %v6505 = vpack.c.bf16 %v6399, %v6398
        %v6506 = vpack.c.bf16 %v6401, %v6400
        %v6507 = vpack.c.bf16 %v6403, %v6402
        %v6508 = vpack.c.bf16 %v6405, %v6404
        %v6509 = vpack.c.bf16 %v6407, %v6406
        %v6510 = vpack.c.bf16 %v6409, %v6408
        %v6511 = vpack.c.bf16 %v6411, %v6410
        %v6512 = vpack.c.bf16 %v6413, %v6412
        %v6513 = vpack.c.bf16 %v6415, %v6414
        %v6514 = vpack.c.bf16 %v6417, %v6416
        %v6515 = vpack.c.bf16 %v6419, %v6418
        %v6516 = vpack.c.bf16 %v6421, %v6420
        %v6517 = vpack.c.bf16 %v6423, %v6422
        %v6518 = vpack.c.bf16 %v6425, %v6424
        %v6519 = vpack.c.bf16 %v6427, %v6426
        %v6520 = vpack.c.bf16 %v6429, %v6428
        %v6521 = vpack.c.bf16 %v6431, %v6430
        %v6522 = vpack.c.bf16 %v6433, %v6432
        %v6523 = vpack.c.bf16 %v6435, %v6434
        %v6524 = vpack.c.bf16 %v6437, %v6436
        %v6525 = vpack.c.bf16 %v6439, %v6438
        %v6526 = vpack.c.bf16 %v6441, %v6440
        %v6527 = vpack.c.bf16 %v6443, %v6442
        %v6528 = vpack.c.bf16 %v6445, %v6444
        %v6529 = vpack.c.bf16 %v6447, %v6446
        %v6530 = vpack.c.bf16 %v6449, %v6448
        %v6531 = vpack.c.bf16 %v6451, %v6450
        %v6532 = vpack.c.bf16 %v6453, %v6452
        %v6533 = vpack.c.bf16 %v6455, %v6454
        %v6534 = vpack.c.bf16 %v6457, %v6456
        %v6535 = vpack.c.bf16 %v6459, %v6458
        %v6536 = vpack.c.bf16 %v6461, %v6460
        %v6537 = vpack.c.bf16 %v6463, %v6462
        %v6538 = vpack.c.bf16 %v6465, %v6464
        %v6539 = vpack.c.bf16 %v6467, %v6466
        %v6540 = vpack.c.bf16 %v6469, %v6468
        %v6541 = vpack.c.bf16 %v6471, %v6470
        %v6542 = vpack.c.bf16 %v6473, %v6472
        %v6543 = vpack.c.bf16 %v6475, %v6474
        %v6544 = vpack.c.bf16 %v6477, %v6476
        %v6545 = vpack.c.bf16 %v6479, %v6478
        %v6546 = vpack.c.bf16 %v6481, %v6480
        %v6547 = vpack.c.bf16 %v6483, %v6482
        %s6548 = scalar_lea.vmem %s232, 12
        %v6549 = vld [vmem:[%s6548] sm:$0x3]
        %v6551 = vsel %vm621, %v6484, 0
        %v6554 = vsel %vm621, %v6485, 0
        %v6557 = vsel %vm621, %v6486, 0
        %v6560 = vsel %vm621, %v6487, 0
        %v6563 = vsel %vm621, %v6488, 0
        %v6566 = vsel %vm621, %v6489, 0
        %v6569 = vsel %vm621, %v6490, 0
        %v6572 = vsel %vm621, %v6491, 0
        %v6575 = vsel %vm621, %v6492, 0
        %v6578 = vsel %vm621, %v6493, 0
        %v6581 = vsel %vm621, %v6494, 0
        %v6584 = vsel %vm621, %v6495, 0
        %v6587 = vsel %vm621, %v6496, 0
        %v6590 = vsel %vm621, %v6497, 0
        %v6593 = vsel %vm621, %v6498, 0
        %v6596 = vsel %vm621, %v6499, 0
        %v6599 = vsel %vm621, %v6500, 0
        %v6602 = vsel %vm621, %v6501, 0
        %v6605 = vsel %vm621, %v6502, 0
        %v6608 = vsel %vm621, %v6503, 0
        %v6611 = vsel %vm621, %v6504, 0
        %v6614 = vsel %vm621, %v6505, 0
        %v6617 = vsel %vm621, %v6506, 0
        %v6620 = vsel %vm621, %v6507, 0
        %v6623 = vsel %vm621, %v6508, 0
        %v6626 = vsel %vm621, %v6509, 0
        %v6629 = vsel %vm621, %v6510, 0
        %v6632 = vsel %vm621, %v6511, 0
        %v6635 = vsel %vm621, %v6512, 0
        %v6638 = vsel %vm621, %v6513, 0
        %v6641 = vsel %vm621, %v6514, 0
        %v6644 = vsel %vm621, %v6515, 0
        %v6647 = vsel %vm621, %v6516, 0
        %v6650 = vsel %vm621, %v6517, 0
        %v6653 = vsel %vm621, %v6518, 0
        %v6656 = vsel %vm621, %v6519, 0
        %v6659 = vsel %vm621, %v6520, 0
        %v6662 = vsel %vm621, %v6521, 0
        %v6665 = vsel %vm621, %v6522, 0
        %v6668 = vsel %vm621, %v6523, 0
        %v6671 = vsel %vm621, %v6524, 0
        %v6674 = vsel %vm621, %v6525, 0
        %v6677 = vsel %vm621, %v6526, 0
        %v6680 = vsel %vm621, %v6527, 0
        %v6683 = vsel %vm621, %v6528, 0
        %v6686 = vsel %vm621, %v6529, 0
        %v6689 = vsel %vm621, %v6530, 0
        %v6692 = vsel %vm621, %v6531, 0
        %v6695 = vsel %vm621, %v6532, 0
        %v6698 = vsel %vm621, %v6533, 0
        %v6701 = vsel %vm621, %v6534, 0
        %v6704 = vsel %vm621, %v6535, 0
        %v6707 = vsel %vm621, %v6536, 0
        %v6710 = vsel %vm621, %v6537, 0
        %v6713 = vsel %vm621, %v6538, 0
        %v6716 = vsel %vm621, %v6539, 0
        %v6719 = vsel %vm621, %v6540, 0
        %v6722 = vsel %vm621, %v6541, 0
        %v6725 = vsel %vm621, %v6542, 0
        %v6728 = vsel %vm621, %v6543, 0
        %v6731 = vsel %vm621, %v6544, 0
        %v6734 = vsel %vm621, %v6545, 0
        %v6737 = vsel %vm621, %v6546, 0
        %v6740 = vsel %vm621, %v6547, 0
        %v6743 = vand.u32 %v6549, %v817
        %6745 = vmatprep.subr.bf16.mxu0 0
        %6746 = vmatpush1.bf16.msra.mxu0 %v6743
        %6747 = vmatprep.subr.bf16.mxu0 0
        %6748 = vmatpush1.bf16.msra.mxu0 0
        %6749 = vmatprep.subr.bf16.mxu0 0
        %6750 = vmatpush1.bf16.msra.mxu0 0
        %6751 = vmatprep.subr.bf16.mxu0 0
        %6752 = vmatpush1.bf16.msra.mxu0 0
        %6753 = vmatprep.subr.bf16.mxu0 0
        %6754 = vmatpush1.bf16.msra.mxu0 0
        %6755 = vmatprep.subr.bf16.mxu0 0
        %6756 = vmatpush1.bf16.msra.mxu0 0
        %6757 = vmatprep.subr.bf16.mxu0 0
        %6758 = vmatpush1.bf16.msra.mxu0 0
        %6759 = vmatprep.subr.bf16.mxu0 0
        %6760 = vmatpush1.bf16.msra.mxu0 0
        %6761 = vmatprep.subr.bf16.mxu0 0
        %6762 = vmatpush1.bf16.msra.mxu0 0
        %6763 = vmatprep.subr.bf16.mxu0 0
        %6764 = vmatpush1.bf16.msra.mxu0 0
        %6765 = vmatprep.subr.bf16.mxu0 0
        %6766 = vmatpush1.bf16.msra.mxu0 0
        %6767 = vmatprep.subr.bf16.mxu0 0
        %6768 = vmatpush1.bf16.msra.mxu0 0
        %6769 = vmatprep.subr.bf16.mxu0 0
        %6770 = vmatpush1.bf16.msra.mxu0 0
        %6771 = vmatprep.subr.bf16.mxu0 0
        %6772 = vmatpush1.bf16.msra.mxu0 0
        %6773 = vmatprep.subr.bf16.mxu0 0
        %6774 = vmatpush1.bf16.msra.mxu0 0
        %6775 = vmatprep.subr.bf16.mxu0 0
        %6776 = vmatpush1.bf16.msra.mxu0 0
        %6777 = vmatprep.mubr.bf16.mxu0 0
        %6778 = vmatmul.mubr.bf16.gmra.mrb[0].mxu0 %v6551
        %v6779 = vpop.f32.mrb[0].mxu0
        %v6780 = vadd.f32 0.0, %v6779
        %v6781 = vpop.f32.mrb[0].mxu0
        %v6782 = vpop.f32.mrb[0].mxu0
        %v6783 = vadd.f32 0.0, %v6782
        %v6784 = vpop.f32.mrb[0].mxu0
        %6785 = vmatprep.mubr.bf16.mxu0 0
        %6786 = vmatmul.mubr.bf16.gmra.mrb[0].mxu0 %v6554
        %v6787 = vpop.f32.mrb[0].mxu0
        %v6788 = vadd.f32 0.0, %v6787
        %v6789 = vpop.f32.mrb[0].mxu0
        %v6790 = vpop.f32.mrb[0].mxu0
        %v6791 = vadd.f32 0.0, %v6790
        %v6792 = vpop.f32.mrb[0].mxu0
        %6793 = vmatprep.mubr.bf16.mxu0 0
        %6794 = vmatmul.mubr.bf16.gmra.mrb[0].mxu0 %v6557
        %v6795 = vpop.f32.mrb[0].mxu0
        %v6796 = vadd.f32 0.0, %v6795
        %v6797 = vpop.f32.mrb[0].mxu0
        %v6798 = vpop.f32.mrb[0].mxu0
        %v6799 = vadd.f32 0.0, %v6798
        %v6800 = vpop.f32.mrb[0].mxu0
        %6801 = vmatprep.mubr.bf16.mxu0 0
        %6802 = vmatmul.mubr.bf16.gmra.mrb[0].mxu0 %v6560
        %v6803 = vpop.f32.mrb[0].mxu0
        %v6804 = vadd.f32 0.0, %v6803
        %v6805 = vpop.f32.mrb[0].mxu0
        %v6806 = vpop.f32.mrb[0].mxu0
        %v6807 = vadd.f32 0.0, %v6806
        %v6808 = vpop.f32.mrb[0].mxu0
        %6809 = vmatprep.mubr.bf16.mxu0 0
        %6810 = vmatmul.mubr.bf16.gmra.mrb[0].mxu0 %v6563
        %v6811 = vpop.f32.mrb[0].mxu0
        %v6812 = vadd.f32 0.0, %v6811
        %v6813 = vpop.f32.mrb[0].mxu0
        %v6814 = vpop.f32.mrb[0].mxu0
        %v6815 = vadd.f32 0.0, %v6814
        %v6816 = vpop.f32.mrb[0].mxu0
        %6817 = vmatprep.mubr.bf16.mxu0 0
        %6818 = vmatmul.mubr.bf16.gmra.mrb[0].mxu0 %v6566
        %v6819 = vpop.f32.mrb[0].mxu0
        %v6820 = vadd.f32 0.0, %v6819
        %v6821 = vpop.f32.mrb[0].mxu0
        %v6822 = vpop.f32.mrb[0].mxu0
        %v6823 = vadd.f32 0.0, %v6822
        %v6824 = vpop.f32.mrb[0].mxu0
        %6825 = vmatprep.mubr.bf16.mxu0 0
        %6826 = vmatmul.mubr.bf16.gmra.mrb[0].mxu0 %v6569
        %v6827 = vpop.f32.mrb[0].mxu0
        %v6828 = vadd.f32 0.0, %v6827
        %v6829 = vpop.f32.mrb[0].mxu0
        %v6830 = vpop.f32.mrb[0].mxu0
        %v6831 = vadd.f32 0.0, %v6830
        %v6832 = vpop.f32.mrb[0].mxu0
        %6833 = vmatprep.mubr.bf16.mxu0 0
        %6834 = vmatmul.mubr.bf16.gmra.mrb[0].mxu0 %v6572
        %v6835 = vpop.f32.mrb[0].mxu0
        %v6836 = vadd.f32 0.0, %v6835
        %v6837 = vpop.f32.mrb[0].mxu0
        %v6838 = vpop.f32.mrb[0].mxu0
        %v6839 = vadd.f32 0.0, %v6838
        %v6840 = vpop.f32.mrb[0].mxu0
        %6841 = vmatprep.mubr.bf16.mxu0 0
        %6842 = vmatmul.mubr.bf16.gmra.mrb[0].mxu0 %v6575
        %v6843 = vpop.f32.mrb[0].mxu0
        %v6844 = vadd.f32 0.0, %v6843
        %v6845 = vpop.f32.mrb[0].mxu0
        %v6846 = vpop.f32.mrb[0].mxu0
        %v6847 = vadd.f32 0.0, %v6846
        %v6848 = vpop.f32.mrb[0].mxu0
        %6849 = vmatprep.mubr.bf16.mxu0 0
        %6850 = vmatmul.mubr.bf16.gmra.mrb[0].mxu0 %v6578
        %v6851 = vpop.f32.mrb[0].mxu0
        %v6852 = vadd.f32 0.0, %v6851
        %v6853 = vpop.f32.mrb[0].mxu0
        %v6854 = vpop.f32.mrb[0].mxu0
        %v6855 = vadd.f32 0.0, %v6854
        %v6856 = vpop.f32.mrb[0].mxu0
        %6857 = vmatprep.mubr.bf16.mxu0 0
        %6858 = vmatmul.mubr.bf16.gmra.mrb[0].mxu0 %v6581
        %v6859 = vpop.f32.mrb[0].mxu0
        %v6860 = vadd.f32 0.0, %v6859
        %v6861 = vpop.f32.mrb[0].mxu0
        %v6862 = vpop.f32.mrb[0].mxu0
        %v6863 = vadd.f32 0.0, %v6862
        %v6864 = vpop.f32.mrb[0].mxu0
        %6865 = vmatprep.mubr.bf16.mxu0 0
        %6866 = vmatmul.mubr.bf16.gmra.mrb[0].mxu0 %v6584
        %v6867 = vpop.f32.mrb[0].mxu0
        %v6868 = vadd.f32 0.0, %v6867
        %v6869 = vpop.f32.mrb[0].mxu0
        %v6870 = vpop.f32.mrb[0].mxu0
        %v6871 = vadd.f32 0.0, %v6870
        %v6872 = vpop.f32.mrb[0].mxu0
        %6873 = vmatprep.mubr.bf16.mxu0 0
        %6874 = vmatmul.mubr.bf16.gmra.mrb[0].mxu0 %v6587
        %v6875 = vpop.f32.mrb[0].mxu0
        %v6876 = vadd.f32 0.0, %v6875
        %v6877 = vpop.f32.mrb[0].mxu0
        %v6878 = vpop.f32.mrb[0].mxu0
        %v6879 = vadd.f32 0.0, %v6878
        %v6880 = vpop.f32.mrb[0].mxu0
        %6881 = vmatprep.mubr.bf16.mxu0 0
        %6882 = vmatmul.mubr.bf16.gmra.mrb[0].mxu0 %v6590
        %v6883 = vpop.f32.mrb[0].mxu0
        %v6884 = vadd.f32 0.0, %v6883
        %v6885 = vpop.f32.mrb[0].mxu0
        %v6886 = vpop.f32.mrb[0].mxu0
        %v6887 = vadd.f32 0.0, %v6886
        %v6888 = vpop.f32.mrb[0].mxu0
        %6889 = vmatprep.mubr.bf16.mxu0 0
        %6890 = vmatmul.mubr.bf16.gmra.mrb[0].mxu0 %v6593
        %v6891 = vpop.f32.mrb[0].mxu0
        %v6892 = vadd.f32 0.0, %v6891
        %v6893 = vpop.f32.mrb[0].mxu0
        %v6894 = vpop.f32.mrb[0].mxu0
        %v6895 = vadd.f32 0.0, %v6894
        %v6896 = vpop.f32.mrb[0].mxu0
        %6897 = vmatprep.mubr.bf16.mxu0 0
        %6898 = vmatmul.mubr.bf16.gmra.mrb[0].mxu0 %v6596
        %v6899 = vpop.f32.mrb[0].mxu0
        %v6900 = vadd.f32 0.0, %v6899
        %v6901 = vpop.f32.mrb[0].mxu0
        %v6902 = vpop.f32.mrb[0].mxu0
        %v6903 = vadd.f32 0.0, %v6902
        %v6904 = vpop.f32.mrb[0].mxu0
        %6905 = vmatprep.mubr.bf16.mxu0 0
        %6906 = vmatmul.mubr.bf16.gmra.mrb[0].mxu0 %v6599
        %v6907 = vpop.f32.mrb[0].mxu0
        %v6908 = vadd.f32 0.0, %v6907
        %v6909 = vpop.f32.mrb[0].mxu0
        %v6910 = vpop.f32.mrb[0].mxu0
        %v6911 = vadd.f32 0.0, %v6910
        %v6912 = vpop.f32.mrb[0].mxu0
        %6913 = vmatprep.mubr.bf16.mxu0 0
        %6914 = vmatmul.mubr.bf16.gmra.mrb[0].mxu0 %v6602
        %v6915 = vpop.f32.mrb[0].mxu0
        %v6916 = vadd.f32 0.0, %v6915
        %v6917 = vpop.f32.mrb[0].mxu0
        %v6918 = vpop.f32.mrb[0].mxu0
        %v6919 = vadd.f32 0.0, %v6918
        %v6920 = vpop.f32.mrb[0].mxu0
        %6921 = vmatprep.mubr.bf16.mxu0 0
        %6922 = vmatmul.mubr.bf16.gmra.mrb[0].mxu0 %v6605
        %v6923 = vpop.f32.mrb[0].mxu0
        %v6924 = vadd.f32 0.0, %v6923
        %v6925 = vpop.f32.mrb[0].mxu0
        %v6926 = vpop.f32.mrb[0].mxu0
        %v6927 = vadd.f32 0.0, %v6926
        %v6928 = vpop.f32.mrb[0].mxu0
        %6929 = vmatprep.mubr.bf16.mxu0 0
        %6930 = vmatmul.mubr.bf16.gmra.mrb[0].mxu0 %v6608
        %v6931 = vpop.f32.mrb[0].mxu0
        %v6932 = vadd.f32 0.0, %v6931
        %v6933 = vpop.f32.mrb[0].mxu0
        %v6934 = vpop.f32.mrb[0].mxu0
        %v6935 = vadd.f32 0.0, %v6934
        %v6936 = vpop.f32.mrb[0].mxu0
        %6937 = vmatprep.mubr.bf16.mxu0 0
        %6938 = vmatmul.mubr.bf16.gmra.mrb[0].mxu0 %v6611
        %v6939 = vpop.f32.mrb[0].mxu0
        %v6940 = vadd.f32 0.0, %v6939
        %v6941 = vpop.f32.mrb[0].mxu0
        %v6942 = vpop.f32.mrb[0].mxu0
        %v6943 = vadd.f32 0.0, %v6942
        %v6944 = vpop.f32.mrb[0].mxu0
        %6945 = vmatprep.mubr.bf16.mxu0 0
        %6946 = vmatmul.mubr.bf16.gmra.mrb[0].mxu0 %v6614
        %v6947 = vpop.f32.mrb[0].mxu0
        %v6948 = vadd.f32 0.0, %v6947
        %v6949 = vpop.f32.mrb[0].mxu0
        %v6950 = vpop.f32.mrb[0].mxu0
        %v6951 = vadd.f32 0.0, %v6950
        %v6952 = vpop.f32.mrb[0].mxu0
        %6953 = vmatprep.mubr.bf16.mxu0 0
        %6954 = vmatmul.mubr.bf16.gmra.mrb[0].mxu0 %v6617
        %v6955 = vpop.f32.mrb[0].mxu0
        %v6956 = vadd.f32 0.0, %v6955
        %v6957 = vpop.f32.mrb[0].mxu0
        %v6958 = vpop.f32.mrb[0].mxu0
        %v6959 = vadd.f32 0.0, %v6958
        %v6960 = vpop.f32.mrb[0].mxu0
        %6961 = vmatprep.mubr.bf16.mxu0 0
        %6962 = vmatmul.mubr.bf16.gmra.mrb[0].mxu0 %v6620
        %v6963 = vpop.f32.mrb[0].mxu0
        %v6964 = vadd.f32 0.0, %v6963
        %v6965 = vpop.f32.mrb[0].mxu0
        %v6966 = vpop.f32.mrb[0].mxu0
        %v6967 = vadd.f32 0.0, %v6966
        %v6968 = vpop.f32.mrb[0].mxu0
        %6969 = vmatprep.mubr.bf16.mxu0 0
        %6970 = vmatmul.mubr.bf16.gmra.mrb[0].mxu0 %v6623
        %v6971 = vpop.f32.mrb[0].mxu0
        %v6972 = vadd.f32 0.0, %v6971
        %v6973 = vpop.f32.mrb[0].mxu0
        %v6974 = vpop.f32.mrb[0].mxu0
        %v6975 = vadd.f32 0.0, %v6974
        %v6976 = vpop.f32.mrb[0].mxu0
        %6977 = vmatprep.mubr.bf16.mxu0 0
        %6978 = vmatmul.mubr.bf16.gmra.mrb[0].mxu0 %v6626
        %v6979 = vpop.f32.mrb[0].mxu0
        %v6980 = vadd.f32 0.0, %v6979
        %v6981 = vpop.f32.mrb[0].mxu0
        %v6982 = vpop.f32.mrb[0].mxu0
        %v6983 = vadd.f32 0.0, %v6982
        %v6984 = vpop.f32.mrb[0].mxu0
        %6985 = vmatprep.mubr.bf16.mxu0 0
        %6986 = vmatmul.mubr.bf16.gmra.mrb[0].mxu0 %v6629
        %v6987 = vpop.f32.mrb[0].mxu0
        %v6988 = vadd.f32 0.0, %v6987
        %v6989 = vpop.f32.mrb[0].mxu0
        %v6990 = vpop.f32.mrb[0].mxu0
        %v6991 = vadd.f32 0.0, %v6990
        %v6992 = vpop.f32.mrb[0].mxu0
        %6993 = vmatprep.mubr.bf16.mxu0 0
        %6994 = vmatmul.mubr.bf16.gmra.mrb[0].mxu0 %v6632
        %v6995 = vpop.f32.mrb[0].mxu0
        %v6996 = vadd.f32 0.0, %v6995
        %v6997 = vpop.f32.mrb[0].mxu0
        %v6998 = vpop.f32.mrb[0].mxu0
        %v6999 = vadd.f32 0.0, %v6998
        %v7000 = vpop.f32.mrb[0].mxu0
        %7001 = vmatprep.mubr.bf16.mxu0 0
        %7002 = vmatmul.mubr.bf16.gmra.mrb[0].mxu0 %v6635
        %v7003 = vpop.f32.mrb[0].mxu0
        %v7004 = vadd.f32 0.0, %v7003
        %v7005 = vpop.f32.mrb[0].mxu0
        %v7006 = vpop.f32.mrb[0].mxu0
        %v7007 = vadd.f32 0.0, %v7006
        %v7008 = vpop.f32.mrb[0].mxu0
        %7009 = vmatprep.mubr.bf16.mxu0 0
        %7010 = vmatmul.mubr.bf16.gmra.mrb[0].mxu0 %v6638
        %v7011 = vpop.f32.mrb[0].mxu0
        %v7012 = vadd.f32 0.0, %v7011
        %v7013 = vpop.f32.mrb[0].mxu0
        %v7014 = vpop.f32.mrb[0].mxu0
        %v7015 = vadd.f32 0.0, %v7014
        %v7016 = vpop.f32.mrb[0].mxu0
        %7017 = vmatprep.mubr.bf16.mxu0 0
        %7018 = vmatmul.mubr.bf16.gmra.mrb[0].mxu0 %v6641
        %v7019 = vpop.f32.mrb[0].mxu0
        %v7020 = vadd.f32 0.0, %v7019
        %v7021 = vpop.f32.mrb[0].mxu0
        %v7022 = vpop.f32.mrb[0].mxu0
        %v7023 = vadd.f32 0.0, %v7022
        %v7024 = vpop.f32.mrb[0].mxu0
        %7025 = vmatprep.mubr.bf16.mxu0 0
        %7026 = vmatmul.mubr.bf16.gmra.mrb[0].mxu0 %v6644
        %v7027 = vpop.f32.mrb[0].mxu0
        %v7028 = vadd.f32 0.0, %v7027
        %v7029 = vpop.f32.mrb[0].mxu0
        %v7030 = vpop.f32.mrb[0].mxu0
        %v7031 = vadd.f32 0.0, %v7030
        %v7032 = vpop.f32.mrb[0].mxu0
        %7033 = vmatprep.mubr.bf16.mxu0 0
        %7034 = vmatmul.mubr.bf16.gmra.mrb[0].mxu0 %v6647
        %v7035 = vpop.f32.mrb[0].mxu0
        %v7036 = vadd.f32 0.0, %v7035
        %v7037 = vpop.f32.mrb[0].mxu0
        %v7038 = vpop.f32.mrb[0].mxu0
        %v7039 = vadd.f32 0.0, %v7038
        %v7040 = vpop.f32.mrb[0].mxu0
        %7041 = vmatprep.mubr.bf16.mxu0 0
        %7042 = vmatmul.mubr.bf16.gmra.mrb[0].mxu0 %v6650
        %v7043 = vpop.f32.mrb[0].mxu0
        %v7044 = vadd.f32 0.0, %v7043
        %v7045 = vpop.f32.mrb[0].mxu0
        %v7046 = vpop.f32.mrb[0].mxu0
        %v7047 = vadd.f32 0.0, %v7046
        %v7048 = vpop.f32.mrb[0].mxu0
        %7049 = vmatprep.mubr.bf16.mxu0 0
        %7050 = vmatmul.mubr.bf16.gmra.mrb[0].mxu0 %v6653
        %v7051 = vpop.f32.mrb[0].mxu0
        %v7052 = vadd.f32 0.0, %v7051
        %v7053 = vpop.f32.mrb[0].mxu0
        %v7054 = vpop.f32.mrb[0].mxu0
        %v7055 = vadd.f32 0.0, %v7054
        %v7056 = vpop.f32.mrb[0].mxu0
        %7057 = vmatprep.mubr.bf16.mxu0 0
        %7058 = vmatmul.mubr.bf16.gmra.mrb[0].mxu0 %v6656
        %v7059 = vpop.f32.mrb[0].mxu0
        %v7060 = vadd.f32 0.0, %v7059
        %v7061 = vpop.f32.mrb[0].mxu0
        %v7062 = vpop.f32.mrb[0].mxu0
        %v7063 = vadd.f32 0.0, %v7062
        %v7064 = vpop.f32.mrb[0].mxu0
        %7065 = vmatprep.mubr.bf16.mxu0 0
        %7066 = vmatmul.mubr.bf16.gmra.mrb[0].mxu0 %v6659
        %v7067 = vpop.f32.mrb[0].mxu0
        %v7068 = vadd.f32 0.0, %v7067
        %v7069 = vpop.f32.mrb[0].mxu0
        %v7070 = vpop.f32.mrb[0].mxu0
        %v7071 = vadd.f32 0.0, %v7070
        %v7072 = vpop.f32.mrb[0].mxu0
        %7073 = vmatprep.mubr.bf16.mxu0 0
        %7074 = vmatmul.mubr.bf16.gmra.mrb[0].mxu0 %v6662
        %v7075 = vpop.f32.mrb[0].mxu0
        %v7076 = vadd.f32 0.0, %v7075
        %v7077 = vpop.f32.mrb[0].mxu0
        %v7078 = vpop.f32.mrb[0].mxu0
        %v7079 = vadd.f32 0.0, %v7078
        %v7080 = vpop.f32.mrb[0].mxu0
        %7081 = vmatprep.mubr.bf16.mxu0 0
        %7082 = vmatmul.mubr.bf16.gmra.mrb[0].mxu0 %v6665
        %v7083 = vpop.f32.mrb[0].mxu0
        %v7084 = vadd.f32 0.0, %v7083
        %v7085 = vpop.f32.mrb[0].mxu0
        %v7086 = vpop.f32.mrb[0].mxu0
        %v7087 = vadd.f32 0.0, %v7086
        %v7088 = vpop.f32.mrb[0].mxu0
        %7089 = vmatprep.mubr.bf16.mxu0 0
        %7090 = vmatmul.mubr.bf16.gmra.mrb[0].mxu0 %v6668
        %v7091 = vpop.f32.mrb[0].mxu0
        %v7092 = vadd.f32 0.0, %v7091
        %v7093 = vpop.f32.mrb[0].mxu0
        %v7094 = vpop.f32.mrb[0].mxu0
        %v7095 = vadd.f32 0.0, %v7094
        %v7096 = vpop.f32.mrb[0].mxu0
        %7097 = vmatprep.mubr.bf16.mxu0 0
        %7098 = vmatmul.mubr.bf16.gmra.mrb[0].mxu0 %v6671
        %v7099 = vpop.f32.mrb[0].mxu0
        %v7100 = vadd.f32 0.0, %v7099
        %v7101 = vpop.f32.mrb[0].mxu0
        %v7102 = vpop.f32.mrb[0].mxu0
        %v7103 = vadd.f32 0.0, %v7102
        %v7104 = vpop.f32.mrb[0].mxu0
        %7105 = vmatprep.mubr.bf16.mxu0 0
        %7106 = vmatmul.mubr.bf16.gmra.mrb[0].mxu0 %v6674
        %v7107 = vpop.f32.mrb[0].mxu0
        %v7108 = vadd.f32 0.0, %v7107
        %v7109 = vpop.f32.mrb[0].mxu0
        %v7110 = vpop.f32.mrb[0].mxu0
        %v7111 = vadd.f32 0.0, %v7110
        %v7112 = vpop.f32.mrb[0].mxu0
        %7113 = vmatprep.mubr.bf16.mxu0 0
        %7114 = vmatmul.mubr.bf16.gmra.mrb[0].mxu0 %v6677
        %v7115 = vpop.f32.mrb[0].mxu0
        %v7116 = vadd.f32 0.0, %v7115
        %v7117 = vpop.f32.mrb[0].mxu0
        %v7118 = vpop.f32.mrb[0].mxu0
        %v7119 = vadd.f32 0.0, %v7118
        %v7120 = vpop.f32.mrb[0].mxu0
        %7121 = vmatprep.mubr.bf16.mxu0 0
        %7122 = vmatmul.mubr.bf16.gmra.mrb[0].mxu0 %v6680
        %v7123 = vpop.f32.mrb[0].mxu0
        %v7124 = vadd.f32 0.0, %v7123
        %v7125 = vpop.f32.mrb[0].mxu0
        %v7126 = vpop.f32.mrb[0].mxu0
        %v7127 = vadd.f32 0.0, %v7126
        %v7128 = vpop.f32.mrb[0].mxu0
        %7129 = vmatprep.mubr.bf16.mxu0 0
        %7130 = vmatmul.mubr.bf16.gmra.mrb[0].mxu0 %v6683
        %v7131 = vpop.f32.mrb[0].mxu0
        %v7132 = vadd.f32 0.0, %v7131
        %v7133 = vpop.f32.mrb[0].mxu0
        %v7134 = vpop.f32.mrb[0].mxu0
        %v7135 = vadd.f32 0.0, %v7134
        %v7136 = vpop.f32.mrb[0].mxu0
        %7137 = vmatprep.mubr.bf16.mxu0 0
        %7138 = vmatmul.mubr.bf16.gmra.mrb[0].mxu0 %v6686
        %v7139 = vpop.f32.mrb[0].mxu0
        %v7140 = vadd.f32 0.0, %v7139
        %v7141 = vpop.f32.mrb[0].mxu0
        %v7142 = vpop.f32.mrb[0].mxu0
        %v7143 = vadd.f32 0.0, %v7142
        %v7144 = vpop.f32.mrb[0].mxu0
        %7145 = vmatprep.mubr.bf16.mxu0 0
        %7146 = vmatmul.mubr.bf16.gmra.mrb[0].mxu0 %v6689
        %v7147 = vpop.f32.mrb[0].mxu0
        %v7148 = vadd.f32 0.0, %v7147
        %v7149 = vpop.f32.mrb[0].mxu0
        %v7150 = vpop.f32.mrb[0].mxu0
        %v7151 = vadd.f32 0.0, %v7150
        %v7152 = vpop.f32.mrb[0].mxu0
        %7153 = vmatprep.mubr.bf16.mxu0 0
        %7154 = vmatmul.mubr.bf16.gmra.mrb[0].mxu0 %v6692
        %v7155 = vpop.f32.mrb[0].mxu0
        %v7156 = vadd.f32 0.0, %v7155
        %v7157 = vpop.f32.mrb[0].mxu0
        %v7158 = vpop.f32.mrb[0].mxu0
        %v7159 = vadd.f32 0.0, %v7158
        %v7160 = vpop.f32.mrb[0].mxu0
        %7161 = vmatprep.mubr.bf16.mxu0 0
        %7162 = vmatmul.mubr.bf16.gmra.mrb[0].mxu0 %v6695
        %v7163 = vpop.f32.mrb[0].mxu0
        %v7164 = vadd.f32 0.0, %v7163
        %v7165 = vpop.f32.mrb[0].mxu0
        %v7166 = vpop.f32.mrb[0].mxu0
        %v7167 = vadd.f32 0.0, %v7166
        %v7168 = vpop.f32.mrb[0].mxu0
        %7169 = vmatprep.mubr.bf16.mxu0 0
        %7170 = vmatmul.mubr.bf16.gmra.mrb[0].mxu0 %v6698
        %v7171 = vpop.f32.mrb[0].mxu0
        %v7172 = vadd.f32 0.0, %v7171
        %v7173 = vpop.f32.mrb[0].mxu0
        %v7174 = vpop.f32.mrb[0].mxu0
        %v7175 = vadd.f32 0.0, %v7174
        %v7176 = vpop.f32.mrb[0].mxu0
        %7177 = vmatprep.mubr.bf16.mxu0 0
        %7178 = vmatmul.mubr.bf16.gmra.mrb[0].mxu0 %v6701
        %v7179 = vpop.f32.mrb[0].mxu0
        %v7180 = vadd.f32 0.0, %v7179
        %v7181 = vpop.f32.mrb[0].mxu0
        %v7182 = vpop.f32.mrb[0].mxu0
        %v7183 = vadd.f32 0.0, %v7182
        %v7184 = vpop.f32.mrb[0].mxu0
        %7185 = vmatprep.mubr.bf16.mxu0 0
        %7186 = vmatmul.mubr.bf16.gmra.mrb[0].mxu0 %v6704
        %v7187 = vpop.f32.mrb[0].mxu0
        %v7188 = vadd.f32 0.0, %v7187
        %v7189 = vpop.f32.mrb[0].mxu0
        %v7190 = vpop.f32.mrb[0].mxu0
        %v7191 = vadd.f32 0.0, %v7190
        %v7192 = vpop.f32.mrb[0].mxu0
        %7193 = vmatprep.mubr.bf16.mxu0 0
        %7194 = vmatmul.mubr.bf16.gmra.mrb[0].mxu0 %v6707
        %v7195 = vpop.f32.mrb[0].mxu0
        %v7196 = vadd.f32 0.0, %v7195
        %v7197 = vpop.f32.mrb[0].mxu0
        %v7198 = vpop.f32.mrb[0].mxu0
        %v7199 = vadd.f32 0.0, %v7198
        %v7200 = vpop.f32.mrb[0].mxu0
        %7201 = vmatprep.mubr.bf16.mxu0 0
        %7202 = vmatmul.mubr.bf16.gmra.mrb[0].mxu0 %v6710
        %v7203 = vpop.f32.mrb[0].mxu0
        %v7204 = vadd.f32 0.0, %v7203
        %v7205 = vpop.f32.mrb[0].mxu0
        %v7206 = vpop.f32.mrb[0].mxu0
        %v7207 = vadd.f32 0.0, %v7206
        %v7208 = vpop.f32.mrb[0].mxu0
        %7209 = vmatprep.mubr.bf16.mxu0 0
        %7210 = vmatmul.mubr.bf16.gmra.mrb[0].mxu0 %v6713
        %v7211 = vpop.f32.mrb[0].mxu0
        %v7212 = vadd.f32 0.0, %v7211
        %v7213 = vpop.f32.mrb[0].mxu0
        %v7214 = vpop.f32.mrb[0].mxu0
        %v7215 = vadd.f32 0.0, %v7214
        %v7216 = vpop.f32.mrb[0].mxu0
        %7217 = vmatprep.mubr.bf16.mxu0 0
        %7218 = vmatmul.mubr.bf16.gmra.mrb[0].mxu0 %v6716
        %v7219 = vpop.f32.mrb[0].mxu0
        %v7220 = vadd.f32 0.0, %v7219
        %v7221 = vpop.f32.mrb[0].mxu0
        %v7222 = vpop.f32.mrb[0].mxu0
        %v7223 = vadd.f32 0.0, %v7222
        %v7224 = vpop.f32.mrb[0].mxu0
        %7225 = vmatprep.mubr.bf16.mxu0 0
        %7226 = vmatmul.mubr.bf16.gmra.mrb[0].mxu0 %v6719
        %v7227 = vpop.f32.mrb[0].mxu0
        %v7228 = vadd.f32 0.0, %v7227
        %v7229 = vpop.f32.mrb[0].mxu0
        %v7230 = vpop.f32.mrb[0].mxu0
        %v7231 = vadd.f32 0.0, %v7230
        %v7232 = vpop.f32.mrb[0].mxu0
        %7233 = vmatprep.mubr.bf16.mxu0 0
        %7234 = vmatmul.mubr.bf16.gmra.mrb[0].mxu0 %v6722
        %v7235 = vpop.f32.mrb[0].mxu0
        %v7236 = vadd.f32 0.0, %v7235
        %v7237 = vpop.f32.mrb[0].mxu0
        %v7238 = vpop.f32.mrb[0].mxu0
        %v7239 = vadd.f32 0.0, %v7238
        %v7240 = vpop.f32.mrb[0].mxu0
        %7241 = vmatprep.mubr.bf16.mxu0 0
        %7242 = vmatmul.mubr.bf16.gmra.mrb[0].mxu0 %v6725
        %v7243 = vpop.f32.mrb[0].mxu0
        %v7244 = vadd.f32 0.0, %v7243
        %v7245 = vpop.f32.mrb[0].mxu0
        %v7246 = vpop.f32.mrb[0].mxu0
        %v7247 = vadd.f32 0.0, %v7246
        %v7248 = vpop.f32.mrb[0].mxu0
        %7249 = vmatprep.mubr.bf16.mxu0 0
        %7250 = vmatmul.mubr.bf16.gmra.mrb[0].mxu0 %v6728
        %v7251 = vpop.f32.mrb[0].mxu0
        %v7252 = vadd.f32 0.0, %v7251
        %v7253 = vpop.f32.mrb[0].mxu0
        %v7254 = vpop.f32.mrb[0].mxu0
        %v7255 = vadd.f32 0.0, %v7254
        %v7256 = vpop.f32.mrb[0].mxu0
        %7257 = vmatprep.mubr.bf16.mxu0 0
        %7258 = vmatmul.mubr.bf16.gmra.mrb[0].mxu0 %v6731
        %v7259 = vpop.f32.mrb[0].mxu0
        %v7260 = vadd.f32 0.0, %v7259
        %v7261 = vpop.f32.mrb[0].mxu0
        %v7262 = vpop.f32.mrb[0].mxu0
        %v7263 = vadd.f32 0.0, %v7262
        %v7264 = vpop.f32.mrb[0].mxu0
        %7265 = vmatprep.mubr.bf16.mxu0 0
        %7266 = vmatmul.mubr.bf16.gmra.mrb[0].mxu0 %v6734
        %v7267 = vpop.f32.mrb[0].mxu0
        %v7268 = vadd.f32 0.0, %v7267
        %v7269 = vpop.f32.mrb[0].mxu0
        %v7270 = vpop.f32.mrb[0].mxu0
        %v7271 = vadd.f32 0.0, %v7270
        %v7272 = vpop.f32.mrb[0].mxu0
        %7273 = vmatprep.mubr.bf16.mxu0 0
        %7274 = vmatmul.mubr.bf16.gmra.mrb[0].mxu0 %v6737
        %v7275 = vpop.f32.mrb[0].mxu0
        %v7276 = vadd.f32 0.0, %v7275
        %v7277 = vpop.f32.mrb[0].mxu0
        %v7278 = vpop.f32.mrb[0].mxu0
        %v7279 = vadd.f32 0.0, %v7278
        %v7280 = vpop.f32.mrb[0].mxu0
        %7281 = vmatprep.mubr.bf16.mxu0 0
        %7282 = vmatmul.mubr.bf16.gmra.mrb[0].mxu0 %v6740
        %v7283 = vpop.f32.mrb[0].mxu0
        %v7284 = vadd.f32 0.0, %v7283
        %v7285 = vpop.f32.mrb[0].mxu0
        %v7286 = vpop.f32.mrb[0].mxu0
        %v7287 = vadd.f32 0.0, %v7286
        %v7288 = vpop.f32.mrb[0].mxu0
        %7289 = vdwg.mxu0
        %v7290 = vadd.f32 %v6227, %v6780
        %v7291 = vadd.f32 %v6228, %v6783
        %v7292 = vadd.f32 %v6229, %v6788
        %v7293 = vadd.f32 %v6230, %v6791
        %v7294 = vadd.f32 %v6231, %v6796
        %v7295 = vadd.f32 %v6232, %v6799
        %v7296 = vadd.f32 %v6233, %v6804
        %v7297 = vadd.f32 %v6234, %v6807
        %v7298 = vadd.f32 %v6235, %v6812
        %v7299 = vadd.f32 %v6236, %v6815
        %v7300 = vadd.f32 %v6237, %v6820
        %v7301 = vadd.f32 %v6238, %v6823
        %v7302 = vadd.f32 %v6239, %v6828
        %v7303 = vadd.f32 %v6240, %v6831
        %v7304 = vadd.f32 %v6241, %v6836
        %v7305 = vadd.f32 %v6242, %v6839
        %v7306 = vadd.f32 %v6243, %v6844
        %v7307 = vadd.f32 %v6244, %v6847
        %v7308 = vadd.f32 %v6245, %v6852
        %v7309 = vadd.f32 %v6246, %v6855
        %v7310 = vadd.f32 %v6247, %v6860
        %v7311 = vadd.f32 %v6248, %v6863
        %v7312 = vadd.f32 %v6249, %v6868
        %v7313 = vadd.f32 %v6250, %v6871
        %v7314 = vadd.f32 %v6251, %v6876
        %v7315 = vadd.f32 %v6252, %v6879
        %v7316 = vadd.f32 %v6253, %v6884
        %v7317 = vadd.f32 %v6254, %v6887
        %v7318 = vadd.f32 %v6255, %v6892
        %v7319 = vadd.f32 %v6256, %v6895
        %v7320 = vadd.f32 %v6257, %v6900
        %v7321 = vadd.f32 %v6258, %v6903
        %v7322 = vadd.f32 %v6259, %v6908
        %v7323 = vadd.f32 %v6260, %v6911
        %v7324 = vadd.f32 %v6261, %v6916
        %v7325 = vadd.f32 %v6262, %v6919
        %v7326 = vadd.f32 %v6263, %v6924
        %v7327 = vadd.f32 %v6264, %v6927
        %v7328 = vadd.f32 %v6265, %v6932
        %v7329 = vadd.f32 %v6266, %v6935
        %v7330 = vadd.f32 %v6267, %v6940
        %v7331 = vadd.f32 %v6268, %v6943
        %v7332 = vadd.f32 %v6269, %v6948
        %v7333 = vadd.f32 %v6270, %v6951
        %v7334 = vadd.f32 %v6271, %v6956
        %v7335 = vadd.f32 %v6272, %v6959
        %v7336 = vadd.f32 %v6273, %v6964
        %v7337 = vadd.f32 %v6274, %v6967
        %v7338 = vadd.f32 %v6275, %v6972
        %v7339 = vadd.f32 %v6276, %v6975
        %v7340 = vadd.f32 %v6277, %v6980
        %v7341 = vadd.f32 %v6278, %v6983
        %v7342 = vadd.f32 %v6279, %v6988
        %v7343 = vadd.f32 %v6280, %v6991
        %v7344 = vadd.f32 %v6281, %v6996
        %v7345 = vadd.f32 %v6282, %v6999
        %v7346 = vadd.f32 %v6283, %v7004
        %v7347 = vadd.f32 %v6284, %v7007
        %v7348 = vadd.f32 %v6285, %v7012
        %v7349 = vadd.f32 %v6286, %v7015
        %v7350 = vadd.f32 %v6287, %v7020
        %v7351 = vadd.f32 %v6288, %v7023
        %v7352 = vadd.f32 %v6289, %v7028
        %v7353 = vadd.f32 %v6290, %v7031
        %v7354 = vadd.f32 %v6291, %v7036
        %v7355 = vadd.f32 %v6292, %v7039
        %v7356 = vadd.f32 %v6293, %v7044
        %v7357 = vadd.f32 %v6294, %v7047
        %v7358 = vadd.f32 %v6295, %v7052
        %v7359 = vadd.f32 %v6296, %v7055
        %v7360 = vadd.f32 %v6297, %v7060
        %v7361 = vadd.f32 %v6298, %v7063
        %v7362 = vadd.f32 %v6299, %v7068
        %v7363 = vadd.f32 %v6300, %v7071
        %v7364 = vadd.f32 %v6301, %v7076
        %v7365 = vadd.f32 %v6302, %v7079
        %v7366 = vadd.f32 %v6303, %v7084
        %v7367 = vadd.f32 %v6304, %v7087
        %v7368 = vadd.f32 %v6305, %v7092
        %v7369 = vadd.f32 %v6306, %v7095
        %v7370 = vadd.f32 %v6307, %v7100
        %v7371 = vadd.f32 %v6308, %v7103
        %v7372 = vadd.f32 %v6309, %v7108
        %v7373 = vadd.f32 %v6310, %v7111
        %v7374 = vadd.f32 %v6311, %v7116
        %v7375 = vadd.f32 %v6312, %v7119
        %v7376 = vadd.f32 %v6313, %v7124
        %v7377 = vadd.f32 %v6314, %v7127
        %v7378 = vadd.f32 %v6315, %v7132
        %v7379 = vadd.f32 %v6316, %v7135
        %v7380 = vadd.f32 %v6317, %v7140
        %v7381 = vadd.f32 %v6318, %v7143
        %v7382 = vadd.f32 %v6319, %v7148
        %v7383 = vadd.f32 %v6320, %v7151
        %v7384 = vadd.f32 %v6321, %v7156
        %v7385 = vadd.f32 %v6322, %v7159
        %v7386 = vadd.f32 %v6323, %v7164
        %v7387 = vadd.f32 %v6324, %v7167
        %v7388 = vadd.f32 %v6325, %v7172
        %v7389 = vadd.f32 %v6326, %v7175
        %v7390 = vadd.f32 %v6327, %v7180
        %v7391 = vadd.f32 %v6328, %v7183
        %v7392 = vadd.f32 %v6329, %v7188
        %v7393 = vadd.f32 %v6330, %v7191
        %v7394 = vadd.f32 %v6331, %v7196
        %v7395 = vadd.f32 %v6332, %v7199
        %v7396 = vadd.f32 %v6333, %v7204
        %v7397 = vadd.f32 %v6334, %v7207
        %v7398 = vadd.f32 %v6335, %v7212
        %v7399 = vadd.f32 %v6336, %v7215
        %v7400 = vadd.f32 %v6337, %v7220
        %v7401 = vadd.f32 %v6338, %v7223
        %v7402 = vadd.f32 %v6339, %v7228
        %v7403 = vadd.f32 %v6340, %v7231
        %v7404 = vadd.f32 %v6341, %v7236
        %v7405 = vadd.f32 %v6342, %v7239
        %v7406 = vadd.f32 %v6343, %v7244
        %v7407 = vadd.f32 %v6344, %v7247
        %v7408 = vadd.f32 %v6345, %v7252
        %v7409 = vadd.f32 %v6346, %v7255
        %v7410 = vadd.f32 %v6347, %v7260
        %v7411 = vadd.f32 %v6348, %v7263
        %v7412 = vadd.f32 %v6349, %v7268
        %v7413 = vadd.f32 %v6350, %v7271
        %v7414 = vadd.f32 %v6351, %v7276
        %v7415 = vadd.f32 %v6352, %v7279
        %v7416 = vadd.f32 %v6353, %v7284
        %v7417 = vadd.f32 %v6354, %v7287
        %v7418 = vld [vmem:[%s6355 + $0x1] sm:$0xff]
        %v7419 = vld [vmem:[%s6355 + $0x9] sm:$0xff]
        %v7420 = vld [vmem:[%s6355 + $0x11] sm:$0xff]
        %v7421 = vld [vmem:[%s6355 + $0x19] sm:$0xff]
        %v7422 = vld [vmem:[%s6355 + $0x29] sm:$0xff]
        %v7423 = vld [vmem:[%s6355 + $0x31] sm:$0xff]
        %v7424 = vld [vmem:[%s6355 + $0x39] sm:$0xff]
        %v7425 = vld [vmem:[%s6355 + $0x41] sm:$0xff]
        %v7426 = vld [vmem:[%s6355 + $0x51] sm:$0xff]
        %v7427 = vld [vmem:[%s6355 + $0x59] sm:$0xff]
        %v7428 = vld [vmem:[%s6355 + $0x61] sm:$0xff]
        %v7429 = vld [vmem:[%s6355 + $0x69] sm:$0xff]
        %v7430 = vld [vmem:[%s6355 + $0x79] sm:$0xff]
        %v7431 = vld [vmem:[%s6355 + $0x81] sm:$0xff]
        %v7432 = vld [vmem:[%s6355 + $0x89] sm:$0xff]
        %v7433 = vld [vmem:[%s6355 + $0x91] sm:$0xff]
        %v7434 = vld [vmem:[%s6355 + $0xa1] sm:$0xff]
        %v7435 = vld [vmem:[%s6355 + $0xa9] sm:$0xff]
        %v7436 = vld [vmem:[%s6355 + $0xb1] sm:$0xff]
        %v7437 = vld [vmem:[%s6355 + $0xb9] sm:$0xff]
        %v7438 = vld [vmem:[%s6355 + $0xc9] sm:$0xff]
        %v7439 = vld [vmem:[%s6355 + $0xd1] sm:$0xff]
        %v7440 = vld [vmem:[%s6355 + $0xd9] sm:$0xff]
        %v7441 = vld [vmem:[%s6355 + $0xe1] sm:$0xff]
        %v7442 = vld [vmem:[%s6355 + $0xf1] sm:$0xff]
        %v7443 = vld [vmem:[%s6355 + $0xf9] sm:$0xff]
        %v7444 = vld [vmem:[%s6355 + $0x101] sm:$0xff]
        %v7445 = vld [vmem:[%s6355 + $0x109] sm:$0xff]
        %v7446 = vld [vmem:[%s6355 + $0x119] sm:$0xff]
        %v7447 = vld [vmem:[%s6355 + $0x121] sm:$0xff]
        %v7448 = vld [vmem:[%s6355 + $0x129] sm:$0xff]
        %v7449 = vld [vmem:[%s6355 + $0x131] sm:$0xff]
        %v7450 = vld [vmem:[%s6355 + $0x141] sm:$0xff]
        %v7451 = vld [vmem:[%s6355 + $0x149] sm:$0xff]
        %v7452 = vld [vmem:[%s6355 + $0x151] sm:$0xff]
        %v7453 = vld [vmem:[%s6355 + $0x159] sm:$0xff]
        %v7454 = vld [vmem:[%s6355 + $0x169] sm:$0xff]
        %v7455 = vld [vmem:[%s6355 + $0x171] sm:$0xff]
        %v7456 = vld [vmem:[%s6355 + $0x179] sm:$0xff]
        %v7457 = vld [vmem:[%s6355 + $0x181] sm:$0xff]
        %v7458 = vld [vmem:[%s6355 + $0x191] sm:$0xff]
        %v7459 = vld [vmem:[%s6355 + $0x199] sm:$0xff]
        %v7460 = vld [vmem:[%s6355 + $0x1a1] sm:$0xff]
        %v7461 = vld [vmem:[%s6355 + $0x1a9] sm:$0xff]
        %v7462 = vld [vmem:[%s6355 + $0x1b9] sm:$0xff]
        %v7463 = vld [vmem:[%s6355 + $0x1c1] sm:$0xff]
        %v7464 = vld [vmem:[%s6355 + $0x1c9] sm:$0xff]
        %v7465 = vld [vmem:[%s6355 + $0x1d1] sm:$0xff]
        %v7466 = vld [vmem:[%s6355 + $0x1e1] sm:$0xff]
        %v7467 = vld [vmem:[%s6355 + $0x1e9] sm:$0xff]
        %v7468 = vld [vmem:[%s6355 + $0x1f1] sm:$0xff]
        %v7469 = vld [vmem:[%s6355 + $0x1f9] sm:$0xff]
        %v7470 = vld [vmem:[%s6355 + $0x209] sm:$0xff]
        %v7471 = vld [vmem:[%s6355 + $0x211] sm:$0xff]
        %v7472 = vld [vmem:[%s6355 + $0x219] sm:$0xff]
        %v7473 = vld [vmem:[%s6355 + $0x221] sm:$0xff]
        %v7474 = vld [vmem:[%s6355 + $0x231] sm:$0xff]
        %v7475 = vld [vmem:[%s6355 + $0x239] sm:$0xff]
        %v7476 = vld [vmem:[%s6355 + $0x241] sm:$0xff]
        %v7477 = vld [vmem:[%s6355 + $0x249] sm:$0xff]
        %v7478 = vld [vmem:[%s6355 + $0x259] sm:$0xff]
        %v7479 = vld [vmem:[%s6355 + $0x261] sm:$0xff]
        %v7480 = vld [vmem:[%s6355 + $0x269] sm:$0xff]
        %v7481 = vld [vmem:[%s6355 + $0x271] sm:$0xff]
        %v7482 = vld [vmem:[%s6355 + $0x281] sm:$0xff]
        %v7483 = vld [vmem:[%s6355 + $0x289] sm:$0xff]
        %v7484 = vld [vmem:[%s6355 + $0x291] sm:$0xff]
        %v7485 = vld [vmem:[%s6355 + $0x299] sm:$0xff]
        %v7486 = vld [vmem:[%s6355 + $0x2a9] sm:$0xff]
        %v7487 = vld [vmem:[%s6355 + $0x2b1] sm:$0xff]
        %v7488 = vld [vmem:[%s6355 + $0x2b9] sm:$0xff]
        %v7489 = vld [vmem:[%s6355 + $0x2c1] sm:$0xff]
        %v7490 = vld [vmem:[%s6355 + $0x2d1] sm:$0xff]
        %v7491 = vld [vmem:[%s6355 + $0x2d9] sm:$0xff]
        %v7492 = vld [vmem:[%s6355 + $0x2e1] sm:$0xff]
        %v7493 = vld [vmem:[%s6355 + $0x2e9] sm:$0xff]
        %v7494 = vld [vmem:[%s6355 + $0x2f9] sm:$0xff]
        %v7495 = vld [vmem:[%s6355 + $0x301] sm:$0xff]
        %v7496 = vld [vmem:[%s6355 + $0x309] sm:$0xff]
        %v7497 = vld [vmem:[%s6355 + $0x311] sm:$0xff]
        %v7498 = vld [vmem:[%s6355 + $0x321] sm:$0xff]
        %v7499 = vld [vmem:[%s6355 + $0x329] sm:$0xff]
        %v7500 = vld [vmem:[%s6355 + $0x331] sm:$0xff]
        %v7501 = vld [vmem:[%s6355 + $0x339] sm:$0xff]
        %v7502 = vld [vmem:[%s6355 + $0x349] sm:$0xff]
        %v7503 = vld [vmem:[%s6355 + $0x351] sm:$0xff]
        %v7504 = vld [vmem:[%s6355 + $0x359] sm:$0xff]
        %v7505 = vld [vmem:[%s6355 + $0x361] sm:$0xff]
        %v7506 = vld [vmem:[%s6355 + $0x371] sm:$0xff]
        %v7507 = vld [vmem:[%s6355 + $0x379] sm:$0xff]
        %v7508 = vld [vmem:[%s6355 + $0x381] sm:$0xff]
        %v7509 = vld [vmem:[%s6355 + $0x389] sm:$0xff]
        %v7510 = vld [vmem:[%s6355 + $0x399] sm:$0xff]
        %v7511 = vld [vmem:[%s6355 + $0x3a1] sm:$0xff]
        %v7512 = vld [vmem:[%s6355 + $0x3a9] sm:$0xff]
        %v7513 = vld [vmem:[%s6355 + $0x3b1] sm:$0xff]
        %v7514 = vld [vmem:[%s6355 + $0x3c1] sm:$0xff]
        %v7515 = vld [vmem:[%s6355 + $0x3c9] sm:$0xff]
        %v7516 = vld [vmem:[%s6355 + $0x3d1] sm:$0xff]
        %v7517 = vld [vmem:[%s6355 + $0x3d9] sm:$0xff]
        %v7518 = vld [vmem:[%s6355 + $0x3e9] sm:$0xff]
        %v7519 = vld [vmem:[%s6355 + $0x3f1] sm:$0xff]
        %v7520 = vld [vmem:[%s6355 + $0x3f9] sm:$0xff]
        %v7521 = vld [vmem:[%s6355 + $0x401] sm:$0xff]
        %v7522 = vld [vmem:[%s6355 + $0x411] sm:$0xff]
        %v7523 = vld [vmem:[%s6355 + $0x419] sm:$0xff]
        %v7524 = vld [vmem:[%s6355 + $0x421] sm:$0xff]
        %v7525 = vld [vmem:[%s6355 + $0x429] sm:$0xff]
        %v7526 = vld [vmem:[%s6355 + $0x439] sm:$0xff]
        %v7527 = vld [vmem:[%s6355 + $0x441] sm:$0xff]
        %v7528 = vld [vmem:[%s6355 + $0x449] sm:$0xff]
        %v7529 = vld [vmem:[%s6355 + $0x451] sm:$0xff]
        %v7530 = vld [vmem:[%s6355 + $0x461] sm:$0xff]
        %v7531 = vld [vmem:[%s6355 + $0x469] sm:$0xff]
        %v7532 = vld [vmem:[%s6355 + $0x471] sm:$0xff]
        %v7533 = vld [vmem:[%s6355 + $0x479] sm:$0xff]
        %v7534 = vld [vmem:[%s6355 + $0x489] sm:$0xff]
        %v7535 = vld [vmem:[%s6355 + $0x491] sm:$0xff]
        %v7536 = vld [vmem:[%s6355 + $0x499] sm:$0xff]
        %v7537 = vld [vmem:[%s6355 + $0x4a1] sm:$0xff]
        %v7538 = vld [vmem:[%s6355 + $0x4b1] sm:$0xff]
        %v7539 = vld [vmem:[%s6355 + $0x4b9] sm:$0xff]
        %v7540 = vld [vmem:[%s6355 + $0x4c1] sm:$0xff]
        %v7541 = vld [vmem:[%s6355 + $0x4c9] sm:$0xff]
        %v7542 = vld [vmem:[%s6355 + $0x4d9] sm:$0xff]
        %v7543 = vld [vmem:[%s6355 + $0x4e1] sm:$0xff]
        %v7544 = vld [vmem:[%s6355 + $0x4e9] sm:$0xff]
        %v7545 = vld [vmem:[%s6355 + $0x4f1] sm:$0xff]
        %v7546 = vpack.c.bf16 %v7419, %v7418
        %v7547 = vpack.c.bf16 %v7421, %v7420
        %v7548 = vpack.c.bf16 %v7423, %v7422
        %v7549 = vpack.c.bf16 %v7425, %v7424
        %v7550 = vpack.c.bf16 %v7427, %v7426
        %v7551 = vpack.c.bf16 %v7429, %v7428
        %v7552 = vpack.c.bf16 %v7431, %v7430
        %v7553 = vpack.c.bf16 %v7433, %v7432
        %v7554 = vpack.c.bf16 %v7435, %v7434
        %v7555 = vpack.c.bf16 %v7437, %v7436
        %v7556 = vpack.c.bf16 %v7439, %v7438
        %v7557 = vpack.c.bf16 %v7441, %v7440
        %v7558 = vpack.c.bf16 %v7443, %v7442
        %v7559 = vpack.c.bf16 %v7445, %v7444
        %v7560 = vpack.c.bf16 %v7447, %v7446
        %v7561 = vpack.c.bf16 %v7449, %v7448
        %v7562 = vpack.c.bf16 %v7451, %v7450
        %v7563 = vpack.c.bf16 %v7453, %v7452
        %v7564 = vpack.c.bf16 %v7455, %v7454
        %v7565 = vpack.c.bf16 %v7457, %v7456
        %v7566 = vpack.c.bf16 %v7459, %v7458
        %v7567 = vpack.c.bf16 %v7461, %v7460
        %v7568 = vpack.c.bf16 %v7463, %v7462
        %v7569 = vpack.c.bf16 %v7465, %v7464
        %v7570 = vpack.c.bf16 %v7467, %v7466
        %v7571 = vpack.c.bf16 %v7469, %v7468
        %v7572 = vpack.c.bf16 %v7471, %v7470
        %v7573 = vpack.c.bf16 %v7473, %v7472
        %v7574 = vpack.c.bf16 %v7475, %v7474
        %v7575 = vpack.c.bf16 %v7477, %v7476
        %v7576 = vpack.c.bf16 %v7479, %v7478
        %v7577 = vpack.c.bf16 %v7481, %v7480
        %v7578 = vpack.c.bf16 %v7483, %v7482
        %v7579 = vpack.c.bf16 %v7485, %v7484
        %v7580 = vpack.c.bf16 %v7487, %v7486
        %v7581 = vpack.c.bf16 %v7489, %v7488
        %v7582 = vpack.c.bf16 %v7491, %v7490
        %v7583 = vpack.c.bf16 %v7493, %v7492
        %v7584 = vpack.c.bf16 %v7495, %v7494
        %v7585 = vpack.c.bf16 %v7497, %v7496
        %v7586 = vpack.c.bf16 %v7499, %v7498
        %v7587 = vpack.c.bf16 %v7501, %v7500
        %v7588 = vpack.c.bf16 %v7503, %v7502
        %v7589 = vpack.c.bf16 %v7505, %v7504
        %v7590 = vpack.c.bf16 %v7507, %v7506
        %v7591 = vpack.c.bf16 %v7509, %v7508
        %v7592 = vpack.c.bf16 %v7511, %v7510
        %v7593 = vpack.c.bf16 %v7513, %v7512
        %v7594 = vpack.c.bf16 %v7515, %v7514
        %v7595 = vpack.c.bf16 %v7517, %v7516
        %v7596 = vpack.c.bf16 %v7519, %v7518
        %v7597 = vpack.c.bf16 %v7521, %v7520
        %v7598 = vpack.c.bf16 %v7523, %v7522
        %v7599 = vpack.c.bf16 %v7525, %v7524
        %v7600 = vpack.c.bf16 %v7527, %v7526
        %v7601 = vpack.c.bf16 %v7529, %v7528
        %v7602 = vpack.c.bf16 %v7531, %v7530
        %v7603 = vpack.c.bf16 %v7533, %v7532
        %v7604 = vpack.c.bf16 %v7535, %v7534
        %v7605 = vpack.c.bf16 %v7537, %v7536
        %v7606 = vpack.c.bf16 %v7539, %v7538
        %v7607 = vpack.c.bf16 %v7541, %v7540
        %v7608 = vpack.c.bf16 %v7543, %v7542
        %v7609 = vpack.c.bf16 %v7545, %v7544
        %s7610 = scalar_lea.vmem %s232, 14
        %v7611 = vld [vmem:[%s7610] sm:$0x3]
        %v7613 = vsel %vm621, %v7546, 0
        %v7616 = vsel %vm621, %v7547, 0
        %v7619 = vsel %vm621, %v7548, 0
        %v7622 = vsel %vm621, %v7549, 0
        %v7625 = vsel %vm621, %v7550, 0
        %v7628 = vsel %vm621, %v7551, 0
        %v7631 = vsel %vm621, %v7552, 0
        %v7634 = vsel %vm621, %v7553, 0
        %v7637 = vsel %vm621, %v7554, 0
        %v7640 = vsel %vm621, %v7555, 0
        %v7643 = vsel %vm621, %v7556, 0
        %v7646 = vsel %vm621, %v7557, 0
        %v7649 = vsel %vm621, %v7558, 0
        %v7652 = vsel %vm621, %v7559, 0
        %v7655 = vsel %vm621, %v7560, 0
        %v7658 = vsel %vm621, %v7561, 0
        %v7661 = vsel %vm621, %v7562, 0
        %v7664 = vsel %vm621, %v7563, 0
        %v7667 = vsel %vm621, %v7564, 0
        %v7670 = vsel %vm621, %v7565, 0
        %v7673 = vsel %vm621, %v7566, 0
        %v7676 = vsel %vm621, %v7567, 0
        %v7679 = vsel %vm621, %v7568, 0
        %v7682 = vsel %vm621, %v7569, 0
        %v7685 = vsel %vm621, %v7570, 0
        %v7688 = vsel %vm621, %v7571, 0
        %v7691 = vsel %vm621, %v7572, 0
        %v7694 = vsel %vm621, %v7573, 0
        %v7697 = vsel %vm621, %v7574, 0
        %v7700 = vsel %vm621, %v7575, 0
        %v7703 = vsel %vm621, %v7576, 0
        %v7706 = vsel %vm621, %v7577, 0
        %v7709 = vsel %vm621, %v7578, 0
        %v7712 = vsel %vm621, %v7579, 0
        %v7715 = vsel %vm621, %v7580, 0
        %v7718 = vsel %vm621, %v7581, 0
        %v7721 = vsel %vm621, %v7582, 0
        %v7724 = vsel %vm621, %v7583, 0
        %v7727 = vsel %vm621, %v7584, 0
        %v7730 = vsel %vm621, %v7585, 0
        %v7733 = vsel %vm621, %v7586, 0
        %v7736 = vsel %vm621, %v7587, 0
        %v7739 = vsel %vm621, %v7588, 0
        %v7742 = vsel %vm621, %v7589, 0
        %v7745 = vsel %vm621, %v7590, 0
        %v7748 = vsel %vm621, %v7591, 0
        %v7751 = vsel %vm621, %v7592, 0
        %v7754 = vsel %vm621, %v7593, 0
        %v7757 = vsel %vm621, %v7594, 0
        %v7760 = vsel %vm621, %v7595, 0
        %v7763 = vsel %vm621, %v7596, 0
        %v7766 = vsel %vm621, %v7597, 0
        %v7769 = vsel %vm621, %v7598, 0
        %v7772 = vsel %vm621, %v7599, 0
        %v7775 = vsel %vm621, %v7600, 0
        %v7778 = vsel %vm621, %v7601, 0
        %v7781 = vsel %vm621, %v7602, 0
        %v7784 = vsel %vm621, %v7603, 0
        %v7787 = vsel %vm621, %v7604, 0
        %v7790 = vsel %vm621, %v7605, 0
        %v7793 = vsel %vm621, %v7606, 0
        %v7796 = vsel %vm621, %v7607, 0
        %v7799 = vsel %vm621, %v7608, 0
        %v7802 = vsel %vm621, %v7609, 0
        %v7805 = vand.u32 %v7611, %v817
        %7807 = vmatprep.subr.bf16.mxu0 0
        %7808 = vmatpush1.bf16.msra.mxu0 %v7805
        %7809 = vmatprep.subr.bf16.mxu0 0
        %7810 = vmatpush1.bf16.msra.mxu0 0
        %7811 = vmatprep.subr.bf16.mxu0 0
        %7812 = vmatpush1.bf16.msra.mxu0 0
        %7813 = vmatprep.subr.bf16.mxu0 0
        %7814 = vmatpush1.bf16.msra.mxu0 0
        %7815 = vmatprep.subr.bf16.mxu0 0
        %7816 = vmatpush1.bf16.msra.mxu0 0
        %7817 = vmatprep.subr.bf16.mxu0 0
        %7818 = vmatpush1.bf16.msra.mxu0 0
        %7819 = vmatprep.subr.bf16.mxu0 0
        %7820 = vmatpush1.bf16.msra.mxu0 0
        %7821 = vmatprep.subr.bf16.mxu0 0
        %7822 = vmatpush1.bf16.msra.mxu0 0
        %7823 = vmatprep.subr.bf16.mxu0 0
        %7824 = vmatpush1.bf16.msra.mxu0 0
        %7825 = vmatprep.subr.bf16.mxu0 0
        %7826 = vmatpush1.bf16.msra.mxu0 0
        %7827 = vmatprep.subr.bf16.mxu0 0
        %7828 = vmatpush1.bf16.msra.mxu0 0
        %7829 = vmatprep.subr.bf16.mxu0 0
        %7830 = vmatpush1.bf16.msra.mxu0 0
        %7831 = vmatprep.subr.bf16.mxu0 0
        %7832 = vmatpush1.bf16.msra.mxu0 0
        %7833 = vmatprep.subr.bf16.mxu0 0
        %7834 = vmatpush1.bf16.msra.mxu0 0
        %7835 = vmatprep.subr.bf16.mxu0 0
        %7836 = vmatpush1.bf16.msra.mxu0 0
        %7837 = vmatprep.subr.bf16.mxu0 0
        %7838 = vmatpush1.bf16.msra.mxu0 0
        %7839 = vmatprep.mubr.bf16.mxu0 0
        %7840 = vmatmul.mubr.bf16.gmra.mrb[0].mxu0 %v7613
        %v7841 = vpop.f32.mrb[0].mxu0
        %v7842 = vadd.f32 0.0, %v7841
        %v7843 = vpop.f32.mrb[0].mxu0
        %v7844 = vpop.f32.mrb[0].mxu0
        %v7845 = vadd.f32 0.0, %v7844
        %v7846 = vpop.f32.mrb[0].mxu0
        %7847 = vmatprep.mubr.bf16.mxu0 0
        %7848 = vmatmul.mubr.bf16.gmra.mrb[0].mxu0 %v7616
        %v7849 = vpop.f32.mrb[0].mxu0
        %v7850 = vadd.f32 0.0, %v7849
        %v7851 = vpop.f32.mrb[0].mxu0
        %v7852 = vpop.f32.mrb[0].mxu0
        %v7853 = vadd.f32 0.0, %v7852
        %v7854 = vpop.f32.mrb[0].mxu0
        %7855 = vmatprep.mubr.bf16.mxu0 0
        %7856 = vmatmul.mubr.bf16.gmra.mrb[0].mxu0 %v7619
        %v7857 = vpop.f32.mrb[0].mxu0
        %v7858 = vadd.f32 0.0, %v7857
        %v7859 = vpop.f32.mrb[0].mxu0
        %v7860 = vpop.f32.mrb[0].mxu0
        %v7861 = vadd.f32 0.0, %v7860
        %v7862 = vpop.f32.mrb[0].mxu0
        %7863 = vmatprep.mubr.bf16.mxu0 0
        %7864 = vmatmul.mubr.bf16.gmra.mrb[0].mxu0 %v7622
        %v7865 = vpop.f32.mrb[0].mxu0
        %v7866 = vadd.f32 0.0, %v7865
        %v7867 = vpop.f32.mrb[0].mxu0
        %v7868 = vpop.f32.mrb[0].mxu0
        %v7869 = vadd.f32 0.0, %v7868
        %v7870 = vpop.f32.mrb[0].mxu0
        %7871 = vmatprep.mubr.bf16.mxu0 0
        %7872 = vmatmul.mubr.bf16.gmra.mrb[0].mxu0 %v7625
        %v7873 = vpop.f32.mrb[0].mxu0
        %v7874 = vadd.f32 0.0, %v7873
        %v7875 = vpop.f32.mrb[0].mxu0
        %v7876 = vpop.f32.mrb[0].mxu0
        %v7877 = vadd.f32 0.0, %v7876
        %v7878 = vpop.f32.mrb[0].mxu0
        %7879 = vmatprep.mubr.bf16.mxu0 0
        %7880 = vmatmul.mubr.bf16.gmra.mrb[0].mxu0 %v7628
        %v7881 = vpop.f32.mrb[0].mxu0
        %v7882 = vadd.f32 0.0, %v7881
        %v7883 = vpop.f32.mrb[0].mxu0
        %v7884 = vpop.f32.mrb[0].mxu0
        %v7885 = vadd.f32 0.0, %v7884
        %v7886 = vpop.f32.mrb[0].mxu0
        %7887 = vmatprep.mubr.bf16.mxu0 0
        %7888 = vmatmul.mubr.bf16.gmra.mrb[0].mxu0 %v7631
        %v7889 = vpop.f32.mrb[0].mxu0
        %v7890 = vadd.f32 0.0, %v7889
        %v7891 = vpop.f32.mrb[0].mxu0
        %v7892 = vpop.f32.mrb[0].mxu0
        %v7893 = vadd.f32 0.0, %v7892
        %v7894 = vpop.f32.mrb[0].mxu0
        %7895 = vmatprep.mubr.bf16.mxu0 0
        %7896 = vmatmul.mubr.bf16.gmra.mrb[0].mxu0 %v7634
        %v7897 = vpop.f32.mrb[0].mxu0
        %v7898 = vadd.f32 0.0, %v7897
        %v7899 = vpop.f32.mrb[0].mxu0
        %v7900 = vpop.f32.mrb[0].mxu0
        %v7901 = vadd.f32 0.0, %v7900
        %v7902 = vpop.f32.mrb[0].mxu0
        %7903 = vmatprep.mubr.bf16.mxu0 0
        %7904 = vmatmul.mubr.bf16.gmra.mrb[0].mxu0 %v7637
        %v7905 = vpop.f32.mrb[0].mxu0
        %v7906 = vadd.f32 0.0, %v7905
        %v7907 = vpop.f32.mrb[0].mxu0
        %v7908 = vpop.f32.mrb[0].mxu0
        %v7909 = vadd.f32 0.0, %v7908
        %v7910 = vpop.f32.mrb[0].mxu0
        %7911 = vmatprep.mubr.bf16.mxu0 0
        %7912 = vmatmul.mubr.bf16.gmra.mrb[0].mxu0 %v7640
        %v7913 = vpop.f32.mrb[0].mxu0
        %v7914 = vadd.f32 0.0, %v7913
        %v7915 = vpop.f32.mrb[0].mxu0
        %v7916 = vpop.f32.mrb[0].mxu0
        %v7917 = vadd.f32 0.0, %v7916
        %v7918 = vpop.f32.mrb[0].mxu0
        %7919 = vmatprep.mubr.bf16.mxu0 0
        %7920 = vmatmul.mubr.bf16.gmra.mrb[0].mxu0 %v7643
        %v7921 = vpop.f32.mrb[0].mxu0
        %v7922 = vadd.f32 0.0, %v7921
        %v7923 = vpop.f32.mrb[0].mxu0
        %v7924 = vpop.f32.mrb[0].mxu0
        %v7925 = vadd.f32 0.0, %v7924
        %v7926 = vpop.f32.mrb[0].mxu0
        %7927 = vmatprep.mubr.bf16.mxu0 0
        %7928 = vmatmul.mubr.bf16.gmra.mrb[0].mxu0 %v7646
        %v7929 = vpop.f32.mrb[0].mxu0
        %v7930 = vadd.f32 0.0, %v7929
        %v7931 = vpop.f32.mrb[0].mxu0
        %v7932 = vpop.f32.mrb[0].mxu0
        %v7933 = vadd.f32 0.0, %v7932
        %v7934 = vpop.f32.mrb[0].mxu0
        %7935 = vmatprep.mubr.bf16.mxu0 0
        %7936 = vmatmul.mubr.bf16.gmra.mrb[0].mxu0 %v7649
        %v7937 = vpop.f32.mrb[0].mxu0
        %v7938 = vadd.f32 0.0, %v7937
        %v7939 = vpop.f32.mrb[0].mxu0
        %v7940 = vpop.f32.mrb[0].mxu0
        %v7941 = vadd.f32 0.0, %v7940
        %v7942 = vpop.f32.mrb[0].mxu0
        %7943 = vmatprep.mubr.bf16.mxu0 0
        %7944 = vmatmul.mubr.bf16.gmra.mrb[0].mxu0 %v7652
        %v7945 = vpop.f32.mrb[0].mxu0
        %v7946 = vadd.f32 0.0, %v7945
        %v7947 = vpop.f32.mrb[0].mxu0
        %v7948 = vpop.f32.mrb[0].mxu0
        %v7949 = vadd.f32 0.0, %v7948
        %v7950 = vpop.f32.mrb[0].mxu0
        %7951 = vmatprep.mubr.bf16.mxu0 0
        %7952 = vmatmul.mubr.bf16.gmra.mrb[0].mxu0 %v7655
        %v7953 = vpop.f32.mrb[0].mxu0
        %v7954 = vadd.f32 0.0, %v7953
        %v7955 = vpop.f32.mrb[0].mxu0
        %v7956 = vpop.f32.mrb[0].mxu0
        %v7957 = vadd.f32 0.0, %v7956
        %v7958 = vpop.f32.mrb[0].mxu0
        %7959 = vmatprep.mubr.bf16.mxu0 0
        %7960 = vmatmul.mubr.bf16.gmra.mrb[0].mxu0 %v7658
        %v7961 = vpop.f32.mrb[0].mxu0
        %v7962 = vadd.f32 0.0, %v7961
        %v7963 = vpop.f32.mrb[0].mxu0
        %v7964 = vpop.f32.mrb[0].mxu0
        %v7965 = vadd.f32 0.0, %v7964
        %v7966 = vpop.f32.mrb[0].mxu0
        %7967 = vmatprep.mubr.bf16.mxu0 0
        %7968 = vmatmul.mubr.bf16.gmra.mrb[0].mxu0 %v7661
        %v7969 = vpop.f32.mrb[0].mxu0
        %v7970 = vadd.f32 0.0, %v7969
        %v7971 = vpop.f32.mrb[0].mxu0
        %v7972 = vpop.f32.mrb[0].mxu0
        %v7973 = vadd.f32 0.0, %v7972
        %v7974 = vpop.f32.mrb[0].mxu0
        %7975 = vmatprep.mubr.bf16.mxu0 0
        %7976 = vmatmul.mubr.bf16.gmra.mrb[0].mxu0 %v7664
        %v7977 = vpop.f32.mrb[0].mxu0
        %v7978 = vadd.f32 0.0, %v7977
        %v7979 = vpop.f32.mrb[0].mxu0
        %v7980 = vpop.f32.mrb[0].mxu0
        %v7981 = vadd.f32 0.0, %v7980
        %v7982 = vpop.f32.mrb[0].mxu0
        %7983 = vmatprep.mubr.bf16.mxu0 0
        %7984 = vmatmul.mubr.bf16.gmra.mrb[0].mxu0 %v7667
        %v7985 = vpop.f32.mrb[0].mxu0
        %v7986 = vadd.f32 0.0, %v7985
        %v7987 = vpop.f32.mrb[0].mxu0
        %v7988 = vpop.f32.mrb[0].mxu0
        %v7989 = vadd.f32 0.0, %v7988
        %v7990 = vpop.f32.mrb[0].mxu0
        %7991 = vmatprep.mubr.bf16.mxu0 0
        %7992 = vmatmul.mubr.bf16.gmra.mrb[0].mxu0 %v7670
        %v7993 = vpop.f32.mrb[0].mxu0
        %v7994 = vadd.f32 0.0, %v7993
        %v7995 = vpop.f32.mrb[0].mxu0
        %v7996 = vpop.f32.mrb[0].mxu0
        %v7997 = vadd.f32 0.0, %v7996
        %v7998 = vpop.f32.mrb[0].mxu0
        %7999 = vmatprep.mubr.bf16.mxu0 0
        %8000 = vmatmul.mubr.bf16.gmra.mrb[0].mxu0 %v7673
        %v8001 = vpop.f32.mrb[0].mxu0
        %v8002 = vadd.f32 0.0, %v8001
        %v8003 = vpop.f32.mrb[0].mxu0
        %v8004 = vpop.f32.mrb[0].mxu0
        %v8005 = vadd.f32 0.0, %v8004
        %v8006 = vpop.f32.mrb[0].mxu0
        %8007 = vmatprep.mubr.bf16.mxu0 0
        %8008 = vmatmul.mubr.bf16.gmra.mrb[0].mxu0 %v7676
        %v8009 = vpop.f32.mrb[0].mxu0
        %v8010 = vadd.f32 0.0, %v8009
        %v8011 = vpop.f32.mrb[0].mxu0
        %v8012 = vpop.f32.mrb[0].mxu0
        %v8013 = vadd.f32 0.0, %v8012
        %v8014 = vpop.f32.mrb[0].mxu0
        %8015 = vmatprep.mubr.bf16.mxu0 0
        %8016 = vmatmul.mubr.bf16.gmra.mrb[0].mxu0 %v7679
        %v8017 = vpop.f32.mrb[0].mxu0
        %v8018 = vadd.f32 0.0, %v8017
        %v8019 = vpop.f32.mrb[0].mxu0
        %v8020 = vpop.f32.mrb[0].mxu0
        %v8021 = vadd.f32 0.0, %v8020
        %v8022 = vpop.f32.mrb[0].mxu0
        %8023 = vmatprep.mubr.bf16.mxu0 0
        %8024 = vmatmul.mubr.bf16.gmra.mrb[0].mxu0 %v7682
        %v8025 = vpop.f32.mrb[0].mxu0
        %v8026 = vadd.f32 0.0, %v8025
        %v8027 = vpop.f32.mrb[0].mxu0
        %v8028 = vpop.f32.mrb[0].mxu0
        %v8029 = vadd.f32 0.0, %v8028
        %v8030 = vpop.f32.mrb[0].mxu0
        %8031 = vmatprep.mubr.bf16.mxu0 0
        %8032 = vmatmul.mubr.bf16.gmra.mrb[0].mxu0 %v7685
        %v8033 = vpop.f32.mrb[0].mxu0
        %v8034 = vadd.f32 0.0, %v8033
        %v8035 = vpop.f32.mrb[0].mxu0
        %v8036 = vpop.f32.mrb[0].mxu0
        %v8037 = vadd.f32 0.0, %v8036
        %v8038 = vpop.f32.mrb[0].mxu0
        %8039 = vmatprep.mubr.bf16.mxu0 0
        %8040 = vmatmul.mubr.bf16.gmra.mrb[0].mxu0 %v7688
        %v8041 = vpop.f32.mrb[0].mxu0
        %v8042 = vadd.f32 0.0, %v8041
        %v8043 = vpop.f32.mrb[0].mxu0
        %v8044 = vpop.f32.mrb[0].mxu0
        %v8045 = vadd.f32 0.0, %v8044
        %v8046 = vpop.f32.mrb[0].mxu0
        %8047 = vmatprep.mubr.bf16.mxu0 0
        %8048 = vmatmul.mubr.bf16.gmra.mrb[0].mxu0 %v7691
        %v8049 = vpop.f32.mrb[0].mxu0
        %v8050 = vadd.f32 0.0, %v8049
        %v8051 = vpop.f32.mrb[0].mxu0
        %v8052 = vpop.f32.mrb[0].mxu0
        %v8053 = vadd.f32 0.0, %v8052
        %v8054 = vpop.f32.mrb[0].mxu0
        %8055 = vmatprep.mubr.bf16.mxu0 0
        %8056 = vmatmul.mubr.bf16.gmra.mrb[0].mxu0 %v7694
        %v8057 = vpop.f32.mrb[0].mxu0
        %v8058 = vadd.f32 0.0, %v8057
        %v8059 = vpop.f32.mrb[0].mxu0
        %v8060 = vpop.f32.mrb[0].mxu0
        %v8061 = vadd.f32 0.0, %v8060
        %v8062 = vpop.f32.mrb[0].mxu0
        %8063 = vmatprep.mubr.bf16.mxu0 0
        %8064 = vmatmul.mubr.bf16.gmra.mrb[0].mxu0 %v7697
        %v8065 = vpop.f32.mrb[0].mxu0
        %v8066 = vadd.f32 0.0, %v8065
        %v8067 = vpop.f32.mrb[0].mxu0
        %v8068 = vpop.f32.mrb[0].mxu0
        %v8069 = vadd.f32 0.0, %v8068
        %v8070 = vpop.f32.mrb[0].mxu0
        %8071 = vmatprep.mubr.bf16.mxu0 0
        %8072 = vmatmul.mubr.bf16.gmra.mrb[0].mxu0 %v7700
        %v8073 = vpop.f32.mrb[0].mxu0
        %v8074 = vadd.f32 0.0, %v8073
        %v8075 = vpop.f32.mrb[0].mxu0
        %v8076 = vpop.f32.mrb[0].mxu0
        %v8077 = vadd.f32 0.0, %v8076
        %v8078 = vpop.f32.mrb[0].mxu0
        %8079 = vmatprep.mubr.bf16.mxu0 0
        %8080 = vmatmul.mubr.bf16.gmra.mrb[0].mxu0 %v7703
        %v8081 = vpop.f32.mrb[0].mxu0
        %v8082 = vadd.f32 0.0, %v8081
        %v8083 = vpop.f32.mrb[0].mxu0
        %v8084 = vpop.f32.mrb[0].mxu0
        %v8085 = vadd.f32 0.0, %v8084
        %v8086 = vpop.f32.mrb[0].mxu0
        %8087 = vmatprep.mubr.bf16.mxu0 0
        %8088 = vmatmul.mubr.bf16.gmra.mrb[0].mxu0 %v7706
        %v8089 = vpop.f32.mrb[0].mxu0
        %v8090 = vadd.f32 0.0, %v8089
        %v8091 = vpop.f32.mrb[0].mxu0
        %v8092 = vpop.f32.mrb[0].mxu0
        %v8093 = vadd.f32 0.0, %v8092
        %v8094 = vpop.f32.mrb[0].mxu0
        %8095 = vmatprep.mubr.bf16.mxu0 0
        %8096 = vmatmul.mubr.bf16.gmra.mrb[0].mxu0 %v7709
        %v8097 = vpop.f32.mrb[0].mxu0
        %v8098 = vadd.f32 0.0, %v8097
        %v8099 = vpop.f32.mrb[0].mxu0
        %v8100 = vpop.f32.mrb[0].mxu0
        %v8101 = vadd.f32 0.0, %v8100
        %v8102 = vpop.f32.mrb[0].mxu0
        %8103 = vmatprep.mubr.bf16.mxu0 0
        %8104 = vmatmul.mubr.bf16.gmra.mrb[0].mxu0 %v7712
        %v8105 = vpop.f32.mrb[0].mxu0
        %v8106 = vadd.f32 0.0, %v8105
        %v8107 = vpop.f32.mrb[0].mxu0
        %v8108 = vpop.f32.mrb[0].mxu0
        %v8109 = vadd.f32 0.0, %v8108
        %v8110 = vpop.f32.mrb[0].mxu0
        %8111 = vmatprep.mubr.bf16.mxu0 0
        %8112 = vmatmul.mubr.bf16.gmra.mrb[0].mxu0 %v7715
        %v8113 = vpop.f32.mrb[0].mxu0
        %v8114 = vadd.f32 0.0, %v8113
        %v8115 = vpop.f32.mrb[0].mxu0
        %v8116 = vpop.f32.mrb[0].mxu0
        %v8117 = vadd.f32 0.0, %v8116
        %v8118 = vpop.f32.mrb[0].mxu0
        %8119 = vmatprep.mubr.bf16.mxu0 0
        %8120 = vmatmul.mubr.bf16.gmra.mrb[0].mxu0 %v7718
        %v8121 = vpop.f32.mrb[0].mxu0
        %v8122 = vadd.f32 0.0, %v8121
        %v8123 = vpop.f32.mrb[0].mxu0
        %v8124 = vpop.f32.mrb[0].mxu0
        %v8125 = vadd.f32 0.0, %v8124
        %v8126 = vpop.f32.mrb[0].mxu0
        %8127 = vmatprep.mubr.bf16.mxu0 0
        %8128 = vmatmul.mubr.bf16.gmra.mrb[0].mxu0 %v7721
        %v8129 = vpop.f32.mrb[0].mxu0
        %v8130 = vadd.f32 0.0, %v8129
        %v8131 = vpop.f32.mrb[0].mxu0
        %v8132 = vpop.f32.mrb[0].mxu0
        %v8133 = vadd.f32 0.0, %v8132
        %v8134 = vpop.f32.mrb[0].mxu0
        %8135 = vmatprep.mubr.bf16.mxu0 0
        %8136 = vmatmul.mubr.bf16.gmra.mrb[0].mxu0 %v7724
        %v8137 = vpop.f32.mrb[0].mxu0
        %v8138 = vadd.f32 0.0, %v8137
        %v8139 = vpop.f32.mrb[0].mxu0
        %v8140 = vpop.f32.mrb[0].mxu0
        %v8141 = vadd.f32 0.0, %v8140
        %v8142 = vpop.f32.mrb[0].mxu0
        %8143 = vmatprep.mubr.bf16.mxu0 0
        %8144 = vmatmul.mubr.bf16.gmra.mrb[0].mxu0 %v7727
        %v8145 = vpop.f32.mrb[0].mxu0
        %v8146 = vadd.f32 0.0, %v8145
        %v8147 = vpop.f32.mrb[0].mxu0
        %v8148 = vpop.f32.mrb[0].mxu0
        %v8149 = vadd.f32 0.0, %v8148
        %v8150 = vpop.f32.mrb[0].mxu0
        %8151 = vmatprep.mubr.bf16.mxu0 0
        %8152 = vmatmul.mubr.bf16.gmra.mrb[0].mxu0 %v7730
        %v8153 = vpop.f32.mrb[0].mxu0
        %v8154 = vadd.f32 0.0, %v8153
        %v8155 = vpop.f32.mrb[0].mxu0
        %v8156 = vpop.f32.mrb[0].mxu0
        %v8157 = vadd.f32 0.0, %v8156
        %v8158 = vpop.f32.mrb[0].mxu0
        %8159 = vmatprep.mubr.bf16.mxu0 0
        %8160 = vmatmul.mubr.bf16.gmra.mrb[0].mxu0 %v7733
        %v8161 = vpop.f32.mrb[0].mxu0
        %v8162 = vadd.f32 0.0, %v8161
        %v8163 = vpop.f32.mrb[0].mxu0
        %v8164 = vpop.f32.mrb[0].mxu0
        %v8165 = vadd.f32 0.0, %v8164
        %v8166 = vpop.f32.mrb[0].mxu0
        %8167 = vmatprep.mubr.bf16.mxu0 0
        %8168 = vmatmul.mubr.bf16.gmra.mrb[0].mxu0 %v7736
        %v8169 = vpop.f32.mrb[0].mxu0
        %v8170 = vadd.f32 0.0, %v8169
        %v8171 = vpop.f32.mrb[0].mxu0
        %v8172 = vpop.f32.mrb[0].mxu0
        %v8173 = vadd.f32 0.0, %v8172
        %v8174 = vpop.f32.mrb[0].mxu0
        %8175 = vmatprep.mubr.bf16.mxu0 0
        %8176 = vmatmul.mubr.bf16.gmra.mrb[0].mxu0 %v7739
        %v8177 = vpop.f32.mrb[0].mxu0
        %v8178 = vadd.f32 0.0, %v8177
        %v8179 = vpop.f32.mrb[0].mxu0
        %v8180 = vpop.f32.mrb[0].mxu0
        %v8181 = vadd.f32 0.0, %v8180
        %v8182 = vpop.f32.mrb[0].mxu0
        %8183 = vmatprep.mubr.bf16.mxu0 0
        %8184 = vmatmul.mubr.bf16.gmra.mrb[0].mxu0 %v7742
        %v8185 = vpop.f32.mrb[0].mxu0
        %v8186 = vadd.f32 0.0, %v8185
        %v8187 = vpop.f32.mrb[0].mxu0
        %v8188 = vpop.f32.mrb[0].mxu0
        %v8189 = vadd.f32 0.0, %v8188
        %v8190 = vpop.f32.mrb[0].mxu0
        %8191 = vmatprep.mubr.bf16.mxu0 0
        %8192 = vmatmul.mubr.bf16.gmra.mrb[0].mxu0 %v7745
        %v8193 = vpop.f32.mrb[0].mxu0
        %v8194 = vadd.f32 0.0, %v8193
        %v8195 = vpop.f32.mrb[0].mxu0
        %v8196 = vpop.f32.mrb[0].mxu0
        %v8197 = vadd.f32 0.0, %v8196
        %v8198 = vpop.f32.mrb[0].mxu0
        %8199 = vmatprep.mubr.bf16.mxu0 0
        %8200 = vmatmul.mubr.bf16.gmra.mrb[0].mxu0 %v7748
        %v8201 = vpop.f32.mrb[0].mxu0
        %v8202 = vadd.f32 0.0, %v8201
        %v8203 = vpop.f32.mrb[0].mxu0
        %v8204 = vpop.f32.mrb[0].mxu0
        %v8205 = vadd.f32 0.0, %v8204
        %v8206 = vpop.f32.mrb[0].mxu0
        %8207 = vmatprep.mubr.bf16.mxu0 0
        %8208 = vmatmul.mubr.bf16.gmra.mrb[0].mxu0 %v7751
        %v8209 = vpop.f32.mrb[0].mxu0
        %v8210 = vadd.f32 0.0, %v8209
        %v8211 = vpop.f32.mrb[0].mxu0
        %v8212 = vpop.f32.mrb[0].mxu0
        %v8213 = vadd.f32 0.0, %v8212
        %v8214 = vpop.f32.mrb[0].mxu0
        %8215 = vmatprep.mubr.bf16.mxu0 0
        %8216 = vmatmul.mubr.bf16.gmra.mrb[0].mxu0 %v7754
        %v8217 = vpop.f32.mrb[0].mxu0
        %v8218 = vadd.f32 0.0, %v8217
        %v8219 = vpop.f32.mrb[0].mxu0
        %v8220 = vpop.f32.mrb[0].mxu0
        %v8221 = vadd.f32 0.0, %v8220
        %v8222 = vpop.f32.mrb[0].mxu0
        %8223 = vmatprep.mubr.bf16.mxu0 0
        %8224 = vmatmul.mubr.bf16.gmra.mrb[0].mxu0 %v7757
        %v8225 = vpop.f32.mrb[0].mxu0
        %v8226 = vadd.f32 0.0, %v8225
        %v8227 = vpop.f32.mrb[0].mxu0
        %v8228 = vpop.f32.mrb[0].mxu0
        %v8229 = vadd.f32 0.0, %v8228
        %v8230 = vpop.f32.mrb[0].mxu0
        %8231 = vmatprep.mubr.bf16.mxu0 0
        %8232 = vmatmul.mubr.bf16.gmra.mrb[0].mxu0 %v7760
        %v8233 = vpop.f32.mrb[0].mxu0
        %v8234 = vadd.f32 0.0, %v8233
        %v8235 = vpop.f32.mrb[0].mxu0
        %v8236 = vpop.f32.mrb[0].mxu0
        %v8237 = vadd.f32 0.0, %v8236
        %v8238 = vpop.f32.mrb[0].mxu0
        %8239 = vmatprep.mubr.bf16.mxu0 0
        %8240 = vmatmul.mubr.bf16.gmra.mrb[0].mxu0 %v7763
        %v8241 = vpop.f32.mrb[0].mxu0
        %v8242 = vadd.f32 0.0, %v8241
        %v8243 = vpop.f32.mrb[0].mxu0
        %v8244 = vpop.f32.mrb[0].mxu0
        %v8245 = vadd.f32 0.0, %v8244
        %v8246 = vpop.f32.mrb[0].mxu0
        %8247 = vmatprep.mubr.bf16.mxu0 0
        %8248 = vmatmul.mubr.bf16.gmra.mrb[0].mxu0 %v7766
        %v8249 = vpop.f32.mrb[0].mxu0
        %v8250 = vadd.f32 0.0, %v8249
        %v8251 = vpop.f32.mrb[0].mxu0
        %v8252 = vpop.f32.mrb[0].mxu0
        %v8253 = vadd.f32 0.0, %v8252
        %v8254 = vpop.f32.mrb[0].mxu0
        %8255 = vmatprep.mubr.bf16.mxu0 0
        %8256 = vmatmul.mubr.bf16.gmra.mrb[0].mxu0 %v7769
        %v8257 = vpop.f32.mrb[0].mxu0
        %v8258 = vadd.f32 0.0, %v8257
        %v8259 = vpop.f32.mrb[0].mxu0
        %v8260 = vpop.f32.mrb[0].mxu0
        %v8261 = vadd.f32 0.0, %v8260
        %v8262 = vpop.f32.mrb[0].mxu0
        %8263 = vmatprep.mubr.bf16.mxu0 0
        %8264 = vmatmul.mubr.bf16.gmra.mrb[0].mxu0 %v7772
        %v8265 = vpop.f32.mrb[0].mxu0
        %v8266 = vadd.f32 0.0, %v8265
        %v8267 = vpop.f32.mrb[0].mxu0
        %v8268 = vpop.f32.mrb[0].mxu0
        %v8269 = vadd.f32 0.0, %v8268
        %v8270 = vpop.f32.mrb[0].mxu0
        %8271 = vmatprep.mubr.bf16.mxu0 0
        %8272 = vmatmul.mubr.bf16.gmra.mrb[0].mxu0 %v7775
        %v8273 = vpop.f32.mrb[0].mxu0
        %v8274 = vadd.f32 0.0, %v8273
        %v8275 = vpop.f32.mrb[0].mxu0
        %v8276 = vpop.f32.mrb[0].mxu0
        %v8277 = vadd.f32 0.0, %v8276
        %v8278 = vpop.f32.mrb[0].mxu0
        %8279 = vmatprep.mubr.bf16.mxu0 0
        %8280 = vmatmul.mubr.bf16.gmra.mrb[0].mxu0 %v7778
        %v8281 = vpop.f32.mrb[0].mxu0
        %v8282 = vadd.f32 0.0, %v8281
        %v8283 = vpop.f32.mrb[0].mxu0
        %v8284 = vpop.f32.mrb[0].mxu0
        %v8285 = vadd.f32 0.0, %v8284
        %v8286 = vpop.f32.mrb[0].mxu0
        %8287 = vmatprep.mubr.bf16.mxu0 0
        %8288 = vmatmul.mubr.bf16.gmra.mrb[0].mxu0 %v7781
        %v8289 = vpop.f32.mrb[0].mxu0
        %v8290 = vadd.f32 0.0, %v8289
        %v8291 = vpop.f32.mrb[0].mxu0
        %v8292 = vpop.f32.mrb[0].mxu0
        %v8293 = vadd.f32 0.0, %v8292
        %v8294 = vpop.f32.mrb[0].mxu0
        %8295 = vmatprep.mubr.bf16.mxu0 0
        %8296 = vmatmul.mubr.bf16.gmra.mrb[0].mxu0 %v7784
        %v8297 = vpop.f32.mrb[0].mxu0
        %v8298 = vadd.f32 0.0, %v8297
        %v8299 = vpop.f32.mrb[0].mxu0
        %v8300 = vpop.f32.mrb[0].mxu0
        %v8301 = vadd.f32 0.0, %v8300
        %v8302 = vpop.f32.mrb[0].mxu0
        %8303 = vmatprep.mubr.bf16.mxu0 0
        %8304 = vmatmul.mubr.bf16.gmra.mrb[0].mxu0 %v7787
        %v8305 = vpop.f32.mrb[0].mxu0
        %v8306 = vadd.f32 0.0, %v8305
        %v8307 = vpop.f32.mrb[0].mxu0
        %v8308 = vpop.f32.mrb[0].mxu0
        %v8309 = vadd.f32 0.0, %v8308
        %v8310 = vpop.f32.mrb[0].mxu0
        %8311 = vmatprep.mubr.bf16.mxu0 0
        %8312 = vmatmul.mubr.bf16.gmra.mrb[0].mxu0 %v7790
        %v8313 = vpop.f32.mrb[0].mxu0
        %v8314 = vadd.f32 0.0, %v8313
        %v8315 = vpop.f32.mrb[0].mxu0
        %v8316 = vpop.f32.mrb[0].mxu0
        %v8317 = vadd.f32 0.0, %v8316
        %v8318 = vpop.f32.mrb[0].mxu0
        %8319 = vmatprep.mubr.bf16.mxu0 0
        %8320 = vmatmul.mubr.bf16.gmra.mrb[0].mxu0 %v7793
        %v8321 = vpop.f32.mrb[0].mxu0
        %v8322 = vadd.f32 0.0, %v8321
        %v8323 = vpop.f32.mrb[0].mxu0
        %v8324 = vpop.f32.mrb[0].mxu0
        %v8325 = vadd.f32 0.0, %v8324
        %v8326 = vpop.f32.mrb[0].mxu0
        %8327 = vmatprep.mubr.bf16.mxu0 0
        %8328 = vmatmul.mubr.bf16.gmra.mrb[0].mxu0 %v7796
        %v8329 = vpop.f32.mrb[0].mxu0
        %v8330 = vadd.f32 0.0, %v8329
        %v8331 = vpop.f32.mrb[0].mxu0
        %v8332 = vpop.f32.mrb[0].mxu0
        %v8333 = vadd.f32 0.0, %v8332
        %v8334 = vpop.f32.mrb[0].mxu0
        %8335 = vmatprep.mubr.bf16.mxu0 0
        %8336 = vmatmul.mubr.bf16.gmra.mrb[0].mxu0 %v7799
        %v8337 = vpop.f32.mrb[0].mxu0
        %v8338 = vadd.f32 0.0, %v8337
        %v8339 = vpop.f32.mrb[0].mxu0
        %v8340 = vpop.f32.mrb[0].mxu0
        %v8341 = vadd.f32 0.0, %v8340
        %v8342 = vpop.f32.mrb[0].mxu0
        %8343 = vmatprep.mubr.bf16.mxu0 0
        %8344 = vmatmul.mubr.bf16.gmra.mrb[0].mxu0 %v7802
        %v8345 = vpop.f32.mrb[0].mxu0
        %v8346 = vadd.f32 0.0, %v8345
        %v8347 = vpop.f32.mrb[0].mxu0
        %v8348 = vpop.f32.mrb[0].mxu0
        %v8349 = vadd.f32 0.0, %v8348
        %v8350 = vpop.f32.mrb[0].mxu0
        %8351 = vdwg.mxu0
        %v8352 = vadd.f32 %v7290, %v7842
        %v8353 = vadd.f32 %v7291, %v7845
        %v8354 = vadd.f32 %v7292, %v7850
        %v8355 = vadd.f32 %v7293, %v7853
        %v8356 = vadd.f32 %v7294, %v7858
        %v8357 = vadd.f32 %v7295, %v7861
        %v8358 = vadd.f32 %v7296, %v7866
        %v8359 = vadd.f32 %v7297, %v7869
        %v8360 = vadd.f32 %v7298, %v7874
        %v8361 = vadd.f32 %v7299, %v7877
        %v8362 = vadd.f32 %v7300, %v7882
        %v8363 = vadd.f32 %v7301, %v7885
        %v8364 = vadd.f32 %v7302, %v7890
        %v8365 = vadd.f32 %v7303, %v7893
        %v8366 = vadd.f32 %v7304, %v7898
        %v8367 = vadd.f32 %v7305, %v7901
        %v8368 = vadd.f32 %v7306, %v7906
        %v8369 = vadd.f32 %v7307, %v7909
        %v8370 = vadd.f32 %v7308, %v7914
        %v8371 = vadd.f32 %v7309, %v7917
        %v8372 = vadd.f32 %v7310, %v7922
        %v8373 = vadd.f32 %v7311, %v7925
        %v8374 = vadd.f32 %v7312, %v7930
        %v8375 = vadd.f32 %v7313, %v7933
        %v8376 = vadd.f32 %v7314, %v7938
        %v8377 = vadd.f32 %v7315, %v7941
        %v8378 = vadd.f32 %v7316, %v7946
        %v8379 = vadd.f32 %v7317, %v7949
        %v8380 = vadd.f32 %v7318, %v7954
        %v8381 = vadd.f32 %v7319, %v7957
        %v8382 = vadd.f32 %v7320, %v7962
        %v8383 = vadd.f32 %v7321, %v7965
        %v8384 = vadd.f32 %v7322, %v7970
        %v8385 = vadd.f32 %v7323, %v7973
        %v8386 = vadd.f32 %v7324, %v7978
        %v8387 = vadd.f32 %v7325, %v7981
        %v8388 = vadd.f32 %v7326, %v7986
        %v8389 = vadd.f32 %v7327, %v7989
        %v8390 = vadd.f32 %v7328, %v7994
        %v8391 = vadd.f32 %v7329, %v7997
        %v8392 = vadd.f32 %v7330, %v8002
        %v8393 = vadd.f32 %v7331, %v8005
        %v8394 = vadd.f32 %v7332, %v8010
        %v8395 = vadd.f32 %v7333, %v8013
        %v8396 = vadd.f32 %v7334, %v8018
        %v8397 = vadd.f32 %v7335, %v8021
        %v8398 = vadd.f32 %v7336, %v8026
        %v8399 = vadd.f32 %v7337, %v8029
        %v8400 = vadd.f32 %v7338, %v8034
        %v8401 = vadd.f32 %v7339, %v8037
        %v8402 = vadd.f32 %v7340, %v8042
        %v8403 = vadd.f32 %v7341, %v8045
        %v8404 = vadd.f32 %v7342, %v8050
        %v8405 = vadd.f32 %v7343, %v8053
        %v8406 = vadd.f32 %v7344, %v8058
        %v8407 = vadd.f32 %v7345, %v8061
        %v8408 = vadd.f32 %v7346, %v8066
        %v8409 = vadd.f32 %v7347, %v8069
        %v8410 = vadd.f32 %v7348, %v8074
        %v8411 = vadd.f32 %v7349, %v8077
        %v8412 = vadd.f32 %v7350, %v8082
        %v8413 = vadd.f32 %v7351, %v8085
        %v8414 = vadd.f32 %v7352, %v8090
        %v8415 = vadd.f32 %v7353, %v8093
        %v8416 = vadd.f32 %v7354, %v8098
        %v8417 = vadd.f32 %v7355, %v8101
        %v8418 = vadd.f32 %v7356, %v8106
        %v8419 = vadd.f32 %v7357, %v8109
        %v8420 = vadd.f32 %v7358, %v8114
        %v8421 = vadd.f32 %v7359, %v8117
        %v8422 = vadd.f32 %v7360, %v8122
        %v8423 = vadd.f32 %v7361, %v8125
        %v8424 = vadd.f32 %v7362, %v8130
        %v8425 = vadd.f32 %v7363, %v8133
        %v8426 = vadd.f32 %v7364, %v8138
        %v8427 = vadd.f32 %v7365, %v8141
        %v8428 = vadd.f32 %v7366, %v8146
        %v8429 = vadd.f32 %v7367, %v8149
        %v8430 = vadd.f32 %v7368, %v8154
        %v8431 = vadd.f32 %v7369, %v8157
        %v8432 = vadd.f32 %v7370, %v8162
        %v8433 = vadd.f32 %v7371, %v8165
        %v8434 = vadd.f32 %v7372, %v8170
        %v8435 = vadd.f32 %v7373, %v8173
        %v8436 = vadd.f32 %v7374, %v8178
        %v8437 = vadd.f32 %v7375, %v8181
        %v8438 = vadd.f32 %v7376, %v8186
        %v8439 = vadd.f32 %v7377, %v8189
        %v8440 = vadd.f32 %v7378, %v8194
        %v8441 = vadd.f32 %v7379, %v8197
        %v8442 = vadd.f32 %v7380, %v8202
        %v8443 = vadd.f32 %v7381, %v8205
        %v8444 = vadd.f32 %v7382, %v8210
        %v8445 = vadd.f32 %v7383, %v8213
        %v8446 = vadd.f32 %v7384, %v8218
        %v8447 = vadd.f32 %v7385, %v8221
        %v8448 = vadd.f32 %v7386, %v8226
        %v8449 = vadd.f32 %v7387, %v8229
        %v8450 = vadd.f32 %v7388, %v8234
        %v8451 = vadd.f32 %v7389, %v8237
        %v8452 = vadd.f32 %v7390, %v8242
        %v8453 = vadd.f32 %v7391, %v8245
        %v8454 = vadd.f32 %v7392, %v8250
        %v8455 = vadd.f32 %v7393, %v8253
        %v8456 = vadd.f32 %v7394, %v8258
        %v8457 = vadd.f32 %v7395, %v8261
        %v8458 = vadd.f32 %v7396, %v8266
        %v8459 = vadd.f32 %v7397, %v8269
        %v8460 = vadd.f32 %v7398, %v8274
        %v8461 = vadd.f32 %v7399, %v8277
        %v8462 = vadd.f32 %v7400, %v8282
        %v8463 = vadd.f32 %v7401, %v8285
        %v8464 = vadd.f32 %v7402, %v8290
        %v8465 = vadd.f32 %v7403, %v8293
        %v8466 = vadd.f32 %v7404, %v8298
        %v8467 = vadd.f32 %v7405, %v8301
        %v8468 = vadd.f32 %v7406, %v8306
        %v8469 = vadd.f32 %v7407, %v8309
        %v8470 = vadd.f32 %v7408, %v8314
        %v8471 = vadd.f32 %v7409, %v8317
        %v8472 = vadd.f32 %v7410, %v8322
        %v8473 = vadd.f32 %v7411, %v8325
        %v8474 = vadd.f32 %v7412, %v8330
        %v8475 = vadd.f32 %v7413, %v8333
        %v8476 = vadd.f32 %v7414, %v8338
        %v8477 = vadd.f32 %v7415, %v8341
        %v8478 = vadd.f32 %v7416, %v8346
        %v8479 = vadd.f32 %v7417, %v8349
        %v8480 = vld [vmem:[%s6355 + $0x2] sm:$0xff]
        %v8481 = vld [vmem:[%s6355 + $0xa] sm:$0xff]
        %v8482 = vld [vmem:[%s6355 + $0x12] sm:$0xff]
        %v8483 = vld [vmem:[%s6355 + $0x1a] sm:$0xff]
        %v8484 = vld [vmem:[%s6355 + $0x2a] sm:$0xff]
        %v8485 = vld [vmem:[%s6355 + $0x32] sm:$0xff]
        %v8486 = vld [vmem:[%s6355 + $0x3a] sm:$0xff]
        %v8487 = vld [vmem:[%s6355 + $0x42] sm:$0xff]
        %v8488 = vld [vmem:[%s6355 + $0x52] sm:$0xff]
        %v8489 = vld [vmem:[%s6355 + $0x5a] sm:$0xff]
        %v8490 = vld [vmem:[%s6355 + $0x62] sm:$0xff]
        %v8491 = vld [vmem:[%s6355 + $0x6a] sm:$0xff]
        %v8492 = vld [vmem:[%s6355 + $0x7a] sm:$0xff]
        %v8493 = vld [vmem:[%s6355 + $0x82] sm:$0xff]
        %v8494 = vld [vmem:[%s6355 + $0x8a] sm:$0xff]
        %v8495 = vld [vmem:[%s6355 + $0x92] sm:$0xff]
        %v8496 = vld [vmem:[%s6355 + $0xa2] sm:$0xff]
        %v8497 = vld [vmem:[%s6355 + $0xaa] sm:$0xff]
        %v8498 = vld [vmem:[%s6355 + $0xb2] sm:$0xff]
        %v8499 = vld [vmem:[%s6355 + $0xba] sm:$0xff]
        %v8500 = vld [vmem:[%s6355 + $0xca] sm:$0xff]
        %v8501 = vld [vmem:[%s6355 + $0xd2] sm:$0xff]
        %v8502 = vld [vmem:[%s6355 + $0xda] sm:$0xff]
        %v8503 = vld [vmem:[%s6355 + $0xe2] sm:$0xff]
        %v8504 = vld [vmem:[%s6355 + $0xf2] sm:$0xff]
        %v8505 = vld [vmem:[%s6355 + $0xfa] sm:$0xff]
        %v8506 = vld [vmem:[%s6355 + $0x102] sm:$0xff]
        %v8507 = vld [vmem:[%s6355 + $0x10a] sm:$0xff]
        %v8508 = vld [vmem:[%s6355 + $0x11a] sm:$0xff]
        %v8509 = vld [vmem:[%s6355 + $0x122] sm:$0xff]
        %v8510 = vld [vmem:[%s6355 + $0x12a] sm:$0xff]
        %v8511 = vld [vmem:[%s6355 + $0x132] sm:$0xff]
        %v8512 = vld [vmem:[%s6355 + $0x142] sm:$0xff]
        %v8513 = vld [vmem:[%s6355 + $0x14a] sm:$0xff]
        %v8514 = vld [vmem:[%s6355 + $0x152] sm:$0xff]
        %v8515 = vld [vmem:[%s6355 + $0x15a] sm:$0xff]
        %v8516 = vld [vmem:[%s6355 + $0x16a] sm:$0xff]
        %v8517 = vld [vmem:[%s6355 + $0x172] sm:$0xff]
        %v8518 = vld [vmem:[%s6355 + $0x17a] sm:$0xff]
        %v8519 = vld [vmem:[%s6355 + $0x182] sm:$0xff]
        %v8520 = vld [vmem:[%s6355 + $0x192] sm:$0xff]
        %v8521 = vld [vmem:[%s6355 + $0x19a] sm:$0xff]
        %v8522 = vld [vmem:[%s6355 + $0x1a2] sm:$0xff]
        %v8523 = vld [vmem:[%s6355 + $0x1aa] sm:$0xff]
        %v8524 = vld [vmem:[%s6355 + $0x1ba] sm:$0xff]
        %v8525 = vld [vmem:[%s6355 + $0x1c2] sm:$0xff]
        %v8526 = vld [vmem:[%s6355 + $0x1ca] sm:$0xff]
        %v8527 = vld [vmem:[%s6355 + $0x1d2] sm:$0xff]
        %v8528 = vld [vmem:[%s6355 + $0x1e2] sm:$0xff]
        %v8529 = vld [vmem:[%s6355 + $0x1ea] sm:$0xff]
        %v8530 = vld [vmem:[%s6355 + $0x1f2] sm:$0xff]
        %v8531 = vld [vmem:[%s6355 + $0x1fa] sm:$0xff]
        %v8532 = vld [vmem:[%s6355 + $0x20a] sm:$0xff]
        %v8533 = vld [vmem:[%s6355 + $0x212] sm:$0xff]
        %v8534 = vld [vmem:[%s6355 + $0x21a] sm:$0xff]
        %v8535 = vld [vmem:[%s6355 + $0x222] sm:$0xff]
        %v8536 = vld [vmem:[%s6355 + $0x232] sm:$0xff]
        %v8537 = vld [vmem:[%s6355 + $0x23a] sm:$0xff]
        %v8538 = vld [vmem:[%s6355 + $0x242] sm:$0xff]
        %v8539 = vld [vmem:[%s6355 + $0x24a] sm:$0xff]
        %v8540 = vld [vmem:[%s6355 + $0x25a] sm:$0xff]
        %v8541 = vld [vmem:[%s6355 + $0x262] sm:$0xff]
        %v8542 = vld [vmem:[%s6355 + $0x26a] sm:$0xff]
        %v8543 = vld [vmem:[%s6355 + $0x272] sm:$0xff]
        %v8544 = vld [vmem:[%s6355 + $0x282] sm:$0xff]
        %v8545 = vld [vmem:[%s6355 + $0x28a] sm:$0xff]
        %v8546 = vld [vmem:[%s6355 + $0x292] sm:$0xff]
        %v8547 = vld [vmem:[%s6355 + $0x29a] sm:$0xff]
        %v8548 = vld [vmem:[%s6355 + $0x2aa] sm:$0xff]
        %v8549 = vld [vmem:[%s6355 + $0x2b2] sm:$0xff]
        %v8550 = vld [vmem:[%s6355 + $0x2ba] sm:$0xff]
        %v8551 = vld [vmem:[%s6355 + $0x2c2] sm:$0xff]
        %v8552 = vld [vmem:[%s6355 + $0x2d2] sm:$0xff]
        %v8553 = vld [vmem:[%s6355 + $0x2da] sm:$0xff]
        %v8554 = vld [vmem:[%s6355 + $0x2e2] sm:$0xff]
        %v8555 = vld [vmem:[%s6355 + $0x2ea] sm:$0xff]
        %v8556 = vld [vmem:[%s6355 + $0x2fa] sm:$0xff]
        %v8557 = vld [vmem:[%s6355 + $0x302] sm:$0xff]
        %v8558 = vld [vmem:[%s6355 + $0x30a] sm:$0xff]
        %v8559 = vld [vmem:[%s6355 + $0x312] sm:$0xff]
        %v8560 = vld [vmem:[%s6355 + $0x322] sm:$0xff]
        %v8561 = vld [vmem:[%s6355 + $0x32a] sm:$0xff]
        %v8562 = vld [vmem:[%s6355 + $0x332] sm:$0xff]
        %v8563 = vld [vmem:[%s6355 + $0x33a] sm:$0xff]
        %v8564 = vld [vmem:[%s6355 + $0x34a] sm:$0xff]
        %v8565 = vld [vmem:[%s6355 + $0x352] sm:$0xff]
        %v8566 = vld [vmem:[%s6355 + $0x35a] sm:$0xff]
        %v8567 = vld [vmem:[%s6355 + $0x362] sm:$0xff]
        %v8568 = vld [vmem:[%s6355 + $0x372] sm:$0xff]
        %v8569 = vld [vmem:[%s6355 + $0x37a] sm:$0xff]
        %v8570 = vld [vmem:[%s6355 + $0x382] sm:$0xff]
        %v8571 = vld [vmem:[%s6355 + $0x38a] sm:$0xff]
        %v8572 = vld [vmem:[%s6355 + $0x39a] sm:$0xff]
        %v8573 = vld [vmem:[%s6355 + $0x3a2] sm:$0xff]
        %v8574 = vld [vmem:[%s6355 + $0x3aa] sm:$0xff]
        %v8575 = vld [vmem:[%s6355 + $0x3b2] sm:$0xff]
        %v8576 = vld [vmem:[%s6355 + $0x3c2] sm:$0xff]
        %v8577 = vld [vmem:[%s6355 + $0x3ca] sm:$0xff]
        %v8578 = vld [vmem:[%s6355 + $0x3d2] sm:$0xff]
        %v8579 = vld [vmem:[%s6355 + $0x3da] sm:$0xff]
        %v8580 = vld [vmem:[%s6355 + $0x3ea] sm:$0xff]
        %v8581 = vld [vmem:[%s6355 + $0x3f2] sm:$0xff]
        %v8582 = vld [vmem:[%s6355 + $0x3fa] sm:$0xff]
        %v8583 = vld [vmem:[%s6355 + $0x402] sm:$0xff]
        %v8584 = vld [vmem:[%s6355 + $0x412] sm:$0xff]
        %v8585 = vld [vmem:[%s6355 + $0x41a] sm:$0xff]
        %v8586 = vld [vmem:[%s6355 + $0x422] sm:$0xff]
        %v8587 = vld [vmem:[%s6355 + $0x42a] sm:$0xff]
        %v8588 = vld [vmem:[%s6355 + $0x43a] sm:$0xff]
        %v8589 = vld [vmem:[%s6355 + $0x442] sm:$0xff]
        %v8590 = vld [vmem:[%s6355 + $0x44a] sm:$0xff]
        %v8591 = vld [vmem:[%s6355 + $0x452] sm:$0xff]
        %v8592 = vld [vmem:[%s6355 + $0x462] sm:$0xff]
        %v8593 = vld [vmem:[%s6355 + $0x46a] sm:$0xff]
        %v8594 = vld [vmem:[%s6355 + $0x472] sm:$0xff]
        %v8595 = vld [vmem:[%s6355 + $0x47a] sm:$0xff]
        %v8596 = vld [vmem:[%s6355 + $0x48a] sm:$0xff]
        %v8597 = vld [vmem:[%s6355 + $0x492] sm:$0xff]
        %v8598 = vld [vmem:[%s6355 + $0x49a] sm:$0xff]
        %v8599 = vld [vmem:[%s6355 + $0x4a2] sm:$0xff]
        %v8600 = vld [vmem:[%s6355 + $0x4b2] sm:$0xff]
        %v8601 = vld [vmem:[%s6355 + $0x4ba] sm:$0xff]
        %v8602 = vld [vmem:[%s6355 + $0x4c2] sm:$0xff]
        %v8603 = vld [vmem:[%s6355 + $0x4ca] sm:$0xff]
        %v8604 = vld [vmem:[%s6355 + $0x4da] sm:$0xff]
        %v8605 = vld [vmem:[%s6355 + $0x4e2] sm:$0xff]
        %v8606 = vld [vmem:[%s6355 + $0x4ea] sm:$0xff]
        %v8607 = vld [vmem:[%s6355 + $0x4f2] sm:$0xff]
        %v8608 = vpack.c.bf16 %v8481, %v8480
        %v8609 = vpack.c.bf16 %v8483, %v8482
        %v8610 = vpack.c.bf16 %v8485, %v8484
        %v8611 = vpack.c.bf16 %v8487, %v8486
        %v8612 = vpack.c.bf16 %v8489, %v8488
        %v8613 = vpack.c.bf16 %v8491, %v8490
        %v8614 = vpack.c.bf16 %v8493, %v8492
        %v8615 = vpack.c.bf16 %v8495, %v8494
        %v8616 = vpack.c.bf16 %v8497, %v8496
        %v8617 = vpack.c.bf16 %v8499, %v8498
        %v8618 = vpack.c.bf16 %v8501, %v8500
        %v8619 = vpack.c.bf16 %v8503, %v8502
        %v8620 = vpack.c.bf16 %v8505, %v8504
        %v8621 = vpack.c.bf16 %v8507, %v8506
        %v8622 = vpack.c.bf16 %v8509, %v8508
        %v8623 = vpack.c.bf16 %v8511, %v8510
        %v8624 = vpack.c.bf16 %v8513, %v8512
        %v8625 = vpack.c.bf16 %v8515, %v8514
        %v8626 = vpack.c.bf16 %v8517, %v8516
        %v8627 = vpack.c.bf16 %v8519, %v8518
        %v8628 = vpack.c.bf16 %v8521, %v8520
        %v8629 = vpack.c.bf16 %v8523, %v8522
        %v8630 = vpack.c.bf16 %v8525, %v8524
        %v8631 = vpack.c.bf16 %v8527, %v8526
        %v8632 = vpack.c.bf16 %v8529, %v8528
        %v8633 = vpack.c.bf16 %v8531, %v8530
        %v8634 = vpack.c.bf16 %v8533, %v8532
        %v8635 = vpack.c.bf16 %v8535, %v8534
        %v8636 = vpack.c.bf16 %v8537, %v8536
        %v8637 = vpack.c.bf16 %v8539, %v8538
        %v8638 = vpack.c.bf16 %v8541, %v8540
        %v8639 = vpack.c.bf16 %v8543, %v8542
        %v8640 = vpack.c.bf16 %v8545, %v8544
        %v8641 = vpack.c.bf16 %v8547, %v8546
        %v8642 = vpack.c.bf16 %v8549, %v8548
        %v8643 = vpack.c.bf16 %v8551, %v8550
        %v8644 = vpack.c.bf16 %v8553, %v8552
        %v8645 = vpack.c.bf16 %v8555, %v8554
        %v8646 = vpack.c.bf16 %v8557, %v8556
        %v8647 = vpack.c.bf16 %v8559, %v8558
        %v8648 = vpack.c.bf16 %v8561, %v8560
        %v8649 = vpack.c.bf16 %v8563, %v8562
        %v8650 = vpack.c.bf16 %v8565, %v8564
        %v8651 = vpack.c.bf16 %v8567, %v8566
        %v8652 = vpack.c.bf16 %v8569, %v8568
        %v8653 = vpack.c.bf16 %v8571, %v8570
        %v8654 = vpack.c.bf16 %v8573, %v8572
        %v8655 = vpack.c.bf16 %v8575, %v8574
        %v8656 = vpack.c.bf16 %v8577, %v8576
        %v8657 = vpack.c.bf16 %v8579, %v8578
        %v8658 = vpack.c.bf16 %v8581, %v8580
        %v8659 = vpack.c.bf16 %v8583, %v8582
        %v8660 = vpack.c.bf16 %v8585, %v8584
        %v8661 = vpack.c.bf16 %v8587, %v8586
        %v8662 = vpack.c.bf16 %v8589, %v8588
        %v8663 = vpack.c.bf16 %v8591, %v8590
        %v8664 = vpack.c.bf16 %v8593, %v8592
        %v8665 = vpack.c.bf16 %v8595, %v8594
        %v8666 = vpack.c.bf16 %v8597, %v8596
        %v8667 = vpack.c.bf16 %v8599, %v8598
        %v8668 = vpack.c.bf16 %v8601, %v8600
        %v8669 = vpack.c.bf16 %v8603, %v8602
        %v8670 = vpack.c.bf16 %v8605, %v8604
        %v8671 = vpack.c.bf16 %v8607, %v8606
        %s8672 = scalar_lea.vmem %s232, 16
        %v8673 = vld [vmem:[%s8672] sm:$0x3]
        %v8675 = vsel %vm621, %v8608, 0
        %v8678 = vsel %vm621, %v8609, 0
        %v8681 = vsel %vm621, %v8610, 0
        %v8684 = vsel %vm621, %v8611, 0
        %v8687 = vsel %vm621, %v8612, 0
        %v8690 = vsel %vm621, %v8613, 0
        %v8693 = vsel %vm621, %v8614, 0
        %v8696 = vsel %vm621, %v8615, 0
        %v8699 = vsel %vm621, %v8616, 0
        %v8702 = vsel %vm621, %v8617, 0
        %v8705 = vsel %vm621, %v8618, 0
        %v8708 = vsel %vm621, %v8619, 0
        %v8711 = vsel %vm621, %v8620, 0
        %v8714 = vsel %vm621, %v8621, 0
        %v8717 = vsel %vm621, %v8622, 0
        %v8720 = vsel %vm621, %v8623, 0
        %v8723 = vsel %vm621, %v8624, 0
        %v8726 = vsel %vm621, %v8625, 0
        %v8729 = vsel %vm621, %v8626, 0
        %v8732 = vsel %vm621, %v8627, 0
        %v8735 = vsel %vm621, %v8628, 0
        %v8738 = vsel %vm621, %v8629, 0
        %v8741 = vsel %vm621, %v8630, 0
        %v8744 = vsel %vm621, %v8631, 0
        %v8747 = vsel %vm621, %v8632, 0
        %v8750 = vsel %vm621, %v8633, 0
        %v8753 = vsel %vm621, %v8634, 0
        %v8756 = vsel %vm621, %v8635, 0
        %v8759 = vsel %vm621, %v8636, 0
        %v8762 = vsel %vm621, %v8637, 0
        %v8765 = vsel %vm621, %v8638, 0
        %v8768 = vsel %vm621, %v8639, 0
        %v8771 = vsel %vm621, %v8640, 0
        %v8774 = vsel %vm621, %v8641, 0
        %v8777 = vsel %vm621, %v8642, 0
        %v8780 = vsel %vm621, %v8643, 0
        %v8783 = vsel %vm621, %v8644, 0
        %v8786 = vsel %vm621, %v8645, 0
        %v8789 = vsel %vm621, %v8646, 0
        %v8792 = vsel %vm621, %v8647, 0
        %v8795 = vsel %vm621, %v8648, 0
        %v8798 = vsel %vm621, %v8649, 0
        %v8801 = vsel %vm621, %v8650, 0
        %v8804 = vsel %vm621, %v8651, 0
        %v8807 = vsel %vm621, %v8652, 0
        %v8810 = vsel %vm621, %v8653, 0
        %v8813 = vsel %vm621, %v8654, 0
        %v8816 = vsel %vm621, %v8655, 0
        %v8819 = vsel %vm621, %v8656, 0
        %v8822 = vsel %vm621, %v8657, 0
        %v8825 = vsel %vm621, %v8658, 0
        %v8828 = vsel %vm621, %v8659, 0
        %v8831 = vsel %vm621, %v8660, 0
        %v8834 = vsel %vm621, %v8661, 0
        %v8837 = vsel %vm621, %v8662, 0
        %v8840 = vsel %vm621, %v8663, 0
        %v8843 = vsel %vm621, %v8664, 0
        %v8846 = vsel %vm621, %v8665, 0
        %v8849 = vsel %vm621, %v8666, 0
        %v8852 = vsel %vm621, %v8667, 0
        %v8855 = vsel %vm621, %v8668, 0
        %v8858 = vsel %vm621, %v8669, 0
        %v8861 = vsel %vm621, %v8670, 0
        %v8864 = vsel %vm621, %v8671, 0
        %v8867 = vand.u32 %v8673, %v817
        %8869 = vmatprep.subr.bf16.mxu0 0
        %8870 = vmatpush1.bf16.msra.mxu0 %v8867
        %8871 = vmatprep.subr.bf16.mxu0 0
        %8872 = vmatpush1.bf16.msra.mxu0 0
        %8873 = vmatprep.subr.bf16.mxu0 0
        %8874 = vmatpush1.bf16.msra.mxu0 0
        %8875 = vmatprep.subr.bf16.mxu0 0
        %8876 = vmatpush1.bf16.msra.mxu0 0
        %8877 = vmatprep.subr.bf16.mxu0 0
        %8878 = vmatpush1.bf16.msra.mxu0 0
        %8879 = vmatprep.subr.bf16.mxu0 0
        %8880 = vmatpush1.bf16.msra.mxu0 0
        %8881 = vmatprep.subr.bf16.mxu0 0
        %8882 = vmatpush1.bf16.msra.mxu0 0
        %8883 = vmatprep.subr.bf16.mxu0 0
        %8884 = vmatpush1.bf16.msra.mxu0 0
        %8885 = vmatprep.subr.bf16.mxu0 0
        %8886 = vmatpush1.bf16.msra.mxu0 0
        %8887 = vmatprep.subr.bf16.mxu0 0
        %8888 = vmatpush1.bf16.msra.mxu0 0
        %8889 = vmatprep.subr.bf16.mxu0 0
        %8890 = vmatpush1.bf16.msra.mxu0 0
        %8891 = vmatprep.subr.bf16.mxu0 0
        %8892 = vmatpush1.bf16.msra.mxu0 0
        %8893 = vmatprep.subr.bf16.mxu0 0
        %8894 = vmatpush1.bf16.msra.mxu0 0
        %8895 = vmatprep.subr.bf16.mxu0 0
        %8896 = vmatpush1.bf16.msra.mxu0 0
        %8897 = vmatprep.subr.bf16.mxu0 0
        %8898 = vmatpush1.bf16.msra.mxu0 0
        %8899 = vmatprep.subr.bf16.mxu0 0
        %8900 = vmatpush1.bf16.msra.mxu0 0
        %8901 = vmatprep.mubr.bf16.mxu0 0
        %8902 = vmatmul.mubr.bf16.gmra.mrb[0].mxu0 %v8675
        %v8903 = vpop.f32.mrb[0].mxu0
        %v8904 = vadd.f32 0.0, %v8903
        %v8905 = vpop.f32.mrb[0].mxu0
        %v8906 = vpop.f32.mrb[0].mxu0
        %v8907 = vadd.f32 0.0, %v8906
        %v8908 = vpop.f32.mrb[0].mxu0
        %8909 = vmatprep.mubr.bf16.mxu0 0
        %8910 = vmatmul.mubr.bf16.gmra.mrb[0].mxu0 %v8678
        %v8911 = vpop.f32.mrb[0].mxu0
        %v8912 = vadd.f32 0.0, %v8911
        %v8913 = vpop.f32.mrb[0].mxu0
        %v8914 = vpop.f32.mrb[0].mxu0
        %v8915 = vadd.f32 0.0, %v8914
        %v8916 = vpop.f32.mrb[0].mxu0
        %8917 = vmatprep.mubr.bf16.mxu0 0
        %8918 = vmatmul.mubr.bf16.gmra.mrb[0].mxu0 %v8681
        %v8919 = vpop.f32.mrb[0].mxu0
        %v8920 = vadd.f32 0.0, %v8919
        %v8921 = vpop.f32.mrb[0].mxu0
        %v8922 = vpop.f32.mrb[0].mxu0
        %v8923 = vadd.f32 0.0, %v8922
        %v8924 = vpop.f32.mrb[0].mxu0
        %8925 = vmatprep.mubr.bf16.mxu0 0
        %8926 = vmatmul.mubr.bf16.gmra.mrb[0].mxu0 %v8684
        %v8927 = vpop.f32.mrb[0].mxu0
        %v8928 = vadd.f32 0.0, %v8927
        %v8929 = vpop.f32.mrb[0].mxu0
        %v8930 = vpop.f32.mrb[0].mxu0
        %v8931 = vadd.f32 0.0, %v8930
        %v8932 = vpop.f32.mrb[0].mxu0
        %8933 = vmatprep.mubr.bf16.mxu0 0
        %8934 = vmatmul.mubr.bf16.gmra.mrb[0].mxu0 %v8687
        %v8935 = vpop.f32.mrb[0].mxu0
        %v8936 = vadd.f32 0.0, %v8935
        %v8937 = vpop.f32.mrb[0].mxu0
        %v8938 = vpop.f32.mrb[0].mxu0
        %v8939 = vadd.f32 0.0, %v8938
        %v8940 = vpop.f32.mrb[0].mxu0
        %8941 = vmatprep.mubr.bf16.mxu0 0
        %8942 = vmatmul.mubr.bf16.gmra.mrb[0].mxu0 %v8690
        %v8943 = vpop.f32.mrb[0].mxu0
        %v8944 = vadd.f32 0.0, %v8943
        %v8945 = vpop.f32.mrb[0].mxu0
        %v8946 = vpop.f32.mrb[0].mxu0
        %v8947 = vadd.f32 0.0, %v8946
        %v8948 = vpop.f32.mrb[0].mxu0
        %8949 = vmatprep.mubr.bf16.mxu0 0
        %8950 = vmatmul.mubr.bf16.gmra.mrb[0].mxu0 %v8693
        %v8951 = vpop.f32.mrb[0].mxu0
        %v8952 = vadd.f32 0.0, %v8951
        %v8953 = vpop.f32.mrb[0].mxu0
        %v8954 = vpop.f32.mrb[0].mxu0
        %v8955 = vadd.f32 0.0, %v8954
        %v8956 = vpop.f32.mrb[0].mxu0
        %8957 = vmatprep.mubr.bf16.mxu0 0
        %8958 = vmatmul.mubr.bf16.gmra.mrb[0].mxu0 %v8696
        %v8959 = vpop.f32.mrb[0].mxu0
        %v8960 = vadd.f32 0.0, %v8959
        %v8961 = vpop.f32.mrb[0].mxu0
        %v8962 = vpop.f32.mrb[0].mxu0
        %v8963 = vadd.f32 0.0, %v8962
        %v8964 = vpop.f32.mrb[0].mxu0
        %8965 = vmatprep.mubr.bf16.mxu0 0
        %8966 = vmatmul.mubr.bf16.gmra.mrb[0].mxu0 %v8699
        %v8967 = vpop.f32.mrb[0].mxu0
        %v8968 = vadd.f32 0.0, %v8967
        %v8969 = vpop.f32.mrb[0].mxu0
        %v8970 = vpop.f32.mrb[0].mxu0
        %v8971 = vadd.f32 0.0, %v8970
        %v8972 = vpop.f32.mrb[0].mxu0
        %8973 = vmatprep.mubr.bf16.mxu0 0
        %8974 = vmatmul.mubr.bf16.gmra.mrb[0].mxu0 %v8702
        %v8975 = vpop.f32.mrb[0].mxu0
        %v8976 = vadd.f32 0.0, %v8975
        %v8977 = vpop.f32.mrb[0].mxu0
        %v8978 = vpop.f32.mrb[0].mxu0
        %v8979 = vadd.f32 0.0, %v8978
        %v8980 = vpop.f32.mrb[0].mxu0
        %8981 = vmatprep.mubr.bf16.mxu0 0
        %8982 = vmatmul.mubr.bf16.gmra.mrb[0].mxu0 %v8705
        %v8983 = vpop.f32.mrb[0].mxu0
        %v8984 = vadd.f32 0.0, %v8983
        %v8985 = vpop.f32.mrb[0].mxu0
        %v8986 = vpop.f32.mrb[0].mxu0
        %v8987 = vadd.f32 0.0, %v8986
        %v8988 = vpop.f32.mrb[0].mxu0
        %8989 = vmatprep.mubr.bf16.mxu0 0
        %8990 = vmatmul.mubr.bf16.gmra.mrb[0].mxu0 %v8708
        %v8991 = vpop.f32.mrb[0].mxu0
        %v8992 = vadd.f32 0.0, %v8991
        %v8993 = vpop.f32.mrb[0].mxu0
        %v8994 = vpop.f32.mrb[0].mxu0
        %v8995 = vadd.f32 0.0, %v8994
        %v8996 = vpop.f32.mrb[0].mxu0
        %8997 = vmatprep.mubr.bf16.mxu0 0
        %8998 = vmatmul.mubr.bf16.gmra.mrb[0].mxu0 %v8711
        %v8999 = vpop.f32.mrb[0].mxu0
        %v9000 = vadd.f32 0.0, %v8999
        %v9001 = vpop.f32.mrb[0].mxu0
        %v9002 = vpop.f32.mrb[0].mxu0
        %v9003 = vadd.f32 0.0, %v9002
        %v9004 = vpop.f32.mrb[0].mxu0
        %9005 = vmatprep.mubr.bf16.mxu0 0
        %9006 = vmatmul.mubr.bf16.gmra.mrb[0].mxu0 %v8714
        %v9007 = vpop.f32.mrb[0].mxu0
        %v9008 = vadd.f32 0.0, %v9007
        %v9009 = vpop.f32.mrb[0].mxu0
        %v9010 = vpop.f32.mrb[0].mxu0
        %v9011 = vadd.f32 0.0, %v9010
        %v9012 = vpop.f32.mrb[0].mxu0
        %9013 = vmatprep.mubr.bf16.mxu0 0
        %9014 = vmatmul.mubr.bf16.gmra.mrb[0].mxu0 %v8717
        %v9015 = vpop.f32.mrb[0].mxu0
        %v9016 = vadd.f32 0.0, %v9015
        %v9017 = vpop.f32.mrb[0].mxu0
        %v9018 = vpop.f32.mrb[0].mxu0
        %v9019 = vadd.f32 0.0, %v9018
        %v9020 = vpop.f32.mrb[0].mxu0
        %9021 = vmatprep.mubr.bf16.mxu0 0
        %9022 = vmatmul.mubr.bf16.gmra.mrb[0].mxu0 %v8720
        %v9023 = vpop.f32.mrb[0].mxu0
        %v9024 = vadd.f32 0.0, %v9023
        %v9025 = vpop.f32.mrb[0].mxu0
        %v9026 = vpop.f32.mrb[0].mxu0
        %v9027 = vadd.f32 0.0, %v9026
        %v9028 = vpop.f32.mrb[0].mxu0
        %9029 = vmatprep.mubr.bf16.mxu0 0
        %9030 = vmatmul.mubr.bf16.gmra.mrb[0].mxu0 %v8723
        %v9031 = vpop.f32.mrb[0].mxu0
        %v9032 = vadd.f32 0.0, %v9031
        %v9033 = vpop.f32.mrb[0].mxu0
        %v9034 = vpop.f32.mrb[0].mxu0
        %v9035 = vadd.f32 0.0, %v9034
        %v9036 = vpop.f32.mrb[0].mxu0
        %9037 = vmatprep.mubr.bf16.mxu0 0
        %9038 = vmatmul.mubr.bf16.gmra.mrb[0].mxu0 %v8726
        %v9039 = vpop.f32.mrb[0].mxu0
        %v9040 = vadd.f32 0.0, %v9039
        %v9041 = vpop.f32.mrb[0].mxu0
        %v9042 = vpop.f32.mrb[0].mxu0
        %v9043 = vadd.f32 0.0, %v9042
        %v9044 = vpop.f32.mrb[0].mxu0
        %9045 = vmatprep.mubr.bf16.mxu0 0
        %9046 = vmatmul.mubr.bf16.gmra.mrb[0].mxu0 %v8729
        %v9047 = vpop.f32.mrb[0].mxu0
        %v9048 = vadd.f32 0.0, %v9047
        %v9049 = vpop.f32.mrb[0].mxu0
        %v9050 = vpop.f32.mrb[0].mxu0
        %v9051 = vadd.f32 0.0, %v9050
        %v9052 = vpop.f32.mrb[0].mxu0
        %9053 = vmatprep.mubr.bf16.mxu0 0
        %9054 = vmatmul.mubr.bf16.gmra.mrb[0].mxu0 %v8732
        %v9055 = vpop.f32.mrb[0].mxu0
        %v9056 = vadd.f32 0.0, %v9055
        %v9057 = vpop.f32.mrb[0].mxu0
        %v9058 = vpop.f32.mrb[0].mxu0
        %v9059 = vadd.f32 0.0, %v9058
        %v9060 = vpop.f32.mrb[0].mxu0
        %9061 = vmatprep.mubr.bf16.mxu0 0
        %9062 = vmatmul.mubr.bf16.gmra.mrb[0].mxu0 %v8735
        %v9063 = vpop.f32.mrb[0].mxu0
        %v9064 = vadd.f32 0.0, %v9063
        %v9065 = vpop.f32.mrb[0].mxu0
        %v9066 = vpop.f32.mrb[0].mxu0
        %v9067 = vadd.f32 0.0, %v9066
        %v9068 = vpop.f32.mrb[0].mxu0
        %9069 = vmatprep.mubr.bf16.mxu0 0
        %9070 = vmatmul.mubr.bf16.gmra.mrb[0].mxu0 %v8738
        %v9071 = vpop.f32.mrb[0].mxu0
        %v9072 = vadd.f32 0.0, %v9071
        %v9073 = vpop.f32.mrb[0].mxu0
        %v9074 = vpop.f32.mrb[0].mxu0
        %v9075 = vadd.f32 0.0, %v9074
        %v9076 = vpop.f32.mrb[0].mxu0
        %9077 = vmatprep.mubr.bf16.mxu0 0
        %9078 = vmatmul.mubr.bf16.gmra.mrb[0].mxu0 %v8741
        %v9079 = vpop.f32.mrb[0].mxu0
        %v9080 = vadd.f32 0.0, %v9079
        %v9081 = vpop.f32.mrb[0].mxu0
        %v9082 = vpop.f32.mrb[0].mxu0
        %v9083 = vadd.f32 0.0, %v9082
        %v9084 = vpop.f32.mrb[0].mxu0
        %9085 = vmatprep.mubr.bf16.mxu0 0
        %9086 = vmatmul.mubr.bf16.gmra.mrb[0].mxu0 %v8744
        %v9087 = vpop.f32.mrb[0].mxu0
        %v9088 = vadd.f32 0.0, %v9087
        %v9089 = vpop.f32.mrb[0].mxu0
        %v9090 = vpop.f32.mrb[0].mxu0
        %v9091 = vadd.f32 0.0, %v9090
        %v9092 = vpop.f32.mrb[0].mxu0
        %9093 = vmatprep.mubr.bf16.mxu0 0
        %9094 = vmatmul.mubr.bf16.gmra.mrb[0].mxu0 %v8747
        %v9095 = vpop.f32.mrb[0].mxu0
        %v9096 = vadd.f32 0.0, %v9095
        %v9097 = vpop.f32.mrb[0].mxu0
        %v9098 = vpop.f32.mrb[0].mxu0
        %v9099 = vadd.f32 0.0, %v9098
        %v9100 = vpop.f32.mrb[0].mxu0
        %9101 = vmatprep.mubr.bf16.mxu0 0
        %9102 = vmatmul.mubr.bf16.gmra.mrb[0].mxu0 %v8750
        %v9103 = vpop.f32.mrb[0].mxu0
        %v9104 = vadd.f32 0.0, %v9103
        %v9105 = vpop.f32.mrb[0].mxu0
        %v9106 = vpop.f32.mrb[0].mxu0
        %v9107 = vadd.f32 0.0, %v9106
        %v9108 = vpop.f32.mrb[0].mxu0
        %9109 = vmatprep.mubr.bf16.mxu0 0
        %9110 = vmatmul.mubr.bf16.gmra.mrb[0].mxu0 %v8753
        %v9111 = vpop.f32.mrb[0].mxu0
        %v9112 = vadd.f32 0.0, %v9111
        %v9113 = vpop.f32.mrb[0].mxu0
        %v9114 = vpop.f32.mrb[0].mxu0
        %v9115 = vadd.f32 0.0, %v9114
        %v9116 = vpop.f32.mrb[0].mxu0
        %9117 = vmatprep.mubr.bf16.mxu0 0
        %9118 = vmatmul.mubr.bf16.gmra.mrb[0].mxu0 %v8756
        %v9119 = vpop.f32.mrb[0].mxu0
        %v9120 = vadd.f32 0.0, %v9119
        %v9121 = vpop.f32.mrb[0].mxu0
        %v9122 = vpop.f32.mrb[0].mxu0
        %v9123 = vadd.f32 0.0, %v9122
        %v9124 = vpop.f32.mrb[0].mxu0
        %9125 = vmatprep.mubr.bf16.mxu0 0
        %9126 = vmatmul.mubr.bf16.gmra.mrb[0].mxu0 %v8759
        %v9127 = vpop.f32.mrb[0].mxu0
        %v9128 = vadd.f32 0.0, %v9127
        %v9129 = vpop.f32.mrb[0].mxu0
        %v9130 = vpop.f32.mrb[0].mxu0
        %v9131 = vadd.f32 0.0, %v9130
        %v9132 = vpop.f32.mrb[0].mxu0
        %9133 = vmatprep.mubr.bf16.mxu0 0
        %9134 = vmatmul.mubr.bf16.gmra.mrb[0].mxu0 %v8762
        %v9135 = vpop.f32.mrb[0].mxu0
        %v9136 = vadd.f32 0.0, %v9135
        %v9137 = vpop.f32.mrb[0].mxu0
        %v9138 = vpop.f32.mrb[0].mxu0
        %v9139 = vadd.f32 0.0, %v9138
        %v9140 = vpop.f32.mrb[0].mxu0
        %9141 = vmatprep.mubr.bf16.mxu0 0
        %9142 = vmatmul.mubr.bf16.gmra.mrb[0].mxu0 %v8765
        %v9143 = vpop.f32.mrb[0].mxu0
        %v9144 = vadd.f32 0.0, %v9143
        %v9145 = vpop.f32.mrb[0].mxu0
        %v9146 = vpop.f32.mrb[0].mxu0
        %v9147 = vadd.f32 0.0, %v9146
        %v9148 = vpop.f32.mrb[0].mxu0
        %9149 = vmatprep.mubr.bf16.mxu0 0
        %9150 = vmatmul.mubr.bf16.gmra.mrb[0].mxu0 %v8768
        %v9151 = vpop.f32.mrb[0].mxu0
        %v9152 = vadd.f32 0.0, %v9151
        %v9153 = vpop.f32.mrb[0].mxu0
        %v9154 = vpop.f32.mrb[0].mxu0
        %v9155 = vadd.f32 0.0, %v9154
        %v9156 = vpop.f32.mrb[0].mxu0
        %9157 = vmatprep.mubr.bf16.mxu0 0
        %9158 = vmatmul.mubr.bf16.gmra.mrb[0].mxu0 %v8771
        %v9159 = vpop.f32.mrb[0].mxu0
        %v9160 = vadd.f32 0.0, %v9159
        %v9161 = vpop.f32.mrb[0].mxu0
        %v9162 = vpop.f32.mrb[0].mxu0
        %v9163 = vadd.f32 0.0, %v9162
        %v9164 = vpop.f32.mrb[0].mxu0
        %9165 = vmatprep.mubr.bf16.mxu0 0
        %9166 = vmatmul.mubr.bf16.gmra.mrb[0].mxu0 %v8774
        %v9167 = vpop.f32.mrb[0].mxu0
        %v9168 = vadd.f32 0.0, %v9167
        %v9169 = vpop.f32.mrb[0].mxu0
        %v9170 = vpop.f32.mrb[0].mxu0
        %v9171 = vadd.f32 0.0, %v9170
        %v9172 = vpop.f32.mrb[0].mxu0
        %9173 = vmatprep.mubr.bf16.mxu0 0
        %9174 = vmatmul.mubr.bf16.gmra.mrb[0].mxu0 %v8777
        %v9175 = vpop.f32.mrb[0].mxu0
        %v9176 = vadd.f32 0.0, %v9175
        %v9177 = vpop.f32.mrb[0].mxu0
        %v9178 = vpop.f32.mrb[0].mxu0
        %v9179 = vadd.f32 0.0, %v9178
        %v9180 = vpop.f32.mrb[0].mxu0
        %9181 = vmatprep.mubr.bf16.mxu0 0
        %9182 = vmatmul.mubr.bf16.gmra.mrb[0].mxu0 %v8780
        %v9183 = vpop.f32.mrb[0].mxu0
        %v9184 = vadd.f32 0.0, %v9183
        %v9185 = vpop.f32.mrb[0].mxu0
        %v9186 = vpop.f32.mrb[0].mxu0
        %v9187 = vadd.f32 0.0, %v9186
        %v9188 = vpop.f32.mrb[0].mxu0
        %9189 = vmatprep.mubr.bf16.mxu0 0
        %9190 = vmatmul.mubr.bf16.gmra.mrb[0].mxu0 %v8783
        %v9191 = vpop.f32.mrb[0].mxu0
        %v9192 = vadd.f32 0.0, %v9191
        %v9193 = vpop.f32.mrb[0].mxu0
        %v9194 = vpop.f32.mrb[0].mxu0
        %v9195 = vadd.f32 0.0, %v9194
        %v9196 = vpop.f32.mrb[0].mxu0
        %9197 = vmatprep.mubr.bf16.mxu0 0
        %9198 = vmatmul.mubr.bf16.gmra.mrb[0].mxu0 %v8786
        %v9199 = vpop.f32.mrb[0].mxu0
        %v9200 = vadd.f32 0.0, %v9199
        %v9201 = vpop.f32.mrb[0].mxu0
        %v9202 = vpop.f32.mrb[0].mxu0
        %v9203 = vadd.f32 0.0, %v9202
        %v9204 = vpop.f32.mrb[0].mxu0
        %9205 = vmatprep.mubr.bf16.mxu0 0
        %9206 = vmatmul.mubr.bf16.gmra.mrb[0].mxu0 %v8789
        %v9207 = vpop.f32.mrb[0].mxu0
        %v9208 = vadd.f32 0.0, %v9207
        %v9209 = vpop.f32.mrb[0].mxu0
        %v9210 = vpop.f32.mrb[0].mxu0
        %v9211 = vadd.f32 0.0, %v9210
        %v9212 = vpop.f32.mrb[0].mxu0
        %9213 = vmatprep.mubr.bf16.mxu0 0
        %9214 = vmatmul.mubr.bf16.gmra.mrb[0].mxu0 %v8792
        %v9215 = vpop.f32.mrb[0].mxu0
        %v9216 = vadd.f32 0.0, %v9215
        %v9217 = vpop.f32.mrb[0].mxu0
        %v9218 = vpop.f32.mrb[0].mxu0
        %v9219 = vadd.f32 0.0, %v9218
        %v9220 = vpop.f32.mrb[0].mxu0
        %9221 = vmatprep.mubr.bf16.mxu0 0
        %9222 = vmatmul.mubr.bf16.gmra.mrb[0].mxu0 %v8795
        %v9223 = vpop.f32.mrb[0].mxu0
        %v9224 = vadd.f32 0.0, %v9223
        %v9225 = vpop.f32.mrb[0].mxu0
        %v9226 = vpop.f32.mrb[0].mxu0
        %v9227 = vadd.f32 0.0, %v9226
        %v9228 = vpop.f32.mrb[0].mxu0
        %9229 = vmatprep.mubr.bf16.mxu0 0
        %9230 = vmatmul.mubr.bf16.gmra.mrb[0].mxu0 %v8798
        %v9231 = vpop.f32.mrb[0].mxu0
        %v9232 = vadd.f32 0.0, %v9231
        %v9233 = vpop.f32.mrb[0].mxu0
        %v9234 = vpop.f32.mrb[0].mxu0
        %v9235 = vadd.f32 0.0, %v9234
        %v9236 = vpop.f32.mrb[0].mxu0
        %9237 = vmatprep.mubr.bf16.mxu0 0
        %9238 = vmatmul.mubr.bf16.gmra.mrb[0].mxu0 %v8801
        %v9239 = vpop.f32.mrb[0].mxu0
        %v9240 = vadd.f32 0.0, %v9239
        %v9241 = vpop.f32.mrb[0].mxu0
        %v9242 = vpop.f32.mrb[0].mxu0
        %v9243 = vadd.f32 0.0, %v9242
        %v9244 = vpop.f32.mrb[0].mxu0
        %9245 = vmatprep.mubr.bf16.mxu0 0
        %9246 = vmatmul.mubr.bf16.gmra.mrb[0].mxu0 %v8804
        %v9247 = vpop.f32.mrb[0].mxu0
        %v9248 = vadd.f32 0.0, %v9247
        %v9249 = vpop.f32.mrb[0].mxu0
        %v9250 = vpop.f32.mrb[0].mxu0
        %v9251 = vadd.f32 0.0, %v9250
        %v9252 = vpop.f32.mrb[0].mxu0
        %9253 = vmatprep.mubr.bf16.mxu0 0
        %9254 = vmatmul.mubr.bf16.gmra.mrb[0].mxu0 %v8807
        %v9255 = vpop.f32.mrb[0].mxu0
        %v9256 = vadd.f32 0.0, %v9255
        %v9257 = vpop.f32.mrb[0].mxu0
        %v9258 = vpop.f32.mrb[0].mxu0
        %v9259 = vadd.f32 0.0, %v9258
        %v9260 = vpop.f32.mrb[0].mxu0
        %9261 = vmatprep.mubr.bf16.mxu0 0
        %9262 = vmatmul.mubr.bf16.gmra.mrb[0].mxu0 %v8810
        %v9263 = vpop.f32.mrb[0].mxu0
        %v9264 = vadd.f32 0.0, %v9263
        %v9265 = vpop.f32.mrb[0].mxu0
        %v9266 = vpop.f32.mrb[0].mxu0
        %v9267 = vadd.f32 0.0, %v9266
        %v9268 = vpop.f32.mrb[0].mxu0
        %9269 = vmatprep.mubr.bf16.mxu0 0
        %9270 = vmatmul.mubr.bf16.gmra.mrb[0].mxu0 %v8813
        %v9271 = vpop.f32.mrb[0].mxu0
        %v9272 = vadd.f32 0.0, %v9271
        %v9273 = vpop.f32.mrb[0].mxu0
        %v9274 = vpop.f32.mrb[0].mxu0
        %v9275 = vadd.f32 0.0, %v9274
        %v9276 = vpop.f32.mrb[0].mxu0
        %9277 = vmatprep.mubr.bf16.mxu0 0
        %9278 = vmatmul.mubr.bf16.gmra.mrb[0].mxu0 %v8816
        %v9279 = vpop.f32.mrb[0].mxu0
        %v9280 = vadd.f32 0.0, %v9279
        %v9281 = vpop.f32.mrb[0].mxu0
        %v9282 = vpop.f32.mrb[0].mxu0
        %v9283 = vadd.f32 0.0, %v9282
        %v9284 = vpop.f32.mrb[0].mxu0
        %9285 = vmatprep.mubr.bf16.mxu0 0
        %9286 = vmatmul.mubr.bf16.gmra.mrb[0].mxu0 %v8819
        %v9287 = vpop.f32.mrb[0].mxu0
        %v9288 = vadd.f32 0.0, %v9287
        %v9289 = vpop.f32.mrb[0].mxu0
        %v9290 = vpop.f32.mrb[0].mxu0
        %v9291 = vadd.f32 0.0, %v9290
        %v9292 = vpop.f32.mrb[0].mxu0
        %9293 = vmatprep.mubr.bf16.mxu0 0
        %9294 = vmatmul.mubr.bf16.gmra.mrb[0].mxu0 %v8822
        %v9295 = vpop.f32.mrb[0].mxu0
        %v9296 = vadd.f32 0.0, %v9295
        %v9297 = vpop.f32.mrb[0].mxu0
        %v9298 = vpop.f32.mrb[0].mxu0
        %v9299 = vadd.f32 0.0, %v9298
        %v9300 = vpop.f32.mrb[0].mxu0
        %9301 = vmatprep.mubr.bf16.mxu0 0
        %9302 = vmatmul.mubr.bf16.gmra.mrb[0].mxu0 %v8825
        %v9303 = vpop.f32.mrb[0].mxu0
        %v9304 = vadd.f32 0.0, %v9303
        %v9305 = vpop.f32.mrb[0].mxu0
        %v9306 = vpop.f32.mrb[0].mxu0
        %v9307 = vadd.f32 0.0, %v9306
        %v9308 = vpop.f32.mrb[0].mxu0
        %9309 = vmatprep.mubr.bf16.mxu0 0
        %9310 = vmatmul.mubr.bf16.gmra.mrb[0].mxu0 %v8828
        %v9311 = vpop.f32.mrb[0].mxu0
        %v9312 = vadd.f32 0.0, %v9311
        %v9313 = vpop.f32.mrb[0].mxu0
        %v9314 = vpop.f32.mrb[0].mxu0
        %v9315 = vadd.f32 0.0, %v9314
        %v9316 = vpop.f32.mrb[0].mxu0
        %9317 = vmatprep.mubr.bf16.mxu0 0
        %9318 = vmatmul.mubr.bf16.gmra.mrb[0].mxu0 %v8831
        %v9319 = vpop.f32.mrb[0].mxu0
        %v9320 = vadd.f32 0.0, %v9319
        %v9321 = vpop.f32.mrb[0].mxu0
        %v9322 = vpop.f32.mrb[0].mxu0
        %v9323 = vadd.f32 0.0, %v9322
        %v9324 = vpop.f32.mrb[0].mxu0
        %9325 = vmatprep.mubr.bf16.mxu0 0
        %9326 = vmatmul.mubr.bf16.gmra.mrb[0].mxu0 %v8834
        %v9327 = vpop.f32.mrb[0].mxu0
        %v9328 = vadd.f32 0.0, %v9327
        %v9329 = vpop.f32.mrb[0].mxu0
        %v9330 = vpop.f32.mrb[0].mxu0
        %v9331 = vadd.f32 0.0, %v9330
        %v9332 = vpop.f32.mrb[0].mxu0
        %9333 = vmatprep.mubr.bf16.mxu0 0
        %9334 = vmatmul.mubr.bf16.gmra.mrb[0].mxu0 %v8837
        %v9335 = vpop.f32.mrb[0].mxu0
        %v9336 = vadd.f32 0.0, %v9335
        %v9337 = vpop.f32.mrb[0].mxu0
        %v9338 = vpop.f32.mrb[0].mxu0
        %v9339 = vadd.f32 0.0, %v9338
        %v9340 = vpop.f32.mrb[0].mxu0
        %9341 = vmatprep.mubr.bf16.mxu0 0
        %9342 = vmatmul.mubr.bf16.gmra.mrb[0].mxu0 %v8840
        %v9343 = vpop.f32.mrb[0].mxu0
        %v9344 = vadd.f32 0.0, %v9343
        %v9345 = vpop.f32.mrb[0].mxu0
        %v9346 = vpop.f32.mrb[0].mxu0
        %v9347 = vadd.f32 0.0, %v9346
        %v9348 = vpop.f32.mrb[0].mxu0
        %9349 = vmatprep.mubr.bf16.mxu0 0
        %9350 = vmatmul.mubr.bf16.gmra.mrb[0].mxu0 %v8843
        %v9351 = vpop.f32.mrb[0].mxu0
        %v9352 = vadd.f32 0.0, %v9351
        %v9353 = vpop.f32.mrb[0].mxu0
        %v9354 = vpop.f32.mrb[0].mxu0
        %v9355 = vadd.f32 0.0, %v9354
        %v9356 = vpop.f32.mrb[0].mxu0
        %9357 = vmatprep.mubr.bf16.mxu0 0
        %9358 = vmatmul.mubr.bf16.gmra.mrb[0].mxu0 %v8846
        %v9359 = vpop.f32.mrb[0].mxu0
        %v9360 = vadd.f32 0.0, %v9359
        %v9361 = vpop.f32.mrb[0].mxu0
        %v9362 = vpop.f32.mrb[0].mxu0
        %v9363 = vadd.f32 0.0, %v9362
        %v9364 = vpop.f32.mrb[0].mxu0
        %9365 = vmatprep.mubr.bf16.mxu0 0
        %9366 = vmatmul.mubr.bf16.gmra.mrb[0].mxu0 %v8849
        %v9367 = vpop.f32.mrb[0].mxu0
        %v9368 = vadd.f32 0.0, %v9367
        %v9369 = vpop.f32.mrb[0].mxu0
        %v9370 = vpop.f32.mrb[0].mxu0
        %v9371 = vadd.f32 0.0, %v9370
        %v9372 = vpop.f32.mrb[0].mxu0
        %9373 = vmatprep.mubr.bf16.mxu0 0
        %9374 = vmatmul.mubr.bf16.gmra.mrb[0].mxu0 %v8852
        %v9375 = vpop.f32.mrb[0].mxu0
        %v9376 = vadd.f32 0.0, %v9375
        %v9377 = vpop.f32.mrb[0].mxu0
        %v9378 = vpop.f32.mrb[0].mxu0
        %v9379 = vadd.f32 0.0, %v9378
        %v9380 = vpop.f32.mrb[0].mxu0
        %9381 = vmatprep.mubr.bf16.mxu0 0
        %9382 = vmatmul.mubr.bf16.gmra.mrb[0].mxu0 %v8855
        %v9383 = vpop.f32.mrb[0].mxu0
        %v9384 = vadd.f32 0.0, %v9383
        %v9385 = vpop.f32.mrb[0].mxu0
        %v9386 = vpop.f32.mrb[0].mxu0
        %v9387 = vadd.f32 0.0, %v9386
        %v9388 = vpop.f32.mrb[0].mxu0
        %9389 = vmatprep.mubr.bf16.mxu0 0
        %9390 = vmatmul.mubr.bf16.gmra.mrb[0].mxu0 %v8858
        %v9391 = vpop.f32.mrb[0].mxu0
        %v9392 = vadd.f32 0.0, %v9391
        %v9393 = vpop.f32.mrb[0].mxu0
        %v9394 = vpop.f32.mrb[0].mxu0
        %v9395 = vadd.f32 0.0, %v9394
        %v9396 = vpop.f32.mrb[0].mxu0
        %9397 = vmatprep.mubr.bf16.mxu0 0
        %9398 = vmatmul.mubr.bf16.gmra.mrb[0].mxu0 %v8861
        %v9399 = vpop.f32.mrb[0].mxu0
        %v9400 = vadd.f32 0.0, %v9399
        %v9401 = vpop.f32.mrb[0].mxu0
        %v9402 = vpop.f32.mrb[0].mxu0
        %v9403 = vadd.f32 0.0, %v9402
        %v9404 = vpop.f32.mrb[0].mxu0
        %9405 = vmatprep.mubr.bf16.mxu0 0
        %9406 = vmatmul.mubr.bf16.gmra.mrb[0].mxu0 %v8864
        %v9407 = vpop.f32.mrb[0].mxu0
        %v9408 = vadd.f32 0.0, %v9407
        %v9409 = vpop.f32.mrb[0].mxu0
        %v9410 = vpop.f32.mrb[0].mxu0
        %v9411 = vadd.f32 0.0, %v9410
        %v9412 = vpop.f32.mrb[0].mxu0
        %9413 = vdwg.mxu0
        %v9414 = vadd.f32 %v8352, %v8904
        %v9415 = vadd.f32 %v8353, %v8907
        %v9416 = vadd.f32 %v8354, %v8912
        %v9417 = vadd.f32 %v8355, %v8915
        %v9418 = vadd.f32 %v8356, %v8920
        %v9419 = vadd.f32 %v8357, %v8923
        %v9420 = vadd.f32 %v8358, %v8928
        %v9421 = vadd.f32 %v8359, %v8931
        %v9422 = vadd.f32 %v8360, %v8936
        %v9423 = vadd.f32 %v8361, %v8939
        %v9424 = vadd.f32 %v8362, %v8944
        %v9425 = vadd.f32 %v8363, %v8947
        %v9426 = vadd.f32 %v8364, %v8952
        %v9427 = vadd.f32 %v8365, %v8955
        %v9428 = vadd.f32 %v8366, %v8960
        %v9429 = vadd.f32 %v8367, %v8963
        %v9430 = vadd.f32 %v8368, %v8968
        %v9431 = vadd.f32 %v8369, %v8971
        %v9432 = vadd.f32 %v8370, %v8976
        %v9433 = vadd.f32 %v8371, %v8979
        %v9434 = vadd.f32 %v8372, %v8984
        %v9435 = vadd.f32 %v8373, %v8987
        %v9436 = vadd.f32 %v8374, %v8992
        %v9437 = vadd.f32 %v8375, %v8995
        %v9438 = vadd.f32 %v8376, %v9000
        %v9439 = vadd.f32 %v8377, %v9003
        %v9440 = vadd.f32 %v8378, %v9008
        %v9441 = vadd.f32 %v8379, %v9011
        %v9442 = vadd.f32 %v8380, %v9016
        %v9443 = vadd.f32 %v8381, %v9019
        %v9444 = vadd.f32 %v8382, %v9024
        %v9445 = vadd.f32 %v8383, %v9027
        %v9446 = vadd.f32 %v8384, %v9032
        %v9447 = vadd.f32 %v8385, %v9035
        %v9448 = vadd.f32 %v8386, %v9040
        %v9449 = vadd.f32 %v8387, %v9043
        %v9450 = vadd.f32 %v8388, %v9048
        %v9451 = vadd.f32 %v8389, %v9051
        %v9452 = vadd.f32 %v8390, %v9056
        %v9453 = vadd.f32 %v8391, %v9059
        %v9454 = vadd.f32 %v8392, %v9064
        %v9455 = vadd.f32 %v8393, %v9067
        %v9456 = vadd.f32 %v8394, %v9072
        %v9457 = vadd.f32 %v8395, %v9075
        %v9458 = vadd.f32 %v8396, %v9080
        %v9459 = vadd.f32 %v8397, %v9083
        %v9460 = vadd.f32 %v8398, %v9088
        %v9461 = vadd.f32 %v8399, %v9091
        %v9462 = vadd.f32 %v8400, %v9096
        %v9463 = vadd.f32 %v8401, %v9099
        %v9464 = vadd.f32 %v8402, %v9104
        %v9465 = vadd.f32 %v8403, %v9107
        %v9466 = vadd.f32 %v8404, %v9112
        %v9467 = vadd.f32 %v8405, %v9115
        %v9468 = vadd.f32 %v8406, %v9120
        %v9469 = vadd.f32 %v8407, %v9123
        %v9470 = vadd.f32 %v8408, %v9128
        %v9471 = vadd.f32 %v8409, %v9131
        %v9472 = vadd.f32 %v8410, %v9136
        %v9473 = vadd.f32 %v8411, %v9139
        %v9474 = vadd.f32 %v8412, %v9144
        %v9475 = vadd.f32 %v8413, %v9147
        %v9476 = vadd.f32 %v8414, %v9152
        %v9477 = vadd.f32 %v8415, %v9155
        %v9478 = vadd.f32 %v8416, %v9160
        %v9479 = vadd.f32 %v8417, %v9163
        %v9480 = vadd.f32 %v8418, %v9168
        %v9481 = vadd.f32 %v8419, %v9171
        %v9482 = vadd.f32 %v8420, %v9176
        %v9483 = vadd.f32 %v8421, %v9179
        %v9484 = vadd.f32 %v8422, %v9184
        %v9485 = vadd.f32 %v8423, %v9187
        %v9486 = vadd.f32 %v8424, %v9192
        %v9487 = vadd.f32 %v8425, %v9195
        %v9488 = vadd.f32 %v8426, %v9200
        %v9489 = vadd.f32 %v8427, %v9203
        %v9490 = vadd.f32 %v8428, %v9208
        %v9491 = vadd.f32 %v8429, %v9211
        %v9492 = vadd.f32 %v8430, %v9216
        %v9493 = vadd.f32 %v8431, %v9219
        %v9494 = vadd.f32 %v8432, %v9224
        %v9495 = vadd.f32 %v8433, %v9227
        %v9496 = vadd.f32 %v8434, %v9232
        %v9497 = vadd.f32 %v8435, %v9235
        %v9498 = vadd.f32 %v8436, %v9240
        %v9499 = vadd.f32 %v8437, %v9243
        %v9500 = vadd.f32 %v8438, %v9248
        %v9501 = vadd.f32 %v8439, %v9251
        %v9502 = vadd.f32 %v8440, %v9256
        %v9503 = vadd.f32 %v8441, %v9259
        %v9504 = vadd.f32 %v8442, %v9264
        %v9505 = vadd.f32 %v8443, %v9267
        %v9506 = vadd.f32 %v8444, %v9272
        %v9507 = vadd.f32 %v8445, %v9275
        %v9508 = vadd.f32 %v8446, %v9280
        %v9509 = vadd.f32 %v8447, %v9283
        %v9510 = vadd.f32 %v8448, %v9288
        %v9511 = vadd.f32 %v8449, %v9291
        %v9512 = vadd.f32 %v8450, %v9296
        %v9513 = vadd.f32 %v8451, %v9299
        %v9514 = vadd.f32 %v8452, %v9304
        %v9515 = vadd.f32 %v8453, %v9307
        %v9516 = vadd.f32 %v8454, %v9312
        %v9517 = vadd.f32 %v8455, %v9315
        %v9518 = vadd.f32 %v8456, %v9320
        %v9519 = vadd.f32 %v8457, %v9323
        %v9520 = vadd.f32 %v8458, %v9328
        %v9521 = vadd.f32 %v8459, %v9331
        %v9522 = vadd.f32 %v8460, %v9336
        %v9523 = vadd.f32 %v8461, %v9339
        %v9524 = vadd.f32 %v8462, %v9344
        %v9525 = vadd.f32 %v8463, %v9347
        %v9526 = vadd.f32 %v8464, %v9352
        %v9527 = vadd.f32 %v8465, %v9355
        %v9528 = vadd.f32 %v8466, %v9360
        %v9529 = vadd.f32 %v8467, %v9363
        %v9530 = vadd.f32 %v8468, %v9368
        %v9531 = vadd.f32 %v8469, %v9371
        %v9532 = vadd.f32 %v8470, %v9376
        %v9533 = vadd.f32 %v8471, %v9379
        %v9534 = vadd.f32 %v8472, %v9384
        %v9535 = vadd.f32 %v8473, %v9387
        %v9536 = vadd.f32 %v8474, %v9392
        %v9537 = vadd.f32 %v8475, %v9395
        %v9538 = vadd.f32 %v8476, %v9400
        %v9539 = vadd.f32 %v8477, %v9403
        %v9540 = vadd.f32 %v8478, %v9408
        %v9541 = vadd.f32 %v8479, %v9411
        %vm9542 = vcmask 523264
        %9543 = vst.msk [vmem:[%s219] sm:$0xff] %vm9542, %v9414
        %9544 = vst.msk [vmem:[%s219 + $0x8] sm:$0xff] %vm9542, %v9415
        %9545 = vst.msk [vmem:[%s219 + $0x10] sm:$0xff] %vm9542, %v9416
        %9546 = vst.msk [vmem:[%s219 + $0x18] sm:$0xff] %vm9542, %v9417
        %9547 = vst.msk [vmem:[%s219 + $0x20] sm:$0xff] %vm9542, %v9418
        %9548 = vst.msk [vmem:[%s219 + $0x28] sm:$0xff] %vm9542, %v9419
        %9549 = vst.msk [vmem:[%s219 + $0x30] sm:$0xff] %vm9542, %v9420
        %9550 = vst.msk [vmem:[%s219 + $0x38] sm:$0xff] %vm9542, %v9421
        %9551 = vst.msk [vmem:[%s219 + $0x40] sm:$0xff] %vm9542, %v9422
        %9552 = vst.msk [vmem:[%s219 + $0x48] sm:$0xff] %vm9542, %v9423
        %9553 = vst.msk [vmem:[%s219 + $0x50] sm:$0xff] %vm9542, %v9424
        %9554 = vst.msk [vmem:[%s219 + $0x58] sm:$0xff] %vm9542, %v9425
        %9555 = vst.msk [vmem:[%s219 + $0x60] sm:$0xff] %vm9542, %v9426
        %9556 = vst.msk [vmem:[%s219 + $0x68] sm:$0xff] %vm9542, %v9427
        %9557 = vst.msk [vmem:[%s219 + $0x70] sm:$0xff] %vm9542, %v9428
        %9558 = vst.msk [vmem:[%s219 + $0x78] sm:$0xff] %vm9542, %v9429
        %9559 = vst.msk [vmem:[%s219 + $0x80] sm:$0xff] %vm9542, %v9430
        %9560 = vst.msk [vmem:[%s219 + $0x88] sm:$0xff] %vm9542, %v9431
        %9561 = vst.msk [vmem:[%s219 + $0x90] sm:$0xff] %vm9542, %v9432
        %9562 = vst.msk [vmem:[%s219 + $0x98] sm:$0xff] %vm9542, %v9433
        %9563 = vst.msk [vmem:[%s219 + $0xa0] sm:$0xff] %vm9542, %v9434
        %9564 = vst.msk [vmem:[%s219 + $0xa8] sm:$0xff] %vm9542, %v9435
        %9565 = vst.msk [vmem:[%s219 + $0xb0] sm:$0xff] %vm9542, %v9436
        %9566 = vst.msk [vmem:[%s219 + $0xb8] sm:$0xff] %vm9542, %v9437
        %9567 = vst.msk [vmem:[%s219 + $0xc0] sm:$0xff] %vm9542, %v9438
        %9568 = vst.msk [vmem:[%s219 + $0xc8] sm:$0xff] %vm9542, %v9439
        %9569 = vst.msk [vmem:[%s219 + $0xd0] sm:$0xff] %vm9542, %v9440
        %9570 = vst.msk [vmem:[%s219 + $0xd8] sm:$0xff] %vm9542, %v9441
        %9571 = vst.msk [vmem:[%s219 + $0xe0] sm:$0xff] %vm9542, %v9442
        %9572 = vst.msk [vmem:[%s219 + $0xe8] sm:$0xff] %vm9542, %v9443
        %9573 = vst.msk [vmem:[%s219 + $0xf0] sm:$0xff] %vm9542, %v9444
        %9574 = vst.msk [vmem:[%s219 + $0xf8] sm:$0xff] %vm9542, %v9445
        %9575 = vst.msk [vmem:[%s219 + $0x100] sm:$0xff] %vm9542, %v9446
        %9576 = vst.msk [vmem:[%s219 + $0x108] sm:$0xff] %vm9542, %v9447
        %9577 = vst.msk [vmem:[%s219 + $0x110] sm:$0xff] %vm9542, %v9448
        %9578 = vst.msk [vmem:[%s219 + $0x118] sm:$0xff] %vm9542, %v9449
        %9579 = vst.msk [vmem:[%s219 + $0x120] sm:$0xff] %vm9542, %v9450
        %9580 = vst.msk [vmem:[%s219 + $0x128] sm:$0xff] %vm9542, %v9451
        %9581 = vst.msk [vmem:[%s219 + $0x130] sm:$0xff] %vm9542, %v9452
        %9582 = vst.msk [vmem:[%s219 + $0x138] sm:$0xff] %vm9542, %v9453
        %9583 = vst.msk [vmem:[%s219 + $0x140] sm:$0xff] %vm9542, %v9454
        %9584 = vst.msk [vmem:[%s219 + $0x148] sm:$0xff] %vm9542, %v9455
        %9585 = vst.msk [vmem:[%s219 + $0x150] sm:$0xff] %vm9542, %v9456
        %9586 = vst.msk [vmem:[%s219 + $0x158] sm:$0xff] %vm9542, %v9457
        %9587 = vst.msk [vmem:[%s219 + $0x160] sm:$0xff] %vm9542, %v9458
        %9588 = vst.msk [vmem:[%s219 + $0x168] sm:$0xff] %vm9542, %v9459
        %9589 = vst.msk [vmem:[%s219 + $0x170] sm:$0xff] %vm9542, %v9460
        %9590 = vst.msk [vmem:[%s219 + $0x178] sm:$0xff] %vm9542, %v9461
        %9591 = vst.msk [vmem:[%s219 + $0x180] sm:$0xff] %vm9542, %v9462
        %9592 = vst.msk [vmem:[%s219 + $0x188] sm:$0xff] %vm9542, %v9463
        %9593 = vst.msk [vmem:[%s219 + $0x190] sm:$0xff] %vm9542, %v9464
        %9594 = vst.msk [vmem:[%s219 + $0x198] sm:$0xff] %vm9542, %v9465
        %9595 = vst.msk [vmem:[%s219 + $0x1a0] sm:$0xff] %vm9542, %v9466
        %9596 = vst.msk [vmem:[%s219 + $0x1a8] sm:$0xff] %vm9542, %v9467
        %9597 = vst.msk [vmem:[%s219 + $0x1b0] sm:$0xff] %vm9542, %v9468
        %9598 = vst.msk [vmem:[%s219 + $0x1b8] sm:$0xff] %vm9542, %v9469
        %9599 = vst.msk [vmem:[%s219 + $0x1c0] sm:$0xff] %vm9542, %v9470
        %9600 = vst.msk [vmem:[%s219 + $0x1c8] sm:$0xff] %vm9542, %v9471
        %9601 = vst.msk [vmem:[%s219 + $0x1d0] sm:$0xff] %vm9542, %v9472
        %9602 = vst.msk [vmem:[%s219 + $0x1d8] sm:$0xff] %vm9542, %v9473
        %9603 = vst.msk [vmem:[%s219 + $0x1e0] sm:$0xff] %vm9542, %v9474
        %9604 = vst.msk [vmem:[%s219 + $0x1e8] sm:$0xff] %vm9542, %v9475
        %9605 = vst.msk [vmem:[%s219 + $0x1f0] sm:$0xff] %vm9542, %v9476
        %9606 = vst.msk [vmem:[%s219 + $0x1f8] sm:$0xff] %vm9542, %v9477
        %9607 = vst.msk [vmem:[%s219 + $0x200] sm:$0xff] %vm9542, %v9478
        %9608 = vst.msk [vmem:[%s219 + $0x208] sm:$0xff] %vm9542, %v9479
        %9609 = vst.msk [vmem:[%s219 + $0x210] sm:$0xff] %vm9542, %v9480
        %9610 = vst.msk [vmem:[%s219 + $0x218] sm:$0xff] %vm9542, %v9481
        %9611 = vst.msk [vmem:[%s219 + $0x220] sm:$0xff] %vm9542, %v9482
        %9612 = vst.msk [vmem:[%s219 + $0x228] sm:$0xff] %vm9542, %v9483
        %9613 = vst.msk [vmem:[%s219 + $0x230] sm:$0xff] %vm9542, %v9484
        %9614 = vst.msk [vmem:[%s219 + $0x238] sm:$0xff] %vm9542, %v9485
        %9615 = vst.msk [vmem:[%s219 + $0x240] sm:$0xff] %vm9542, %v9486
        %9616 = vst.msk [vmem:[%s219 + $0x248] sm:$0xff] %vm9542, %v9487
        %9617 = vst.msk [vmem:[%s219 + $0x250] sm:$0xff] %vm9542, %v9488
        %9618 = vst.msk [vmem:[%s219 + $0x258] sm:$0xff] %vm9542, %v9489
        %9619 = vst.msk [vmem:[%s219 + $0x260] sm:$0xff] %vm9542, %v9490
        %9620 = vst.msk [vmem:[%s219 + $0x268] sm:$0xff] %vm9542, %v9491
        %9621 = vst.msk [vmem:[%s219 + $0x270] sm:$0xff] %vm9542, %v9492
        %9622 = vst.msk [vmem:[%s219 + $0x278] sm:$0xff] %vm9542, %v9493
        %9623 = vst.msk [vmem:[%s219 + $0x280] sm:$0xff] %vm9542, %v9494
        %9624 = vst.msk [vmem:[%s219 + $0x288] sm:$0xff] %vm9542, %v9495
        %9625 = vst.msk [vmem:[%s219 + $0x290] sm:$0xff] %vm9542, %v9496
        %9626 = vst.msk [vmem:[%s219 + $0x298] sm:$0xff] %vm9542, %v9497
        %9627 = vst.msk [vmem:[%s219 + $0x2a0] sm:$0xff] %vm9542, %v9498
        %9628 = vst.msk [vmem:[%s219 + $0x2a8] sm:$0xff] %vm9542, %v9499
        %9629 = vst.msk [vmem:[%s219 + $0x2b0] sm:$0xff] %vm9542, %v9500
        %9630 = vst.msk [vmem:[%s219 + $0x2b8] sm:$0xff] %vm9542, %v9501
        %9631 = vst.msk [vmem:[%s219 + $0x2c0] sm:$0xff] %vm9542, %v9502
        %9632 = vst.msk [vmem:[%s219 + $0x2c8] sm:$0xff] %vm9542, %v9503
        %9633 = vst.msk [vmem:[%s219 + $0x2d0] sm:$0xff] %vm9542, %v9504
        %9634 = vst.msk [vmem:[%s219 + $0x2d8] sm:$0xff] %vm9542, %v9505
        %9635 = vst.msk [vmem:[%s219 + $0x2e0] sm:$0xff] %vm9542, %v9506
        %9636 = vst.msk [vmem:[%s219 + $0x2e8] sm:$0xff] %vm9542, %v9507
        %9637 = vst.msk [vmem:[%s219 + $0x2f0] sm:$0xff] %vm9542, %v9508
        %9638 = vst.msk [vmem:[%s219 + $0x2f8] sm:$0xff] %vm9542, %v9509
        %9639 = vst.msk [vmem:[%s219 + $0x300] sm:$0xff] %vm9542, %v9510
        %9640 = vst.msk [vmem:[%s219 + $0x308] sm:$0xff] %vm9542, %v9511
        %9641 = vst.msk [vmem:[%s219 + $0x310] sm:$0xff] %vm9542, %v9512
        %9642 = vst.msk [vmem:[%s219 + $0x318] sm:$0xff] %vm9542, %v9513
        %9643 = vst.msk [vmem:[%s219 + $0x320] sm:$0xff] %vm9542, %v9514
        %9644 = vst.msk [vmem:[%s219 + $0x328] sm:$0xff] %vm9542, %v9515
        %9645 = vst.msk [vmem:[%s219 + $0x330] sm:$0xff] %vm9542, %v9516
        %9646 = vst.msk [vmem:[%s219 + $0x338] sm:$0xff] %vm9542, %v9517
        %9647 = vst.msk [vmem:[%s219 + $0x340] sm:$0xff] %vm9542, %v9518
        %9648 = vst.msk [vmem:[%s219 + $0x348] sm:$0xff] %vm9542, %v9519
        %9649 = vst.msk [vmem:[%s219 + $0x350] sm:$0xff] %vm9542, %v9520
        %9650 = vst.msk [vmem:[%s219 + $0x358] sm:$0xff] %vm9542, %v9521
        %9651 = vst.msk [vmem:[%s219 + $0x360] sm:$0xff] %vm9542, %v9522
        %9652 = vst.msk [vmem:[%s219 + $0x368] sm:$0xff] %vm9542, %v9523
        %9653 = vst.msk [vmem:[%s219 + $0x370] sm:$0xff] %vm9542, %v9524
        %9654 = vst.msk [vmem:[%s219 + $0x378] sm:$0xff] %vm9542, %v9525
        %9655 = vst.msk [vmem:[%s219 + $0x380] sm:$0xff] %vm9542, %v9526
        %9656 = vst.msk [vmem:[%s219 + $0x388] sm:$0xff] %vm9542, %v9527
        %9657 = vst.msk [vmem:[%s219 + $0x390] sm:$0xff] %vm9542, %v9528
        %9658 = vst.msk [vmem:[%s219 + $0x398] sm:$0xff] %vm9542, %v9529
        %9659 = vst.msk [vmem:[%s219 + $0x3a0] sm:$0xff] %vm9542, %v9530
        %9660 = vst.msk [vmem:[%s219 + $0x3a8] sm:$0xff] %vm9542, %v9531
        %9661 = vst.msk [vmem:[%s219 + $0x3b0] sm:$0xff] %vm9542, %v9532
        %9662 = vst.msk [vmem:[%s219 + $0x3b8] sm:$0xff] %vm9542, %v9533
        %9663 = vst.msk [vmem:[%s219 + $0x3c0] sm:$0xff] %vm9542, %v9534
        %9664 = vst.msk [vmem:[%s219 + $0x3c8] sm:$0xff] %vm9542, %v9535
        %9665 = vst.msk [vmem:[%s219 + $0x3d0] sm:$0xff] %vm9542, %v9536
        %9666 = vst.msk [vmem:[%s219 + $0x3d8] sm:$0xff] %vm9542, %v9537
        %9667 = vst.msk [vmem:[%s219 + $0x3e0] sm:$0xff] %vm9542, %v9538
        %9668 = vst.msk [vmem:[%s219 + $0x3e8] sm:$0xff] %vm9542, %v9539
        %9669 = vst.msk [vmem:[%s219 + $0x3f0] sm:$0xff] %vm9542, %v9540
        %9670 = vst.msk [vmem:[%s219 + $0x3f8] sm:$0xff] %vm9542, %v9541
        %p9671 = scmp.eq.s32.totalorder %s25, 0
        // Predicated region
        $region29: #{_conv3x3_jit.1} parent=27 // pred_check
          %p9672 = pneg %p9671
        $region30: #{_conv3x3_jit.1} parent=27 // pred_check_branch
          %9674 = sbr.rel (%p9672) target = $region32
        $region31: #{_conv3x3_jit.1} parent=27 // pred_region
          %vm9675 = vcmask 516096
          %9676 = vst.msk [vmem:[#allocation4] sm:$0x1] %vm9675, 0.0
          %9677 = vst.msk [vmem:[#allocation6] sm:$0x1] %vm9675, 0.0
        $region32: #{_conv3x3_jit.1} parent=27 // pred_fallthru
          _
        %v9678 = vld [vmem:[#allocation4] sm:$0x1]
        %v9679 = vsel %vm9542, %v9414, 0.0
        %v9680 = vsel %vm9542, %v9415, 0.0
        %v9681 = vadd.f32 %v9679, %v9680
        %v9682 = vsel %vm9542, %v9416, 0.0
        %v9683 = vadd.f32 %v9681, %v9682
        %v9684 = vsel %vm9542, %v9417, 0.0
        %v9685 = vadd.f32 %v9683, %v9684
        %v9686 = vsel %vm9542, %v9418, 0.0
        %v9687 = vadd.f32 %v9685, %v9686
        %v9688 = vsel %vm9542, %v9419, 0.0
        %v9689 = vadd.f32 %v9687, %v9688
        %v9690 = vsel %vm9542, %v9420, 0.0
        %v9691 = vadd.f32 %v9689, %v9690
        %v9692 = vsel %vm9542, %v9421, 0.0
        %v9693 = vadd.f32 %v9691, %v9692
        %v9694 = vsel %vm9542, %v9422, 0.0
        %v9695 = vadd.f32 %v9693, %v9694
        %v9696 = vsel %vm9542, %v9423, 0.0
        %v9697 = vadd.f32 %v9695, %v9696
        %v9698 = vsel %vm9542, %v9424, 0.0
        %v9699 = vadd.f32 %v9697, %v9698
        %v9700 = vsel %vm9542, %v9425, 0.0
        %v9701 = vadd.f32 %v9699, %v9700
        %v9702 = vsel %vm9542, %v9426, 0.0
        %v9703 = vadd.f32 %v9701, %v9702
        %v9704 = vsel %vm9542, %v9427, 0.0
        %v9705 = vadd.f32 %v9703, %v9704
        %v9706 = vsel %vm9542, %v9428, 0.0
        %v9707 = vadd.f32 %v9705, %v9706
        %v9708 = vsel %vm9542, %v9429, 0.0
        %v9709 = vadd.f32 %v9707, %v9708
        %v9710 = vsel %vm9542, %v9430, 0.0
        %v9711 = vadd.f32 %v9709, %v9710
        %v9712 = vsel %vm9542, %v9431, 0.0
        %v9713 = vadd.f32 %v9711, %v9712
        %v9714 = vsel %vm9542, %v9432, 0.0
        %v9715 = vadd.f32 %v9713, %v9714
        %v9716 = vsel %vm9542, %v9433, 0.0
        %v9717 = vadd.f32 %v9715, %v9716
        %v9718 = vsel %vm9542, %v9434, 0.0
        %v9719 = vadd.f32 %v9717, %v9718
        %v9720 = vsel %vm9542, %v9435, 0.0
        %v9721 = vadd.f32 %v9719, %v9720
        %v9722 = vsel %vm9542, %v9436, 0.0
        %v9723 = vadd.f32 %v9721, %v9722
        %v9724 = vsel %vm9542, %v9437, 0.0
        %v9725 = vadd.f32 %v9723, %v9724
        %v9726 = vsel %vm9542, %v9438, 0.0
        %v9727 = vadd.f32 %v9725, %v9726
        %v9728 = vsel %vm9542, %v9439, 0.0
        %v9729 = vadd.f32 %v9727, %v9728
        %v9730 = vsel %vm9542, %v9440, 0.0
        %v9731 = vadd.f32 %v9729, %v9730
        %v9732 = vsel %vm9542, %v9441, 0.0
        %v9733 = vadd.f32 %v9731, %v9732
        %v9734 = vsel %vm9542, %v9442, 0.0
        %v9735 = vadd.f32 %v9733, %v9734
        %v9736 = vsel %vm9542, %v9443, 0.0
        %v9737 = vadd.f32 %v9735, %v9736
        %v9738 = vsel %vm9542, %v9444, 0.0
        %v9739 = vadd.f32 %v9737, %v9738
        %v9740 = vsel %vm9542, %v9445, 0.0
        %v9741 = vadd.f32 %v9739, %v9740
        %v9742 = vsel %vm9542, %v9446, 0.0
        %v9743 = vadd.f32 %v9741, %v9742
        %v9744 = vsel %vm9542, %v9447, 0.0
        %v9745 = vadd.f32 %v9743, %v9744
        %v9746 = vsel %vm9542, %v9448, 0.0
        %v9747 = vadd.f32 %v9745, %v9746
        %v9748 = vsel %vm9542, %v9449, 0.0
        %v9749 = vadd.f32 %v9747, %v9748
        %v9750 = vsel %vm9542, %v9450, 0.0
        %v9751 = vadd.f32 %v9749, %v9750
        %v9752 = vsel %vm9542, %v9451, 0.0
        %v9753 = vadd.f32 %v9751, %v9752
        %v9754 = vsel %vm9542, %v9452, 0.0
        %v9755 = vadd.f32 %v9753, %v9754
        %v9756 = vsel %vm9542, %v9453, 0.0
        %v9757 = vadd.f32 %v9755, %v9756
        %v9758 = vsel %vm9542, %v9454, 0.0
        %v9759 = vadd.f32 %v9757, %v9758
        %v9760 = vsel %vm9542, %v9455, 0.0
        %v9761 = vadd.f32 %v9759, %v9760
        %v9762 = vsel %vm9542, %v9456, 0.0
        %v9763 = vadd.f32 %v9761, %v9762
        %v9764 = vsel %vm9542, %v9457, 0.0
        %v9765 = vadd.f32 %v9763, %v9764
        %v9766 = vsel %vm9542, %v9458, 0.0
        %v9767 = vadd.f32 %v9765, %v9766
        %v9768 = vsel %vm9542, %v9459, 0.0
        %v9769 = vadd.f32 %v9767, %v9768
        %v9770 = vsel %vm9542, %v9460, 0.0
        %v9771 = vadd.f32 %v9769, %v9770
        %v9772 = vsel %vm9542, %v9461, 0.0
        %v9773 = vadd.f32 %v9771, %v9772
        %v9774 = vsel %vm9542, %v9462, 0.0
        %v9775 = vadd.f32 %v9773, %v9774
        %v9776 = vsel %vm9542, %v9463, 0.0
        %v9777 = vadd.f32 %v9775, %v9776
        %v9778 = vsel %vm9542, %v9464, 0.0
        %v9779 = vadd.f32 %v9777, %v9778
        %v9780 = vsel %vm9542, %v9465, 0.0
        %v9781 = vadd.f32 %v9779, %v9780
        %v9782 = vsel %vm9542, %v9466, 0.0
        %v9783 = vadd.f32 %v9781, %v9782
        %v9784 = vsel %vm9542, %v9467, 0.0
        %v9785 = vadd.f32 %v9783, %v9784
        %v9786 = vsel %vm9542, %v9468, 0.0
        %v9787 = vadd.f32 %v9785, %v9786
        %v9788 = vsel %vm9542, %v9469, 0.0
        %v9789 = vadd.f32 %v9787, %v9788
        %v9790 = vsel %vm9542, %v9470, 0.0
        %v9791 = vadd.f32 %v9789, %v9790
        %v9792 = vsel %vm9542, %v9471, 0.0
        %v9793 = vadd.f32 %v9791, %v9792
        %v9794 = vsel %vm9542, %v9472, 0.0
        %v9795 = vadd.f32 %v9793, %v9794
        %v9796 = vsel %vm9542, %v9473, 0.0
        %v9797 = vadd.f32 %v9795, %v9796
        %v9798 = vsel %vm9542, %v9474, 0.0
        %v9799 = vadd.f32 %v9797, %v9798
        %v9800 = vsel %vm9542, %v9475, 0.0
        %v9801 = vadd.f32 %v9799, %v9800
        %v9802 = vsel %vm9542, %v9476, 0.0
        %v9803 = vadd.f32 %v9801, %v9802
        %v9804 = vsel %vm9542, %v9477, 0.0
        %v9805 = vadd.f32 %v9803, %v9804
        %v9806 = vsel %vm9542, %v9478, 0.0
        %v9807 = vadd.f32 %v9805, %v9806
        %v9808 = vsel %vm9542, %v9479, 0.0
        %v9809 = vadd.f32 %v9807, %v9808
        %v9810 = vsel %vm9542, %v9480, 0.0
        %v9811 = vadd.f32 %v9809, %v9810
        %v9812 = vsel %vm9542, %v9481, 0.0
        %v9813 = vadd.f32 %v9811, %v9812
        %v9814 = vsel %vm9542, %v9482, 0.0
        %v9815 = vadd.f32 %v9813, %v9814
        %v9816 = vsel %vm9542, %v9483, 0.0
        %v9817 = vadd.f32 %v9815, %v9816
        %v9818 = vsel %vm9542, %v9484, 0.0
        %v9819 = vadd.f32 %v9817, %v9818
        %v9820 = vsel %vm9542, %v9485, 0.0
        %v9821 = vadd.f32 %v9819, %v9820
        %v9822 = vsel %vm9542, %v9486, 0.0
        %v9823 = vadd.f32 %v9821, %v9822
        %v9824 = vsel %vm9542, %v9487, 0.0
        %v9825 = vadd.f32 %v9823, %v9824
        %v9826 = vsel %vm9542, %v9488, 0.0
        %v9827 = vadd.f32 %v9825, %v9826
        %v9828 = vsel %vm9542, %v9489, 0.0
        %v9829 = vadd.f32 %v9827, %v9828
        %v9830 = vsel %vm9542, %v9490, 0.0
        %v9831 = vadd.f32 %v9829, %v9830
        %v9832 = vsel %vm9542, %v9491, 0.0
        %v9833 = vadd.f32 %v9831, %v9832
        %v9834 = vsel %vm9542, %v9492, 0.0
        %v9835 = vadd.f32 %v9833, %v9834
        %v9836 = vsel %vm9542, %v9493, 0.0
        %v9837 = vadd.f32 %v9835, %v9836
        %v9838 = vsel %vm9542, %v9494, 0.0
        %v9839 = vadd.f32 %v9837, %v9838
        %v9840 = vsel %vm9542, %v9495, 0.0
        %v9841 = vadd.f32 %v9839, %v9840
        %v9842 = vsel %vm9542, %v9496, 0.0
        %v9843 = vadd.f32 %v9841, %v9842
        %v9844 = vsel %vm9542, %v9497, 0.0
        %v9845 = vadd.f32 %v9843, %v9844
        %v9846 = vsel %vm9542, %v9498, 0.0
        %v9847 = vadd.f32 %v9845, %v9846
        %v9848 = vsel %vm9542, %v9499, 0.0
        %v9849 = vadd.f32 %v9847, %v9848
        %v9850 = vsel %vm9542, %v9500, 0.0
        %v9851 = vadd.f32 %v9849, %v9850
        %v9852 = vsel %vm9542, %v9501, 0.0
        %v9853 = vadd.f32 %v9851, %v9852
        %v9854 = vsel %vm9542, %v9502, 0.0
        %v9855 = vadd.f32 %v9853, %v9854
        %v9856 = vsel %vm9542, %v9503, 0.0
        %v9857 = vadd.f32 %v9855, %v9856
        %v9858 = vsel %vm9542, %v9504, 0.0
        %v9859 = vadd.f32 %v9857, %v9858
        %v9860 = vsel %vm9542, %v9505, 0.0
        %v9861 = vadd.f32 %v9859, %v9860
        %v9862 = vsel %vm9542, %v9506, 0.0
        %v9863 = vadd.f32 %v9861, %v9862
        %v9864 = vsel %vm9542, %v9507, 0.0
        %v9865 = vadd.f32 %v9863, %v9864
        %v9866 = vsel %vm9542, %v9508, 0.0
        %v9867 = vadd.f32 %v9865, %v9866
        %v9868 = vsel %vm9542, %v9509, 0.0
        %v9869 = vadd.f32 %v9867, %v9868
        %v9870 = vsel %vm9542, %v9510, 0.0
        %v9871 = vadd.f32 %v9869, %v9870
        %v9872 = vsel %vm9542, %v9511, 0.0
        %v9873 = vadd.f32 %v9871, %v9872
        %v9874 = vsel %vm9542, %v9512, 0.0
        %v9875 = vadd.f32 %v9873, %v9874
        %v9876 = vsel %vm9542, %v9513, 0.0
        %v9877 = vadd.f32 %v9875, %v9876
        %v9878 = vsel %vm9542, %v9514, 0.0
        %v9879 = vadd.f32 %v9877, %v9878
        %v9880 = vsel %vm9542, %v9515, 0.0
        %v9881 = vadd.f32 %v9879, %v9880
        %v9882 = vsel %vm9542, %v9516, 0.0
        %v9883 = vadd.f32 %v9881, %v9882
        %v9884 = vsel %vm9542, %v9517, 0.0
        %v9885 = vadd.f32 %v9883, %v9884
        %v9886 = vsel %vm9542, %v9518, 0.0
        %v9887 = vadd.f32 %v9885, %v9886
        %v9888 = vsel %vm9542, %v9519, 0.0
        %v9889 = vadd.f32 %v9887, %v9888
        %v9890 = vsel %vm9542, %v9520, 0.0
        %v9891 = vadd.f32 %v9889, %v9890
        %v9892 = vsel %vm9542, %v9521, 0.0
        %v9893 = vadd.f32 %v9891, %v9892
        %v9894 = vsel %vm9542, %v9522, 0.0
        %v9895 = vadd.f32 %v9893, %v9894
        %v9896 = vsel %vm9542, %v9523, 0.0
        %v9897 = vadd.f32 %v9895, %v9896
        %v9898 = vsel %vm9542, %v9524, 0.0
        %v9899 = vadd.f32 %v9897, %v9898
        %v9900 = vsel %vm9542, %v9525, 0.0
        %v9901 = vadd.f32 %v9899, %v9900
        %v9902 = vsel %vm9542, %v9526, 0.0
        %v9903 = vadd.f32 %v9901, %v9902
        %v9904 = vsel %vm9542, %v9527, 0.0
        %v9905 = vadd.f32 %v9903, %v9904
        %v9906 = vsel %vm9542, %v9528, 0.0
        %v9907 = vadd.f32 %v9905, %v9906
        %v9908 = vsel %vm9542, %v9529, 0.0
        %v9909 = vadd.f32 %v9907, %v9908
        %v9910 = vsel %vm9542, %v9530, 0.0
        %v9911 = vadd.f32 %v9909, %v9910
        %v9912 = vsel %vm9542, %v9531, 0.0
        %v9913 = vadd.f32 %v9911, %v9912
        %v9914 = vsel %vm9542, %v9532, 0.0
        %v9915 = vadd.f32 %v9913, %v9914
        %v9916 = vsel %vm9542, %v9533, 0.0
        %v9917 = vadd.f32 %v9915, %v9916
        %v9918 = vsel %vm9542, %v9534, 0.0
        %v9919 = vadd.f32 %v9917, %v9918
        %v9920 = vsel %vm9542, %v9535, 0.0
        %v9921 = vadd.f32 %v9919, %v9920
        %v9922 = vsel %vm9542, %v9536, 0.0
        %v9923 = vadd.f32 %v9921, %v9922
        %v9924 = vsel %vm9542, %v9537, 0.0
        %v9925 = vadd.f32 %v9923, %v9924
        %v9926 = vsel %vm9542, %v9538, 0.0
        %v9927 = vadd.f32 %v9925, %v9926
        %v9928 = vsel %vm9542, %v9539, 0.0
        %v9929 = vadd.f32 %v9927, %v9928
        %v9930 = vsel %vm9542, %v9540, 0.0
        %v9931 = vadd.f32 %v9929, %v9930
        %v9932 = vsel %vm9542, %v9541, 0.0
        %v9933 = vadd.f32 %v9931, %v9932
        %v9934 = vrot.slane %v9933, 4
        %v9935 = vadd.f32 %v9933, %v9934
        %v9936 = vrot.slane %v9935, 2
        %v9937 = vadd.f32 %v9935, %v9936
        %v9938 = vrot.slane %v9937, 1
        %v9939 = vadd.f32 %v9937, %v9938
        %v9940 = vadd.f32 %v9678, %v9939
        %vm9941 = vcmask 516096
        %9942 = vst.msk [vmem:[#allocation4] sm:$0x1] %vm9941, %v9940
        %v9943 = vld [vmem:[#allocation6] sm:$0x1]
        %v9944 = vmul.f32 %v9414, %v9414
        %v9945 = vmul.f32 %v9415, %v9415
        %v9946 = vmul.f32 %v9416, %v9416
        %v9947 = vmul.f32 %v9417, %v9417
        %v9948 = vmul.f32 %v9418, %v9418
        %v9949 = vmul.f32 %v9419, %v9419
        %v9950 = vmul.f32 %v9420, %v9420
        %v9951 = vmul.f32 %v9421, %v9421
        %v9952 = vmul.f32 %v9422, %v9422
        %v9953 = vmul.f32 %v9423, %v9423
        %v9954 = vmul.f32 %v9424, %v9424
        %v9955 = vmul.f32 %v9425, %v9425
        %v9956 = vmul.f32 %v9426, %v9426
        %v9957 = vmul.f32 %v9427, %v9427
        %v9958 = vmul.f32 %v9428, %v9428
        %v9959 = vmul.f32 %v9429, %v9429
        %v9960 = vmul.f32 %v9430, %v9430
        %v9961 = vmul.f32 %v9431, %v9431
        %v9962 = vmul.f32 %v9432, %v9432
        %v9963 = vmul.f32 %v9433, %v9433
        %v9964 = vmul.f32 %v9434, %v9434
        %v9965 = vmul.f32 %v9435, %v9435
        %v9966 = vmul.f32 %v9436, %v9436
        %v9967 = vmul.f32 %v9437, %v9437
        %v9968 = vmul.f32 %v9438, %v9438
        %v9969 = vmul.f32 %v9439, %v9439
        %v9970 = vmul.f32 %v9440, %v9440
        %v9971 = vmul.f32 %v9441, %v9441
        %v9972 = vmul.f32 %v9442, %v9442
        %v9973 = vmul.f32 %v9443, %v9443
        %v9974 = vmul.f32 %v9444, %v9444
        %v9975 = vmul.f32 %v9445, %v9445
        %v9976 = vmul.f32 %v9446, %v9446
        %v9977 = vmul.f32 %v9447, %v9447
        %v9978 = vmul.f32 %v9448, %v9448
        %v9979 = vmul.f32 %v9449, %v9449
        %v9980 = vmul.f32 %v9450, %v9450
        %v9981 = vmul.f32 %v9451, %v9451
        %v9982 = vmul.f32 %v9452, %v9452
        %v9983 = vmul.f32 %v9453, %v9453
        %v9984 = vmul.f32 %v9454, %v9454
        %v9985 = vmul.f32 %v9455, %v9455
        %v9986 = vmul.f32 %v9456, %v9456
        %v9987 = vmul.f32 %v9457, %v9457
        %v9988 = vmul.f32 %v9458, %v9458
        %v9989 = vmul.f32 %v9459, %v9459
        %v9990 = vmul.f32 %v9460, %v9460
        %v9991 = vmul.f32 %v9461, %v9461
        %v9992 = vmul.f32 %v9462, %v9462
        %v9993 = vmul.f32 %v9463, %v9463
        %v9994 = vmul.f32 %v9464, %v9464
        %v9995 = vmul.f32 %v9465, %v9465
        %v9996 = vmul.f32 %v9466, %v9466
        %v9997 = vmul.f32 %v9467, %v9467
        %v9998 = vmul.f32 %v9468, %v9468
        %v9999 = vmul.f32 %v9469, %v9469
        %v10000 = vmul.f32 %v9470, %v9470
        %v10001 = vmul.f32 %v9471, %v9471
        %v10002 = vmul.f32 %v9472, %v9472
        %v10003 = vmul.f32 %v9473, %v9473
        %v10004 = vmul.f32 %v9474, %v9474
        %v10005 = vmul.f32 %v9475, %v9475
        %v10006 = vmul.f32 %v9476, %v9476
        %v10007 = vmul.f32 %v9477, %v9477
        %v10008 = vmul.f32 %v9478, %v9478
        %v10009 = vmul.f32 %v9479, %v9479
        %v10010 = vmul.f32 %v9480, %v9480
        %v10011 = vmul.f32 %v9481, %v9481
        %v10012 = vmul.f32 %v9482, %v9482
        %v10013 = vmul.f32 %v9483, %v9483
        %v10014 = vmul.f32 %v9484, %v9484
        %v10015 = vmul.f32 %v9485, %v9485
        %v10016 = vmul.f32 %v9486, %v9486
        %v10017 = vmul.f32 %v9487, %v9487
        %v10018 = vmul.f32 %v9488, %v9488
        %v10019 = vmul.f32 %v9489, %v9489
        %v10020 = vmul.f32 %v9490, %v9490
        %v10021 = vmul.f32 %v9491, %v9491
        %v10022 = vmul.f32 %v9492, %v9492
        %v10023 = vmul.f32 %v9493, %v9493
        %v10024 = vmul.f32 %v9494, %v9494
        %v10025 = vmul.f32 %v9495, %v9495
        %v10026 = vmul.f32 %v9496, %v9496
        %v10027 = vmul.f32 %v9497, %v9497
        %v10028 = vmul.f32 %v9498, %v9498
        %v10029 = vmul.f32 %v9499, %v9499
        %v10030 = vmul.f32 %v9500, %v9500
        %v10031 = vmul.f32 %v9501, %v9501
        %v10032 = vmul.f32 %v9502, %v9502
        %v10033 = vmul.f32 %v9503, %v9503
        %v10034 = vmul.f32 %v9504, %v9504
        %v10035 = vmul.f32 %v9505, %v9505
        %v10036 = vmul.f32 %v9506, %v9506
        %v10037 = vmul.f32 %v9507, %v9507
        %v10038 = vmul.f32 %v9508, %v9508
        %v10039 = vmul.f32 %v9509, %v9509
        %v10040 = vmul.f32 %v9510, %v9510
        %v10041 = vmul.f32 %v9511, %v9511
        %v10042 = vmul.f32 %v9512, %v9512
        %v10043 = vmul.f32 %v9513, %v9513
        %v10044 = vmul.f32 %v9514, %v9514
        %v10045 = vmul.f32 %v9515, %v9515
        %v10046 = vmul.f32 %v9516, %v9516
        %v10047 = vmul.f32 %v9517, %v9517
        %v10048 = vmul.f32 %v9518, %v9518
        %v10049 = vmul.f32 %v9519, %v9519
        %v10050 = vmul.f32 %v9520, %v9520
        %v10051 = vmul.f32 %v9521, %v9521
        %v10052 = vmul.f32 %v9522, %v9522
        %v10053 = vmul.f32 %v9523, %v9523
        %v10054 = vmul.f32 %v9524, %v9524
        %v10055 = vmul.f32 %v9525, %v9525
        %v10056 = vmul.f32 %v9526, %v9526
        %v10057 = vmul.f32 %v9527, %v9527
        %v10058 = vmul.f32 %v9528, %v9528
        %v10059 = vmul.f32 %v9529, %v9529
        %v10060 = vmul.f32 %v9530, %v9530
        %v10061 = vmul.f32 %v9531, %v9531
        %v10062 = vmul.f32 %v9532, %v9532
        %v10063 = vmul.f32 %v9533, %v9533
        %v10064 = vmul.f32 %v9534, %v9534
        %v10065 = vmul.f32 %v9535, %v9535
        %v10066 = vmul.f32 %v9536, %v9536
        %v10067 = vmul.f32 %v9537, %v9537
        %v10068 = vmul.f32 %v9538, %v9538
        %v10069 = vmul.f32 %v9539, %v9539
        %v10070 = vmul.f32 %v9540, %v9540
        %v10071 = vmul.f32 %v9541, %v9541
        %v10072 = vsel %vm9542, %v9944, 0.0
        %v10073 = vsel %vm9542, %v9945, 0.0
        %v10074 = vadd.f32 %v10072, %v10073
        %v10075 = vsel %vm9542, %v9946, 0.0
        %v10076 = vadd.f32 %v10074, %v10075
        %v10077 = vsel %vm9542, %v9947, 0.0
        %v10078 = vadd.f32 %v10076, %v10077
        %v10079 = vsel %vm9542, %v9948, 0.0
        %v10080 = vadd.f32 %v10078, %v10079
        %v10081 = vsel %vm9542, %v9949, 0.0
        %v10082 = vadd.f32 %v10080, %v10081
        %v10083 = vsel %vm9542, %v9950, 0.0
        %v10084 = vadd.f32 %v10082, %v10083
        %v10085 = vsel %vm9542, %v9951, 0.0
        %v10086 = vadd.f32 %v10084, %v10085
        %v10087 = vsel %vm9542, %v9952, 0.0
        %v10088 = vadd.f32 %v10086, %v10087
        %v10089 = vsel %vm9542, %v9953, 0.0
        %v10090 = vadd.f32 %v10088, %v10089
        %v10091 = vsel %vm9542, %v9954, 0.0
        %v10092 = vadd.f32 %v10090, %v10091
        %v10093 = vsel %vm9542, %v9955, 0.0
        %v10094 = vadd.f32 %v10092, %v10093
        %v10095 = vsel %vm9542, %v9956, 0.0
        %v10096 = vadd.f32 %v10094, %v10095
        %v10097 = vsel %vm9542, %v9957, 0.0
        %v10098 = vadd.f32 %v10096, %v10097
        %v10099 = vsel %vm9542, %v9958, 0.0
        %v10100 = vadd.f32 %v10098, %v10099
        %v10101 = vsel %vm9542, %v9959, 0.0
        %v10102 = vadd.f32 %v10100, %v10101
        %v10103 = vsel %vm9542, %v9960, 0.0
        %v10104 = vadd.f32 %v10102, %v10103
        %v10105 = vsel %vm9542, %v9961, 0.0
        %v10106 = vadd.f32 %v10104, %v10105
        %v10107 = vsel %vm9542, %v9962, 0.0
        %v10108 = vadd.f32 %v10106, %v10107
        %v10109 = vsel %vm9542, %v9963, 0.0
        %v10110 = vadd.f32 %v10108, %v10109
        %v10111 = vsel %vm9542, %v9964, 0.0
        %v10112 = vadd.f32 %v10110, %v10111
        %v10113 = vsel %vm9542, %v9965, 0.0
        %v10114 = vadd.f32 %v10112, %v10113
        %v10115 = vsel %vm9542, %v9966, 0.0
        %v10116 = vadd.f32 %v10114, %v10115
        %v10117 = vsel %vm9542, %v9967, 0.0
        %v10118 = vadd.f32 %v10116, %v10117
        %v10119 = vsel %vm9542, %v9968, 0.0
        %v10120 = vadd.f32 %v10118, %v10119
        %v10121 = vsel %vm9542, %v9969, 0.0
        %v10122 = vadd.f32 %v10120, %v10121
        %v10123 = vsel %vm9542, %v9970, 0.0
        %v10124 = vadd.f32 %v10122, %v10123
        %v10125 = vsel %vm9542, %v9971, 0.0
        %v10126 = vadd.f32 %v10124, %v10125
        %v10127 = vsel %vm9542, %v9972, 0.0
        %v10128 = vadd.f32 %v10126, %v10127
        %v10129 = vsel %vm9542, %v9973, 0.0
        %v10130 = vadd.f32 %v10128, %v10129
        %v10131 = vsel %vm9542, %v9974, 0.0
        %v10132 = vadd.f32 %v10130, %v10131
        %v10133 = vsel %vm9542, %v9975, 0.0
        %v10134 = vadd.f32 %v10132, %v10133
        %v10135 = vsel %vm9542, %v9976, 0.0
        %v10136 = vadd.f32 %v10134, %v10135
        %v10137 = vsel %vm9542, %v9977, 0.0
        %v10138 = vadd.f32 %v10136, %v10137
        %v10139 = vsel %vm9542, %v9978, 0.0
        %v10140 = vadd.f32 %v10138, %v10139
        %v10141 = vsel %vm9542, %v9979, 0.0
        %v10142 = vadd.f32 %v10140, %v10141
        %v10143 = vsel %vm9542, %v9980, 0.0
        %v10144 = vadd.f32 %v10142, %v10143
        %v10145 = vsel %vm9542, %v9981, 0.0
        %v10146 = vadd.f32 %v10144, %v10145
        %v10147 = vsel %vm9542, %v9982, 0.0
        %v10148 = vadd.f32 %v10146, %v10147
        %v10149 = vsel %vm9542, %v9983, 0.0
        %v10150 = vadd.f32 %v10148, %v10149
        %v10151 = vsel %vm9542, %v9984, 0.0
        %v10152 = vadd.f32 %v10150, %v10151
        %v10153 = vsel %vm9542, %v9985, 0.0
        %v10154 = vadd.f32 %v10152, %v10153
        %v10155 = vsel %vm9542, %v9986, 0.0
        %v10156 = vadd.f32 %v10154, %v10155
        %v10157 = vsel %vm9542, %v9987, 0.0
        %v10158 = vadd.f32 %v10156, %v10157
        %v10159 = vsel %vm9542, %v9988, 0.0
        %v10160 = vadd.f32 %v10158, %v10159
        %v10161 = vsel %vm9542, %v9989, 0.0
        %v10162 = vadd.f32 %v10160, %v10161
        %v10163 = vsel %vm9542, %v9990, 0.0
        %v10164 = vadd.f32 %v10162, %v10163
        %v10165 = vsel %vm9542, %v9991, 0.0
        %v10166 = vadd.f32 %v10164, %v10165
        %v10167 = vsel %vm9542, %v9992, 0.0
        %v10168 = vadd.f32 %v10166, %v10167
        %v10169 = vsel %vm9542, %v9993, 0.0
        %v10170 = vadd.f32 %v10168, %v10169
        %v10171 = vsel %vm9542, %v9994, 0.0
        %v10172 = vadd.f32 %v10170, %v10171
        %v10173 = vsel %vm9542, %v9995, 0.0
        %v10174 = vadd.f32 %v10172, %v10173
        %v10175 = vsel %vm9542, %v9996, 0.0
        %v10176 = vadd.f32 %v10174, %v10175
        %v10177 = vsel %vm9542, %v9997, 0.0
        %v10178 = vadd.f32 %v10176, %v10177
        %v10179 = vsel %vm9542, %v9998, 0.0
        %v10180 = vadd.f32 %v10178, %v10179
        %v10181 = vsel %vm9542, %v9999, 0.0
        %v10182 = vadd.f32 %v10180, %v10181
        %v10183 = vsel %vm9542, %v10000, 0.0
        %v10184 = vadd.f32 %v10182, %v10183
        %v10185 = vsel %vm9542, %v10001, 0.0
        %v10186 = vadd.f32 %v10184, %v10185
        %v10187 = vsel %vm9542, %v10002, 0.0
        %v10188 = vadd.f32 %v10186, %v10187
        %v10189 = vsel %vm9542, %v10003, 0.0
        %v10190 = vadd.f32 %v10188, %v10189
        %v10191 = vsel %vm9542, %v10004, 0.0
        %v10192 = vadd.f32 %v10190, %v10191
        %v10193 = vsel %vm9542, %v10005, 0.0
        %v10194 = vadd.f32 %v10192, %v10193
        %v10195 = vsel %vm9542, %v10006, 0.0
        %v10196 = vadd.f32 %v10194, %v10195
        %v10197 = vsel %vm9542, %v10007, 0.0
        %v10198 = vadd.f32 %v10196, %v10197
        %v10199 = vsel %vm9542, %v10008, 0.0
        %v10200 = vadd.f32 %v10198, %v10199
        %v10201 = vsel %vm9542, %v10009, 0.0
        %v10202 = vadd.f32 %v10200, %v10201
        %v10203 = vsel %vm9542, %v10010, 0.0
        %v10204 = vadd.f32 %v10202, %v10203
        %v10205 = vsel %vm9542, %v10011, 0.0
        %v10206 = vadd.f32 %v10204, %v10205
        %v10207 = vsel %vm9542, %v10012, 0.0
        %v10208 = vadd.f32 %v10206, %v10207
        %v10209 = vsel %vm9542, %v10013, 0.0
        %v10210 = vadd.f32 %v10208, %v10209
        %v10211 = vsel %vm9542, %v10014, 0.0
        %v10212 = vadd.f32 %v10210, %v10211
        %v10213 = vsel %vm9542, %v10015, 0.0
        %v10214 = vadd.f32 %v10212, %v10213
        %v10215 = vsel %vm9542, %v10016, 0.0
        %v10216 = vadd.f32 %v10214, %v10215
        %v10217 = vsel %vm9542, %v10017, 0.0
        %v10218 = vadd.f32 %v10216, %v10217
        %v10219 = vsel %vm9542, %v10018, 0.0
        %v10220 = vadd.f32 %v10218, %v10219
        %v10221 = vsel %vm9542, %v10019, 0.0
        %v10222 = vadd.f32 %v10220, %v10221
        %v10223 = vsel %vm9542, %v10020, 0.0
        %v10224 = vadd.f32 %v10222, %v10223
        %v10225 = vsel %vm9542, %v10021, 0.0
        %v10226 = vadd.f32 %v10224, %v10225
        %v10227 = vsel %vm9542, %v10022, 0.0
        %v10228 = vadd.f32 %v10226, %v10227
        %v10229 = vsel %vm9542, %v10023, 0.0
        %v10230 = vadd.f32 %v10228, %v10229
        %v10231 = vsel %vm9542, %v10024, 0.0
        %v10232 = vadd.f32 %v10230, %v10231
        %v10233 = vsel %vm9542, %v10025, 0.0
        %v10234 = vadd.f32 %v10232, %v10233
        %v10235 = vsel %vm9542, %v10026, 0.0
        %v10236 = vadd.f32 %v10234, %v10235
        %v10237 = vsel %vm9542, %v10027, 0.0
        %v10238 = vadd.f32 %v10236, %v10237
        %v10239 = vsel %vm9542, %v10028, 0.0
        %v10240 = vadd.f32 %v10238, %v10239
        %v10241 = vsel %vm9542, %v10029, 0.0
        %v10242 = vadd.f32 %v10240, %v10241
        %v10243 = vsel %vm9542, %v10030, 0.0
        %v10244 = vadd.f32 %v10242, %v10243
        %v10245 = vsel %vm9542, %v10031, 0.0
        %v10246 = vadd.f32 %v10244, %v10245
        %v10247 = vsel %vm9542, %v10032, 0.0
        %v10248 = vadd.f32 %v10246, %v10247
        %v10249 = vsel %vm9542, %v10033, 0.0
        %v10250 = vadd.f32 %v10248, %v10249
        %v10251 = vsel %vm9542, %v10034, 0.0
        %v10252 = vadd.f32 %v10250, %v10251
        %v10253 = vsel %vm9542, %v10035, 0.0
        %v10254 = vadd.f32 %v10252, %v10253
        %v10255 = vsel %vm9542, %v10036, 0.0
        %v10256 = vadd.f32 %v10254, %v10255
        %v10257 = vsel %vm9542, %v10037, 0.0
        %v10258 = vadd.f32 %v10256, %v10257
        %v10259 = vsel %vm9542, %v10038, 0.0
        %v10260 = vadd.f32 %v10258, %v10259
        %v10261 = vsel %vm9542, %v10039, 0.0
        %v10262 = vadd.f32 %v10260, %v10261
        %v10263 = vsel %vm9542, %v10040, 0.0
        %v10264 = vadd.f32 %v10262, %v10263
        %v10265 = vsel %vm9542, %v10041, 0.0
        %v10266 = vadd.f32 %v10264, %v10265
        %v10267 = vsel %vm9542, %v10042, 0.0
        %v10268 = vadd.f32 %v10266, %v10267
        %v10269 = vsel %vm9542, %v10043, 0.0
        %v10270 = vadd.f32 %v10268, %v10269
        %v10271 = vsel %vm9542, %v10044, 0.0
        %v10272 = vadd.f32 %v10270, %v10271
        %v10273 = vsel %vm9542, %v10045, 0.0
        %v10274 = vadd.f32 %v10272, %v10273
        %v10275 = vsel %vm9542, %v10046, 0.0
        %v10276 = vadd.f32 %v10274, %v10275
        %v10277 = vsel %vm9542, %v10047, 0.0
        %v10278 = vadd.f32 %v10276, %v10277
        %v10279 = vsel %vm9542, %v10048, 0.0
        %v10280 = vadd.f32 %v10278, %v10279
        %v10281 = vsel %vm9542, %v10049, 0.0
        %v10282 = vadd.f32 %v10280, %v10281
        %v10283 = vsel %vm9542, %v10050, 0.0
        %v10284 = vadd.f32 %v10282, %v10283
        %v10285 = vsel %vm9542, %v10051, 0.0
        %v10286 = vadd.f32 %v10284, %v10285
        %v10287 = vsel %vm9542, %v10052, 0.0
        %v10288 = vadd.f32 %v10286, %v10287
        %v10289 = vsel %vm9542, %v10053, 0.0
        %v10290 = vadd.f32 %v10288, %v10289
        %v10291 = vsel %vm9542, %v10054, 0.0
        %v10292 = vadd.f32 %v10290, %v10291
        %v10293 = vsel %vm9542, %v10055, 0.0
        %v10294 = vadd.f32 %v10292, %v10293
        %v10295 = vsel %vm9542, %v10056, 0.0
        %v10296 = vadd.f32 %v10294, %v10295
        %v10297 = vsel %vm9542, %v10057, 0.0
        %v10298 = vadd.f32 %v10296, %v10297
        %v10299 = vsel %vm9542, %v10058, 0.0
        %v10300 = vadd.f32 %v10298, %v10299
        %v10301 = vsel %vm9542, %v10059, 0.0
        %v10302 = vadd.f32 %v10300, %v10301
        %v10303 = vsel %vm9542, %v10060, 0.0
        %v10304 = vadd.f32 %v10302, %v10303
        %v10305 = vsel %vm9542, %v10061, 0.0
        %v10306 = vadd.f32 %v10304, %v10305
        %v10307 = vsel %vm9542, %v10062, 0.0
        %v10308 = vadd.f32 %v10306, %v10307
        %v10309 = vsel %vm9542, %v10063, 0.0
        %v10310 = vadd.f32 %v10308, %v10309
        %v10311 = vsel %vm9542, %v10064, 0.0
        %v10312 = vadd.f32 %v10310, %v10311
        %v10313 = vsel %vm9542, %v10065, 0.0
        %v10314 = vadd.f32 %v10312, %v10313
        %v10315 = vsel %vm9542, %v10066, 0.0
        %v10316 = vadd.f32 %v10314, %v10315
        %v10317 = vsel %vm9542, %v10067, 0.0
        %v10318 = vadd.f32 %v10316, %v10317
        %v10319 = vsel %vm9542, %v10068, 0.0
        %v10320 = vadd.f32 %v10318, %v10319
        %v10321 = vsel %vm9542, %v10069, 0.0
        %v10322 = vadd.f32 %v10320, %v10321
        %v10323 = vsel %vm9542, %v10070, 0.0
        %v10324 = vadd.f32 %v10322, %v10323
        %v10325 = vsel %vm9542, %v10071, 0.0
        %v10326 = vadd.f32 %v10324, %v10325
        %v10327 = vrot.slane %v10326, 4
        %v10328 = vadd.f32 %v10326, %v10327
        %v10329 = vrot.slane %v10328, 2
        %v10330 = vadd.f32 %v10328, %v10329
        %v10331 = vrot.slane %v10330, 1
        %v10332 = vadd.f32 %v10330, %v10331
        %v10333 = vadd.f32 %v9943, %v10332
        %10334 = vst.msk [vmem:[#allocation6] sm:$0x1] %vm9941, %v10333
        %s10335 = sand.u32 %s94, 1
        %s10336 = scalar_lea.sflag [#allocation3], %s10335
        %s10337 = sand.u32 %s94, 1
        %s10338 = smul.addr %s10337, 1024
        %s10339 = scalar_lea.vmem [#allocation2], %s10338
        // Predicated region
        $region33: #{_conv3x3_jit.1} parent=27 // pred_check
          %p10340 = pneg %p104
        $region34: #{_conv3x3_jit.1} parent=27 // pred_check_branch
          %10342 = sbr.rel (%p10340) target = $region36
        $region35: #{_conv3x3_jit.1} parent=27 // pred_region
          %s10344 = ssub.s32 16384, 16384
          %10345 = vsyncadd %s10336, %s10344
          %s10346 = smul.addr %s25, 128
          %s10347 = sadd.s32 %s24, %s10346
          %s10348 = smul.addr %s10347, 128
          %s10349 = scalar_lea.hbm %s2, %s10348
          %s10350 = sshll.u32 %s10339, 4
          %s10351 = int_to_ptr.vmem [resolvable:$true] %s10350
          %10356 = dma.vmem_to_hbm [thread:$0]  %s10351, 16384, %s10349, %s10336, 128, 128, 8
        $region36: #{_conv3x3_jit.1} parent=27 // pred_fallthru
          _
        // Predicated region
        $region37: #{_conv3x3_jit.1} parent=27 // pred_check
          %p10357 = pneg %p130
        $region38: #{_conv3x3_jit.1} parent=27 // pred_check_branch
          %10359 = sbr.rel (%p10357) target = $region40
        $region39: #{_conv3x3_jit.1} parent=27 // pred_region
          %s10361 = ssub.s32 16, 16
          %10362 = vsyncadd [#allocation5], %s10361
          %s10363 = smul.addr %s24, 16
          %s10364 = scalar_lea.hbm %s3, %s10363
          %s10366 = sshll.u32 [#allocation4], 4
          %s10367 = int_to_ptr.vmem [resolvable:$true] %s10366
          %10369 = dma.vmem_to_hbm [thread:$0]  %s10367, 16, %s10364, [#allocation5]
        $region40: #{_conv3x3_jit.1} parent=27 // pred_fallthru
          _
        // Predicated region
        $region41: #{_conv3x3_jit.1} parent=27 // pred_check
          %p10370 = pneg %p156
        $region42: #{_conv3x3_jit.1} parent=27 // pred_check_branch
          %10372 = sbr.rel (%p10370) target = $region44
        $region43: #{_conv3x3_jit.1} parent=27 // pred_region
          %s10374 = ssub.s32 16, 16
          %10375 = vsyncadd [#allocation5], %s10374
          %s10376 = smul.addr %s24, 16
          %s10377 = scalar_lea.hbm %s4, %s10376
          %s10379 = sshll.u32 [#allocation6], 4
          %s10380 = int_to_ptr.vmem [resolvable:$true] %s10379
          %10382 = dma.vmem_to_hbm [thread:$0]  %s10380, 16, %s10377, [#allocation5]
        $region44: #{_conv3x3_jit.1} parent=27 // pred_fallthru
          _
        // Predicated region
        $region45: #{_conv3x3_jit.1} parent=27 // pred_check
          %p10383 = pneg %p130
        $region46: #{_conv3x3_jit.1} parent=27 // pred_check_branch
          %10385 = sbr.rel (%p10383) target = $region48
        $region47: #{_conv3x3_jit.1} parent=27 // pred_region
          %10386 = dma.done [#allocation5], 16
        $region48: #{_conv3x3_jit.1} parent=27 // pred_fallthru
          _
        // Predicated region
        $region49: #{_conv3x3_jit.1} parent=27 // pred_check
          %p10387 = pneg %p156
        $region50: #{_conv3x3_jit.1} parent=27 // pred_check_branch
          %10389 = sbr.rel (%p10387) target = $region52
        $region51: #{_conv3x3_jit.1} parent=27 // pred_region
          %10390 = dma.done [#allocation5], 16
        $region52: #{_conv3x3_jit.1} parent=27 // pred_fallthru
          _
      $region28: #{_conv3x3_jit.1} parent=5 // pred_fallthru
        _
      %p10391 = scmp.le.s32.totalorder 2, %s15
      // Predicated region
      $region53: #{_conv3x3_jit.1} parent=5 // pred_check
        %p10392 = pneg %p10391
      $region54: #{_conv3x3_jit.1} parent=5 // pred_check_branch
        %10394 = sbr.rel (%p10392) target = $region56
      $region55: #{_conv3x3_jit.1} parent=5 // pred_region
        %s10395 = ssub.s32 %s15, 2
        // Predicated region
        $region57: #{_conv3x3_jit.1} parent=55 // pred_check
          %p10396 = pneg %p110
        $region58: #{_conv3x3_jit.1} parent=55 // pred_check_branch
          %10398 = sbr.rel (%p10396) target = $region60
        $region59: #{_conv3x3_jit.1} parent=55 // pred_region
          %s10399 = sand.u32 %s95, 1
          %s10400 = scalar_lea.sflag [#allocation3], %s10399
          %s10401 = sand.u32 %s95, 1
          %s10402 = smul.addr %s10401, 1024
          %s10403 = scalar_lea.vmem [#allocation2], %s10402
          %10404 = dma.done %s10400, 16384
        $region60: #{_conv3x3_jit.1} parent=55 // pred_fallthru
          _
      $region56: #{_conv3x3_jit.1} parent=5 // pred_fallthru
        _
    $region6: #{_conv3x3_jit.1} parent=1 // loop_footer
      %s19 = sadd.s32 1, %s15
    $region7: #{_conv3x3_jit.1} parent=1 // loop_footer_branch
      %14 = sbr.rel target = $region3
    $region8: #{_conv3x3_jit.1} parent=1 // loop_exit
      _
    %10405 = vsyncpa [#allocation3], 1
    %s10406 = scalar_lea.sflag [#allocation3], 1
    %10407 = vsyncpa %s10406, 1
    %10408 = vsyncpa [#allocation5], 1

</llo_original>
